<compile_context>
chip_gen: v5e
topology: v5e:2x2
jax: 0.10.0
libtpu: 0.0.40
codegen_flags: <defaults>
</compile_context>

<pallas_src>
import functools

import jax
import jax.numpy as jnp
from jax.experimental import pallas as pl
from jax.experimental.pallas import tpu as pltpu


# ----------------------------------------------------------------------------
# Pallas kernel: out = prelu(sum_i x_i @ w_i + b) [+ res_scale * res]
#   - x_i, w_i are bf16 (MXU), accumulation + epilogue in f32 (VPU).
#   - alpha / res_scale are static Python floats, n_x is a static int.
# ----------------------------------------------------------------------------
def _gemm_bias_act_kernel(*refs, n_x, alpha, apply_act, res_scale):
    o_ref = refs[-1]
    xs = refs[:n_x]
    ws = refs[n_x:2 * n_x]
    b_ref = refs[2 * n_x]

    acc = jnp.dot(xs[0][...], ws[0][...], preferred_element_type=jnp.float32)
    for i in range(1, n_x):
        acc = acc + jnp.dot(xs[i][...], ws[i][...],
                            preferred_element_type=jnp.float32)
    acc = acc + b_ref[...]                              # (1, N) broadcast
    if apply_act:                                       # PReLU, shared alpha
        acc = jnp.where(acc >= 0.0, acc, alpha * acc)
    if res_scale is not None:                           # fused residual
        res_ref = refs[2 * n_x + 1]
        acc = acc + res_scale * res_ref[...].astype(jnp.float32)
    o_ref[...] = acc.astype(o_ref.dtype)


def _round_up(v, m):
    return (v + m - 1) // m * m


def fused_gemm(xs, ws, b, *, res=None, res_scale=1.0, alpha=0.25,
               apply_act=True, out_dtype=jnp.bfloat16):
    """sum_i xs[i](M,Ki) @ ws[i](Ki,N) + b(N,), optional PReLU and residual.

    GEMM on the MXU (bf16 in, f32 acc) + bias/PReLU/residual epilogue on the
    VPU, all inside a single pallas_call tiled only along M.
    """
    xs, ws = list(xs), list(ws)
    n_x = len(xs)
    M = xs[0].shape[0]
    N = ws[0].shape[1]

    # bf16 GEMM inputs; pad K to a multiple of 16 for clean bf16 sublane
    # packing (only feat0's K=27 actually pads).  K and N stay full-extent
    # blocks -> no other HBM padding and no output slice along N.
    xs_b, ws_b = [], []
    for x, w in zip(xs, ws):
        K = x.shape[1]
        Kp = _round_up(K, 16)
        xb = x.astype(jnp.bfloat16)
        wb = w.astype(jnp.bfloat16)
        if Kp != K:
            xb = jnp.pad(xb, ((0, 0), (0, Kp - K)))
            wb = jnp.pad(wb, ((0, Kp - K), (0, 0)))
        xs_b.append(xb)
        ws_b.append(wb)

    # Big M tiles (low per-step overhead) but >=2 grid steps so the "parallel"
    # axis can shard across both v7x TensorCores; multiple of 16 for bf16.
    TM = max(16, min(512, _round_up((M + 1) // 2, 16)))
    Mp = _round_up(M, TM)
    if Mp != M:
        xs_b = [jnp.pad(x, ((0, Mp - M), (0, 0))) for x in xs_b]

    b2 = b.reshape(1, N).astype(jnp.float32)

    inputs = xs_b + ws_b + [b2]
    in_specs = (
        [pl.BlockSpec((TM, x.shape[1]), lambda i: (i, 0)) for x in xs_b]
        + [pl.BlockSpec(w.shape, lambda i: (0, 0)) for w in ws_b]
        + [pl.BlockSpec((1, N), lambda i: (0, 0))]
    )

    rs = None
    if res is not None:
        rmat = res
        if Mp != M:
            rmat = jnp.pad(rmat, ((0, Mp - M), (0, 0)))
        inputs.append(rmat)
        in_specs.append(pl.BlockSpec((TM, N), lambda i: (i, 0)))
        rs = float(res_scale)

    kernel = functools.partial(_gemm_bias_act_kernel, n_x=n_x, alpha=alpha,
                               apply_act=apply_act, res_scale=rs)
    out = pl.pallas_call(
        kernel,
        out_shape=jax.ShapeDtypeStruct((Mp, N), out_dtype),
        grid=(Mp // TM,),
        in_specs=in_specs,
        out_specs=pl.BlockSpec((TM, N), lambda i: (i, 0)),
        compiler_params=pltpu.CompilerParams(dimension_semantics=("parallel",)),
    )(*inputs)
    if Mp != M:
        out = out[:M]
    return out


# ----------------------------------------------------------------------------
# im2col glue + conv / conv_transpose wrappers (PyTorch weight layouts)
# ----------------------------------------------------------------------------
def _extract_patches(x, kh, kw, stride):
    """x: padded NHWC.  Returns (patches [N*Ho*Wo, kh*kw*C], (N,Ho,Wo))."""
    N, H, W, C = x.shape
    Ho = (H - kh) // stride + 1
    Wo = (W - kw) // stride + 1
    taps = []
    for i in range(kh):
        for j in range(kw):
            taps.append(x[:, i:i + stride * Ho:stride, j:j + stride * Wo:stride, :])
    p = jnp.stack(taps, axis=3)                       # (N,Ho,Wo,kh*kw,C)
    return p.reshape(N * Ho * Wo, kh * kw * C), (N, Ho, Wo)


def conv2d(xs, w, b, stride, padding, *, act, res=None, res_scale=1.0,
           out_dtype=jnp.bfloat16):
    """xs: NHWC array or list of NHWC arrays (implicit channel concat of the
    inputs, avoiding an HBM concatenate).  w: PyTorch Conv2d weight
    (Cout, sum(Cin_i), kh, kw).  Optional fused residual: out += res_scale*res."""
    if not isinstance(xs, (list, tuple)):
        xs = [xs]
    Cout, _, kh, kw = w.shape
    patches_list, wmats = [], []
    coff, dims = 0, None
    for x in xs:
        C = x.shape[-1]
        xp = x
        if padding:
            xp = jnp.pad(x, ((0, 0), (padding, padding), (padding, padding), (0, 0)))
        p, dims = _extract_patches(xp, kh, kw, stride)
        patches_list.append(p)
        wmats.append(jnp.transpose(w[:, coff:coff + C], (2, 3, 1, 0))
                     .reshape(kh * kw * C, Cout))
        coff += C
    N, Ho, Wo = dims
    res_mat = None if res is None else res.reshape(-1, Cout)
    out = fused_gemm(patches_list, wmats, b, res=res_mat, res_scale=res_scale,
                     apply_act=act, out_dtype=out_dtype)
    return out.reshape(N, Ho, Wo, Cout)


def _conv_transpose2d_subpixel_s2(x, w, b, *, act, res=None, res_scale=1.0,
                                  out_dtype=jnp.bfloat16):
    """ConvTranspose2d(k=6, s=2, p=2) via sub-pixel decomposition:
    one stride-1 3x3 GEMM with 4*Cout output columns on the un-dilated input,
    then interleave the 4 output phases.  Avoids the zero-dilated 36-tap im2col."""
    Cin, Cout, _, _ = w.shape
    N, H, W, _ = x.shape

    # Sub-kernel for output phase (r, c):
    #   wc[co, ci, i, j] = w[ci, co, r + 2*(2-i), c + 2*(2-j)]
    # == spatially flipped w[:, :, r::2, c::2].  Pack phases along N (lanes).
    subs = []
    for r in range(2):
        for c in range(2):
            wsub = w[:, :, r::2, c::2][:, :, ::-1, ::-1]        # (Cin,Cout,3,3)
            subs.append(jnp.transpose(wsub, (2, 3, 0, 1)))      # (3,3,Cin,Cout)
    wmat = jnp.concatenate(subs, axis=-1).reshape(9 * Cin, 4 * Cout)

    xp = jnp.pad(x, ((0, 0), (1, 1), (1, 1), (0, 0)))
    patches, _ = _extract_patches(xp, 3, 3, 1)                  # (N*H*W, 9*Cin)
    bias4 = jnp.tile(b, 4)                                      # same bias per phase

    res_mat = None
    if res is not None:
        # De-interleave the residual (N, 2H, 2W, Cout) into the phase-major
        # GEMM layout (N*H*W, 4*Cout) so the add fuses into the kernel epilogue.
        r_ = res.reshape(N, H, 2, W, 2, Cout)
        r_ = jnp.transpose(r_, (0, 1, 3, 2, 4, 5))
        res_mat = r_.reshape(N * H * W, 4 * Cout)

    out = fused_gemm([patches], [wmat], bias4, res=res_mat, res_scale=res_scale,
                     apply_act=act, out_dtype=out_dtype)
    out = out.reshape(N, H, W, 2, 2, Cout)
    out = jnp.transpose(out, (0, 1, 3, 2, 4, 5)).reshape(N, 2 * H, 2 * W, Cout)
    return out


def conv_transpose2d(x, w, b, stride, padding, *, act, res=None, res_scale=1.0,
                     out_dtype=jnp.bfloat16):
    """x: NHWC.  w: PyTorch ConvTranspose2d weight (Cin, Cout, kh, kw)."""
    Cin, Cout, kh, kw = w.shape
    if stride == 2 and kh == 6 and kw == 6 and padding == 2:
        return _conv_transpose2d_subpixel_s2(x, w, b, act=act, res=res,
                                             res_scale=res_scale,
                                             out_dtype=out_dtype)
    # General fallback (scale 4/8): zero-dilate + flipped-kernel correlation.
    N, H, W, C = x.shape
    xd = jnp.zeros((N, (H - 1) * stride + 1, (W - 1) * stride + 1, C), x.dtype)
    xd = xd.at[:, ::stride, ::stride, :].set(x)
    p = kh - 1 - padding
    xp = jnp.pad(xd, ((0, 0), (p, p), (p, p), (0, 0)))
    wflip = w[:, :, ::-1, ::-1]                                  # (Cin,Cout,kh,kw)
    wmat = jnp.transpose(wflip, (2, 3, 0, 1)).reshape(kh * kw * Cin, Cout)
    patches, (N, Ho, Wo) = _extract_patches(xp, kh, kw, 1)
    res_mat = None if res is None else res.reshape(-1, Cout)
    out = fused_gemm([patches], [wmat], b, res=res_mat, res_scale=res_scale,
                     apply_act=act, out_dtype=out_dtype)
    return out.reshape(N, Ho, Wo, Cout)


# ----------------------------------------------------------------------------
# Parameter construction (deterministic, kaiming-normal-like, zero bias)
# ----------------------------------------------------------------------------
def _kaiming(key, shape):
    fan_in = shape[1] * shape[2] * shape[3]
    std = jnp.sqrt(2.0 / fan_in)
    return jax.random.normal(key, shape, jnp.float32) * std


def make_params(scale_factor=2, num_channels=3, base_filter=16, feat=32, seed=1):
    if scale_factor == 2:
        kernel, stride, padding = 6, 2, 2
    elif scale_factor == 4:
        kernel, stride, padding = 8, 4, 2
    elif scale_factor == 8:
        kernel, stride, padding = 12, 8, 2
    else:
        raise ValueError(scale_factor)

    keys = iter(jax.random.split(jax.random.PRNGKey(seed), 32))
    nc, bf, ft, k = num_channels, base_filter, feat, kernel

    def conv_p(cout, cin, kh):
        return {"w": _kaiming(next(keys), (cout, cin, kh, kh)),
                "b": jnp.zeros((cout,), jnp.float32)}

    def deconv_p(cin, cout, kh):
        return {"w": _kaiming(next(keys), (cin, cout, kh, kh)),
                "b": jnp.zeros((cout,), jnp.float32)}

    def upblock():
        return {"up_conv1": deconv_p(bf, bf, k),
                "up_conv2": conv_p(bf, bf, k),
                "up_conv3": deconv_p(bf, bf, k)}

    def downblock():
        return {"down_conv1": conv_p(bf, bf, k),
                "down_conv2": deconv_p(bf, bf, k),
                "down_conv3": conv_p(bf, bf, k)}

    params = {
        "feat0": conv_p(ft, nc, 3),
        "feat1": conv_p(bf, ft, 1),
        "up1": upblock(),
        "down1": downblock(),
        "up2": upblock(),
        "output_conv": conv_p(nc, 2 * bf, 3),
    }
    cfg = {"kernel": kernel, "stride": stride, "padding": padding}
    return params, cfg


# ----------------------------------------------------------------------------
# Net_2 forward (residual adds fused into the GEMM epilogue)
# ----------------------------------------------------------------------------
def up_block(p, x, s, pad):
    h0 = conv_transpose2d(x, p["up_conv1"]["w"], p["up_conv1"]["b"], s, pad, act=True)
    # l0 - x, fused
    l0m = conv2d(h0, p["up_conv2"]["w"], p["up_conv2"]["b"], s, pad, act=True,
                 res=x, res_scale=-1.0)
    # h1 + h0, fused
    return conv_transpose2d(l0m, p["up_conv3"]["w"], p["up_conv3"]["b"], s, pad,
                            act=True, res=h0, res_scale=1.0)


def down_block(p, x, s, pad):
    l0 = conv2d(x, p["down_conv1"]["w"], p["down_conv1"]["b"], s, pad, act=True)
    # h0 - x, fused
    h0m = conv_transpose2d(l0, p["down_conv2"]["w"], p["down_conv2"]["b"], s, pad,
                           act=True, res=x, res_scale=-1.0)
    # l1 + l0, fused
    return conv2d(h0m, p["down_conv3"]["w"], p["down_conv3"]["b"], s, pad, act=True,
                  res=l0, res_scale=1.0)


def net2_forward(params, cfg, x_nchw):
    s, pad = cfg["stride"], cfg["padding"]
    x = jnp.transpose(x_nchw, (0, 2, 3, 1))                       # NCHW -> NHWC
    x0 = conv2d(x, params["feat0"]["w"], params["feat0"]["b"], 1, 1, act=True)
    x1 = conv2d(x0, params["feat1"]["w"], params["feat1"]["b"], 1, 0, act=True)
    h1 = up_block(params["up1"], x1, s, pad)
    l1 = down_block(params["down1"], h1, s, pad)
    h2 = up_block(params["up2"], l1, s, pad)
    # torch.cat((h2, h1), 1) + output_conv: fed as two K-split GEMM operands,
    # no HBM concatenate; final output stays f32.
    out = conv2d([h2, h1], params["output_conv"]["w"], params["output_conv"]["b"],
                 1, 1, act=False, out_dtype=jnp.float32)
    # concat_l = torch.cat((l1, _input), 1) in the reference is dead code
    # (never returned/used), so it is intentionally omitted.
    return jnp.transpose(out, (0, 3, 1, 2))                       # NHWC -> NCHW


# ----------------------------------------------------------------------------
if __name__ == "__main__":
    SCALE = 2
    NUM_CHANNELS = 3
    BASE_FILTER = 16
    FEAT = 32
    B, H, W = 2, 16, 16

    params, cfg = make_params(SCALE, NUM_CHANNELS, BASE_FILTER, FEAT, seed=1)
    x = jax.random.normal(jax.random.PRNGKey(0), (B, NUM_CHANNELS, H, W), jnp.float32)

    fwd = jax.jit(functools.partial(net2_forward, params, cfg))
    y = fwd(x)
    jax.block_until_ready(y)

    expected = (B, NUM_CHANNELS, H * SCALE, W * SCALE)
    assert y.shape == expected, (y.shape, expected)
    assert bool(jnp.all(jnp.isfinite(y)))
    print("KERNEL_OK")
</pallas_src>

<mosaic_0001>
module attributes {stable_mosaic.version = 11 : i64} {
  func.func @_gemm_bias_act_kernel(%arg0: i32, %arg1: memref<256x32xbf16, #tpu.memory_space<vmem>>, %arg2: memref<32x32xbf16, #tpu.memory_space<vmem>>, %arg3: memref<1x32xf32, #tpu.memory_space<vmem>>, %arg4: memref<256x32xbf16, #tpu.memory_space<vmem>>) attributes {dimension_semantics = [#tpu.dimension_semantics<parallel>], iteration_bounds = array<i64: 2>, scalar_prefetch = 0 : i64, scratch_operands = 0 : i64, tpu.core_type = #tpu.core_type<tc>, window_params = [{transform_indices = @transform_0, window_bounds = array<i64: 256, 32>}, {pipeline_mode = #tpu.pipeline_mode<synchronous>, transform_indices = @transform_1, window_bounds = array<i64: 32, 32>}, {pipeline_mode = #tpu.pipeline_mode<synchronous>, transform_indices = @transform_2, window_bounds = array<i64: 1, 32>}, {transform_indices = @transform_3, window_bounds = array<i64: 256, 32>}]} {
    %c0 = arith.constant 0 : index
    %c0_0 = arith.constant 0 : index
    %0 = vector.load %arg1[%c0, %c0_0] : memref<256x32xbf16, #tpu.memory_space<vmem>>, vector<256x32xbf16>
    %c0_1 = arith.constant 0 : index
    %c0_2 = arith.constant 0 : index
    %1 = vector.load %arg2[%c0_1, %c0_2] : memref<32x32xbf16, #tpu.memory_space<vmem>>, vector<32x32xbf16>
    %cst = arith.constant dense<0.000000e+00> : vector<256x32xf32>
    %2 = tpu.matmul %0, %1, %cst {dimension_numbers = #tpu.dot_dimension_numbers<[1], [0], [0], [1], [0, 0, 1, 1], [], []>} : vector<256x32xbf16>, vector<32x32xbf16>, vector<256x32xf32> -> vector<256x32xf32>
    %c0_3 = arith.constant 0 : index
    %c0_4 = arith.constant 0 : index
    %3 = vector.load %arg3[%c0_3, %c0_4] : memref<1x32xf32, #tpu.memory_space<vmem>>, vector<1x32xf32>
    %4 = vector.broadcast %3 : vector<1x32xf32> to vector<256x32xf32>
    %5 = arith.addf %2, %4 : vector<256x32xf32>
    %cst_5 = arith.constant 0.000000e+00 : f32
    %6 = vector.broadcast %cst_5 : f32 to vector<256x32xf32>
    %7 = arith.cmpf oge, %5, %6 : vector<256x32xf32>
    %cst_6 = arith.constant 2.500000e-01 : f32
    %8 = vector.broadcast %cst_6 : f32 to vector<256x32xf32>
    %9 = arith.mulf %8, %5 : vector<256x32xf32>
    %10 = arith.select %7, %5, %9 : vector<256x32xi1>, vector<256x32xf32>
    %11 = arith.truncf %10 : vector<256x32xf32> to vector<256x32xbf16>
    %c0_7 = arith.constant 0 : index
    %c0_8 = arith.constant 0 : index
    %12 = vector.load %arg4[%c0_7, %c0_8] : memref<256x32xbf16, #tpu.memory_space<vmem>>, vector<256x32xbf16>
    tpu.vector_store %arg4[%c0_7, %c0_8], %11 {strides = array<i32>} : memref<256x32xbf16, #tpu.memory_space<vmem>>, vector<256x32xbf16>,
    return
  }
  func.func @transform_0(%arg0: i32) -> (i32, i32) {
    %c0_i32 = arith.constant 0 : i32
    %c0_i32_0 = arith.constant 0 : i32
    return %arg0, %c0_i32 : i32, i32
  }
  func.func @transform_1(%arg0: i32) -> (i32, i32) {
    %c0_i32 = arith.constant 0 : i32
    %c0_i32_0 = arith.constant 0 : i32
    %c0_i32_1 = arith.constant 0 : i32
    return %c0_i32, %c0_i32_0 : i32, i32
  }
  func.func @transform_2(%arg0: i32) -> (i32, i32) {
    %c0_i32 = arith.constant 0 : i32
    %c0_i32_0 = arith.constant 0 : i32
    %c0_i32_1 = arith.constant 0 : i32
    return %c0_i32, %c0_i32_0 : i32, i32
  }
  func.func @transform_3(%arg0: i32) -> (i32, i32) {
    %c0_i32 = arith.constant 0 : i32
    %c0_i32_0 = arith.constant 0 : i32
    return %arg0, %c0_i32 : i32, i32
  }
}

module attributes {stable_mosaic.version = 11 : i64} {
  func.func @_gemm_bias_act_kernel(%arg0: i32, %arg1: memref<256x32xbf16, #tpu.memory_space<vmem>>, %arg2: memref<32x16xbf16, #tpu.memory_space<vmem>>, %arg3: memref<1x16xf32, #tpu.memory_space<vmem>>, %arg4: memref<256x16xbf16, #tpu.memory_space<vmem>>) attributes {dimension_semantics = [#tpu.dimension_semantics<parallel>], iteration_bounds = array<i64: 2>, scalar_prefetch = 0 : i64, scratch_operands = 0 : i64, tpu.core_type = #tpu.core_type<tc>, window_params = [{transform_indices = @transform_0, window_bounds = array<i64: 256, 32>}, {pipeline_mode = #tpu.pipeline_mode<synchronous>, transform_indices = @transform_1, window_bounds = array<i64: 32, 16>}, {pipeline_mode = #tpu.pipeline_mode<synchronous>, transform_indices = @transform_2, window_bounds = array<i64: 1, 16>}, {transform_indices = @transform_3, window_bounds = array<i64: 256, 16>}]} {
    %c0 = arith.constant 0 : index
    %c0_0 = arith.constant 0 : index
    %0 = vector.load %arg1[%c0, %c0_0] : memref<256x32xbf16, #tpu.memory_space<vmem>>, vector<256x32xbf16>
    %c0_1 = arith.constant 0 : index
    %c0_2 = arith.constant 0 : index
    %1 = vector.load %arg2[%c0_1, %c0_2] : memref<32x16xbf16, #tpu.memory_space<vmem>>, vector<32x16xbf16>
    %cst = arith.constant dense<0.000000e+00> : vector<256x16xf32>
    %2 = tpu.matmul %0, %1, %cst {dimension_numbers = #tpu.dot_dimension_numbers<[1], [0], [0], [1], [0, 0, 1, 1], [], []>} : vector<256x32xbf16>, vector<32x16xbf16>, vector<256x16xf32> -> vector<256x16xf32>
    %c0_3 = arith.constant 0 : index
    %c0_4 = arith.constant 0 : index
    %3 = vector.load %arg3[%c0_3, %c0_4] : memref<1x16xf32, #tpu.memory_space<vmem>>, vector<1x16xf32>
    %4 = vector.broadcast %3 : vector<1x16xf32> to vector<256x16xf32>
    %5 = arith.addf %2, %4 : vector<256x16xf32>
    %cst_5 = arith.constant 0.000000e+00 : f32
    %6 = vector.broadcast %cst_5 : f32 to vector<256x16xf32>
    %7 = arith.cmpf oge, %5, %6 : vector<256x16xf32>
    %cst_6 = arith.constant 2.500000e-01 : f32
    %8 = vector.broadcast %cst_6 : f32 to vector<256x16xf32>
    %9 = arith.mulf %8, %5 : vector<256x16xf32>
    %10 = arith.select %7, %5, %9 : vector<256x16xi1>, vector<256x16xf32>
    %11 = arith.truncf %10 : vector<256x16xf32> to vector<256x16xbf16>
    %c0_7 = arith.constant 0 : index
    %c0_8 = arith.constant 0 : index
    %12 = vector.load %arg4[%c0_7, %c0_8] : memref<256x16xbf16, #tpu.memory_space<vmem>>, vector<256x16xbf16>
    tpu.vector_store %arg4[%c0_7, %c0_8], %11 {strides = array<i32>} : memref<256x16xbf16, #tpu.memory_space<vmem>>, vector<256x16xbf16>,
    return
  }
  func.func @transform_0(%arg0: i32) -> (i32, i32) {
    %c0_i32 = arith.constant 0 : i32
    %c0_i32_0 = arith.constant 0 : i32
    return %arg0, %c0_i32 : i32, i32
  }
  func.func @transform_1(%arg0: i32) -> (i32, i32) {
    %c0_i32 = arith.constant 0 : i32
    %c0_i32_0 = arith.constant 0 : i32
    %c0_i32_1 = arith.constant 0 : i32
    return %c0_i32, %c0_i32_0 : i32, i32
  }
  func.func @transform_2(%arg0: i32) -> (i32, i32) {
    %c0_i32 = arith.constant 0 : i32
    %c0_i32_0 = arith.constant 0 : i32
    %c0_i32_1 = arith.constant 0 : i32
    return %c0_i32, %c0_i32_0 : i32, i32
  }
  func.func @transform_3(%arg0: i32) -> (i32, i32) {
    %c0_i32 = arith.constant 0 : i32
    %c0_i32_0 = arith.constant 0 : i32
    return %arg0, %c0_i32 : i32, i32
  }
}

module attributes {stable_mosaic.version = 11 : i64} {
  func.func @_gemm_bias_act_kernel(%arg0: i32, %arg1: memref<256x144xbf16, #tpu.memory_space<vmem>>, %arg2: memref<144x64xbf16, #tpu.memory_space<vmem>>, %arg3: memref<1x64xf32, #tpu.memory_space<vmem>>, %arg4: memref<256x64xbf16, #tpu.memory_space<vmem>>) attributes {dimension_semantics = [#tpu.dimension_semantics<parallel>], iteration_bounds = array<i64: 2>, scalar_prefetch = 0 : i64, scratch_operands = 0 : i64, tpu.core_type = #tpu.core_type<tc>, window_params = [{transform_indices = @transform_0, window_bounds = array<i64: 256, 144>}, {pipeline_mode = #tpu.pipeline_mode<synchronous>, transform_indices = @transform_1, window_bounds = array<i64: 144, 64>}, {pipeline_mode = #tpu.pipeline_mode<synchronous>, transform_indices = @transform_2, window_bounds = array<i64: 1, 64>}, {transform_indices = @transform_3, window_bounds = array<i64: 256, 64>}]} {
    %c0 = arith.constant 0 : index
    %c0_0 = arith.constant 0 : index
    %0 = vector.load %arg1[%c0, %c0_0] : memref<256x144xbf16, #tpu.memory_space<vmem>>, vector<256x144xbf16>
    %c0_1 = arith.constant 0 : index
    %c0_2 = arith.constant 0 : index
    %1 = vector.load %arg2[%c0_1, %c0_2] : memref<144x64xbf16, #tpu.memory_space<vmem>>, vector<144x64xbf16>
    %cst = arith.constant dense<0.000000e+00> : vector<256x64xf32>
    %2 = tpu.matmul %0, %1, %cst {dimension_numbers = #tpu.dot_dimension_numbers<[1], [0], [0], [1], [0, 0, 1, 1], [], []>} : vector<256x144xbf16>, vector<144x64xbf16>, vector<256x64xf32> -> vector<256x64xf32>
    %c0_3 = arith.constant 0 : index
    %c0_4 = arith.constant 0 : index
    %3 = vector.load %arg3[%c0_3, %c0_4] : memref<1x64xf32, #tpu.memory_space<vmem>>, vector<1x64xf32>
    %4 = vector.broadcast %3 : vector<1x64xf32> to vector<256x64xf32>
    %5 = arith.addf %2, %4 : vector<256x64xf32>
    %cst_5 = arith.constant 0.000000e+00 : f32
    %6 = vector.broadcast %cst_5 : f32 to vector<256x64xf32>
    %7 = arith.cmpf oge, %5, %6 : vector<256x64xf32>
    %cst_6 = arith.constant 2.500000e-01 : f32
    %8 = vector.broadcast %cst_6 : f32 to vector<256x64xf32>
    %9 = arith.mulf %8, %5 : vector<256x64xf32>
    %10 = arith.select %7, %5, %9 : vector<256x64xi1>, vector<256x64xf32>
    %11 = arith.truncf %10 : vector<256x64xf32> to vector<256x64xbf16>
    %c0_7 = arith.constant 0 : index
    %c0_8 = arith.constant 0 : index
    %12 = vector.load %arg4[%c0_7, %c0_8] : memref<256x64xbf16, #tpu.memory_space<vmem>>, vector<256x64xbf16>
    tpu.vector_store %arg4[%c0_7, %c0_8], %11 {strides = array<i32>} : memref<256x64xbf16, #tpu.memory_space<vmem>>, vector<256x64xbf16>,
    return
  }
  func.func @transform_0(%arg0: i32) -> (i32, i32) {
    %c0_i32 = arith.constant 0 : i32
    %c0_i32_0 = arith.constant 0 : i32
    return %arg0, %c0_i32 : i32, i32
  }
  func.func @transform_1(%arg0: i32) -> (i32, i32) {
    %c0_i32 = arith.constant 0 : i32
    %c0_i32_0 = arith.constant 0 : i32
    %c0_i32_1 = arith.constant 0 : i32
    return %c0_i32, %c0_i32_0 : i32, i32
  }
  func.func @transform_2(%arg0: i32) -> (i32, i32) {
    %c0_i32 = arith.constant 0 : i32
    %c0_i32_0 = arith.constant 0 : i32
    %c0_i32_1 = arith.constant 0 : i32
    return %c0_i32, %c0_i32_0 : i32, i32
  }
  func.func @transform_3(%arg0: i32) -> (i32, i32) {
    %c0_i32 = arith.constant 0 : i32
    %c0_i32_0 = arith.constant 0 : i32
    return %arg0, %c0_i32 : i32, i32
  }
}

module attributes {stable_mosaic.version = 11 : i64} {
  func.func @_gemm_bias_act_kernel(%arg0: i32, %arg1: memref<256x576xbf16, #tpu.memory_space<vmem>>, %arg2: memref<576x16xbf16, #tpu.memory_space<vmem>>, %arg3: memref<1x16xf32, #tpu.memory_space<vmem>>, %arg4: memref<256x16xbf16, #tpu.memory_space<vmem>>, %arg5: memref<256x16xbf16, #tpu.memory_space<vmem>>) attributes {dimension_semantics = [#tpu.dimension_semantics<parallel>], iteration_bounds = array<i64: 2>, scalar_prefetch = 0 : i64, scratch_operands = 0 : i64, tpu.core_type = #tpu.core_type<tc>, window_params = [{transform_indices = @transform_0, window_bounds = array<i64: 256, 576>}, {pipeline_mode = #tpu.pipeline_mode<synchronous>, transform_indices = @transform_1, window_bounds = array<i64: 576, 16>}, {pipeline_mode = #tpu.pipeline_mode<synchronous>, transform_indices = @transform_2, window_bounds = array<i64: 1, 16>}, {transform_indices = @transform_3, window_bounds = array<i64: 256, 16>}, {transform_indices = @transform_4, window_bounds = array<i64: 256, 16>}]} {
    %c0 = arith.constant 0 : index
    %c0_0 = arith.constant 0 : index
    %0 = vector.load %arg1[%c0, %c0_0] : memref<256x576xbf16, #tpu.memory_space<vmem>>, vector<256x576xbf16>
    %c0_1 = arith.constant 0 : index
    %c0_2 = arith.constant 0 : index
    %1 = vector.load %arg2[%c0_1, %c0_2] : memref<576x16xbf16, #tpu.memory_space<vmem>>, vector<576x16xbf16>
    %cst = arith.constant dense<0.000000e+00> : vector<256x16xf32>
    %2 = tpu.matmul %0, %1, %cst {dimension_numbers = #tpu.dot_dimension_numbers<[1], [0], [0], [1], [0, 0, 1, 1], [], []>} : vector<256x576xbf16>, vector<576x16xbf16>, vector<256x16xf32> -> vector<256x16xf32>
    %c0_3 = arith.constant 0 : index
    %c0_4 = arith.constant 0 : index
    %3 = vector.load %arg3[%c0_3, %c0_4] : memref<1x16xf32, #tpu.memory_space<vmem>>, vector<1x16xf32>
    %4 = vector.broadcast %3 : vector<1x16xf32> to vector<256x16xf32>
    %5 = arith.addf %2, %4 : vector<256x16xf32>
    %cst_5 = arith.constant 0.000000e+00 : f32
    %6 = vector.broadcast %cst_5 : f32 to vector<256x16xf32>
    %7 = arith.cmpf oge, %5, %6 : vector<256x16xf32>
    %cst_6 = arith.constant 2.500000e-01 : f32
    %8 = vector.broadcast %cst_6 : f32 to vector<256x16xf32>
    %9 = arith.mulf %8, %5 : vector<256x16xf32>
    %10 = arith.select %7, %5, %9 : vector<256x16xi1>, vector<256x16xf32>
    %c0_7 = arith.constant 0 : index
    %c0_8 = arith.constant 0 : index
    %11 = vector.load %arg4[%c0_7, %c0_8] : memref<256x16xbf16, #tpu.memory_space<vmem>>, vector<256x16xbf16>
    %12 = arith.extf %11 : vector<256x16xbf16> to vector<256x16xf32>
    %cst_9 = arith.constant -1.000000e+00 : f32
    %13 = vector.broadcast %cst_9 : f32 to vector<256x16xf32>
    %14 = arith.mulf %13, %12 : vector<256x16xf32>
    %15 = arith.addf %10, %14 : vector<256x16xf32>
    %16 = arith.truncf %15 : vector<256x16xf32> to vector<256x16xbf16>
    %c0_10 = arith.constant 0 : index
    %c0_11 = arith.constant 0 : index
    %17 = vector.load %arg5[%c0_10, %c0_11] : memref<256x16xbf16, #tpu.memory_space<vmem>>, vector<256x16xbf16>
    tpu.vector_store %arg5[%c0_10, %c0_11], %16 {strides = array<i32>} : memref<256x16xbf16, #tpu.memory_space<vmem>>, vector<256x16xbf16>,
    return
  }
  func.func @transform_0(%arg0: i32) -> (i32, i32) {
    %c0_i32 = arith.constant 0 : i32
    %c0_i32_0 = arith.constant 0 : i32
    return %arg0, %c0_i32 : i32, i32
  }
  func.func @transform_1(%arg0: i32) -> (i32, i32) {
    %c0_i32 = arith.constant 0 : i32
    %c0_i32_0 = arith.constant 0 : i32
    %c0_i32_1 = arith.constant 0 : i32
    return %c0_i32, %c0_i32_0 : i32, i32
  }
  func.func @transform_2(%arg0: i32) -> (i32, i32) {
    %c0_i32 = arith.constant 0 : i32
    %c0_i32_0 = arith.constant 0 : i32
    %c0_i32_1 = arith.constant 0 : i32
    return %c0_i32, %c0_i32_0 : i32, i32
  }
  func.func @transform_3(%arg0: i32) -> (i32, i32) {
    %c0_i32 = arith.constant 0 : i32
    %c0_i32_0 = arith.constant 0 : i32
    return %arg0, %c0_i32 : i32, i32
  }
  func.func @transform_4(%arg0: i32) -> (i32, i32) {
    %c0_i32 = arith.constant 0 : i32
    %c0_i32_0 = arith.constant 0 : i32
    return %arg0, %c0_i32 : i32, i32
  }
}

module attributes {stable_mosaic.version = 11 : i64} {
  func.func @_gemm_bias_act_kernel(%arg0: i32, %arg1: memref<256x144xbf16, #tpu.memory_space<vmem>>, %arg2: memref<144x64xbf16, #tpu.memory_space<vmem>>, %arg3: memref<1x64xf32, #tpu.memory_space<vmem>>, %arg4: memref<256x64xbf16, #tpu.memory_space<vmem>>, %arg5: memref<256x64xbf16, #tpu.memory_space<vmem>>) attributes {dimension_semantics = [#tpu.dimension_semantics<parallel>], iteration_bounds = array<i64: 2>, scalar_prefetch = 0 : i64, scratch_operands = 0 : i64, tpu.core_type = #tpu.core_type<tc>, window_params = [{transform_indices = @transform_0, window_bounds = array<i64: 256, 144>}, {pipeline_mode = #tpu.pipeline_mode<synchronous>, transform_indices = @transform_1, window_bounds = array<i64: 144, 64>}, {pipeline_mode = #tpu.pipeline_mode<synchronous>, transform_indices = @transform_2, window_bounds = array<i64: 1, 64>}, {transform_indices = @transform_3, window_bounds = array<i64: 256, 64>}, {transform_indices = @transform_4, window_bounds = array<i64: 256, 64>}]} {
    %c0 = arith.constant 0 : index
    %c0_0 = arith.constant 0 : index
    %0 = vector.load %arg1[%c0, %c0_0] : memref<256x144xbf16, #tpu.memory_space<vmem>>, vector<256x144xbf16>
    %c0_1 = arith.constant 0 : index
    %c0_2 = arith.constant 0 : index
    %1 = vector.load %arg2[%c0_1, %c0_2] : memref<144x64xbf16, #tpu.memory_space<vmem>>, vector<144x64xbf16>
    %cst = arith.constant dense<0.000000e+00> : vector<256x64xf32>
    %2 = tpu.matmul %0, %1, %cst {dimension_numbers = #tpu.dot_dimension_numbers<[1], [0], [0], [1], [0, 0, 1, 1], [], []>} : vector<256x144xbf16>, vector<144x64xbf16>, vector<256x64xf32> -> vector<256x64xf32>
    %c0_3 = arith.constant 0 : index
    %c0_4 = arith.constant 0 : index
    %3 = vector.load %arg3[%c0_3, %c0_4] : memref<1x64xf32, #tpu.memory_space<vmem>>, vector<1x64xf32>
    %4 = vector.broadcast %3 : vector<1x64xf32> to vector<256x64xf32>
    %5 = arith.addf %2, %4 : vector<256x64xf32>
    %cst_5 = arith.constant 0.000000e+00 : f32
    %6 = vector.broadcast %cst_5 : f32 to vector<256x64xf32>
    %7 = arith.cmpf oge, %5, %6 : vector<256x64xf32>
    %cst_6 = arith.constant 2.500000e-01 : f32
    %8 = vector.broadcast %cst_6 : f32 to vector<256x64xf32>
    %9 = arith.mulf %8, %5 : vector<256x64xf32>
    %10 = arith.select %7, %5, %9 : vector<256x64xi1>, vector<256x64xf32>
    %c0_7 = arith.constant 0 : index
    %c0_8 = arith.constant 0 : index
    %11 = vector.load %arg4[%c0_7, %c0_8] : memref<256x64xbf16, #tpu.memory_space<vmem>>, vector<256x64xbf16>
    %12 = arith.extf %11 : vector<256x64xbf16> to vector<256x64xf32>
    %cst_9 = arith.constant 1.000000e+00 : f32
    %13 = vector.broadcast %cst_9 : f32 to vector<256x64xf32>
    %14 = arith.mulf %13, %12 : vector<256x64xf32>
    %15 = arith.addf %10, %14 : vector<256x64xf32>
    %16 = arith.truncf %15 : vector<256x64xf32> to vector<256x64xbf16>
    %c0_10 = arith.constant 0 : index
    %c0_11 = arith.constant 0 : index
    %17 = vector.load %arg5[%c0_10, %c0_11] : memref<256x64xbf16, #tpu.memory_space<vmem>>, vector<256x64xbf16>
    tpu.vector_store %arg5[%c0_10, %c0_11], %16 {strides = array<i32>} : memref<256x64xbf16, #tpu.memory_space<vmem>>, vector<256x64xbf16>,
    return
  }
  func.func @transform_0(%arg0: i32) -> (i32, i32) {
    %c0_i32 = arith.constant 0 : i32
    %c0_i32_0 = arith.constant 0 : i32
    return %arg0, %c0_i32 : i32, i32
  }
  func.func @transform_1(%arg0: i32) -> (i32, i32) {
    %c0_i32 = arith.constant 0 : i32
    %c0_i32_0 = arith.constant 0 : i32
    %c0_i32_1 = arith.constant 0 : i32
    return %c0_i32, %c0_i32_0 : i32, i32
  }
  func.func @transform_2(%arg0: i32) -> (i32, i32) {
    %c0_i32 = arith.constant 0 : i32
    %c0_i32_0 = arith.constant 0 : i32
    %c0_i32_1 = arith.constant 0 : i32
    return %c0_i32, %c0_i32_0 : i32, i32
  }
  func.func @transform_3(%arg0: i32) -> (i32, i32) {
    %c0_i32 = arith.constant 0 : i32
    %c0_i32_0 = arith.constant 0 : i32
    return %arg0, %c0_i32 : i32, i32
  }
  func.func @transform_4(%arg0: i32) -> (i32, i32) {
    %c0_i32 = arith.constant 0 : i32
    %c0_i32_0 = arith.constant 0 : i32
    return %arg0, %c0_i32 : i32, i32
  }
}

module attributes {stable_mosaic.version = 11 : i64} {
  func.func @_gemm_bias_act_kernel(%arg0: i32, %arg1: memref<256x576xbf16, #tpu.memory_space<vmem>>, %arg2: memref<576x16xbf16, #tpu.memory_space<vmem>>, %arg3: memref<1x16xf32, #tpu.memory_space<vmem>>, %arg4: memref<256x16xbf16, #tpu.memory_space<vmem>>) attributes {dimension_semantics = [#tpu.dimension_semantics<parallel>], iteration_bounds = array<i64: 2>, scalar_prefetch = 0 : i64, scratch_operands = 0 : i64, tpu.core_type = #tpu.core_type<tc>, window_params = [{transform_indices = @transform_0, window_bounds = array<i64: 256, 576>}, {pipeline_mode = #tpu.pipeline_mode<synchronous>, transform_indices = @transform_1, window_bounds = array<i64: 576, 16>}, {pipeline_mode = #tpu.pipeline_mode<synchronous>, transform_indices = @transform_2, window_bounds = array<i64: 1, 16>}, {transform_indices = @transform_3, window_bounds = array<i64: 256, 16>}]} {
    %c0 = arith.constant 0 : index
    %c0_0 = arith.constant 0 : index
    %0 = vector.load %arg1[%c0, %c0_0] : memref<256x576xbf16, #tpu.memory_space<vmem>>, vector<256x576xbf16>
    %c0_1 = arith.constant 0 : index
    %c0_2 = arith.constant 0 : index
    %1 = vector.load %arg2[%c0_1, %c0_2] : memref<576x16xbf16, #tpu.memory_space<vmem>>, vector<576x16xbf16>
    %cst = arith.constant dense<0.000000e+00> : vector<256x16xf32>
    %2 = tpu.matmul %0, %1, %cst {dimension_numbers = #tpu.dot_dimension_numbers<[1], [0], [0], [1], [0, 0, 1, 1], [], []>} : vector<256x576xbf16>, vector<576x16xbf16>, vector<256x16xf32> -> vector<256x16xf32>
    %c0_3 = arith.constant 0 : index
    %c0_4 = arith.constant 0 : index
    %3 = vector.load %arg3[%c0_3, %c0_4] : memref<1x16xf32, #tpu.memory_space<vmem>>, vector<1x16xf32>
    %4 = vector.broadcast %3 : vector<1x16xf32> to vector<256x16xf32>
    %5 = arith.addf %2, %4 : vector<256x16xf32>
    %cst_5 = arith.constant 0.000000e+00 : f32
    %6 = vector.broadcast %cst_5 : f32 to vector<256x16xf32>
    %7 = arith.cmpf oge, %5, %6 : vector<256x16xf32>
    %cst_6 = arith.constant 2.500000e-01 : f32
    %8 = vector.broadcast %cst_6 : f32 to vector<256x16xf32>
    %9 = arith.mulf %8, %5 : vector<256x16xf32>
    %10 = arith.select %7, %5, %9 : vector<256x16xi1>, vector<256x16xf32>
    %11 = arith.truncf %10 : vector<256x16xf32> to vector<256x16xbf16>
    %c0_7 = arith.constant 0 : index
    %c0_8 = arith.constant 0 : index
    %12 = vector.load %arg4[%c0_7, %c0_8] : memref<256x16xbf16, #tpu.memory_space<vmem>>, vector<256x16xbf16>
    tpu.vector_store %arg4[%c0_7, %c0_8], %11 {strides = array<i32>} : memref<256x16xbf16, #tpu.memory_space<vmem>>, vector<256x16xbf16>,
    return
  }
  func.func @transform_0(%arg0: i32) -> (i32, i32) {
    %c0_i32 = arith.constant 0 : i32
    %c0_i32_0 = arith.constant 0 : i32
    return %arg0, %c0_i32 : i32, i32
  }
  func.func @transform_1(%arg0: i32) -> (i32, i32) {
    %c0_i32 = arith.constant 0 : i32
    %c0_i32_0 = arith.constant 0 : i32
    %c0_i32_1 = arith.constant 0 : i32
    return %c0_i32, %c0_i32_0 : i32, i32
  }
  func.func @transform_2(%arg0: i32) -> (i32, i32) {
    %c0_i32 = arith.constant 0 : i32
    %c0_i32_0 = arith.constant 0 : i32
    %c0_i32_1 = arith.constant 0 : i32
    return %c0_i32, %c0_i32_0 : i32, i32
  }
  func.func @transform_3(%arg0: i32) -> (i32, i32) {
    %c0_i32 = arith.constant 0 : i32
    %c0_i32_0 = arith.constant 0 : i32
    return %arg0, %c0_i32 : i32, i32
  }
}

module attributes {stable_mosaic.version = 11 : i64} {
  func.func @_gemm_bias_act_kernel(%arg0: i32, %arg1: memref<256x144xbf16, #tpu.memory_space<vmem>>, %arg2: memref<144x64xbf16, #tpu.memory_space<vmem>>, %arg3: memref<1x64xf32, #tpu.memory_space<vmem>>, %arg4: memref<256x64xbf16, #tpu.memory_space<vmem>>, %arg5: memref<256x64xbf16, #tpu.memory_space<vmem>>) attributes {dimension_semantics = [#tpu.dimension_semantics<parallel>], iteration_bounds = array<i64: 2>, scalar_prefetch = 0 : i64, scratch_operands = 0 : i64, tpu.core_type = #tpu.core_type<tc>, window_params = [{transform_indices = @transform_0, window_bounds = array<i64: 256, 144>}, {pipeline_mode = #tpu.pipeline_mode<synchronous>, transform_indices = @transform_1, window_bounds = array<i64: 144, 64>}, {pipeline_mode = #tpu.pipeline_mode<synchronous>, transform_indices = @transform_2, window_bounds = array<i64: 1, 64>}, {transform_indices = @transform_3, window_bounds = array<i64: 256, 64>}, {transform_indices = @transform_4, window_bounds = array<i64: 256, 64>}]} {
    %c0 = arith.constant 0 : index
    %c0_0 = arith.constant 0 : index
    %0 = vector.load %arg1[%c0, %c0_0] : memref<256x144xbf16, #tpu.memory_space<vmem>>, vector<256x144xbf16>
    %c0_1 = arith.constant 0 : index
    %c0_2 = arith.constant 0 : index
    %1 = vector.load %arg2[%c0_1, %c0_2] : memref<144x64xbf16, #tpu.memory_space<vmem>>, vector<144x64xbf16>
    %cst = arith.constant dense<0.000000e+00> : vector<256x64xf32>
    %2 = tpu.matmul %0, %1, %cst {dimension_numbers = #tpu.dot_dimension_numbers<[1], [0], [0], [1], [0, 0, 1, 1], [], []>} : vector<256x144xbf16>, vector<144x64xbf16>, vector<256x64xf32> -> vector<256x64xf32>
    %c0_3 = arith.constant 0 : index
    %c0_4 = arith.constant 0 : index
    %3 = vector.load %arg3[%c0_3, %c0_4] : memref<1x64xf32, #tpu.memory_space<vmem>>, vector<1x64xf32>
    %4 = vector.broadcast %3 : vector<1x64xf32> to vector<256x64xf32>
    %5 = arith.addf %2, %4 : vector<256x64xf32>
    %cst_5 = arith.constant 0.000000e+00 : f32
    %6 = vector.broadcast %cst_5 : f32 to vector<256x64xf32>
    %7 = arith.cmpf oge, %5, %6 : vector<256x64xf32>
    %cst_6 = arith.constant 2.500000e-01 : f32
    %8 = vector.broadcast %cst_6 : f32 to vector<256x64xf32>
    %9 = arith.mulf %8, %5 : vector<256x64xf32>
    %10 = arith.select %7, %5, %9 : vector<256x64xi1>, vector<256x64xf32>
    %c0_7 = arith.constant 0 : index
    %c0_8 = arith.constant 0 : index
    %11 = vector.load %arg4[%c0_7, %c0_8] : memref<256x64xbf16, #tpu.memory_space<vmem>>, vector<256x64xbf16>
    %12 = arith.extf %11 : vector<256x64xbf16> to vector<256x64xf32>
    %cst_9 = arith.constant -1.000000e+00 : f32
    %13 = vector.broadcast %cst_9 : f32 to vector<256x64xf32>
    %14 = arith.mulf %13, %12 : vector<256x64xf32>
    %15 = arith.addf %10, %14 : vector<256x64xf32>
    %16 = arith.truncf %15 : vector<256x64xf32> to vector<256x64xbf16>
    %c0_10 = arith.constant 0 : index
    %c0_11 = arith.constant 0 : index
    %17 = vector.load %arg5[%c0_10, %c0_11] : memref<256x64xbf16, #tpu.memory_space<vmem>>, vector<256x64xbf16>
    tpu.vector_store %arg5[%c0_10, %c0_11], %16 {strides = array<i32>} : memref<256x64xbf16, #tpu.memory_space<vmem>>, vector<256x64xbf16>,
    return
  }
  func.func @transform_0(%arg0: i32) -> (i32, i32) {
    %c0_i32 = arith.constant 0 : i32
    %c0_i32_0 = arith.constant 0 : i32
    return %arg0, %c0_i32 : i32, i32
  }
  func.func @transform_1(%arg0: i32) -> (i32, i32) {
    %c0_i32 = arith.constant 0 : i32
    %c0_i32_0 = arith.constant 0 : i32
    %c0_i32_1 = arith.constant 0 : i32
    return %c0_i32, %c0_i32_0 : i32, i32
  }
  func.func @transform_2(%arg0: i32) -> (i32, i32) {
    %c0_i32 = arith.constant 0 : i32
    %c0_i32_0 = arith.constant 0 : i32
    %c0_i32_1 = arith.constant 0 : i32
    return %c0_i32, %c0_i32_0 : i32, i32
  }
  func.func @transform_3(%arg0: i32) -> (i32, i32) {
    %c0_i32 = arith.constant 0 : i32
    %c0_i32_0 = arith.constant 0 : i32
    return %arg0, %c0_i32 : i32, i32
  }
  func.func @transform_4(%arg0: i32) -> (i32, i32) {
    %c0_i32 = arith.constant 0 : i32
    %c0_i32_0 = arith.constant 0 : i32
    return %arg0, %c0_i32 : i32, i32
  }
}

module attributes {stable_mosaic.version = 11 : i64} {
  func.func @_gemm_bias_act_kernel(%arg0: i32, %arg1: memref<256x576xbf16, #tpu.memory_space<vmem>>, %arg2: memref<576x16xbf16, #tpu.memory_space<vmem>>, %arg3: memref<1x16xf32, #tpu.memory_space<vmem>>, %arg4: memref<256x16xbf16, #tpu.memory_space<vmem>>, %arg5: memref<256x16xbf16, #tpu.memory_space<vmem>>) attributes {dimension_semantics = [#tpu.dimension_semantics<parallel>], iteration_bounds = array<i64: 2>, scalar_prefetch = 0 : i64, scratch_operands = 0 : i64, tpu.core_type = #tpu.core_type<tc>, window_params = [{transform_indices = @transform_0, window_bounds = array<i64: 256, 576>}, {pipeline_mode = #tpu.pipeline_mode<synchronous>, transform_indices = @transform_1, window_bounds = array<i64: 576, 16>}, {pipeline_mode = #tpu.pipeline_mode<synchronous>, transform_indices = @transform_2, window_bounds = array<i64: 1, 16>}, {transform_indices = @transform_3, window_bounds = array<i64: 256, 16>}, {transform_indices = @transform_4, window_bounds = array<i64: 256, 16>}]} {
    %c0 = arith.constant 0 : index
    %c0_0 = arith.constant 0 : index
    %0 = vector.load %arg1[%c0, %c0_0] : memref<256x576xbf16, #tpu.memory_space<vmem>>, vector<256x576xbf16>
    %c0_1 = arith.constant 0 : index
    %c0_2 = arith.constant 0 : index
    %1 = vector.load %arg2[%c0_1, %c0_2] : memref<576x16xbf16, #tpu.memory_space<vmem>>, vector<576x16xbf16>
    %cst = arith.constant dense<0.000000e+00> : vector<256x16xf32>
    %2 = tpu.matmul %0, %1, %cst {dimension_numbers = #tpu.dot_dimension_numbers<[1], [0], [0], [1], [0, 0, 1, 1], [], []>} : vector<256x576xbf16>, vector<576x16xbf16>, vector<256x16xf32> -> vector<256x16xf32>
    %c0_3 = arith.constant 0 : index
    %c0_4 = arith.constant 0 : index
    %3 = vector.load %arg3[%c0_3, %c0_4] : memref<1x16xf32, #tpu.memory_space<vmem>>, vector<1x16xf32>
    %4 = vector.broadcast %3 : vector<1x16xf32> to vector<256x16xf32>
    %5 = arith.addf %2, %4 : vector<256x16xf32>
    %cst_5 = arith.constant 0.000000e+00 : f32
    %6 = vector.broadcast %cst_5 : f32 to vector<256x16xf32>
    %7 = arith.cmpf oge, %5, %6 : vector<256x16xf32>
    %cst_6 = arith.constant 2.500000e-01 : f32
    %8 = vector.broadcast %cst_6 : f32 to vector<256x16xf32>
    %9 = arith.mulf %8, %5 : vector<256x16xf32>
    %10 = arith.select %7, %5, %9 : vector<256x16xi1>, vector<256x16xf32>
    %c0_7 = arith.constant 0 : index
    %c0_8 = arith.constant 0 : index
    %11 = vector.load %arg4[%c0_7, %c0_8] : memref<256x16xbf16, #tpu.memory_space<vmem>>, vector<256x16xbf16>
    %12 = arith.extf %11 : vector<256x16xbf16> to vector<256x16xf32>
    %cst_9 = arith.constant 1.000000e+00 : f32
    %13 = vector.broadcast %cst_9 : f32 to vector<256x16xf32>
    %14 = arith.mulf %13, %12 : vector<256x16xf32>
    %15 = arith.addf %10, %14 : vector<256x16xf32>
    %16 = arith.truncf %15 : vector<256x16xf32> to vector<256x16xbf16>
    %c0_10 = arith.constant 0 : index
    %c0_11 = arith.constant 0 : index
    %17 = vector.load %arg5[%c0_10, %c0_11] : memref<256x16xbf16, #tpu.memory_space<vmem>>, vector<256x16xbf16>
    tpu.vector_store %arg5[%c0_10, %c0_11], %16 {strides = array<i32>} : memref<256x16xbf16, #tpu.memory_space<vmem>>, vector<256x16xbf16>,
    return
  }
  func.func @transform_0(%arg0: i32) -> (i32, i32) {
    %c0_i32 = arith.constant 0 : i32
    %c0_i32_0 = arith.constant 0 : i32
    return %arg0, %c0_i32 : i32, i32
  }
  func.func @transform_1(%arg0: i32) -> (i32, i32) {
    %c0_i32 = arith.constant 0 : i32
    %c0_i32_0 = arith.constant 0 : i32
    %c0_i32_1 = arith.constant 0 : i32
    return %c0_i32, %c0_i32_0 : i32, i32
  }
  func.func @transform_2(%arg0: i32) -> (i32, i32) {
    %c0_i32 = arith.constant 0 : i32
    %c0_i32_0 = arith.constant 0 : i32
    %c0_i32_1 = arith.constant 0 : i32
    return %c0_i32, %c0_i32_0 : i32, i32
  }
  func.func @transform_3(%arg0: i32) -> (i32, i32) {
    %c0_i32 = arith.constant 0 : i32
    %c0_i32_0 = arith.constant 0 : i32
    return %arg0, %c0_i32 : i32, i32
  }
  func.func @transform_4(%arg0: i32) -> (i32, i32) {
    %c0_i32 = arith.constant 0 : i32
    %c0_i32_0 = arith.constant 0 : i32
    return %arg0, %c0_i32 : i32, i32
  }
}

module attributes {stable_mosaic.version = 11 : i64} {
  func.func @_gemm_bias_act_kernel(%arg0: i32, %arg1: memref<512x144xbf16, #tpu.memory_space<vmem>>, %arg2: memref<512x144xbf16, #tpu.memory_space<vmem>>, %arg3: memref<144x3xbf16, #tpu.memory_space<vmem>>, %arg4: memref<144x3xbf16, #tpu.memory_space<vmem>>, %arg5: memref<1x3xf32, #tpu.memory_space<vmem>>, %arg6: memref<512x3xf32, #tpu.memory_space<vmem>>) attributes {dimension_semantics = [#tpu.dimension_semantics<parallel>], iteration_bounds = array<i64: 4>, scalar_prefetch = 0 : i64, scratch_operands = 0 : i64, tpu.core_type = #tpu.core_type<tc>, window_params = [{transform_indices = @transform_0, window_bounds = array<i64: 512, 144>}, {transform_indices = @transform_1, window_bounds = array<i64: 512, 144>}, {pipeline_mode = #tpu.pipeline_mode<synchronous>, transform_indices = @transform_2, window_bounds = array<i64: 144, 3>}, {pipeline_mode = #tpu.pipeline_mode<synchronous>, transform_indices = @transform_3, window_bounds = array<i64: 144, 3>}, {pipeline_mode = #tpu.pipeline_mode<synchronous>, transform_indices = @transform_4, window_bounds = array<i64: 1, 3>}, {transform_indices = @transform_5, window_bounds = array<i64: 512, 3>}]} {
    %c0 = arith.constant 0 : index
    %c0_0 = arith.constant 0 : index
    %0 = vector.load %arg1[%c0, %c0_0] : memref<512x144xbf16, #tpu.memory_space<vmem>>, vector<512x144xbf16>
    %c0_1 = arith.constant 0 : index
    %c0_2 = arith.constant 0 : index
    %1 = vector.load %arg3[%c0_1, %c0_2] : memref<144x3xbf16, #tpu.memory_space<vmem>>, vector<144x3xbf16>
    %cst = arith.constant dense<0.000000e+00> : vector<512x3xf32>
    %2 = tpu.matmul %0, %1, %cst {dimension_numbers = #tpu.dot_dimension_numbers<[1], [0], [0], [1], [0, 0, 1, 1], [], []>} : vector<512x144xbf16>, vector<144x3xbf16>, vector<512x3xf32> -> vector<512x3xf32>
    %c0_3 = arith.constant 0 : index
    %c0_4 = arith.constant 0 : index
    %3 = vector.load %arg2[%c0_3, %c0_4] : memref<512x144xbf16, #tpu.memory_space<vmem>>, vector<512x144xbf16>
    %c0_5 = arith.constant 0 : index
    %c0_6 = arith.constant 0 : index
    %4 = vector.load %arg4[%c0_5, %c0_6] : memref<144x3xbf16, #tpu.memory_space<vmem>>, vector<144x3xbf16>
    %cst_7 = arith.constant dense<0.000000e+00> : vector<512x3xf32>
    %5 = tpu.matmul %3, %4, %cst_7 {dimension_numbers = #tpu.dot_dimension_numbers<[1], [0], [0], [1], [0, 0, 1, 1], [], []>} : vector<512x144xbf16>, vector<144x3xbf16>, vector<512x3xf32> -> vector<512x3xf32>
    %6 = arith.addf %2, %5 : vector<512x3xf32>
    %c0_8 = arith.constant 0 : index
    %c0_9 = arith.constant 0 : index
    %7 = vector.load %arg5[%c0_8, %c0_9] : memref<1x3xf32, #tpu.memory_space<vmem>>, vector<1x3xf32>
    %8 = vector.broadcast %7 : vector<1x3xf32> to vector<512x3xf32>
    %9 = arith.addf %6, %8 : vector<512x3xf32>
    %c0_10 = arith.constant 0 : index
    %c0_11 = arith.constant 0 : index
    %10 = vector.load %arg6[%c0_10, %c0_11] : memref<512x3xf32, #tpu.memory_space<vmem>>, vector<512x3xf32>
    tpu.vector_store %arg6[%c0_10, %c0_11], %9 {strides = array<i32>} : memref<512x3xf32, #tpu.memory_space<vmem>>, vector<512x3xf32>,
    return
  }
  func.func @transform_0(%arg0: i32) -> (i32, i32) {
    %c0_i32 = arith.constant 0 : i32
    %c0_i32_0 = arith.constant 0 : i32
    return %arg0, %c0_i32 : i32, i32
  }
  func.func @transform_1(%arg0: i32) -> (i32, i32) {
    %c0_i32 = arith.constant 0 : i32
    %c0_i32_0 = arith.constant 0 : i32
    return %arg0, %c0_i32 : i32, i32
  }
  func.func @transform_2(%arg0: i32) -> (i32, i32) {
    %c0_i32 = arith.constant 0 : i32
    %c0_i32_0 = arith.constant 0 : i32
    %c0_i32_1 = arith.constant 0 : i32
    return %c0_i32, %c0_i32_0 : i32, i32
  }
  func.func @transform_3(%arg0: i32) -> (i32, i32) {
    %c0_i32 = arith.constant 0 : i32
    %c0_i32_0 = arith.constant 0 : i32
    %c0_i32_1 = arith.constant 0 : i32
    return %c0_i32, %c0_i32_0 : i32, i32
  }
  func.func @transform_4(%arg0: i32) -> (i32, i32) {
    %c0_i32 = arith.constant 0 : i32
    %c0_i32_0 = arith.constant 0 : i32
    %c0_i32_1 = arith.constant 0 : i32
    return %c0_i32, %c0_i32_0 : i32, i32
  }
  func.func @transform_5(%arg0: i32) -> (i32, i32) {
    %c0_i32 = arith.constant 0 : i32
    %c0_i32_0 = arith.constant 0 : i32
    return %arg0, %c0_i32 : i32, i32
  }
}

</mosaic_0001>

<llo_original>
// kernel: net2_forward.12
$region0: #{net2_forward.12}
  #allocation0 [shape = 'u32[]', space=smem, size = 0x4, offset = 0x4, fixed_abs, tag = 'smem constant byte address 0x4 - core index']
  #allocation1 [shape = 'u32[72,128]{1,0:T(1,128)}', space=vmem, size = 0x9000, scoped, tag = 'internal scratch']
  %s0 = inlined_call_operand.vmem [shape: bf16[512,32], index: 0, kind: input, shape index: {}]
  %s1 = inlined_call_operand.hbm [shape: bf16[32,32], index: 1, kind: input, shape index: {}]
  %s2 = inlined_call_operand.vmem [shape: f32[1,32], index: 2, kind: input, shape index: {}]
  %s3 = inlined_call_operand.vmem [shape: bf16[512,32], index: 3, kind: output, shape index: {}]
  %s4 = sld [smem:[#allocation0]]
  $region49: #{net2_forward.12} parent=0
    _
  %s6 = ssub.s32 1, %s4
  %s7 = scalar_select 0, %s6, %s4
  $region1: #{net2_forward.12} parent=0
    #allocation2 [shape = 'u8[8192]{0}', space=vmem, size = 0x2000, scoped, tag = 'input window, operand 1, single buffered']
    #allocation3 [shape = 's32[2]{0}', space=sflag, size = 0x8, scoped, tag = 'scoped memory for net2_forward.12']
    %8 = vsyncpa [#allocation3], 0
    loop: start=0, step=1, limit=4
    $region2: #{net2_forward.12} parent=1 // loop_pre_header
      _
    $region3: #{net2_forward.12} parent=1 // loop_header
      %s10 = sphi 0, %s14
      %p11 = scmp.ge.s32.totalorder %s10, 4
      %s20 = sphi 0, %s22
      %s23 = sphi 0, %s20
      %s24 = sphi 0, %s23
      %s40 = sphi 0, %s24
      %s44 = sphi 0, %s44
      %s46 = sphi 0, %s44
      %s47 = sphi 0, %s46
      %s61 = sphi 0, %s47
      %s65 = sphi 0, %s65
      %s67 = sphi 0, %s65
      %s68 = sphi 0, %s67
      %s82 = sphi 0, %s68
      %s88 = sphi 0, %s90
      %s91 = sphi 0, %s88
      %s92 = sphi 0, %s91
      %s108 = sphi 0, %s92
    $region4: #{net2_forward.12} parent=1 // loop_header_branch
      %13 = sbr.rel (%p11) target = $region8
    $region5: #{net2_forward.12} parent=1 // loop_body
      %s15 = ssub.s32 %s10, 1
      %s16 = ssub.s32 %s10, 2
      %s17 = sadd.s32 %s10, 1
      %s18 = ssub.s32 %s10, %s17
      %p19 = scmp.eq.s32.totalorder %s18, 0
      %s21 = sadd.s32 %s20, 1
      %s22 = scalar_select %p19, %s20, %s21
      %p25 = pneg %p19
      %p26 = scmp.eq.s32.totalorder %s10, 1
      %p27 = por %p25, %p26
      %p28 = scmp.ne.s32.totalorder %s20, %s23
      %p29 = scmp.eq.s32.totalorder %s10, 0
      %p30 = por %p28, %p29
      %p31 = scmp.ne.s32.totalorder %s20, %s23
      %p32 = scmp.eq.s32.totalorder %s15, 1
      %p33 = por %p31, %p32
      %p34 = scmp.ne.s32.totalorder %s23, %s24
      %p35 = scmp.eq.s32.totalorder %s15, 0
      %p36 = por %p34, %p35
      %p37 = scmp.ne.s32.totalorder %s23, %s24
      %p38 = scmp.eq.s32.totalorder %s16, 1
      %p39 = por %p37, %p38
      %p41 = scmp.ne.s32.totalorder %s24, %s40
      %p42 = scmp.eq.s32.totalorder %s16, 0
      %p43 = por %p41, %p42
      %s45 = sadd.s32 %s44, 1
      %p48 = scmp.eq.s32.totalorder %s10, 1
      %p49 = scmp.ne.s32.totalorder %s44, %s46
      %p50 = scmp.eq.s32.totalorder %s10, 0
      %p51 = por %p49, %p50
      %p52 = scmp.ne.s32.totalorder %s44, %s46
      %p53 = scmp.eq.s32.totalorder %s15, 1
      %p54 = por %p52, %p53
      %p55 = scmp.ne.s32.totalorder %s46, %s47
      %p56 = scmp.eq.s32.totalorder %s15, 0
      %p57 = por %p55, %p56
      %p58 = scmp.ne.s32.totalorder %s46, %s47
      %p59 = scmp.eq.s32.totalorder %s16, 1
      %p60 = por %p58, %p59
      %p62 = scmp.ne.s32.totalorder %s47, %s61
      %p63 = scmp.eq.s32.totalorder %s16, 0
      %p64 = por %p62, %p63
      %s66 = sadd.s32 %s65, 1
      %p69 = scmp.eq.s32.totalorder %s10, 1
      %p70 = scmp.ne.s32.totalorder %s65, %s67
      %p71 = scmp.eq.s32.totalorder %s10, 0
      %p72 = por %p70, %p71
      %p73 = scmp.ne.s32.totalorder %s65, %s67
      %p74 = scmp.eq.s32.totalorder %s15, 1
      %p75 = por %p73, %p74
      %p76 = scmp.ne.s32.totalorder %s67, %s68
      %p77 = scmp.eq.s32.totalorder %s15, 0
      %p78 = por %p76, %p77
      %p79 = scmp.ne.s32.totalorder %s67, %s68
      %p80 = scmp.eq.s32.totalorder %s16, 1
      %p81 = por %p79, %p80
      %p83 = scmp.ne.s32.totalorder %s68, %s82
      %p84 = scmp.eq.s32.totalorder %s16, 0
      %p85 = por %p83, %p84
      %s86 = ssub.s32 %s10, %s17
      %p87 = scmp.eq.s32.totalorder %s86, 0
      %s89 = sadd.s32 %s88, 1
      %s90 = scalar_select %p87, %s88, %s89
      %p93 = pneg %p87
      %p94 = scmp.eq.s32.totalorder %s10, 1
      %p95 = por %p93, %p94
      %p96 = scmp.ne.s32.totalorder %s88, %s91
      %p97 = scmp.eq.s32.totalorder %s10, 0
      %p98 = por %p96, %p97
      %p99 = scmp.ne.s32.totalorder %s88, %s91
      %p100 = scmp.eq.s32.totalorder %s15, 1
      %p101 = por %p99, %p100
      %p102 = scmp.ne.s32.totalorder %s91, %s92
      %p103 = scmp.eq.s32.totalorder %s15, 0
      %p104 = por %p102, %p103
      %p105 = scmp.ne.s32.totalorder %s91, %s92
      %p106 = scmp.eq.s32.totalorder %s16, 1
      %p107 = por %p105, %p106
      %p109 = scmp.ne.s32.totalorder %s92, %s108
      %p110 = scmp.eq.s32.totalorder %s16, 0
      %p111 = por %p109, %p110
      %p112 = scmp.le.s32.totalorder 1, %s10
      %p113 = scmp.lt.s32.totalorder %s10, 3
      %p114 = pnand %p112, %p113
      %p115 = pneg %p114
      // Predicated region
      $region9: #{net2_forward.12} parent=5 // pred_check
        _
      $region10: #{net2_forward.12} parent=5 // pred_check_branch
        %117 = sbr.rel (%p114) target = $region12
      $region11: #{net2_forward.12} parent=5 // pred_region
        %s118 = ssub.s32 %s10, 1
        // Predicated region
        $region13: #{net2_forward.12} parent=11 // pred_check
          %p119 = pneg %p57
        $region14: #{net2_forward.12} parent=11 // pred_check_branch
          %121 = sbr.rel (%p119) target = $region16
        $region15: #{net2_forward.12} parent=11 // pred_region
          %123 = vsyncadd [#allocation3], 0
          %s124 = sshll.u32 %s1, 4
          %s125 = int_to_ptr.hbm [resolvable:$true] %s124
          %s126 = sshll.u32 [#allocation2], 4
          %s127 = int_to_ptr.vmem [resolvable:$true] %s126
          %132 = dma.hbm_to_vmem [thread:$0]  %s125, 256, %s127, [#allocation3], 64, 64, 4
        $region16: #{net2_forward.12} parent=11 // pred_fallthru
          _
        // Predicated region
        $region17: #{net2_forward.12} parent=11 // pred_check
          %p133 = pneg %p78
        $region18: #{net2_forward.12} parent=11 // pred_check_branch
          %135 = sbr.rel (%p133) target = $region20
        $region19: #{net2_forward.12} parent=11 // pred_region
          _
        $region20: #{net2_forward.12} parent=11 // pred_fallthru
          _
      $region12: #{net2_forward.12} parent=5 // pred_fallthru
        _
      %p136 = scmp.lt.s32.totalorder %s10, 2
      // Predicated region
      $region21: #{net2_forward.12} parent=5 // pred_check
        %p137 = pneg %p136
      $region22: #{net2_forward.12} parent=5 // pred_check_branch
        %139 = sbr.rel (%p137) target = $region24
      $region23: #{net2_forward.12} parent=5 // pred_region
        // Predicated region
        $region25: #{net2_forward.12} parent=23 // pred_check
          %p140 = pneg %p30
        $region26: #{net2_forward.12} parent=23 // pred_check_branch
          %142 = sbr.rel (%p140) target = $region28
        $region27: #{net2_forward.12} parent=23 // pred_region
          %s143 = smul.u32 32, %s10
          %p144 = scmp.lt.s32.totalorder %s143, 63
          %s145 = scalar_select %p144, %s143, 63
          %s146 = smul.addr %s145, 4
          %s147 = scalar_lea.vmem %s0, %s146
          %s148 = smul.u32 32, %s10
        $region28: #{net2_forward.12} parent=23 // pred_fallthru
          _
      $region24: #{net2_forward.12} parent=5 // pred_fallthru
        _
      %p149 = scmp.le.s32.totalorder 1, %s10
      %p150 = scmp.lt.s32.totalorder %s10, 3
      %p151 = pnand %p149, %p150
      %p152 = pneg %p151
      // Predicated region
      $region29: #{net2_forward.12} parent=5 // pred_check
        _
      $region30: #{net2_forward.12} parent=5 // pred_check_branch
        %154 = sbr.rel (%p151) target = $region32
      $region31: #{net2_forward.12} parent=5 // pred_region
        %s155 = ssub.s32 %s10, 1
        // Predicated region
        $region33: #{net2_forward.12} parent=31 // pred_check
          %p156 = pneg %p57
        $region34: #{net2_forward.12} parent=31 // pred_check_branch
          %158 = sbr.rel (%p156) target = $region36
        $region35: #{net2_forward.12} parent=31 // pred_region
          %160 = dma.done [#allocation3], 256
        $region36: #{net2_forward.12} parent=31 // pred_fallthru
          _
        %s161 = smul.u32 32, %s15
        %p162 = scmp.lt.s32.totalorder %s161, 63
        %s163 = scalar_select %p162, %s161, 63
        %s164 = smul.addr %s163, 4
        %s165 = scalar_lea.vmem %s0, %s164
        %p166 = pneg %p36
        %p167 = pneg %p33
        %p168 = pneg %p57
        %p169 = pneg %p54
        %p170 = pneg %p78
        %p171 = pneg %p75
        %p172 = pneg %p104
        %p173 = pneg %p101
        %s174 = smul.u32 32, %s15
        %p175 = scmp.lt.s32.totalorder %s174, 63
        %s176 = scalar_select %p175, %s174, 63
        %s177 = smul.addr %s176, 4
        %s178 = scalar_lea.vmem %s3, %s177
        %s179 = smul.u32 32, %s15
        %p180 = scmp.lt.s32.totalorder %s179, 63
        %s181 = scalar_select %p180, %s179, 63
        %s182 = smul.addr %s181, 4
        %s183 = scalar_lea.vmem %s0, %s182
        %s184 = smul.u32 32, %s15
        %s185 = smul.u32 32, %s15
        %p186 = scmp.lt.s32.totalorder %s185, 63
        %s187 = scalar_select %p186, %s185, 63
        %s188 = smul.addr %s187, 4
        %s189 = scalar_lea.vmem %s3, %s188
        %s190 = smul.u32 32, %s15
        %v192 = vld [vmem:[%s183] sm:$0xf]
        %v193 = vld [vmem:[%s183 + $0x4] sm:$0xf]
        %v194 = vld [vmem:[%s183 + $0x8] sm:$0xf]
        %v195 = vld [vmem:[%s183 + $0xc] sm:$0xf]
        %v196 = vld [vmem:[%s183 + $0x10] sm:$0xf]
        %v197 = vld [vmem:[%s183 + $0x14] sm:$0xf]
        %v198 = vld [vmem:[%s183 + $0x18] sm:$0xf]
        %v199 = vld [vmem:[%s183 + $0x1c] sm:$0xf]
        %v200 = vld [vmem:[%s183 + $0x20] sm:$0xf]
        %v201 = vld [vmem:[%s183 + $0x24] sm:$0xf]
        %v202 = vld [vmem:[%s183 + $0x28] sm:$0xf]
        %v203 = vld [vmem:[%s183 + $0x2c] sm:$0xf]
        %v204 = vld [vmem:[%s183 + $0x30] sm:$0xf]
        %v205 = vld [vmem:[%s183 + $0x34] sm:$0xf]
        %v206 = vld [vmem:[%s183 + $0x38] sm:$0xf]
        %v207 = vld [vmem:[%s183 + $0x3c] sm:$0xf]
        %v208 = vld [vmem:[%s183 + $0x40] sm:$0xf]
        %v209 = vld [vmem:[%s183 + $0x44] sm:$0xf]
        %v210 = vld [vmem:[%s183 + $0x48] sm:$0xf]
        %v211 = vld [vmem:[%s183 + $0x4c] sm:$0xf]
        %v212 = vld [vmem:[%s183 + $0x50] sm:$0xf]
        %v213 = vld [vmem:[%s183 + $0x54] sm:$0xf]
        %v214 = vld [vmem:[%s183 + $0x58] sm:$0xf]
        %v215 = vld [vmem:[%s183 + $0x5c] sm:$0xf]
        %v216 = vld [vmem:[%s183 + $0x60] sm:$0xf]
        %v217 = vld [vmem:[%s183 + $0x64] sm:$0xf]
        %v218 = vld [vmem:[%s183 + $0x68] sm:$0xf]
        %v219 = vld [vmem:[%s183 + $0x6c] sm:$0xf]
        %v220 = vld [vmem:[%s183 + $0x70] sm:$0xf]
        %v221 = vld [vmem:[%s183 + $0x74] sm:$0xf]
        %v222 = vld [vmem:[%s183 + $0x78] sm:$0xf]
        %v223 = vld [vmem:[%s183 + $0x7c] sm:$0xf]
        %v224 = vld [vmem:[#allocation2] sm:$0xf]
        %v225 = vld [vmem:[#allocation2 + $0x4] sm:$0xf]
        %v226 = vld [vmem:[#allocation2 + $0x8] sm:$0xf]
        %v227 = vld [vmem:[#allocation2 + $0xc] sm:$0xf]
        %v228 = vld [vmem:[%s2] sm:$0x1]
        %v230 = vperm.slane %v228, 0
        %v264 = vunpack.c.l.b16 %v192
        %v265 = vunpack.c.l.b16 %v193
        %v266 = vunpack.c.l.b16 %v194
        %v267 = vunpack.c.l.b16 %v195
        %v268 = vunpack.c.l.b16 %v196
        %v269 = vunpack.c.l.b16 %v197
        %v270 = vunpack.c.l.b16 %v198
        %v271 = vunpack.c.l.b16 %v199
        %v272 = vunpack.c.l.b16 %v200
        %v273 = vunpack.c.l.b16 %v201
        %v274 = vunpack.c.l.b16 %v202
        %v275 = vunpack.c.l.b16 %v203
        %v276 = vunpack.c.l.b16 %v204
        %v277 = vunpack.c.l.b16 %v205
        %v278 = vunpack.c.l.b16 %v206
        %v279 = vunpack.c.l.b16 %v207
        %v280 = vunpack.c.l.b16 %v208
        %v281 = vunpack.c.l.b16 %v209
        %v282 = vunpack.c.l.b16 %v210
        %v283 = vunpack.c.l.b16 %v211
        %v284 = vunpack.c.l.b16 %v212
        %v285 = vunpack.c.l.b16 %v213
        %v286 = vunpack.c.l.b16 %v214
        %v287 = vunpack.c.l.b16 %v215
        %v288 = vunpack.c.l.b16 %v216
        %v289 = vunpack.c.l.b16 %v217
        %v290 = vunpack.c.l.b16 %v218
        %v291 = vunpack.c.l.b16 %v219
        %v292 = vunpack.c.l.b16 %v220
        %v293 = vunpack.c.l.b16 %v221
        %v294 = vunpack.c.l.b16 %v222
        %v295 = vunpack.c.l.b16 %v223
        %v296 = vpack.c.b16 %v265, %v264
        %v297 = vpack.c.b16 %v267, %v266
        %v298 = vpack.c.b16 %v269, %v268
        %v299 = vpack.c.b16 %v271, %v270
        %v300 = vpack.c.b16 %v273, %v272
        %v301 = vpack.c.b16 %v275, %v274
        %v302 = vpack.c.b16 %v277, %v276
        %v303 = vpack.c.b16 %v279, %v278
        %v304 = vpack.c.b16 %v281, %v280
        %v305 = vpack.c.b16 %v283, %v282
        %v306 = vpack.c.b16 %v285, %v284
        %v307 = vpack.c.b16 %v287, %v286
        %v308 = vpack.c.b16 %v289, %v288
        %v309 = vpack.c.b16 %v291, %v290
        %v310 = vpack.c.b16 %v293, %v292
        %v311 = vpack.c.b16 %v295, %v294
        %v316 = vunpack.c.l.b16 %v224
        %v317 = vunpack.c.l.b16 %v225
        %v318 = vunpack.c.l.b16 %v226
        %v319 = vunpack.c.l.b16 %v227
        %v320 = vpack.c.b16 %v317, %v316
        %v321 = vpack.c.b16 %v319, %v318
        %vm324 = vcmask 261120
        %v326 = vsel %vm324, %v296, 0
        %v329 = vsel %vm324, %v297, 0
        %v332 = vsel %vm324, %v298, 0
        %v335 = vsel %vm324, %v299, 0
        %v338 = vsel %vm324, %v300, 0
        %v341 = vsel %vm324, %v301, 0
        %v344 = vsel %vm324, %v302, 0
        %v347 = vsel %vm324, %v303, 0
        %v350 = vsel %vm324, %v304, 0
        %v353 = vsel %vm324, %v305, 0
        %v356 = vsel %vm324, %v306, 0
        %v359 = vsel %vm324, %v307, 0
        %v362 = vsel %vm324, %v308, 0
        %v365 = vsel %vm324, %v309, 0
        %v368 = vsel %vm324, %v310, 0
        %v371 = vsel %vm324, %v311, 0
        %373 = vmatpush.bf16.msra.mxu0 0
        %374 = vmatpush.bf16.msra.mxu0 0
        %375 = vmatpush.bf16.msra.mxu0 0
        %376 = vmatpush.bf16.msra.mxu0 0
        %377 = vmatpush.bf16.msra.mxu0 0
        %378 = vmatpush.bf16.msra.mxu0 0
        %379 = vmatpush.bf16.msra.mxu0 %v321
        %380 = vmatpush.bf16.msra.mxu0 %v320
        %381 = vmatmul.bf16.gmra.mxu0 %v326
        %v382 = vpop.f32.mrf.mxu0
        %v383 = vadd.f32 %v230, %v382
        %v384 = vpop.f32.mrf.mxu0
        %v385 = vadd.f32 %v230, %v384
        %386 = vmatmul.bf16.gmra.mxu0 %v329
        %v387 = vpop.f32.mrf.mxu0
        %v388 = vadd.f32 %v230, %v387
        %v389 = vpop.f32.mrf.mxu0
        %v390 = vadd.f32 %v230, %v389
        %391 = vmatmul.bf16.gmra.mxu0 %v332
        %v392 = vpop.f32.mrf.mxu0
        %v393 = vadd.f32 %v230, %v392
        %v394 = vpop.f32.mrf.mxu0
        %v395 = vadd.f32 %v230, %v394
        %396 = vmatmul.bf16.gmra.mxu0 %v335
        %v397 = vpop.f32.mrf.mxu0
        %v398 = vadd.f32 %v230, %v397
        %v399 = vpop.f32.mrf.mxu0
        %v400 = vadd.f32 %v230, %v399
        %401 = vmatmul.bf16.gmra.mxu0 %v338
        %v402 = vpop.f32.mrf.mxu0
        %v403 = vadd.f32 %v230, %v402
        %v404 = vpop.f32.mrf.mxu0
        %v405 = vadd.f32 %v230, %v404
        %406 = vmatmul.bf16.gmra.mxu0 %v341
        %v407 = vpop.f32.mrf.mxu0
        %v408 = vadd.f32 %v230, %v407
        %v409 = vpop.f32.mrf.mxu0
        %v410 = vadd.f32 %v230, %v409
        %411 = vmatmul.bf16.gmra.mxu0 %v344
        %v412 = vpop.f32.mrf.mxu0
        %v413 = vadd.f32 %v230, %v412
        %v414 = vpop.f32.mrf.mxu0
        %v415 = vadd.f32 %v230, %v414
        %416 = vmatmul.bf16.gmra.mxu0 %v347
        %v417 = vpop.f32.mrf.mxu0
        %v418 = vadd.f32 %v230, %v417
        %v419 = vpop.f32.mrf.mxu0
        %v420 = vadd.f32 %v230, %v419
        %421 = vmatmul.bf16.gmra.mxu0 %v350
        %v422 = vpop.f32.mrf.mxu0
        %v423 = vadd.f32 %v230, %v422
        %v424 = vpop.f32.mrf.mxu0
        %v425 = vadd.f32 %v230, %v424
        %426 = vmatmul.bf16.gmra.mxu0 %v353
        %v427 = vpop.f32.mrf.mxu0
        %v428 = vadd.f32 %v230, %v427
        %v429 = vpop.f32.mrf.mxu0
        %v430 = vadd.f32 %v230, %v429
        %431 = vmatmul.bf16.gmra.mxu0 %v356
        %v432 = vpop.f32.mrf.mxu0
        %v433 = vadd.f32 %v230, %v432
        %v434 = vpop.f32.mrf.mxu0
        %v435 = vadd.f32 %v230, %v434
        %436 = vmatmul.bf16.gmra.mxu0 %v359
        %v437 = vpop.f32.mrf.mxu0
        %v438 = vadd.f32 %v230, %v437
        %v439 = vpop.f32.mrf.mxu0
        %v440 = vadd.f32 %v230, %v439
        %441 = vmatmul.bf16.gmra.mxu0 %v362
        %v442 = vpop.f32.mrf.mxu0
        %v443 = vadd.f32 %v230, %v442
        %v444 = vpop.f32.mrf.mxu0
        %v445 = vadd.f32 %v230, %v444
        %446 = vmatmul.bf16.gmra.mxu0 %v365
        %v447 = vpop.f32.mrf.mxu0
        %v448 = vadd.f32 %v230, %v447
        %v449 = vpop.f32.mrf.mxu0
        %v450 = vadd.f32 %v230, %v449
        %451 = vmatmul.bf16.gmra.mxu0 %v368
        %v452 = vpop.f32.mrf.mxu0
        %v453 = vadd.f32 %v230, %v452
        %v454 = vpop.f32.mrf.mxu0
        %v455 = vadd.f32 %v230, %v454
        %456 = vmatmul.bf16.gmra.mxu0 %v371
        %v457 = vpop.f32.mrf.mxu0
        %v458 = vadd.f32 %v230, %v457
        %v459 = vpop.f32.mrf.mxu0
        %v460 = vadd.f32 %v230, %v459
        %461 = vdwg.mxu0
        %vm462 = vcmp.ge.f32.partialorder %v383, 0.0
        %vm463 = vcmp.ge.f32.partialorder %v385, 0.0
        %vm464 = vcmp.ge.f32.partialorder %v388, 0.0
        %vm465 = vcmp.ge.f32.partialorder %v390, 0.0
        %vm466 = vcmp.ge.f32.partialorder %v393, 0.0
        %vm467 = vcmp.ge.f32.partialorder %v395, 0.0
        %vm468 = vcmp.ge.f32.partialorder %v398, 0.0
        %vm469 = vcmp.ge.f32.partialorder %v400, 0.0
        %vm470 = vcmp.ge.f32.partialorder %v403, 0.0
        %vm471 = vcmp.ge.f32.partialorder %v405, 0.0
        %vm472 = vcmp.ge.f32.partialorder %v408, 0.0
        %vm473 = vcmp.ge.f32.partialorder %v410, 0.0
        %vm474 = vcmp.ge.f32.partialorder %v413, 0.0
        %vm475 = vcmp.ge.f32.partialorder %v415, 0.0
        %vm476 = vcmp.ge.f32.partialorder %v418, 0.0
        %vm477 = vcmp.ge.f32.partialorder %v420, 0.0
        %vm478 = vcmp.ge.f32.partialorder %v423, 0.0
        %vm479 = vcmp.ge.f32.partialorder %v425, 0.0
        %vm480 = vcmp.ge.f32.partialorder %v428, 0.0
        %vm481 = vcmp.ge.f32.partialorder %v430, 0.0
        %vm482 = vcmp.ge.f32.partialorder %v433, 0.0
        %vm483 = vcmp.ge.f32.partialorder %v435, 0.0
        %vm484 = vcmp.ge.f32.partialorder %v438, 0.0
        %vm485 = vcmp.ge.f32.partialorder %v440, 0.0
        %vm486 = vcmp.ge.f32.partialorder %v443, 0.0
        %vm487 = vcmp.ge.f32.partialorder %v445, 0.0
        %vm488 = vcmp.ge.f32.partialorder %v448, 0.0
        %vm489 = vcmp.ge.f32.partialorder %v450, 0.0
        %vm490 = vcmp.ge.f32.partialorder %v453, 0.0
        %vm491 = vcmp.ge.f32.partialorder %v455, 0.0
        %vm492 = vcmp.ge.f32.partialorder %v458, 0.0
        %vm493 = vcmp.ge.f32.partialorder %v460, 0.0
        %v494 = vmul.f32 %v383, 0.25
        %v495 = vmul.f32 %v385, 0.25
        %v496 = vmul.f32 %v388, 0.25
        %v497 = vmul.f32 %v390, 0.25
        %v498 = vmul.f32 %v393, 0.25
        %v499 = vmul.f32 %v395, 0.25
        %v500 = vmul.f32 %v398, 0.25
        %v501 = vmul.f32 %v400, 0.25
        %v502 = vmul.f32 %v403, 0.25
        %v503 = vmul.f32 %v405, 0.25
        %v504 = vmul.f32 %v408, 0.25
        %v505 = vmul.f32 %v410, 0.25
        %v506 = vmul.f32 %v413, 0.25
        %v507 = vmul.f32 %v415, 0.25
        %v508 = vmul.f32 %v418, 0.25
        %v509 = vmul.f32 %v420, 0.25
        %v510 = vmul.f32 %v423, 0.25
        %v511 = vmul.f32 %v425, 0.25
        %v512 = vmul.f32 %v428, 0.25
        %v513 = vmul.f32 %v430, 0.25
        %v514 = vmul.f32 %v433, 0.25
        %v515 = vmul.f32 %v435, 0.25
        %v516 = vmul.f32 %v438, 0.25
        %v517 = vmul.f32 %v440, 0.25
        %v518 = vmul.f32 %v443, 0.25
        %v519 = vmul.f32 %v445, 0.25
        %v520 = vmul.f32 %v448, 0.25
        %v521 = vmul.f32 %v450, 0.25
        %v522 = vmul.f32 %v453, 0.25
        %v523 = vmul.f32 %v455, 0.25
        %v524 = vmul.f32 %v458, 0.25
        %v525 = vmul.f32 %v460, 0.25
        %v526 = vsel %vm462, %v383, %v494
        %v527 = vsel %vm463, %v385, %v495
        %v528 = vsel %vm464, %v388, %v496
        %v529 = vsel %vm465, %v390, %v497
        %v530 = vsel %vm466, %v393, %v498
        %v531 = vsel %vm467, %v395, %v499
        %v532 = vsel %vm468, %v398, %v500
        %v533 = vsel %vm469, %v400, %v501
        %v534 = vsel %vm470, %v403, %v502
        %v535 = vsel %vm471, %v405, %v503
        %v536 = vsel %vm472, %v408, %v504
        %v537 = vsel %vm473, %v410, %v505
        %v538 = vsel %vm474, %v413, %v506
        %v539 = vsel %vm475, %v415, %v507
        %v540 = vsel %vm476, %v418, %v508
        %v541 = vsel %vm477, %v420, %v509
        %v542 = vsel %vm478, %v423, %v510
        %v543 = vsel %vm479, %v425, %v511
        %v544 = vsel %vm480, %v428, %v512
        %v545 = vsel %vm481, %v430, %v513
        %v546 = vsel %vm482, %v433, %v514
        %v547 = vsel %vm483, %v435, %v515
        %v548 = vsel %vm484, %v438, %v516
        %v549 = vsel %vm485, %v440, %v517
        %v550 = vsel %vm486, %v443, %v518
        %v551 = vsel %vm487, %v445, %v519
        %v552 = vsel %vm488, %v448, %v520
        %v553 = vsel %vm489, %v450, %v521
        %v554 = vsel %vm490, %v453, %v522
        %v555 = vsel %vm491, %v455, %v523
        %v556 = vsel %vm492, %v458, %v524
        %v557 = vsel %vm493, %v460, %v525
        %v558 = vpack.c.bf16 %v526, %v526
        %v559 = vpack.c.bf16 %v527, %v527
        %v560 = vpack.c.bf16 %v528, %v528
        %v561 = vpack.c.bf16 %v529, %v529
        %v562 = vpack.c.bf16 %v530, %v530
        %v563 = vpack.c.bf16 %v531, %v531
        %v564 = vpack.c.bf16 %v532, %v532
        %v565 = vpack.c.bf16 %v533, %v533
        %v566 = vpack.c.bf16 %v534, %v534
        %v567 = vpack.c.bf16 %v535, %v535
        %v568 = vpack.c.bf16 %v536, %v536
        %v569 = vpack.c.bf16 %v537, %v537
        %v570 = vpack.c.bf16 %v538, %v538
        %v571 = vpack.c.bf16 %v539, %v539
        %v572 = vpack.c.bf16 %v540, %v540
        %v573 = vpack.c.bf16 %v541, %v541
        %v574 = vpack.c.bf16 %v542, %v542
        %v575 = vpack.c.bf16 %v543, %v543
        %v576 = vpack.c.bf16 %v544, %v544
        %v577 = vpack.c.bf16 %v545, %v545
        %v578 = vpack.c.bf16 %v546, %v546
        %v579 = vpack.c.bf16 %v547, %v547
        %v580 = vpack.c.bf16 %v548, %v548
        %v581 = vpack.c.bf16 %v549, %v549
        %v582 = vpack.c.bf16 %v550, %v550
        %v583 = vpack.c.bf16 %v551, %v551
        %v584 = vpack.c.bf16 %v552, %v552
        %v585 = vpack.c.bf16 %v553, %v553
        %v586 = vpack.c.bf16 %v554, %v554
        %v587 = vpack.c.bf16 %v555, %v555
        %v588 = vpack.c.bf16 %v556, %v556
        %v589 = vpack.c.bf16 %v557, %v557
        %vm590 = vcmask 257024
        %591 = vst.msk [vmem:[%s189] sm:$0xf] %vm590, %v558
        %592 = vst.msk [vmem:[%s189 + $0x4] sm:$0xf] %vm590, %v559
        %593 = vst.msk [vmem:[%s189 + $0x8] sm:$0xf] %vm590, %v560
        %594 = vst.msk [vmem:[%s189 + $0xc] sm:$0xf] %vm590, %v561
        %595 = vst.msk [vmem:[%s189 + $0x10] sm:$0xf] %vm590, %v562
        %596 = vst.msk [vmem:[%s189 + $0x14] sm:$0xf] %vm590, %v563
        %597 = vst.msk [vmem:[%s189 + $0x18] sm:$0xf] %vm590, %v564
        %598 = vst.msk [vmem:[%s189 + $0x1c] sm:$0xf] %vm590, %v565
        %599 = vst.msk [vmem:[%s189 + $0x20] sm:$0xf] %vm590, %v566
        %600 = vst.msk [vmem:[%s189 + $0x24] sm:$0xf] %vm590, %v567
        %601 = vst.msk [vmem:[%s189 + $0x28] sm:$0xf] %vm590, %v568
        %602 = vst.msk [vmem:[%s189 + $0x2c] sm:$0xf] %vm590, %v569
        %603 = vst.msk [vmem:[%s189 + $0x30] sm:$0xf] %vm590, %v570
        %604 = vst.msk [vmem:[%s189 + $0x34] sm:$0xf] %vm590, %v571
        %605 = vst.msk [vmem:[%s189 + $0x38] sm:$0xf] %vm590, %v572
        %606 = vst.msk [vmem:[%s189 + $0x3c] sm:$0xf] %vm590, %v573
        %607 = vst.msk [vmem:[%s189 + $0x40] sm:$0xf] %vm590, %v574
        %608 = vst.msk [vmem:[%s189 + $0x44] sm:$0xf] %vm590, %v575
        %609 = vst.msk [vmem:[%s189 + $0x48] sm:$0xf] %vm590, %v576
        %610 = vst.msk [vmem:[%s189 + $0x4c] sm:$0xf] %vm590, %v577
        %611 = vst.msk [vmem:[%s189 + $0x50] sm:$0xf] %vm590, %v578
        %612 = vst.msk [vmem:[%s189 + $0x54] sm:$0xf] %vm590, %v579
        %613 = vst.msk [vmem:[%s189 + $0x58] sm:$0xf] %vm590, %v580
        %614 = vst.msk [vmem:[%s189 + $0x5c] sm:$0xf] %vm590, %v581
        %615 = vst.msk [vmem:[%s189 + $0x60] sm:$0xf] %vm590, %v582
        %616 = vst.msk [vmem:[%s189 + $0x64] sm:$0xf] %vm590, %v583
        %617 = vst.msk [vmem:[%s189 + $0x68] sm:$0xf] %vm590, %v584
        %618 = vst.msk [vmem:[%s189 + $0x6c] sm:$0xf] %vm590, %v585
        %619 = vst.msk [vmem:[%s189 + $0x70] sm:$0xf] %vm590, %v586
        %620 = vst.msk [vmem:[%s189 + $0x74] sm:$0xf] %vm590, %v587
        %621 = vst.msk [vmem:[%s189 + $0x78] sm:$0xf] %vm590, %v588
        %622 = vst.msk [vmem:[%s189 + $0x7c] sm:$0xf] %vm590, %v589
        %s623 = smul.u32 32, %s15
        %p624 = scmp.lt.s32.totalorder %s623, 63
        %s625 = scalar_select %p624, %s623, 63
        %s626 = smul.addr %s625, 4
        %s627 = scalar_lea.vmem %s3, %s626
        // Predicated region
        $region37: #{net2_forward.12} parent=31 // pred_check
          %p628 = pneg %p101
        $region38: #{net2_forward.12} parent=31 // pred_check_branch
          %630 = sbr.rel (%p628) target = $region40
        $region39: #{net2_forward.12} parent=31 // pred_region
          %s631 = smul.u32 32, %s15
        $region40: #{net2_forward.12} parent=31 // pred_fallthru
          _
      $region32: #{net2_forward.12} parent=5 // pred_fallthru
        _
      %p632 = scmp.le.s32.totalorder 2, %s10
      // Predicated region
      $region41: #{net2_forward.12} parent=5 // pred_check
        %p633 = pneg %p632
      $region42: #{net2_forward.12} parent=5 // pred_check_branch
        %635 = sbr.rel (%p633) target = $region44
      $region43: #{net2_forward.12} parent=5 // pred_region
        %s636 = ssub.s32 %s10, 2
        // Predicated region
        $region45: #{net2_forward.12} parent=43 // pred_check
          %p637 = pneg %p107
        $region46: #{net2_forward.12} parent=43 // pred_check_branch
          %639 = sbr.rel (%p637) target = $region48
        $region47: #{net2_forward.12} parent=43 // pred_region
          %s640 = smul.u32 32, %s16
          %p641 = scmp.lt.s32.totalorder %s640, 63
          %s642 = scalar_select %p641, %s640, 63
          %s643 = smul.addr %s642, 4
          %s644 = scalar_lea.vmem %s3, %s643
        $region48: #{net2_forward.12} parent=43 // pred_fallthru
          _
      $region44: #{net2_forward.12} parent=5 // pred_fallthru
        _
    $region6: #{net2_forward.12} parent=1 // loop_footer
      %s14 = sadd.s32 1, %s10
    $region7: #{net2_forward.12} parent=1 // loop_footer_branch
      %9 = sbr.rel target = $region3
    $region8: #{net2_forward.12} parent=1 // loop_exit
      _
    %645 = vsyncpa [#allocation3], 1
    %s646 = scalar_lea.sflag [#allocation3], 1
    %647 = vsyncpa %s646, 1

// kernel: net2_forward.13
$region0: #{net2_forward.13}
  #allocation0 [shape = 'u32[]', space=smem, size = 0x4, offset = 0x4, fixed_abs, tag = 'smem constant byte address 0x4 - core index']
  #allocation1 [shape = 'u32[72,128]{1,0:T(1,128)}', space=vmem, size = 0x9000, scoped, tag = 'internal scratch']
  %s0 = inlined_call_operand.vmem [shape: bf16[512,32], index: 0, kind: input, shape index: {}]
  %s1 = inlined_call_operand.hbm [shape: bf16[32,16], index: 1, kind: input, shape index: {}]
  %s2 = inlined_call_operand.vmem [shape: f32[1,16], index: 2, kind: input, shape index: {}]
  %s3 = inlined_call_operand.vmem [shape: bf16[512,16], index: 3, kind: output, shape index: {}]
  %s4 = sld [smem:[#allocation0]]
  $region49: #{net2_forward.13} parent=0
    _
  %s6 = ssub.s32 1, %s4
  %s7 = scalar_select 0, %s6, %s4
  $region1: #{net2_forward.13} parent=0
    #allocation2 [shape = 'u8[8192]{0}', space=vmem, size = 0x2000, scoped, tag = 'input window, operand 1, single buffered']
    #allocation3 [shape = 's32[2]{0}', space=sflag, size = 0x8, scoped, tag = 'scoped memory for net2_forward.13']
    %8 = vsyncpa [#allocation3], 0
    loop: start=0, step=1, limit=4
    $region2: #{net2_forward.13} parent=1 // loop_pre_header
      _
    $region3: #{net2_forward.13} parent=1 // loop_header
      %s10 = sphi 0, %s14
      %p11 = scmp.ge.s32.totalorder %s10, 4
      %s20 = sphi 0, %s22
      %s23 = sphi 0, %s20
      %s24 = sphi 0, %s23
      %s40 = sphi 0, %s24
      %s44 = sphi 0, %s44
      %s46 = sphi 0, %s44
      %s47 = sphi 0, %s46
      %s61 = sphi 0, %s47
      %s65 = sphi 0, %s65
      %s67 = sphi 0, %s65
      %s68 = sphi 0, %s67
      %s82 = sphi 0, %s68
      %s88 = sphi 0, %s90
      %s91 = sphi 0, %s88
      %s92 = sphi 0, %s91
      %s108 = sphi 0, %s92
    $region4: #{net2_forward.13} parent=1 // loop_header_branch
      %13 = sbr.rel (%p11) target = $region8
    $region5: #{net2_forward.13} parent=1 // loop_body
      %s15 = ssub.s32 %s10, 1
      %s16 = ssub.s32 %s10, 2
      %s17 = sadd.s32 %s10, 1
      %s18 = ssub.s32 %s10, %s17
      %p19 = scmp.eq.s32.totalorder %s18, 0
      %s21 = sadd.s32 %s20, 1
      %s22 = scalar_select %p19, %s20, %s21
      %p25 = pneg %p19
      %p26 = scmp.eq.s32.totalorder %s10, 1
      %p27 = por %p25, %p26
      %p28 = scmp.ne.s32.totalorder %s20, %s23
      %p29 = scmp.eq.s32.totalorder %s10, 0
      %p30 = por %p28, %p29
      %p31 = scmp.ne.s32.totalorder %s20, %s23
      %p32 = scmp.eq.s32.totalorder %s15, 1
      %p33 = por %p31, %p32
      %p34 = scmp.ne.s32.totalorder %s23, %s24
      %p35 = scmp.eq.s32.totalorder %s15, 0
      %p36 = por %p34, %p35
      %p37 = scmp.ne.s32.totalorder %s23, %s24
      %p38 = scmp.eq.s32.totalorder %s16, 1
      %p39 = por %p37, %p38
      %p41 = scmp.ne.s32.totalorder %s24, %s40
      %p42 = scmp.eq.s32.totalorder %s16, 0
      %p43 = por %p41, %p42
      %s45 = sadd.s32 %s44, 1
      %p48 = scmp.eq.s32.totalorder %s10, 1
      %p49 = scmp.ne.s32.totalorder %s44, %s46
      %p50 = scmp.eq.s32.totalorder %s10, 0
      %p51 = por %p49, %p50
      %p52 = scmp.ne.s32.totalorder %s44, %s46
      %p53 = scmp.eq.s32.totalorder %s15, 1
      %p54 = por %p52, %p53
      %p55 = scmp.ne.s32.totalorder %s46, %s47
      %p56 = scmp.eq.s32.totalorder %s15, 0
      %p57 = por %p55, %p56
      %p58 = scmp.ne.s32.totalorder %s46, %s47
      %p59 = scmp.eq.s32.totalorder %s16, 1
      %p60 = por %p58, %p59
      %p62 = scmp.ne.s32.totalorder %s47, %s61
      %p63 = scmp.eq.s32.totalorder %s16, 0
      %p64 = por %p62, %p63
      %s66 = sadd.s32 %s65, 1
      %p69 = scmp.eq.s32.totalorder %s10, 1
      %p70 = scmp.ne.s32.totalorder %s65, %s67
      %p71 = scmp.eq.s32.totalorder %s10, 0
      %p72 = por %p70, %p71
      %p73 = scmp.ne.s32.totalorder %s65, %s67
      %p74 = scmp.eq.s32.totalorder %s15, 1
      %p75 = por %p73, %p74
      %p76 = scmp.ne.s32.totalorder %s67, %s68
      %p77 = scmp.eq.s32.totalorder %s15, 0
      %p78 = por %p76, %p77
      %p79 = scmp.ne.s32.totalorder %s67, %s68
      %p80 = scmp.eq.s32.totalorder %s16, 1
      %p81 = por %p79, %p80
      %p83 = scmp.ne.s32.totalorder %s68, %s82
      %p84 = scmp.eq.s32.totalorder %s16, 0
      %p85 = por %p83, %p84
      %s86 = ssub.s32 %s10, %s17
      %p87 = scmp.eq.s32.totalorder %s86, 0
      %s89 = sadd.s32 %s88, 1
      %s90 = scalar_select %p87, %s88, %s89
      %p93 = pneg %p87
      %p94 = scmp.eq.s32.totalorder %s10, 1
      %p95 = por %p93, %p94
      %p96 = scmp.ne.s32.totalorder %s88, %s91
      %p97 = scmp.eq.s32.totalorder %s10, 0
      %p98 = por %p96, %p97
      %p99 = scmp.ne.s32.totalorder %s88, %s91
      %p100 = scmp.eq.s32.totalorder %s15, 1
      %p101 = por %p99, %p100
      %p102 = scmp.ne.s32.totalorder %s91, %s92
      %p103 = scmp.eq.s32.totalorder %s15, 0
      %p104 = por %p102, %p103
      %p105 = scmp.ne.s32.totalorder %s91, %s92
      %p106 = scmp.eq.s32.totalorder %s16, 1
      %p107 = por %p105, %p106
      %p109 = scmp.ne.s32.totalorder %s92, %s108
      %p110 = scmp.eq.s32.totalorder %s16, 0
      %p111 = por %p109, %p110
      %p112 = scmp.le.s32.totalorder 1, %s10
      %p113 = scmp.lt.s32.totalorder %s10, 3
      %p114 = pnand %p112, %p113
      %p115 = pneg %p114
      // Predicated region
      $region9: #{net2_forward.13} parent=5 // pred_check
        _
      $region10: #{net2_forward.13} parent=5 // pred_check_branch
        %117 = sbr.rel (%p114) target = $region12
      $region11: #{net2_forward.13} parent=5 // pred_region
        %s118 = ssub.s32 %s10, 1
        // Predicated region
        $region13: #{net2_forward.13} parent=11 // pred_check
          %p119 = pneg %p57
        $region14: #{net2_forward.13} parent=11 // pred_check_branch
          %121 = sbr.rel (%p119) target = $region16
        $region15: #{net2_forward.13} parent=11 // pred_region
          %123 = vsyncadd [#allocation3], 0
          %s124 = sshll.u32 %s1, 4
          %s125 = int_to_ptr.hbm [resolvable:$true] %s124
          %s126 = sshll.u32 [#allocation2], 4
          %s127 = int_to_ptr.vmem [resolvable:$true] %s126
          %132 = dma.hbm_to_vmem [thread:$0]  %s125, 256, %s127, [#allocation3], 64, 64, 4
        $region16: #{net2_forward.13} parent=11 // pred_fallthru
          _
        // Predicated region
        $region17: #{net2_forward.13} parent=11 // pred_check
          %p133 = pneg %p78
        $region18: #{net2_forward.13} parent=11 // pred_check_branch
          %135 = sbr.rel (%p133) target = $region20
        $region19: #{net2_forward.13} parent=11 // pred_region
          _
        $region20: #{net2_forward.13} parent=11 // pred_fallthru
          _
      $region12: #{net2_forward.13} parent=5 // pred_fallthru
        _
      %p136 = scmp.lt.s32.totalorder %s10, 2
      // Predicated region
      $region21: #{net2_forward.13} parent=5 // pred_check
        %p137 = pneg %p136
      $region22: #{net2_forward.13} parent=5 // pred_check_branch
        %139 = sbr.rel (%p137) target = $region24
      $region23: #{net2_forward.13} parent=5 // pred_region
        // Predicated region
        $region25: #{net2_forward.13} parent=23 // pred_check
          %p140 = pneg %p30
        $region26: #{net2_forward.13} parent=23 // pred_check_branch
          %142 = sbr.rel (%p140) target = $region28
        $region27: #{net2_forward.13} parent=23 // pred_region
          %s143 = smul.u32 32, %s10
          %p144 = scmp.lt.s32.totalorder %s143, 63
          %s145 = scalar_select %p144, %s143, 63
          %s146 = smul.addr %s145, 4
          %s147 = scalar_lea.vmem %s0, %s146
          %s148 = smul.u32 32, %s10
        $region28: #{net2_forward.13} parent=23 // pred_fallthru
          _
      $region24: #{net2_forward.13} parent=5 // pred_fallthru
        _
      %p149 = scmp.le.s32.totalorder 1, %s10
      %p150 = scmp.lt.s32.totalorder %s10, 3
      %p151 = pnand %p149, %p150
      %p152 = pneg %p151
      // Predicated region
      $region29: #{net2_forward.13} parent=5 // pred_check
        _
      $region30: #{net2_forward.13} parent=5 // pred_check_branch
        %154 = sbr.rel (%p151) target = $region32
      $region31: #{net2_forward.13} parent=5 // pred_region
        %s155 = ssub.s32 %s10, 1
        // Predicated region
        $region33: #{net2_forward.13} parent=31 // pred_check
          %p156 = pneg %p57
        $region34: #{net2_forward.13} parent=31 // pred_check_branch
          %158 = sbr.rel (%p156) target = $region36
        $region35: #{net2_forward.13} parent=31 // pred_region
          %160 = dma.done [#allocation3], 256
        $region36: #{net2_forward.13} parent=31 // pred_fallthru
          _
        %s161 = smul.u32 32, %s15
        %p162 = scmp.lt.s32.totalorder %s161, 63
        %s163 = scalar_select %p162, %s161, 63
        %s164 = smul.addr %s163, 4
        %s165 = scalar_lea.vmem %s0, %s164
        %p166 = pneg %p36
        %p167 = pneg %p33
        %p168 = pneg %p57
        %p169 = pneg %p54
        %p170 = pneg %p78
        %p171 = pneg %p75
        %p172 = pneg %p104
        %p173 = pneg %p101
        %s174 = smul.u32 32, %s15
        %p175 = scmp.lt.s32.totalorder %s174, 63
        %s176 = scalar_select %p175, %s174, 63
        %s177 = smul.addr %s176, 4
        %s178 = scalar_lea.vmem %s3, %s177
        %s179 = smul.u32 32, %s15
        %p180 = scmp.lt.s32.totalorder %s179, 63
        %s181 = scalar_select %p180, %s179, 63
        %s182 = smul.addr %s181, 4
        %s183 = scalar_lea.vmem %s0, %s182
        %s184 = smul.u32 32, %s15
        %s185 = smul.u32 32, %s15
        %p186 = scmp.lt.s32.totalorder %s185, 63
        %s187 = scalar_select %p186, %s185, 63
        %s188 = smul.addr %s187, 4
        %s189 = scalar_lea.vmem %s3, %s188
        %s190 = smul.u32 32, %s15
        %v192 = vld [vmem:[%s183] sm:$0xf]
        %v193 = vld [vmem:[%s183 + $0x4] sm:$0xf]
        %v194 = vld [vmem:[%s183 + $0x8] sm:$0xf]
        %v195 = vld [vmem:[%s183 + $0xc] sm:$0xf]
        %v196 = vld [vmem:[%s183 + $0x10] sm:$0xf]
        %v197 = vld [vmem:[%s183 + $0x14] sm:$0xf]
        %v198 = vld [vmem:[%s183 + $0x18] sm:$0xf]
        %v199 = vld [vmem:[%s183 + $0x1c] sm:$0xf]
        %v200 = vld [vmem:[%s183 + $0x20] sm:$0xf]
        %v201 = vld [vmem:[%s183 + $0x24] sm:$0xf]
        %v202 = vld [vmem:[%s183 + $0x28] sm:$0xf]
        %v203 = vld [vmem:[%s183 + $0x2c] sm:$0xf]
        %v204 = vld [vmem:[%s183 + $0x30] sm:$0xf]
        %v205 = vld [vmem:[%s183 + $0x34] sm:$0xf]
        %v206 = vld [vmem:[%s183 + $0x38] sm:$0xf]
        %v207 = vld [vmem:[%s183 + $0x3c] sm:$0xf]
        %v208 = vld [vmem:[%s183 + $0x40] sm:$0xf]
        %v209 = vld [vmem:[%s183 + $0x44] sm:$0xf]
        %v210 = vld [vmem:[%s183 + $0x48] sm:$0xf]
        %v211 = vld [vmem:[%s183 + $0x4c] sm:$0xf]
        %v212 = vld [vmem:[%s183 + $0x50] sm:$0xf]
        %v213 = vld [vmem:[%s183 + $0x54] sm:$0xf]
        %v214 = vld [vmem:[%s183 + $0x58] sm:$0xf]
        %v215 = vld [vmem:[%s183 + $0x5c] sm:$0xf]
        %v216 = vld [vmem:[%s183 + $0x60] sm:$0xf]
        %v217 = vld [vmem:[%s183 + $0x64] sm:$0xf]
        %v218 = vld [vmem:[%s183 + $0x68] sm:$0xf]
        %v219 = vld [vmem:[%s183 + $0x6c] sm:$0xf]
        %v220 = vld [vmem:[%s183 + $0x70] sm:$0xf]
        %v221 = vld [vmem:[%s183 + $0x74] sm:$0xf]
        %v222 = vld [vmem:[%s183 + $0x78] sm:$0xf]
        %v223 = vld [vmem:[%s183 + $0x7c] sm:$0xf]
        %v224 = vld [vmem:[#allocation2] sm:$0xf]
        %v225 = vld [vmem:[#allocation2 + $0x4] sm:$0xf]
        %v226 = vld [vmem:[#allocation2 + $0x8] sm:$0xf]
        %v227 = vld [vmem:[#allocation2 + $0xc] sm:$0xf]
        %v228 = vld [vmem:[%s2] sm:$0x1]
        %v230 = vperm.slane %v228, 0
        %v264 = vunpack.c.l.b16 %v192
        %v265 = vunpack.c.l.b16 %v193
        %v266 = vunpack.c.l.b16 %v194
        %v267 = vunpack.c.l.b16 %v195
        %v268 = vunpack.c.l.b16 %v196
        %v269 = vunpack.c.l.b16 %v197
        %v270 = vunpack.c.l.b16 %v198
        %v271 = vunpack.c.l.b16 %v199
        %v272 = vunpack.c.l.b16 %v200
        %v273 = vunpack.c.l.b16 %v201
        %v274 = vunpack.c.l.b16 %v202
        %v275 = vunpack.c.l.b16 %v203
        %v276 = vunpack.c.l.b16 %v204
        %v277 = vunpack.c.l.b16 %v205
        %v278 = vunpack.c.l.b16 %v206
        %v279 = vunpack.c.l.b16 %v207
        %v280 = vunpack.c.l.b16 %v208
        %v281 = vunpack.c.l.b16 %v209
        %v282 = vunpack.c.l.b16 %v210
        %v283 = vunpack.c.l.b16 %v211
        %v284 = vunpack.c.l.b16 %v212
        %v285 = vunpack.c.l.b16 %v213
        %v286 = vunpack.c.l.b16 %v214
        %v287 = vunpack.c.l.b16 %v215
        %v288 = vunpack.c.l.b16 %v216
        %v289 = vunpack.c.l.b16 %v217
        %v290 = vunpack.c.l.b16 %v218
        %v291 = vunpack.c.l.b16 %v219
        %v292 = vunpack.c.l.b16 %v220
        %v293 = vunpack.c.l.b16 %v221
        %v294 = vunpack.c.l.b16 %v222
        %v295 = vunpack.c.l.b16 %v223
        %v296 = vpack.c.b16 %v265, %v264
        %v297 = vpack.c.b16 %v267, %v266
        %v298 = vpack.c.b16 %v269, %v268
        %v299 = vpack.c.b16 %v271, %v270
        %v300 = vpack.c.b16 %v273, %v272
        %v301 = vpack.c.b16 %v275, %v274
        %v302 = vpack.c.b16 %v277, %v276
        %v303 = vpack.c.b16 %v279, %v278
        %v304 = vpack.c.b16 %v281, %v280
        %v305 = vpack.c.b16 %v283, %v282
        %v306 = vpack.c.b16 %v285, %v284
        %v307 = vpack.c.b16 %v287, %v286
        %v308 = vpack.c.b16 %v289, %v288
        %v309 = vpack.c.b16 %v291, %v290
        %v310 = vpack.c.b16 %v293, %v292
        %v311 = vpack.c.b16 %v295, %v294
        %v316 = vunpack.c.l.b16 %v224
        %v317 = vunpack.c.l.b16 %v225
        %v318 = vunpack.c.l.b16 %v226
        %v319 = vunpack.c.l.b16 %v227
        %v320 = vpack.c.b16 %v317, %v316
        %v321 = vpack.c.b16 %v319, %v318
        %vm324 = vcmask 261120
        %v326 = vsel %vm324, %v296, 0
        %v329 = vsel %vm324, %v297, 0
        %v332 = vsel %vm324, %v298, 0
        %v335 = vsel %vm324, %v299, 0
        %v338 = vsel %vm324, %v300, 0
        %v341 = vsel %vm324, %v301, 0
        %v344 = vsel %vm324, %v302, 0
        %v347 = vsel %vm324, %v303, 0
        %v350 = vsel %vm324, %v304, 0
        %v353 = vsel %vm324, %v305, 0
        %v356 = vsel %vm324, %v306, 0
        %v359 = vsel %vm324, %v307, 0
        %v362 = vsel %vm324, %v308, 0
        %v365 = vsel %vm324, %v309, 0
        %v368 = vsel %vm324, %v310, 0
        %v371 = vsel %vm324, %v311, 0
        %373 = vmatpush.bf16.msra.mxu0 0
        %374 = vmatpush.bf16.msra.mxu0 0
        %375 = vmatpush.bf16.msra.mxu0 0
        %376 = vmatpush.bf16.msra.mxu0 0
        %377 = vmatpush.bf16.msra.mxu0 0
        %378 = vmatpush.bf16.msra.mxu0 0
        %379 = vmatpush.bf16.msra.mxu0 %v321
        %380 = vmatpush.bf16.msra.mxu0 %v320
        %381 = vmatmul.bf16.gmra.mxu0 %v326
        %v382 = vpop.f32.mrf.mxu0
        %v383 = vadd.f32 %v230, %v382
        %v384 = vpop.f32.mrf.mxu0
        %v385 = vadd.f32 %v230, %v384
        %386 = vmatmul.bf16.gmra.mxu0 %v329
        %v387 = vpop.f32.mrf.mxu0
        %v388 = vadd.f32 %v230, %v387
        %v389 = vpop.f32.mrf.mxu0
        %v390 = vadd.f32 %v230, %v389
        %391 = vmatmul.bf16.gmra.mxu0 %v332
        %v392 = vpop.f32.mrf.mxu0
        %v393 = vadd.f32 %v230, %v392
        %v394 = vpop.f32.mrf.mxu0
        %v395 = vadd.f32 %v230, %v394
        %396 = vmatmul.bf16.gmra.mxu0 %v335
        %v397 = vpop.f32.mrf.mxu0
        %v398 = vadd.f32 %v230, %v397
        %v399 = vpop.f32.mrf.mxu0
        %v400 = vadd.f32 %v230, %v399
        %401 = vmatmul.bf16.gmra.mxu0 %v338
        %v402 = vpop.f32.mrf.mxu0
        %v403 = vadd.f32 %v230, %v402
        %v404 = vpop.f32.mrf.mxu0
        %v405 = vadd.f32 %v230, %v404
        %406 = vmatmul.bf16.gmra.mxu0 %v341
        %v407 = vpop.f32.mrf.mxu0
        %v408 = vadd.f32 %v230, %v407
        %v409 = vpop.f32.mrf.mxu0
        %v410 = vadd.f32 %v230, %v409
        %411 = vmatmul.bf16.gmra.mxu0 %v344
        %v412 = vpop.f32.mrf.mxu0
        %v413 = vadd.f32 %v230, %v412
        %v414 = vpop.f32.mrf.mxu0
        %v415 = vadd.f32 %v230, %v414
        %416 = vmatmul.bf16.gmra.mxu0 %v347
        %v417 = vpop.f32.mrf.mxu0
        %v418 = vadd.f32 %v230, %v417
        %v419 = vpop.f32.mrf.mxu0
        %v420 = vadd.f32 %v230, %v419
        %421 = vmatmul.bf16.gmra.mxu0 %v350
        %v422 = vpop.f32.mrf.mxu0
        %v423 = vadd.f32 %v230, %v422
        %v424 = vpop.f32.mrf.mxu0
        %v425 = vadd.f32 %v230, %v424
        %426 = vmatmul.bf16.gmra.mxu0 %v353
        %v427 = vpop.f32.mrf.mxu0
        %v428 = vadd.f32 %v230, %v427
        %v429 = vpop.f32.mrf.mxu0
        %v430 = vadd.f32 %v230, %v429
        %431 = vmatmul.bf16.gmra.mxu0 %v356
        %v432 = vpop.f32.mrf.mxu0
        %v433 = vadd.f32 %v230, %v432
        %v434 = vpop.f32.mrf.mxu0
        %v435 = vadd.f32 %v230, %v434
        %436 = vmatmul.bf16.gmra.mxu0 %v359
        %v437 = vpop.f32.mrf.mxu0
        %v438 = vadd.f32 %v230, %v437
        %v439 = vpop.f32.mrf.mxu0
        %v440 = vadd.f32 %v230, %v439
        %441 = vmatmul.bf16.gmra.mxu0 %v362
        %v442 = vpop.f32.mrf.mxu0
        %v443 = vadd.f32 %v230, %v442
        %v444 = vpop.f32.mrf.mxu0
        %v445 = vadd.f32 %v230, %v444
        %446 = vmatmul.bf16.gmra.mxu0 %v365
        %v447 = vpop.f32.mrf.mxu0
        %v448 = vadd.f32 %v230, %v447
        %v449 = vpop.f32.mrf.mxu0
        %v450 = vadd.f32 %v230, %v449
        %451 = vmatmul.bf16.gmra.mxu0 %v368
        %v452 = vpop.f32.mrf.mxu0
        %v453 = vadd.f32 %v230, %v452
        %v454 = vpop.f32.mrf.mxu0
        %v455 = vadd.f32 %v230, %v454
        %456 = vmatmul.bf16.gmra.mxu0 %v371
        %v457 = vpop.f32.mrf.mxu0
        %v458 = vadd.f32 %v230, %v457
        %v459 = vpop.f32.mrf.mxu0
        %v460 = vadd.f32 %v230, %v459
        %461 = vdwg.mxu0
        %vm462 = vcmp.ge.f32.partialorder %v383, 0.0
        %vm463 = vcmp.ge.f32.partialorder %v385, 0.0
        %vm464 = vcmp.ge.f32.partialorder %v388, 0.0
        %vm465 = vcmp.ge.f32.partialorder %v390, 0.0
        %vm466 = vcmp.ge.f32.partialorder %v393, 0.0
        %vm467 = vcmp.ge.f32.partialorder %v395, 0.0
        %vm468 = vcmp.ge.f32.partialorder %v398, 0.0
        %vm469 = vcmp.ge.f32.partialorder %v400, 0.0
        %vm470 = vcmp.ge.f32.partialorder %v403, 0.0
        %vm471 = vcmp.ge.f32.partialorder %v405, 0.0
        %vm472 = vcmp.ge.f32.partialorder %v408, 0.0
        %vm473 = vcmp.ge.f32.partialorder %v410, 0.0
        %vm474 = vcmp.ge.f32.partialorder %v413, 0.0
        %vm475 = vcmp.ge.f32.partialorder %v415, 0.0
        %vm476 = vcmp.ge.f32.partialorder %v418, 0.0
        %vm477 = vcmp.ge.f32.partialorder %v420, 0.0
        %vm478 = vcmp.ge.f32.partialorder %v423, 0.0
        %vm479 = vcmp.ge.f32.partialorder %v425, 0.0
        %vm480 = vcmp.ge.f32.partialorder %v428, 0.0
        %vm481 = vcmp.ge.f32.partialorder %v430, 0.0
        %vm482 = vcmp.ge.f32.partialorder %v433, 0.0
        %vm483 = vcmp.ge.f32.partialorder %v435, 0.0
        %vm484 = vcmp.ge.f32.partialorder %v438, 0.0
        %vm485 = vcmp.ge.f32.partialorder %v440, 0.0
        %vm486 = vcmp.ge.f32.partialorder %v443, 0.0
        %vm487 = vcmp.ge.f32.partialorder %v445, 0.0
        %vm488 = vcmp.ge.f32.partialorder %v448, 0.0
        %vm489 = vcmp.ge.f32.partialorder %v450, 0.0
        %vm490 = vcmp.ge.f32.partialorder %v453, 0.0
        %vm491 = vcmp.ge.f32.partialorder %v455, 0.0
        %vm492 = vcmp.ge.f32.partialorder %v458, 0.0
        %vm493 = vcmp.ge.f32.partialorder %v460, 0.0
        %v494 = vmul.f32 %v383, 0.25
        %v495 = vmul.f32 %v385, 0.25
        %v496 = vmul.f32 %v388, 0.25
        %v497 = vmul.f32 %v390, 0.25
        %v498 = vmul.f32 %v393, 0.25
        %v499 = vmul.f32 %v395, 0.25
        %v500 = vmul.f32 %v398, 0.25
        %v501 = vmul.f32 %v400, 0.25
        %v502 = vmul.f32 %v403, 0.25
        %v503 = vmul.f32 %v405, 0.25
        %v504 = vmul.f32 %v408, 0.25
        %v505 = vmul.f32 %v410, 0.25
        %v506 = vmul.f32 %v413, 0.25
        %v507 = vmul.f32 %v415, 0.25
        %v508 = vmul.f32 %v418, 0.25
        %v509 = vmul.f32 %v420, 0.25
        %v510 = vmul.f32 %v423, 0.25
        %v511 = vmul.f32 %v425, 0.25
        %v512 = vmul.f32 %v428, 0.25
        %v513 = vmul.f32 %v430, 0.25
        %v514 = vmul.f32 %v433, 0.25
        %v515 = vmul.f32 %v435, 0.25
        %v516 = vmul.f32 %v438, 0.25
        %v517 = vmul.f32 %v440, 0.25
        %v518 = vmul.f32 %v443, 0.25
        %v519 = vmul.f32 %v445, 0.25
        %v520 = vmul.f32 %v448, 0.25
        %v521 = vmul.f32 %v450, 0.25
        %v522 = vmul.f32 %v453, 0.25
        %v523 = vmul.f32 %v455, 0.25
        %v524 = vmul.f32 %v458, 0.25
        %v525 = vmul.f32 %v460, 0.25
        %v526 = vsel %vm462, %v383, %v494
        %v527 = vsel %vm463, %v385, %v495
        %v528 = vsel %vm464, %v388, %v496
        %v529 = vsel %vm465, %v390, %v497
        %v530 = vsel %vm466, %v393, %v498
        %v531 = vsel %vm467, %v395, %v499
        %v532 = vsel %vm468, %v398, %v500
        %v533 = vsel %vm469, %v400, %v501
        %v534 = vsel %vm470, %v403, %v502
        %v535 = vsel %vm471, %v405, %v503
        %v536 = vsel %vm472, %v408, %v504
        %v537 = vsel %vm473, %v410, %v505
        %v538 = vsel %vm474, %v413, %v506
        %v539 = vsel %vm475, %v415, %v507
        %v540 = vsel %vm476, %v418, %v508
        %v541 = vsel %vm477, %v420, %v509
        %v542 = vsel %vm478, %v423, %v510
        %v543 = vsel %vm479, %v425, %v511
        %v544 = vsel %vm480, %v428, %v512
        %v545 = vsel %vm481, %v430, %v513
        %v546 = vsel %vm482, %v433, %v514
        %v547 = vsel %vm483, %v435, %v515
        %v548 = vsel %vm484, %v438, %v516
        %v549 = vsel %vm485, %v440, %v517
        %v550 = vsel %vm486, %v443, %v518
        %v551 = vsel %vm487, %v445, %v519
        %v552 = vsel %vm488, %v448, %v520
        %v553 = vsel %vm489, %v450, %v521
        %v554 = vsel %vm490, %v453, %v522
        %v555 = vsel %vm491, %v455, %v523
        %v556 = vsel %vm492, %v458, %v524
        %v557 = vsel %vm493, %v460, %v525
        %v558 = vpack.c.bf16 %v526, %v526
        %v559 = vpack.c.bf16 %v527, %v527
        %v560 = vpack.c.bf16 %v528, %v528
        %v561 = vpack.c.bf16 %v529, %v529
        %v562 = vpack.c.bf16 %v530, %v530
        %v563 = vpack.c.bf16 %v531, %v531
        %v564 = vpack.c.bf16 %v532, %v532
        %v565 = vpack.c.bf16 %v533, %v533
        %v566 = vpack.c.bf16 %v534, %v534
        %v567 = vpack.c.bf16 %v535, %v535
        %v568 = vpack.c.bf16 %v536, %v536
        %v569 = vpack.c.bf16 %v537, %v537
        %v570 = vpack.c.bf16 %v538, %v538
        %v571 = vpack.c.bf16 %v539, %v539
        %v572 = vpack.c.bf16 %v540, %v540
        %v573 = vpack.c.bf16 %v541, %v541
        %v574 = vpack.c.bf16 %v542, %v542
        %v575 = vpack.c.bf16 %v543, %v543
        %v576 = vpack.c.bf16 %v544, %v544
        %v577 = vpack.c.bf16 %v545, %v545
        %v578 = vpack.c.bf16 %v546, %v546
        %v579 = vpack.c.bf16 %v547, %v547
        %v580 = vpack.c.bf16 %v548, %v548
        %v581 = vpack.c.bf16 %v549, %v549
        %v582 = vpack.c.bf16 %v550, %v550
        %v583 = vpack.c.bf16 %v551, %v551
        %v584 = vpack.c.bf16 %v552, %v552
        %v585 = vpack.c.bf16 %v553, %v553
        %v586 = vpack.c.bf16 %v554, %v554
        %v587 = vpack.c.bf16 %v555, %v555
        %v588 = vpack.c.bf16 %v556, %v556
        %v589 = vpack.c.bf16 %v557, %v557
        %vm590 = vcmask 125952
        %591 = vst.msk [vmem:[%s189] sm:$0xf] %vm590, %v558
        %592 = vst.msk [vmem:[%s189 + $0x4] sm:$0xf] %vm590, %v559
        %593 = vst.msk [vmem:[%s189 + $0x8] sm:$0xf] %vm590, %v560
        %594 = vst.msk [vmem:[%s189 + $0xc] sm:$0xf] %vm590, %v561
        %595 = vst.msk [vmem:[%s189 + $0x10] sm:$0xf] %vm590, %v562
        %596 = vst.msk [vmem:[%s189 + $0x14] sm:$0xf] %vm590, %v563
        %597 = vst.msk [vmem:[%s189 + $0x18] sm:$0xf] %vm590, %v564
        %598 = vst.msk [vmem:[%s189 + $0x1c] sm:$0xf] %vm590, %v565
        %599 = vst.msk [vmem:[%s189 + $0x20] sm:$0xf] %vm590, %v566
        %600 = vst.msk [vmem:[%s189 + $0x24] sm:$0xf] %vm590, %v567
        %601 = vst.msk [vmem:[%s189 + $0x28] sm:$0xf] %vm590, %v568
        %602 = vst.msk [vmem:[%s189 + $0x2c] sm:$0xf] %vm590, %v569
        %603 = vst.msk [vmem:[%s189 + $0x30] sm:$0xf] %vm590, %v570
        %604 = vst.msk [vmem:[%s189 + $0x34] sm:$0xf] %vm590, %v571
        %605 = vst.msk [vmem:[%s189 + $0x38] sm:$0xf] %vm590, %v572
        %606 = vst.msk [vmem:[%s189 + $0x3c] sm:$0xf] %vm590, %v573
        %607 = vst.msk [vmem:[%s189 + $0x40] sm:$0xf] %vm590, %v574
        %608 = vst.msk [vmem:[%s189 + $0x44] sm:$0xf] %vm590, %v575
        %609 = vst.msk [vmem:[%s189 + $0x48] sm:$0xf] %vm590, %v576
        %610 = vst.msk [vmem:[%s189 + $0x4c] sm:$0xf] %vm590, %v577
        %611 = vst.msk [vmem:[%s189 + $0x50] sm:$0xf] %vm590, %v578
        %612 = vst.msk [vmem:[%s189 + $0x54] sm:$0xf] %vm590, %v579
        %613 = vst.msk [vmem:[%s189 + $0x58] sm:$0xf] %vm590, %v580
        %614 = vst.msk [vmem:[%s189 + $0x5c] sm:$0xf] %vm590, %v581
        %615 = vst.msk [vmem:[%s189 + $0x60] sm:$0xf] %vm590, %v582
        %616 = vst.msk [vmem:[%s189 + $0x64] sm:$0xf] %vm590, %v583
        %617 = vst.msk [vmem:[%s189 + $0x68] sm:$0xf] %vm590, %v584
        %618 = vst.msk [vmem:[%s189 + $0x6c] sm:$0xf] %vm590, %v585
        %619 = vst.msk [vmem:[%s189 + $0x70] sm:$0xf] %vm590, %v586
        %620 = vst.msk [vmem:[%s189 + $0x74] sm:$0xf] %vm590, %v587
        %621 = vst.msk [vmem:[%s189 + $0x78] sm:$0xf] %vm590, %v588
        %622 = vst.msk [vmem:[%s189 + $0x7c] sm:$0xf] %vm590, %v589
        %s623 = smul.u32 32, %s15
        %p624 = scmp.lt.s32.totalorder %s623, 63
        %s625 = scalar_select %p624, %s623, 63
        %s626 = smul.addr %s625, 4
        %s627 = scalar_lea.vmem %s3, %s626
        // Predicated region
        $region37: #{net2_forward.13} parent=31 // pred_check
          %p628 = pneg %p101
        $region38: #{net2_forward.13} parent=31 // pred_check_branch
          %630 = sbr.rel (%p628) target = $region40
        $region39: #{net2_forward.13} parent=31 // pred_region
          %s631 = smul.u32 32, %s15
        $region40: #{net2_forward.13} parent=31 // pred_fallthru
          _
      $region32: #{net2_forward.13} parent=5 // pred_fallthru
        _
      %p632 = scmp.le.s32.totalorder 2, %s10
      // Predicated region
      $region41: #{net2_forward.13} parent=5 // pred_check
        %p633 = pneg %p632
      $region42: #{net2_forward.13} parent=5 // pred_check_branch
        %635 = sbr.rel (%p633) target = $region44
      $region43: #{net2_forward.13} parent=5 // pred_region
        %s636 = ssub.s32 %s10, 2
        // Predicated region
        $region45: #{net2_forward.13} parent=43 // pred_check
          %p637 = pneg %p107
        $region46: #{net2_forward.13} parent=43 // pred_check_branch
          %639 = sbr.rel (%p637) target = $region48
        $region47: #{net2_forward.13} parent=43 // pred_region
          %s640 = smul.u32 32, %s16
          %p641 = scmp.lt.s32.totalorder %s640, 63
          %s642 = scalar_select %p641, %s640, 63
          %s643 = smul.addr %s642, 4
          %s644 = scalar_lea.vmem %s3, %s643
        $region48: #{net2_forward.13} parent=43 // pred_fallthru
          _
      $region44: #{net2_forward.13} parent=5 // pred_fallthru
        _
    $region6: #{net2_forward.13} parent=1 // loop_footer
      %s14 = sadd.s32 1, %s10
    $region7: #{net2_forward.13} parent=1 // loop_footer_branch
      %9 = sbr.rel target = $region3
    $region8: #{net2_forward.13} parent=1 // loop_exit
      _
    %645 = vsyncpa [#allocation3], 1
    %s646 = scalar_lea.sflag [#allocation3], 1
    %647 = vsyncpa %s646, 1

// kernel: net2_forward.14
$region0: #{net2_forward.14}
  #allocation0 [shape = 'u32[]', space=smem, size = 0x4, offset = 0x4, fixed_abs, tag = 'smem constant byte address 0x4 - core index']
  #allocation1 [shape = 'u32[72,128]{1,0:T(1,128)}', space=vmem, size = 0x9000, scoped, tag = 'internal scratch']
  %s0 = inlined_call_operand.vmem [shape: bf16[512,144], index: 0, kind: input, shape index: {}]
  %s1 = inlined_call_operand.vmem [shape: bf16[144,64], index: 1, kind: input, shape index: {}]
  %s2 = inlined_call_operand.vmem [shape: f32[1,64], index: 2, kind: input, shape index: {}]
  %s3 = inlined_call_operand.vmem [shape: bf16[512,64], index: 3, kind: output, shape index: {}]
  %s4 = sld [smem:[#allocation0]]
  $region45: #{net2_forward.14} parent=0
    _
  %s6 = ssub.s32 1, %s4
  %s7 = scalar_select 0, %s6, %s4
  loop: start=0, step=1, limit=4
  $region2: #{net2_forward.14} parent=0 // loop_pre_header
    _
  $region3: #{net2_forward.14} parent=0 // loop_header
    %s9 = sphi 0, %s13
    %p10 = scmp.ge.s32.totalorder %s9, 4
    %s19 = sphi 0, %s21
    %s22 = sphi 0, %s19
    %s23 = sphi 0, %s22
    %s39 = sphi 0, %s23
    %s43 = sphi 0, %s43
    %s45 = sphi 0, %s43
    %s46 = sphi 0, %s45
    %s60 = sphi 0, %s46
    %s64 = sphi 0, %s64
    %s66 = sphi 0, %s64
    %s67 = sphi 0, %s66
    %s81 = sphi 0, %s67
    %s87 = sphi 0, %s89
    %s90 = sphi 0, %s87
    %s91 = sphi 0, %s90
    %s107 = sphi 0, %s91
  $region4: #{net2_forward.14} parent=0 // loop_header_branch
    %12 = sbr.rel (%p10) target = $region8
  $region5: #{net2_forward.14} parent=0 // loop_body
    %s14 = ssub.s32 %s9, 1
    %s15 = ssub.s32 %s9, 2
    %s16 = sadd.s32 %s9, 1
    %s17 = ssub.s32 %s9, %s16
    %p18 = scmp.eq.s32.totalorder %s17, 0
    %s20 = sadd.s32 %s19, 1
    %s21 = scalar_select %p18, %s19, %s20
    %p24 = pneg %p18
    %p25 = scmp.eq.s32.totalorder %s9, 1
    %p26 = por %p24, %p25
    %p27 = scmp.ne.s32.totalorder %s19, %s22
    %p28 = scmp.eq.s32.totalorder %s9, 0
    %p29 = por %p27, %p28
    %p30 = scmp.ne.s32.totalorder %s19, %s22
    %p31 = scmp.eq.s32.totalorder %s14, 1
    %p32 = por %p30, %p31
    %p33 = scmp.ne.s32.totalorder %s22, %s23
    %p34 = scmp.eq.s32.totalorder %s14, 0
    %p35 = por %p33, %p34
    %p36 = scmp.ne.s32.totalorder %s22, %s23
    %p37 = scmp.eq.s32.totalorder %s15, 1
    %p38 = por %p36, %p37
    %p40 = scmp.ne.s32.totalorder %s23, %s39
    %p41 = scmp.eq.s32.totalorder %s15, 0
    %p42 = por %p40, %p41
    %s44 = sadd.s32 %s43, 1
    %p47 = scmp.eq.s32.totalorder %s9, 1
    %p48 = scmp.ne.s32.totalorder %s43, %s45
    %p49 = scmp.eq.s32.totalorder %s9, 0
    %p50 = por %p48, %p49
    %p51 = scmp.ne.s32.totalorder %s43, %s45
    %p52 = scmp.eq.s32.totalorder %s14, 1
    %p53 = por %p51, %p52
    %p54 = scmp.ne.s32.totalorder %s45, %s46
    %p55 = scmp.eq.s32.totalorder %s14, 0
    %p56 = por %p54, %p55
    %p57 = scmp.ne.s32.totalorder %s45, %s46
    %p58 = scmp.eq.s32.totalorder %s15, 1
    %p59 = por %p57, %p58
    %p61 = scmp.ne.s32.totalorder %s46, %s60
    %p62 = scmp.eq.s32.totalorder %s15, 0
    %p63 = por %p61, %p62
    %s65 = sadd.s32 %s64, 1
    %p68 = scmp.eq.s32.totalorder %s9, 1
    %p69 = scmp.ne.s32.totalorder %s64, %s66
    %p70 = scmp.eq.s32.totalorder %s9, 0
    %p71 = por %p69, %p70
    %p72 = scmp.ne.s32.totalorder %s64, %s66
    %p73 = scmp.eq.s32.totalorder %s14, 1
    %p74 = por %p72, %p73
    %p75 = scmp.ne.s32.totalorder %s66, %s67
    %p76 = scmp.eq.s32.totalorder %s14, 0
    %p77 = por %p75, %p76
    %p78 = scmp.ne.s32.totalorder %s66, %s67
    %p79 = scmp.eq.s32.totalorder %s15, 1
    %p80 = por %p78, %p79
    %p82 = scmp.ne.s32.totalorder %s67, %s81
    %p83 = scmp.eq.s32.totalorder %s15, 0
    %p84 = por %p82, %p83
    %s85 = ssub.s32 %s9, %s16
    %p86 = scmp.eq.s32.totalorder %s85, 0
    %s88 = sadd.s32 %s87, 1
    %s89 = scalar_select %p86, %s87, %s88
    %p92 = pneg %p86
    %p93 = scmp.eq.s32.totalorder %s9, 1
    %p94 = por %p92, %p93
    %p95 = scmp.ne.s32.totalorder %s87, %s90
    %p96 = scmp.eq.s32.totalorder %s9, 0
    %p97 = por %p95, %p96
    %p98 = scmp.ne.s32.totalorder %s87, %s90
    %p99 = scmp.eq.s32.totalorder %s14, 1
    %p100 = por %p98, %p99
    %p101 = scmp.ne.s32.totalorder %s90, %s91
    %p102 = scmp.eq.s32.totalorder %s14, 0
    %p103 = por %p101, %p102
    %p104 = scmp.ne.s32.totalorder %s90, %s91
    %p105 = scmp.eq.s32.totalorder %s15, 1
    %p106 = por %p104, %p105
    %p108 = scmp.ne.s32.totalorder %s91, %s107
    %p109 = scmp.eq.s32.totalorder %s15, 0
    %p110 = por %p108, %p109
    %p111 = scmp.le.s32.totalorder 1, %s9
    %p112 = scmp.lt.s32.totalorder %s9, 3
    %p113 = pnand %p111, %p112
    %p114 = pneg %p113
    // Predicated region
    $region9: #{net2_forward.14} parent=5 // pred_check
      _
    $region10: #{net2_forward.14} parent=5 // pred_check_branch
      %116 = sbr.rel (%p113) target = $region12
    $region11: #{net2_forward.14} parent=5 // pred_region
      %s117 = ssub.s32 %s9, 1
      // Predicated region
      $region13: #{net2_forward.14} parent=11 // pred_check
        %p118 = pneg %p56
      $region14: #{net2_forward.14} parent=11 // pred_check_branch
        %120 = sbr.rel (%p118) target = $region16
      $region15: #{net2_forward.14} parent=11 // pred_region
        _
      $region16: #{net2_forward.14} parent=11 // pred_fallthru
        _
      // Predicated region
      $region17: #{net2_forward.14} parent=11 // pred_check
        %p121 = pneg %p77
      $region18: #{net2_forward.14} parent=11 // pred_check_branch
        %123 = sbr.rel (%p121) target = $region20
      $region19: #{net2_forward.14} parent=11 // pred_region
        _
      $region20: #{net2_forward.14} parent=11 // pred_fallthru
        _
    $region12: #{net2_forward.14} parent=5 // pred_fallthru
      _
    %p124 = scmp.lt.s32.totalorder %s9, 2
    // Predicated region
    $region21: #{net2_forward.14} parent=5 // pred_check
      %p125 = pneg %p124
    $region22: #{net2_forward.14} parent=5 // pred_check_branch
      %127 = sbr.rel (%p125) target = $region24
    $region23: #{net2_forward.14} parent=5 // pred_region
      // Predicated region
      $region25: #{net2_forward.14} parent=23 // pred_check
        %p128 = pneg %p29
      $region26: #{net2_forward.14} parent=23 // pred_check_branch
        %130 = sbr.rel (%p128) target = $region28
      $region27: #{net2_forward.14} parent=23 // pred_region
        %s131 = smul.u32 32, %s9
        %p132 = scmp.lt.s32.totalorder %s131, 63
        %s133 = scalar_select %p132, %s131, 63
        %s134 = smul.addr %s133, 2
        %s135 = smul.addr %s134, 4
        %s136 = scalar_lea.vmem %s0, %s135
        %s137 = smul.u32 32, %s9
      $region28: #{net2_forward.14} parent=23 // pred_fallthru
        _
    $region24: #{net2_forward.14} parent=5 // pred_fallthru
      _
    %p138 = scmp.le.s32.totalorder 1, %s9
    %p139 = scmp.lt.s32.totalorder %s9, 3
    %p140 = pnand %p138, %p139
    %p141 = pneg %p140
    // Predicated region
    $region29: #{net2_forward.14} parent=5 // pred_check
      _
    $region30: #{net2_forward.14} parent=5 // pred_check_branch
      %143 = sbr.rel (%p140) target = $region32
    $region31: #{net2_forward.14} parent=5 // pred_region
      %s144 = ssub.s32 %s9, 1
      %s145 = smul.u32 32, %s14
      %p146 = scmp.lt.s32.totalorder %s145, 63
      %s147 = scalar_select %p146, %s145, 63
      %s148 = smul.addr %s147, 2
      %s149 = smul.addr %s148, 4
      %s150 = scalar_lea.vmem %s0, %s149
      %p151 = pneg %p35
      %p152 = pneg %p32
      %p153 = pneg %p56
      %p154 = pneg %p53
      %p155 = pneg %p77
      %p156 = pneg %p74
      %p157 = pneg %p103
      %p158 = pneg %p100
      %s159 = smul.u32 32, %s14
      %p160 = scmp.lt.s32.totalorder %s159, 63
      %s161 = scalar_select %p160, %s159, 63
      %s162 = smul.addr %s161, 4
      %s163 = scalar_lea.vmem %s3, %s162
      %s164 = smul.u32 32, %s14
      %p165 = scmp.lt.s32.totalorder %s164, 63
      %s166 = scalar_select %p165, %s164, 63
      %s167 = smul.addr %s166, 2
      %s168 = smul.addr %s167, 4
      %s169 = scalar_lea.vmem %s0, %s168
      %s170 = smul.u32 32, %s14
      %s171 = smul.u32 32, %s14
      %p172 = scmp.lt.s32.totalorder %s171, 63
      %s173 = scalar_select %p172, %s171, 63
      %s174 = smul.addr %s173, 4
      %s175 = scalar_lea.vmem %s3, %s174
      %s176 = smul.u32 32, %s14
      %v178 = vld [vmem:[%s169] sm:$0xff]
      %v179 = vld [vmem:[%s169 + $0x8] sm:$0xff]
      %v180 = vld [vmem:[%s169 + $0x10] sm:$0xff]
      %v181 = vld [vmem:[%s169 + $0x18] sm:$0xff]
      %v182 = vld [vmem:[%s169 + $0x20] sm:$0xff]
      %v183 = vld [vmem:[%s169 + $0x28] sm:$0xff]
      %v184 = vld [vmem:[%s169 + $0x30] sm:$0xff]
      %v185 = vld [vmem:[%s169 + $0x38] sm:$0xff]
      %v186 = vld [vmem:[%s169 + $0x40] sm:$0xff]
      %v187 = vld [vmem:[%s169 + $0x48] sm:$0xff]
      %v188 = vld [vmem:[%s169 + $0x50] sm:$0xff]
      %v189 = vld [vmem:[%s169 + $0x58] sm:$0xff]
      %v190 = vld [vmem:[%s169 + $0x60] sm:$0xff]
      %v191 = vld [vmem:[%s169 + $0x68] sm:$0xff]
      %v192 = vld [vmem:[%s169 + $0x70] sm:$0xff]
      %v193 = vld [vmem:[%s169 + $0x78] sm:$0xff]
      %v194 = vld [vmem:[%s169 + $0x80] sm:$0xff]
      %v195 = vld [vmem:[%s169 + $0x88] sm:$0xff]
      %v196 = vld [vmem:[%s169 + $0x90] sm:$0xff]
      %v197 = vld [vmem:[%s169 + $0x98] sm:$0xff]
      %v198 = vld [vmem:[%s169 + $0xa0] sm:$0xff]
      %v199 = vld [vmem:[%s169 + $0xa8] sm:$0xff]
      %v200 = vld [vmem:[%s169 + $0xb0] sm:$0xff]
      %v201 = vld [vmem:[%s169 + $0xb8] sm:$0xff]
      %v202 = vld [vmem:[%s169 + $0xc0] sm:$0xff]
      %v203 = vld [vmem:[%s169 + $0xc8] sm:$0xff]
      %v204 = vld [vmem:[%s169 + $0xd0] sm:$0xff]
      %v205 = vld [vmem:[%s169 + $0xd8] sm:$0xff]
      %v206 = vld [vmem:[%s169 + $0xe0] sm:$0xff]
      %v207 = vld [vmem:[%s169 + $0xe8] sm:$0xff]
      %v208 = vld [vmem:[%s169 + $0xf0] sm:$0xff]
      %v209 = vld [vmem:[%s169 + $0xf8] sm:$0xff]
      %v210 = vld [vmem:[%s1] sm:$0xf]
      %v211 = vld [vmem:[%s1 + $0x4] sm:$0xf]
      %v212 = vld [vmem:[%s1 + $0x8] sm:$0xf]
      %v213 = vld [vmem:[%s1 + $0xc] sm:$0xf]
      %v214 = vld [vmem:[%s1 + $0x10] sm:$0xf]
      %v215 = vld [vmem:[%s1 + $0x14] sm:$0xf]
      %v216 = vld [vmem:[%s1 + $0x18] sm:$0xf]
      %v217 = vld [vmem:[%s1 + $0x1c] sm:$0xf]
      %v218 = vld [vmem:[%s1 + $0x20] sm:$0xf]
      %v219 = vld [vmem:[%s1 + $0x24] sm:$0xf]
      %v220 = vld [vmem:[%s1 + $0x28] sm:$0xf]
      %v221 = vld [vmem:[%s1 + $0x2c] sm:$0xf]
      %v222 = vld [vmem:[%s1 + $0x30] sm:$0xf]
      %v223 = vld [vmem:[%s1 + $0x34] sm:$0xf]
      %v224 = vld [vmem:[%s1 + $0x38] sm:$0xf]
      %v225 = vld [vmem:[%s1 + $0x3c] sm:$0xf]
      %v226 = vld [vmem:[%s1 + $0x40] sm:$0xf]
      %v227 = vld [vmem:[%s1 + $0x44] sm:$0xf]
      %v228 = vld [vmem:[%s2] sm:$0x1]
      %v230 = vperm.slane %v228, 0
      %v264 = vunpack.c.l.b16 %v178
      %v265 = vunpack.c.h.b16 %v178
      %v266 = vunpack.c.l.b16 %v179
      %v267 = vunpack.c.h.b16 %v179
      %v268 = vunpack.c.l.b16 %v180
      %v269 = vunpack.c.h.b16 %v180
      %v270 = vunpack.c.l.b16 %v181
      %v271 = vunpack.c.h.b16 %v181
      %v272 = vunpack.c.l.b16 %v182
      %v273 = vunpack.c.h.b16 %v182
      %v274 = vunpack.c.l.b16 %v183
      %v275 = vunpack.c.h.b16 %v183
      %v276 = vunpack.c.l.b16 %v184
      %v277 = vunpack.c.h.b16 %v184
      %v278 = vunpack.c.l.b16 %v185
      %v279 = vunpack.c.h.b16 %v185
      %v280 = vunpack.c.l.b16 %v186
      %v281 = vunpack.c.h.b16 %v186
      %v282 = vunpack.c.l.b16 %v187
      %v283 = vunpack.c.h.b16 %v187
      %v284 = vunpack.c.l.b16 %v188
      %v285 = vunpack.c.h.b16 %v188
      %v286 = vunpack.c.l.b16 %v189
      %v287 = vunpack.c.h.b16 %v189
      %v288 = vunpack.c.l.b16 %v190
      %v289 = vunpack.c.h.b16 %v190
      %v290 = vunpack.c.l.b16 %v191
      %v291 = vunpack.c.h.b16 %v191
      %v292 = vunpack.c.l.b16 %v192
      %v293 = vunpack.c.h.b16 %v192
      %v294 = vunpack.c.l.b16 %v193
      %v295 = vunpack.c.h.b16 %v193
      %v296 = vunpack.c.l.b16 %v194
      %v297 = vunpack.c.h.b16 %v194
      %v298 = vunpack.c.l.b16 %v195
      %v299 = vunpack.c.h.b16 %v195
      %v300 = vunpack.c.l.b16 %v196
      %v301 = vunpack.c.h.b16 %v196
      %v302 = vunpack.c.l.b16 %v197
      %v303 = vunpack.c.h.b16 %v197
      %v304 = vunpack.c.l.b16 %v198
      %v305 = vunpack.c.h.b16 %v198
      %v306 = vunpack.c.l.b16 %v199
      %v307 = vunpack.c.h.b16 %v199
      %v308 = vunpack.c.l.b16 %v200
      %v309 = vunpack.c.h.b16 %v200
      %v310 = vunpack.c.l.b16 %v201
      %v311 = vunpack.c.h.b16 %v201
      %v312 = vunpack.c.l.b16 %v202
      %v313 = vunpack.c.h.b16 %v202
      %v314 = vunpack.c.l.b16 %v203
      %v315 = vunpack.c.h.b16 %v203
      %v316 = vunpack.c.l.b16 %v204
      %v317 = vunpack.c.h.b16 %v204
      %v318 = vunpack.c.l.b16 %v205
      %v319 = vunpack.c.h.b16 %v205
      %v320 = vunpack.c.l.b16 %v206
      %v321 = vunpack.c.h.b16 %v206
      %v322 = vunpack.c.l.b16 %v207
      %v323 = vunpack.c.h.b16 %v207
      %v324 = vunpack.c.l.b16 %v208
      %v325 = vunpack.c.h.b16 %v208
      %v326 = vunpack.c.l.b16 %v209
      %v327 = vunpack.c.h.b16 %v209
      %v328 = vpack.c.b16 %v266, %v264
      %v329 = vpack.c.b16 %v267, %v265
      %v330 = vpack.c.b16 %v270, %v268
      %v331 = vpack.c.b16 %v271, %v269
      %v332 = vpack.c.b16 %v274, %v272
      %v333 = vpack.c.b16 %v275, %v273
      %v334 = vpack.c.b16 %v278, %v276
      %v335 = vpack.c.b16 %v279, %v277
      %v336 = vpack.c.b16 %v282, %v280
      %v337 = vpack.c.b16 %v283, %v281
      %v338 = vpack.c.b16 %v286, %v284
      %v339 = vpack.c.b16 %v287, %v285
      %v340 = vpack.c.b16 %v290, %v288
      %v341 = vpack.c.b16 %v291, %v289
      %v342 = vpack.c.b16 %v294, %v292
      %v343 = vpack.c.b16 %v295, %v293
      %v344 = vpack.c.b16 %v298, %v296
      %v345 = vpack.c.b16 %v299, %v297
      %v346 = vpack.c.b16 %v302, %v300
      %v347 = vpack.c.b16 %v303, %v301
      %v348 = vpack.c.b16 %v306, %v304
      %v349 = vpack.c.b16 %v307, %v305
      %v350 = vpack.c.b16 %v310, %v308
      %v351 = vpack.c.b16 %v311, %v309
      %v352 = vpack.c.b16 %v314, %v312
      %v353 = vpack.c.b16 %v315, %v313
      %v354 = vpack.c.b16 %v318, %v316
      %v355 = vpack.c.b16 %v319, %v317
      %v356 = vpack.c.b16 %v322, %v320
      %v357 = vpack.c.b16 %v323, %v321
      %v358 = vpack.c.b16 %v326, %v324
      %v359 = vpack.c.b16 %v327, %v325
      %v394 = vunpack.c.l.b16 %v210
      %v395 = vunpack.c.l.b16 %v211
      %v396 = vunpack.c.l.b16 %v212
      %v397 = vunpack.c.l.b16 %v213
      %v398 = vunpack.c.l.b16 %v214
      %v399 = vunpack.c.l.b16 %v215
      %v400 = vunpack.c.l.b16 %v216
      %v401 = vunpack.c.l.b16 %v217
      %v402 = vunpack.c.l.b16 %v218
      %v403 = vunpack.c.l.b16 %v219
      %v404 = vunpack.c.l.b16 %v220
      %v405 = vunpack.c.l.b16 %v221
      %v406 = vunpack.c.l.b16 %v222
      %v407 = vunpack.c.l.b16 %v223
      %v408 = vunpack.c.l.b16 %v224
      %v409 = vunpack.c.l.b16 %v225
      %v410 = vunpack.c.l.b16 %v226
      %v411 = vunpack.c.l.b16 %v227
      %v412 = vpack.c.b16 %v395, %v394
      %v413 = vpack.c.b16 %v397, %v396
      %v414 = vpack.c.b16 %v399, %v398
      %v415 = vpack.c.b16 %v401, %v400
      %v416 = vpack.c.b16 %v403, %v402
      %v417 = vpack.c.b16 %v405, %v404
      %v418 = vpack.c.b16 %v407, %v406
      %v419 = vpack.c.b16 %v409, %v408
      %v420 = vpack.c.b16 %v411, %v410
      %vm430 = vcmask 130048
      %v432 = vsel %vm430, %v329, 0
      %v435 = vsel %vm430, %v331, 0
      %v438 = vsel %vm430, %v333, 0
      %v441 = vsel %vm430, %v335, 0
      %v444 = vsel %vm430, %v337, 0
      %v447 = vsel %vm430, %v339, 0
      %v450 = vsel %vm430, %v341, 0
      %v453 = vsel %vm430, %v343, 0
      %v456 = vsel %vm430, %v345, 0
      %v459 = vsel %vm430, %v347, 0
      %v462 = vsel %vm430, %v349, 0
      %v465 = vsel %vm430, %v351, 0
      %v468 = vsel %vm430, %v353, 0
      %v471 = vsel %vm430, %v355, 0
      %v474 = vsel %vm430, %v357, 0
      %v477 = vsel %vm430, %v359, 0
      %479 = vmatpush.bf16.msra.mxu0 %v419
      %480 = vmatpush.bf16.msra.mxu0 %v418
      %481 = vmatpush.bf16.msra.mxu0 %v417
      %482 = vmatpush.bf16.msra.mxu0 %v416
      %483 = vmatpush.bf16.msra.mxu0 %v415
      %484 = vmatpush.bf16.msra.mxu0 %v414
      %485 = vmatpush.bf16.msra.mxu0 %v413
      %486 = vmatpush.bf16.msra.mxu0 %v412
      %487 = vmatmul.bf16.gmra.mxu0 %v328
      %v488 = vpop.f32.mrf.mxu0
      %v489 = vadd.f32 %v230, %v488
      %v490 = vpop.f32.mrf.mxu0
      %v491 = vadd.f32 %v230, %v490
      %492 = vmatmul.bf16.gmra.mxu0 %v330
      %v493 = vpop.f32.mrf.mxu0
      %v494 = vadd.f32 %v230, %v493
      %v495 = vpop.f32.mrf.mxu0
      %v496 = vadd.f32 %v230, %v495
      %497 = vmatmul.bf16.gmra.mxu0 %v332
      %v498 = vpop.f32.mrf.mxu0
      %v499 = vadd.f32 %v230, %v498
      %v500 = vpop.f32.mrf.mxu0
      %v501 = vadd.f32 %v230, %v500
      %502 = vmatmul.bf16.gmra.mxu0 %v334
      %v503 = vpop.f32.mrf.mxu0
      %v504 = vadd.f32 %v230, %v503
      %v505 = vpop.f32.mrf.mxu0
      %v506 = vadd.f32 %v230, %v505
      %507 = vmatmul.bf16.gmra.mxu0 %v336
      %v508 = vpop.f32.mrf.mxu0
      %v509 = vadd.f32 %v230, %v508
      %v510 = vpop.f32.mrf.mxu0
      %v511 = vadd.f32 %v230, %v510
      %512 = vmatmul.bf16.gmra.mxu0 %v338
      %v513 = vpop.f32.mrf.mxu0
      %v514 = vadd.f32 %v230, %v513
      %v515 = vpop.f32.mrf.mxu0
      %v516 = vadd.f32 %v230, %v515
      %517 = vmatmul.bf16.gmra.mxu0 %v340
      %v518 = vpop.f32.mrf.mxu0
      %v519 = vadd.f32 %v230, %v518
      %v520 = vpop.f32.mrf.mxu0
      %v521 = vadd.f32 %v230, %v520
      %522 = vmatmul.bf16.gmra.mxu0 %v342
      %v523 = vpop.f32.mrf.mxu0
      %v524 = vadd.f32 %v230, %v523
      %v525 = vpop.f32.mrf.mxu0
      %v526 = vadd.f32 %v230, %v525
      %527 = vmatmul.bf16.gmra.mxu0 %v344
      %v528 = vpop.f32.mrf.mxu0
      %v529 = vadd.f32 %v230, %v528
      %v530 = vpop.f32.mrf.mxu0
      %v531 = vadd.f32 %v230, %v530
      %532 = vmatmul.bf16.gmra.mxu0 %v346
      %v533 = vpop.f32.mrf.mxu0
      %v534 = vadd.f32 %v230, %v533
      %v535 = vpop.f32.mrf.mxu0
      %v536 = vadd.f32 %v230, %v535
      %537 = vmatmul.bf16.gmra.mxu0 %v348
      %v538 = vpop.f32.mrf.mxu0
      %v539 = vadd.f32 %v230, %v538
      %v540 = vpop.f32.mrf.mxu0
      %v541 = vadd.f32 %v230, %v540
      %542 = vmatmul.bf16.gmra.mxu0 %v350
      %v543 = vpop.f32.mrf.mxu0
      %v544 = vadd.f32 %v230, %v543
      %v545 = vpop.f32.mrf.mxu0
      %v546 = vadd.f32 %v230, %v545
      %547 = vmatmul.bf16.gmra.mxu0 %v352
      %v548 = vpop.f32.mrf.mxu0
      %v549 = vadd.f32 %v230, %v548
      %v550 = vpop.f32.mrf.mxu0
      %v551 = vadd.f32 %v230, %v550
      %552 = vmatmul.bf16.gmra.mxu0 %v354
      %v553 = vpop.f32.mrf.mxu0
      %v554 = vadd.f32 %v230, %v553
      %v555 = vpop.f32.mrf.mxu0
      %v556 = vadd.f32 %v230, %v555
      %557 = vmatmul.bf16.gmra.mxu0 %v356
      %v558 = vpop.f32.mrf.mxu0
      %v559 = vadd.f32 %v230, %v558
      %v560 = vpop.f32.mrf.mxu0
      %v561 = vadd.f32 %v230, %v560
      %562 = vmatmul.bf16.gmra.mxu0 %v358
      %v563 = vpop.f32.mrf.mxu0
      %v564 = vadd.f32 %v230, %v563
      %v565 = vpop.f32.mrf.mxu0
      %v566 = vadd.f32 %v230, %v565
      %567 = vdwg.mxu0
      %568 = vmatpush.bf16.msra.mxu0 0
      %569 = vmatpush.bf16.msra.mxu0 0
      %570 = vmatpush.bf16.msra.mxu0 0
      %571 = vmatpush.bf16.msra.mxu0 0
      %572 = vmatpush.bf16.msra.mxu0 0
      %573 = vmatpush.bf16.msra.mxu0 0
      %574 = vmatpush.bf16.msra.mxu0 0
      %575 = vmatpush.bf16.msra.mxu0 %v420
      %576 = vmatmul.bf16.gmra.mxu0 %v432
      %v577 = vpop.f32.mrf.mxu0
      %v578 = vadd.f32 %v489, %v577
      %v579 = vpop.f32.mrf.mxu0
      %v580 = vadd.f32 %v491, %v579
      %581 = vmatmul.bf16.gmra.mxu0 %v435
      %v582 = vpop.f32.mrf.mxu0
      %v583 = vadd.f32 %v494, %v582
      %v584 = vpop.f32.mrf.mxu0
      %v585 = vadd.f32 %v496, %v584
      %586 = vmatmul.bf16.gmra.mxu0 %v438
      %v587 = vpop.f32.mrf.mxu0
      %v588 = vadd.f32 %v499, %v587
      %v589 = vpop.f32.mrf.mxu0
      %v590 = vadd.f32 %v501, %v589
      %591 = vmatmul.bf16.gmra.mxu0 %v441
      %v592 = vpop.f32.mrf.mxu0
      %v593 = vadd.f32 %v504, %v592
      %v594 = vpop.f32.mrf.mxu0
      %v595 = vadd.f32 %v506, %v594
      %596 = vmatmul.bf16.gmra.mxu0 %v444
      %v597 = vpop.f32.mrf.mxu0
      %v598 = vadd.f32 %v509, %v597
      %v599 = vpop.f32.mrf.mxu0
      %v600 = vadd.f32 %v511, %v599
      %601 = vmatmul.bf16.gmra.mxu0 %v447
      %v602 = vpop.f32.mrf.mxu0
      %v603 = vadd.f32 %v514, %v602
      %v604 = vpop.f32.mrf.mxu0
      %v605 = vadd.f32 %v516, %v604
      %606 = vmatmul.bf16.gmra.mxu0 %v450
      %v607 = vpop.f32.mrf.mxu0
      %v608 = vadd.f32 %v519, %v607
      %v609 = vpop.f32.mrf.mxu0
      %v610 = vadd.f32 %v521, %v609
      %611 = vmatmul.bf16.gmra.mxu0 %v453
      %v612 = vpop.f32.mrf.mxu0
      %v613 = vadd.f32 %v524, %v612
      %v614 = vpop.f32.mrf.mxu0
      %v615 = vadd.f32 %v526, %v614
      %616 = vmatmul.bf16.gmra.mxu0 %v456
      %v617 = vpop.f32.mrf.mxu0
      %v618 = vadd.f32 %v529, %v617
      %v619 = vpop.f32.mrf.mxu0
      %v620 = vadd.f32 %v531, %v619
      %621 = vmatmul.bf16.gmra.mxu0 %v459
      %v622 = vpop.f32.mrf.mxu0
      %v623 = vadd.f32 %v534, %v622
      %v624 = vpop.f32.mrf.mxu0
      %v625 = vadd.f32 %v536, %v624
      %626 = vmatmul.bf16.gmra.mxu0 %v462
      %v627 = vpop.f32.mrf.mxu0
      %v628 = vadd.f32 %v539, %v627
      %v629 = vpop.f32.mrf.mxu0
      %v630 = vadd.f32 %v541, %v629
      %631 = vmatmul.bf16.gmra.mxu0 %v465
      %v632 = vpop.f32.mrf.mxu0
      %v633 = vadd.f32 %v544, %v632
      %v634 = vpop.f32.mrf.mxu0
      %v635 = vadd.f32 %v546, %v634
      %636 = vmatmul.bf16.gmra.mxu0 %v468
      %v637 = vpop.f32.mrf.mxu0
      %v638 = vadd.f32 %v549, %v637
      %v639 = vpop.f32.mrf.mxu0
      %v640 = vadd.f32 %v551, %v639
      %641 = vmatmul.bf16.gmra.mxu0 %v471
      %v642 = vpop.f32.mrf.mxu0
      %v643 = vadd.f32 %v554, %v642
      %v644 = vpop.f32.mrf.mxu0
      %v645 = vadd.f32 %v556, %v644
      %646 = vmatmul.bf16.gmra.mxu0 %v474
      %v647 = vpop.f32.mrf.mxu0
      %v648 = vadd.f32 %v559, %v647
      %v649 = vpop.f32.mrf.mxu0
      %v650 = vadd.f32 %v561, %v649
      %651 = vmatmul.bf16.gmra.mxu0 %v477
      %v652 = vpop.f32.mrf.mxu0
      %v653 = vadd.f32 %v564, %v652
      %v654 = vpop.f32.mrf.mxu0
      %v655 = vadd.f32 %v566, %v654
      %656 = vdwg.mxu0
      %vm657 = vcmp.ge.f32.partialorder %v578, 0.0
      %vm658 = vcmp.ge.f32.partialorder %v580, 0.0
      %vm659 = vcmp.ge.f32.partialorder %v583, 0.0
      %vm660 = vcmp.ge.f32.partialorder %v585, 0.0
      %vm661 = vcmp.ge.f32.partialorder %v588, 0.0
      %vm662 = vcmp.ge.f32.partialorder %v590, 0.0
      %vm663 = vcmp.ge.f32.partialorder %v593, 0.0
      %vm664 = vcmp.ge.f32.partialorder %v595, 0.0
      %vm665 = vcmp.ge.f32.partialorder %v598, 0.0
      %vm666 = vcmp.ge.f32.partialorder %v600, 0.0
      %vm667 = vcmp.ge.f32.partialorder %v603, 0.0
      %vm668 = vcmp.ge.f32.partialorder %v605, 0.0
      %vm669 = vcmp.ge.f32.partialorder %v608, 0.0
      %vm670 = vcmp.ge.f32.partialorder %v610, 0.0
      %vm671 = vcmp.ge.f32.partialorder %v613, 0.0
      %vm672 = vcmp.ge.f32.partialorder %v615, 0.0
      %vm673 = vcmp.ge.f32.partialorder %v618, 0.0
      %vm674 = vcmp.ge.f32.partialorder %v620, 0.0
      %vm675 = vcmp.ge.f32.partialorder %v623, 0.0
      %vm676 = vcmp.ge.f32.partialorder %v625, 0.0
      %vm677 = vcmp.ge.f32.partialorder %v628, 0.0
      %vm678 = vcmp.ge.f32.partialorder %v630, 0.0
      %vm679 = vcmp.ge.f32.partialorder %v633, 0.0
      %vm680 = vcmp.ge.f32.partialorder %v635, 0.0
      %vm681 = vcmp.ge.f32.partialorder %v638, 0.0
      %vm682 = vcmp.ge.f32.partialorder %v640, 0.0
      %vm683 = vcmp.ge.f32.partialorder %v643, 0.0
      %vm684 = vcmp.ge.f32.partialorder %v645, 0.0
      %vm685 = vcmp.ge.f32.partialorder %v648, 0.0
      %vm686 = vcmp.ge.f32.partialorder %v650, 0.0
      %vm687 = vcmp.ge.f32.partialorder %v653, 0.0
      %vm688 = vcmp.ge.f32.partialorder %v655, 0.0
      %v689 = vmul.f32 %v578, 0.25
      %v690 = vmul.f32 %v580, 0.25
      %v691 = vmul.f32 %v583, 0.25
      %v692 = vmul.f32 %v585, 0.25
      %v693 = vmul.f32 %v588, 0.25
      %v694 = vmul.f32 %v590, 0.25
      %v695 = vmul.f32 %v593, 0.25
      %v696 = vmul.f32 %v595, 0.25
      %v697 = vmul.f32 %v598, 0.25
      %v698 = vmul.f32 %v600, 0.25
      %v699 = vmul.f32 %v603, 0.25
      %v700 = vmul.f32 %v605, 0.25
      %v701 = vmul.f32 %v608, 0.25
      %v702 = vmul.f32 %v610, 0.25
      %v703 = vmul.f32 %v613, 0.25
      %v704 = vmul.f32 %v615, 0.25
      %v705 = vmul.f32 %v618, 0.25
      %v706 = vmul.f32 %v620, 0.25
      %v707 = vmul.f32 %v623, 0.25
      %v708 = vmul.f32 %v625, 0.25
      %v709 = vmul.f32 %v628, 0.25
      %v710 = vmul.f32 %v630, 0.25
      %v711 = vmul.f32 %v633, 0.25
      %v712 = vmul.f32 %v635, 0.25
      %v713 = vmul.f32 %v638, 0.25
      %v714 = vmul.f32 %v640, 0.25
      %v715 = vmul.f32 %v643, 0.25
      %v716 = vmul.f32 %v645, 0.25
      %v717 = vmul.f32 %v648, 0.25
      %v718 = vmul.f32 %v650, 0.25
      %v719 = vmul.f32 %v653, 0.25
      %v720 = vmul.f32 %v655, 0.25
      %v721 = vsel %vm657, %v578, %v689
      %v722 = vsel %vm658, %v580, %v690
      %v723 = vsel %vm659, %v583, %v691
      %v724 = vsel %vm660, %v585, %v692
      %v725 = vsel %vm661, %v588, %v693
      %v726 = vsel %vm662, %v590, %v694
      %v727 = vsel %vm663, %v593, %v695
      %v728 = vsel %vm664, %v595, %v696
      %v729 = vsel %vm665, %v598, %v697
      %v730 = vsel %vm666, %v600, %v698
      %v731 = vsel %vm667, %v603, %v699
      %v732 = vsel %vm668, %v605, %v700
      %v733 = vsel %vm669, %v608, %v701
      %v734 = vsel %vm670, %v610, %v702
      %v735 = vsel %vm671, %v613, %v703
      %v736 = vsel %vm672, %v615, %v704
      %v737 = vsel %vm673, %v618, %v705
      %v738 = vsel %vm674, %v620, %v706
      %v739 = vsel %vm675, %v623, %v707
      %v740 = vsel %vm676, %v625, %v708
      %v741 = vsel %vm677, %v628, %v709
      %v742 = vsel %vm678, %v630, %v710
      %v743 = vsel %vm679, %v633, %v711
      %v744 = vsel %vm680, %v635, %v712
      %v745 = vsel %vm681, %v638, %v713
      %v746 = vsel %vm682, %v640, %v714
      %v747 = vsel %vm683, %v643, %v715
      %v748 = vsel %vm684, %v645, %v716
      %v749 = vsel %vm685, %v648, %v717
      %v750 = vsel %vm686, %v650, %v718
      %v751 = vsel %vm687, %v653, %v719
      %v752 = vsel %vm688, %v655, %v720
      %v753 = vpack.c.bf16 %v721, %v721
      %v754 = vpack.c.bf16 %v722, %v722
      %v755 = vpack.c.bf16 %v723, %v723
      %v756 = vpack.c.bf16 %v724, %v724
      %v757 = vpack.c.bf16 %v725, %v725
      %v758 = vpack.c.bf16 %v726, %v726
      %v759 = vpack.c.bf16 %v727, %v727
      %v760 = vpack.c.bf16 %v728, %v728
      %v761 = vpack.c.bf16 %v729, %v729
      %v762 = vpack.c.bf16 %v730, %v730
      %v763 = vpack.c.bf16 %v731, %v731
      %v764 = vpack.c.bf16 %v732, %v732
      %v765 = vpack.c.bf16 %v733, %v733
      %v766 = vpack.c.bf16 %v734, %v734
      %v767 = vpack.c.bf16 %v735, %v735
      %v768 = vpack.c.bf16 %v736, %v736
      %v769 = vpack.c.bf16 %v737, %v737
      %v770 = vpack.c.bf16 %v738, %v738
      %v771 = vpack.c.bf16 %v739, %v739
      %v772 = vpack.c.bf16 %v740, %v740
      %v773 = vpack.c.bf16 %v741, %v741
      %v774 = vpack.c.bf16 %v742, %v742
      %v775 = vpack.c.bf16 %v743, %v743
      %v776 = vpack.c.bf16 %v744, %v744
      %v777 = vpack.c.bf16 %v745, %v745
      %v778 = vpack.c.bf16 %v746, %v746
      %v779 = vpack.c.bf16 %v747, %v747
      %v780 = vpack.c.bf16 %v748, %v748
      %v781 = vpack.c.bf16 %v749, %v749
      %v782 = vpack.c.bf16 %v750, %v750
      %v783 = vpack.c.bf16 %v751, %v751
      %v784 = vpack.c.bf16 %v752, %v752
      %vm785 = vcmask 519168
      %786 = vst.msk [vmem:[%s175] sm:$0xf] %vm785, %v753
      %787 = vst.msk [vmem:[%s175 + $0x4] sm:$0xf] %vm785, %v754
      %788 = vst.msk [vmem:[%s175 + $0x8] sm:$0xf] %vm785, %v755
      %789 = vst.msk [vmem:[%s175 + $0xc] sm:$0xf] %vm785, %v756
      %790 = vst.msk [vmem:[%s175 + $0x10] sm:$0xf] %vm785, %v757
      %791 = vst.msk [vmem:[%s175 + $0x14] sm:$0xf] %vm785, %v758
      %792 = vst.msk [vmem:[%s175 + $0x18] sm:$0xf] %vm785, %v759
      %793 = vst.msk [vmem:[%s175 + $0x1c] sm:$0xf] %vm785, %v760
      %794 = vst.msk [vmem:[%s175 + $0x20] sm:$0xf] %vm785, %v761
      %795 = vst.msk [vmem:[%s175 + $0x24] sm:$0xf] %vm785, %v762
      %796 = vst.msk [vmem:[%s175 + $0x28] sm:$0xf] %vm785, %v763
      %797 = vst.msk [vmem:[%s175 + $0x2c] sm:$0xf] %vm785, %v764
      %798 = vst.msk [vmem:[%s175 + $0x30] sm:$0xf] %vm785, %v765
      %799 = vst.msk [vmem:[%s175 + $0x34] sm:$0xf] %vm785, %v766
      %800 = vst.msk [vmem:[%s175 + $0x38] sm:$0xf] %vm785, %v767
      %801 = vst.msk [vmem:[%s175 + $0x3c] sm:$0xf] %vm785, %v768
      %802 = vst.msk [vmem:[%s175 + $0x40] sm:$0xf] %vm785, %v769
      %803 = vst.msk [vmem:[%s175 + $0x44] sm:$0xf] %vm785, %v770
      %804 = vst.msk [vmem:[%s175 + $0x48] sm:$0xf] %vm785, %v771
      %805 = vst.msk [vmem:[%s175 + $0x4c] sm:$0xf] %vm785, %v772
      %806 = vst.msk [vmem:[%s175 + $0x50] sm:$0xf] %vm785, %v773
      %807 = vst.msk [vmem:[%s175 + $0x54] sm:$0xf] %vm785, %v774
      %808 = vst.msk [vmem:[%s175 + $0x58] sm:$0xf] %vm785, %v775
      %809 = vst.msk [vmem:[%s175 + $0x5c] sm:$0xf] %vm785, %v776
      %810 = vst.msk [vmem:[%s175 + $0x60] sm:$0xf] %vm785, %v777
      %811 = vst.msk [vmem:[%s175 + $0x64] sm:$0xf] %vm785, %v778
      %812 = vst.msk [vmem:[%s175 + $0x68] sm:$0xf] %vm785, %v779
      %813 = vst.msk [vmem:[%s175 + $0x6c] sm:$0xf] %vm785, %v780
      %814 = vst.msk [vmem:[%s175 + $0x70] sm:$0xf] %vm785, %v781
      %815 = vst.msk [vmem:[%s175 + $0x74] sm:$0xf] %vm785, %v782
      %816 = vst.msk [vmem:[%s175 + $0x78] sm:$0xf] %vm785, %v783
      %817 = vst.msk [vmem:[%s175 + $0x7c] sm:$0xf] %vm785, %v784
      %s818 = smul.u32 32, %s14
      %p819 = scmp.lt.s32.totalorder %s818, 63
      %s820 = scalar_select %p819, %s818, 63
      %s821 = smul.addr %s820, 4
      %s822 = scalar_lea.vmem %s3, %s821
      // Predicated region
      $region33: #{net2_forward.14} parent=31 // pred_check
        %p823 = pneg %p100
      $region34: #{net2_forward.14} parent=31 // pred_check_branch
        %825 = sbr.rel (%p823) target = $region36
      $region35: #{net2_forward.14} parent=31 // pred_region
        %s826 = smul.u32 32, %s14
      $region36: #{net2_forward.14} parent=31 // pred_fallthru
        _
    $region32: #{net2_forward.14} parent=5 // pred_fallthru
      _
    %p827 = scmp.le.s32.totalorder 2, %s9
    // Predicated region
    $region37: #{net2_forward.14} parent=5 // pred_check
      %p828 = pneg %p827
    $region38: #{net2_forward.14} parent=5 // pred_check_branch
      %830 = sbr.rel (%p828) target = $region40
    $region39: #{net2_forward.14} parent=5 // pred_region
      %s831 = ssub.s32 %s9, 2
      // Predicated region
      $region41: #{net2_forward.14} parent=39 // pred_check
        %p832 = pneg %p106
      $region42: #{net2_forward.14} parent=39 // pred_check_branch
        %834 = sbr.rel (%p832) target = $region44
      $region43: #{net2_forward.14} parent=39 // pred_region
        %s835 = smul.u32 32, %s15
        %p836 = scmp.lt.s32.totalorder %s835, 63
        %s837 = scalar_select %p836, %s835, 63
        %s838 = smul.addr %s837, 4
        %s839 = scalar_lea.vmem %s3, %s838
      $region44: #{net2_forward.14} parent=39 // pred_fallthru
        _
    $region40: #{net2_forward.14} parent=5 // pred_fallthru
      _
  $region6: #{net2_forward.14} parent=0 // loop_footer
    %s13 = sadd.s32 1, %s9
  $region7: #{net2_forward.14} parent=0 // loop_footer_branch
    %8 = sbr.rel target = $region3
  $region8: #{net2_forward.14} parent=0 // loop_exit
    _

// kernel: net2_forward.15
$region0: #{net2_forward.15}
  #allocation0 [shape = 'u32[]', space=smem, size = 0x4, offset = 0x4, fixed_abs, tag = 'smem constant byte address 0x4 - core index']
  #allocation1 [shape = 'u32[72,128]{1,0:T(1,128)}', space=vmem, size = 0x9000, scoped, tag = 'internal scratch']
  %s0 = inlined_call_operand.vmem [shape: bf16[512,576], index: 0, kind: input, shape index: {}]
  %s1 = inlined_call_operand.vmem [shape: bf16[576,16], index: 1, kind: input, shape index: {}]
  %s2 = inlined_call_operand.vmem [shape: f32[1,16], index: 2, kind: input, shape index: {}]
  %s3 = inlined_call_operand.vmem [shape: bf16[512,16], index: 3, kind: input, shape index: {}]
  %s4 = inlined_call_operand.vmem [shape: bf16[512,16], index: 4, kind: output, shape index: {}]
  %s5 = sld [smem:[#allocation0]]
  $region49: #{net2_forward.15} parent=0
    _
  %s7 = ssub.s32 1, %s5
  %s8 = scalar_select 0, %s7, %s5
  loop: start=0, step=1, limit=4
  $region2: #{net2_forward.15} parent=0 // loop_pre_header
    _
  $region3: #{net2_forward.15} parent=0 // loop_header
    %s10 = sphi 0, %s14
    %p11 = scmp.ge.s32.totalorder %s10, 4
    %s20 = sphi 0, %s22
    %s23 = sphi 0, %s20
    %s24 = sphi 0, %s23
    %s40 = sphi 0, %s24
    %s44 = sphi 0, %s44
    %s46 = sphi 0, %s44
    %s47 = sphi 0, %s46
    %s61 = sphi 0, %s47
    %s65 = sphi 0, %s65
    %s67 = sphi 0, %s65
    %s68 = sphi 0, %s67
    %s82 = sphi 0, %s68
    %s88 = sphi 0, %s90
    %s91 = sphi 0, %s88
    %s92 = sphi 0, %s91
    %s108 = sphi 0, %s92
    %s114 = sphi 0, %s116
    %s117 = sphi 0, %s114
    %s118 = sphi 0, %s117
    %s134 = sphi 0, %s118
  $region4: #{net2_forward.15} parent=0 // loop_header_branch
    %13 = sbr.rel (%p11) target = $region8
  $region5: #{net2_forward.15} parent=0 // loop_body
    %s15 = ssub.s32 %s10, 1
    %s16 = ssub.s32 %s10, 2
    %s17 = sadd.s32 %s10, 1
    %s18 = ssub.s32 %s10, %s17
    %p19 = scmp.eq.s32.totalorder %s18, 0
    %s21 = sadd.s32 %s20, 1
    %s22 = scalar_select %p19, %s20, %s21
    %p25 = pneg %p19
    %p26 = scmp.eq.s32.totalorder %s10, 1
    %p27 = por %p25, %p26
    %p28 = scmp.ne.s32.totalorder %s20, %s23
    %p29 = scmp.eq.s32.totalorder %s10, 0
    %p30 = por %p28, %p29
    %p31 = scmp.ne.s32.totalorder %s20, %s23
    %p32 = scmp.eq.s32.totalorder %s15, 1
    %p33 = por %p31, %p32
    %p34 = scmp.ne.s32.totalorder %s23, %s24
    %p35 = scmp.eq.s32.totalorder %s15, 0
    %p36 = por %p34, %p35
    %p37 = scmp.ne.s32.totalorder %s23, %s24
    %p38 = scmp.eq.s32.totalorder %s16, 1
    %p39 = por %p37, %p38
    %p41 = scmp.ne.s32.totalorder %s24, %s40
    %p42 = scmp.eq.s32.totalorder %s16, 0
    %p43 = por %p41, %p42
    %s45 = sadd.s32 %s44, 1
    %p48 = scmp.eq.s32.totalorder %s10, 1
    %p49 = scmp.ne.s32.totalorder %s44, %s46
    %p50 = scmp.eq.s32.totalorder %s10, 0
    %p51 = por %p49, %p50
    %p52 = scmp.ne.s32.totalorder %s44, %s46
    %p53 = scmp.eq.s32.totalorder %s15, 1
    %p54 = por %p52, %p53
    %p55 = scmp.ne.s32.totalorder %s46, %s47
    %p56 = scmp.eq.s32.totalorder %s15, 0
    %p57 = por %p55, %p56
    %p58 = scmp.ne.s32.totalorder %s46, %s47
    %p59 = scmp.eq.s32.totalorder %s16, 1
    %p60 = por %p58, %p59
    %p62 = scmp.ne.s32.totalorder %s47, %s61
    %p63 = scmp.eq.s32.totalorder %s16, 0
    %p64 = por %p62, %p63
    %s66 = sadd.s32 %s65, 1
    %p69 = scmp.eq.s32.totalorder %s10, 1
    %p70 = scmp.ne.s32.totalorder %s65, %s67
    %p71 = scmp.eq.s32.totalorder %s10, 0
    %p72 = por %p70, %p71
    %p73 = scmp.ne.s32.totalorder %s65, %s67
    %p74 = scmp.eq.s32.totalorder %s15, 1
    %p75 = por %p73, %p74
    %p76 = scmp.ne.s32.totalorder %s67, %s68
    %p77 = scmp.eq.s32.totalorder %s15, 0
    %p78 = por %p76, %p77
    %p79 = scmp.ne.s32.totalorder %s67, %s68
    %p80 = scmp.eq.s32.totalorder %s16, 1
    %p81 = por %p79, %p80
    %p83 = scmp.ne.s32.totalorder %s68, %s82
    %p84 = scmp.eq.s32.totalorder %s16, 0
    %p85 = por %p83, %p84
    %s86 = ssub.s32 %s10, %s17
    %p87 = scmp.eq.s32.totalorder %s86, 0
    %s89 = sadd.s32 %s88, 1
    %s90 = scalar_select %p87, %s88, %s89
    %p93 = pneg %p87
    %p94 = scmp.eq.s32.totalorder %s10, 1
    %p95 = por %p93, %p94
    %p96 = scmp.ne.s32.totalorder %s88, %s91
    %p97 = scmp.eq.s32.totalorder %s10, 0
    %p98 = por %p96, %p97
    %p99 = scmp.ne.s32.totalorder %s88, %s91
    %p100 = scmp.eq.s32.totalorder %s15, 1
    %p101 = por %p99, %p100
    %p102 = scmp.ne.s32.totalorder %s91, %s92
    %p103 = scmp.eq.s32.totalorder %s15, 0
    %p104 = por %p102, %p103
    %p105 = scmp.ne.s32.totalorder %s91, %s92
    %p106 = scmp.eq.s32.totalorder %s16, 1
    %p107 = por %p105, %p106
    %p109 = scmp.ne.s32.totalorder %s92, %s108
    %p110 = scmp.eq.s32.totalorder %s16, 0
    %p111 = por %p109, %p110
    %s112 = ssub.s32 %s10, %s17
    %p113 = scmp.eq.s32.totalorder %s112, 0
    %s115 = sadd.s32 %s114, 1
    %s116 = scalar_select %p113, %s114, %s115
    %p119 = pneg %p113
    %p120 = scmp.eq.s32.totalorder %s10, 1
    %p121 = por %p119, %p120
    %p122 = scmp.ne.s32.totalorder %s114, %s117
    %p123 = scmp.eq.s32.totalorder %s10, 0
    %p124 = por %p122, %p123
    %p125 = scmp.ne.s32.totalorder %s114, %s117
    %p126 = scmp.eq.s32.totalorder %s15, 1
    %p127 = por %p125, %p126
    %p128 = scmp.ne.s32.totalorder %s117, %s118
    %p129 = scmp.eq.s32.totalorder %s15, 0
    %p130 = por %p128, %p129
    %p131 = scmp.ne.s32.totalorder %s117, %s118
    %p132 = scmp.eq.s32.totalorder %s16, 1
    %p133 = por %p131, %p132
    %p135 = scmp.ne.s32.totalorder %s118, %s134
    %p136 = scmp.eq.s32.totalorder %s16, 0
    %p137 = por %p135, %p136
    %p138 = scmp.le.s32.totalorder 1, %s10
    %p139 = scmp.lt.s32.totalorder %s10, 3
    %p140 = pnand %p138, %p139
    %p141 = pneg %p140
    // Predicated region
    $region9: #{net2_forward.15} parent=5 // pred_check
      _
    $region10: #{net2_forward.15} parent=5 // pred_check_branch
      %143 = sbr.rel (%p140) target = $region12
    $region11: #{net2_forward.15} parent=5 // pred_region
      %s144 = ssub.s32 %s10, 1
      // Predicated region
      $region13: #{net2_forward.15} parent=11 // pred_check
        %p145 = pneg %p57
      $region14: #{net2_forward.15} parent=11 // pred_check_branch
        %147 = sbr.rel (%p145) target = $region16
      $region15: #{net2_forward.15} parent=11 // pred_region
        _
      $region16: #{net2_forward.15} parent=11 // pred_fallthru
        _
      // Predicated region
      $region17: #{net2_forward.15} parent=11 // pred_check
        %p148 = pneg %p78
      $region18: #{net2_forward.15} parent=11 // pred_check_branch
        %150 = sbr.rel (%p148) target = $region20
      $region19: #{net2_forward.15} parent=11 // pred_region
        _
      $region20: #{net2_forward.15} parent=11 // pred_fallthru
        _
    $region12: #{net2_forward.15} parent=5 // pred_fallthru
      _
    %p151 = scmp.lt.s32.totalorder %s10, 2
    // Predicated region
    $region21: #{net2_forward.15} parent=5 // pred_check
      %p152 = pneg %p151
    $region22: #{net2_forward.15} parent=5 // pred_check_branch
      %154 = sbr.rel (%p152) target = $region24
    $region23: #{net2_forward.15} parent=5 // pred_region
      // Predicated region
      $region25: #{net2_forward.15} parent=23 // pred_check
        %p155 = pneg %p30
      $region26: #{net2_forward.15} parent=23 // pred_check_branch
        %157 = sbr.rel (%p155) target = $region28
      $region27: #{net2_forward.15} parent=23 // pred_region
        %s158 = smul.u32 32, %s10
        %p159 = scmp.lt.s32.totalorder %s158, 63
        %s160 = scalar_select %p159, %s158, 63
        %s161 = smul.addr %s160, 5
        %s162 = smul.addr %s161, 4
        %s163 = scalar_lea.vmem %s0, %s162
        %s164 = smul.u32 32, %s10
      $region28: #{net2_forward.15} parent=23 // pred_fallthru
        _
      // Predicated region
      $region29: #{net2_forward.15} parent=23 // pred_check
        %p165 = pneg %p98
      $region30: #{net2_forward.15} parent=23 // pred_check_branch
        %167 = sbr.rel (%p165) target = $region32
      $region31: #{net2_forward.15} parent=23 // pred_region
        %s168 = smul.u32 32, %s10
        %p169 = scmp.lt.s32.totalorder %s168, 63
        %s170 = scalar_select %p169, %s168, 63
        %s171 = smul.addr %s170, 4
        %s172 = scalar_lea.vmem %s3, %s171
        %s173 = smul.u32 32, %s10
      $region32: #{net2_forward.15} parent=23 // pred_fallthru
        _
    $region24: #{net2_forward.15} parent=5 // pred_fallthru
      _
    %p174 = scmp.le.s32.totalorder 1, %s10
    %p175 = scmp.lt.s32.totalorder %s10, 3
    %p176 = pnand %p174, %p175
    %p177 = pneg %p176
    // Predicated region
    $region33: #{net2_forward.15} parent=5 // pred_check
      _
    $region34: #{net2_forward.15} parent=5 // pred_check_branch
      %179 = sbr.rel (%p176) target = $region36
    $region35: #{net2_forward.15} parent=5 // pred_region
      %s180 = ssub.s32 %s10, 1
      %s181 = smul.u32 32, %s15
      %p182 = scmp.lt.s32.totalorder %s181, 63
      %s183 = scalar_select %p182, %s181, 63
      %s184 = smul.addr %s183, 5
      %s185 = smul.addr %s184, 4
      %s186 = scalar_lea.vmem %s0, %s185
      %p187 = pneg %p36
      %p188 = pneg %p33
      %p189 = pneg %p57
      %p190 = pneg %p54
      %p191 = pneg %p78
      %p192 = pneg %p75
      %s193 = smul.u32 32, %s15
      %p194 = scmp.lt.s32.totalorder %s193, 63
      %s195 = scalar_select %p194, %s193, 63
      %s196 = smul.addr %s195, 4
      %s197 = scalar_lea.vmem %s3, %s196
      %p198 = pneg %p104
      %p199 = pneg %p101
      %p200 = pneg %p130
      %p201 = pneg %p127
      %s202 = smul.u32 32, %s15
      %p203 = scmp.lt.s32.totalorder %s202, 63
      %s204 = scalar_select %p203, %s202, 63
      %s205 = smul.addr %s204, 4
      %s206 = scalar_lea.vmem %s4, %s205
      %s207 = smul.u32 32, %s15
      %p208 = scmp.lt.s32.totalorder %s207, 63
      %s209 = scalar_select %p208, %s207, 63
      %s210 = smul.addr %s209, 5
      %s211 = smul.addr %s210, 4
      %s212 = scalar_lea.vmem %s0, %s211
      %s213 = smul.u32 32, %s15
      %s214 = smul.u32 32, %s15
      %p215 = scmp.lt.s32.totalorder %s214, 63
      %s216 = scalar_select %p215, %s214, 63
      %s217 = smul.addr %s216, 4
      %s218 = scalar_lea.vmem %s3, %s217
      %s219 = smul.u32 32, %s15
      %s220 = smul.u32 32, %s15
      %p221 = scmp.lt.s32.totalorder %s220, 63
      %s222 = scalar_select %p221, %s220, 63
      %s223 = smul.addr %s222, 4
      %s224 = scalar_lea.vmem %s4, %s223
      %s225 = smul.u32 32, %s15
      %v227 = vld [vmem:[%s212] sm:$0xff]
      %v228 = vld [vmem:[%s212 + $0x8] sm:$0xff]
      %v229 = vld [vmem:[%s212 + $0x10] sm:$0xf]
      %v230 = vld [vmem:[%s212 + $0x14] sm:$0xff]
      %v231 = vld [vmem:[%s212 + $0x1c] sm:$0xff]
      %v232 = vld [vmem:[%s212 + $0x24] sm:$0xf]
      %v233 = vld [vmem:[%s212 + $0x28] sm:$0xff]
      %v234 = vld [vmem:[%s212 + $0x30] sm:$0xff]
      %v235 = vld [vmem:[%s212 + $0x38] sm:$0xf]
      %v236 = vld [vmem:[%s212 + $0x3c] sm:$0xff]
      %v237 = vld [vmem:[%s212 + $0x44] sm:$0xff]
      %v238 = vld [vmem:[%s212 + $0x4c] sm:$0xf]
      %v239 = vld [vmem:[%s212 + $0x50] sm:$0xff]
      %v240 = vld [vmem:[%s212 + $0x58] sm:$0xff]
      %v241 = vld [vmem:[%s212 + $0x60] sm:$0xf]
      %v242 = vld [vmem:[%s212 + $0x64] sm:$0xff]
      %v243 = vld [vmem:[%s212 + $0x6c] sm:$0xff]
      %v244 = vld [vmem:[%s212 + $0x74] sm:$0xf]
      %v245 = vld [vmem:[%s212 + $0x78] sm:$0xff]
      %v246 = vld [vmem:[%s212 + $0x80] sm:$0xff]
      %v247 = vld [vmem:[%s212 + $0x88] sm:$0xf]
      %v248 = vld [vmem:[%s212 + $0x8c] sm:$0xff]
      %v249 = vld [vmem:[%s212 + $0x94] sm:$0xff]
      %v250 = vld [vmem:[%s212 + $0x9c] sm:$0xf]
      %v251 = vld [vmem:[%s212 + $0xa0] sm:$0xff]
      %v252 = vld [vmem:[%s212 + $0xa8] sm:$0xff]
      %v253 = vld [vmem:[%s212 + $0xb0] sm:$0xf]
      %v254 = vld [vmem:[%s212 + $0xb4] sm:$0xff]
      %v255 = vld [vmem:[%s212 + $0xbc] sm:$0xff]
      %v256 = vld [vmem:[%s212 + $0xc4] sm:$0xf]
      %v257 = vld [vmem:[%s212 + $0xc8] sm:$0xff]
      %v258 = vld [vmem:[%s212 + $0xd0] sm:$0xff]
      %v259 = vld [vmem:[%s212 + $0xd8] sm:$0xf]
      %v260 = vld [vmem:[%s212 + $0xdc] sm:$0xff]
      %v261 = vld [vmem:[%s212 + $0xe4] sm:$0xff]
      %v262 = vld [vmem:[%s212 + $0xec] sm:$0xf]
      %v263 = vld [vmem:[%s212 + $0xf0] sm:$0xff]
      %v264 = vld [vmem:[%s212 + $0xf8] sm:$0xff]
      %v265 = vld [vmem:[%s212 + $0x100] sm:$0xf]
      %v266 = vld [vmem:[%s212 + $0x104] sm:$0xff]
      %v267 = vld [vmem:[%s212 + $0x10c] sm:$0xff]
      %v268 = vld [vmem:[%s212 + $0x114] sm:$0xf]
      %v269 = vld [vmem:[%s212 + $0x118] sm:$0xff]
      %v270 = vld [vmem:[%s212 + $0x120] sm:$0xff]
      %v271 = vld [vmem:[%s212 + $0x128] sm:$0xf]
      %v272 = vld [vmem:[%s212 + $0x12c] sm:$0xff]
      %v273 = vld [vmem:[%s212 + $0x134] sm:$0xff]
      %v274 = vld [vmem:[%s212 + $0x13c] sm:$0xf]
      %v275 = vld [vmem:[%s212 + $0x140] sm:$0xff]
      %v276 = vld [vmem:[%s212 + $0x148] sm:$0xff]
      %v277 = vld [vmem:[%s212 + $0x150] sm:$0xf]
      %v278 = vld [vmem:[%s212 + $0x154] sm:$0xff]
      %v279 = vld [vmem:[%s212 + $0x15c] sm:$0xff]
      %v280 = vld [vmem:[%s212 + $0x164] sm:$0xf]
      %v281 = vld [vmem:[%s212 + $0x168] sm:$0xff]
      %v282 = vld [vmem:[%s212 + $0x170] sm:$0xff]
      %v283 = vld [vmem:[%s212 + $0x178] sm:$0xf]
      %v284 = vld [vmem:[%s212 + $0x17c] sm:$0xff]
      %v285 = vld [vmem:[%s212 + $0x184] sm:$0xff]
      %v286 = vld [vmem:[%s212 + $0x18c] sm:$0xf]
      %v287 = vld [vmem:[%s212 + $0x190] sm:$0xff]
      %v288 = vld [vmem:[%s212 + $0x198] sm:$0xff]
      %v289 = vld [vmem:[%s212 + $0x1a0] sm:$0xf]
      %v290 = vld [vmem:[%s212 + $0x1a4] sm:$0xff]
      %v291 = vld [vmem:[%s212 + $0x1ac] sm:$0xff]
      %v292 = vld [vmem:[%s212 + $0x1b4] sm:$0xf]
      %v293 = vld [vmem:[%s212 + $0x1b8] sm:$0xff]
      %v294 = vld [vmem:[%s212 + $0x1c0] sm:$0xff]
      %v295 = vld [vmem:[%s212 + $0x1c8] sm:$0xf]
      %v296 = vld [vmem:[%s212 + $0x1cc] sm:$0xff]
      %v297 = vld [vmem:[%s212 + $0x1d4] sm:$0xff]
      %v298 = vld [vmem:[%s212 + $0x1dc] sm:$0xf]
      %v299 = vld [vmem:[%s212 + $0x1e0] sm:$0xff]
      %v300 = vld [vmem:[%s212 + $0x1e8] sm:$0xff]
      %v301 = vld [vmem:[%s212 + $0x1f0] sm:$0xf]
      %v302 = vld [vmem:[%s212 + $0x1f4] sm:$0xff]
      %v303 = vld [vmem:[%s212 + $0x1fc] sm:$0xff]
      %v304 = vld [vmem:[%s212 + $0x204] sm:$0xf]
      %v305 = vld [vmem:[%s212 + $0x208] sm:$0xff]
      %v306 = vld [vmem:[%s212 + $0x210] sm:$0xff]
      %v307 = vld [vmem:[%s212 + $0x218] sm:$0xf]
      %v308 = vld [vmem:[%s212 + $0x21c] sm:$0xff]
      %v309 = vld [vmem:[%s212 + $0x224] sm:$0xff]
      %v310 = vld [vmem:[%s212 + $0x22c] sm:$0xf]
      %v311 = vld [vmem:[%s212 + $0x230] sm:$0xff]
      %v312 = vld [vmem:[%s212 + $0x238] sm:$0xff]
      %v313 = vld [vmem:[%s212 + $0x240] sm:$0xf]
      %v314 = vld [vmem:[%s212 + $0x244] sm:$0xff]
      %v315 = vld [vmem:[%s212 + $0x24c] sm:$0xff]
      %v316 = vld [vmem:[%s212 + $0x254] sm:$0xf]
      %v317 = vld [vmem:[%s212 + $0x258] sm:$0xff]
      %v318 = vld [vmem:[%s212 + $0x260] sm:$0xff]
      %v319 = vld [vmem:[%s212 + $0x268] sm:$0xf]
      %v320 = vld [vmem:[%s212 + $0x26c] sm:$0xff]
      %v321 = vld [vmem:[%s212 + $0x274] sm:$0xff]
      %v322 = vld [vmem:[%s212 + $0x27c] sm:$0xf]
      %v323 = vld [vmem:[%s1] sm:$0xf]
      %v324 = vld [vmem:[%s1 + $0x4] sm:$0xf]
      %v325 = vld [vmem:[%s1 + $0x8] sm:$0xf]
      %v326 = vld [vmem:[%s1 + $0xc] sm:$0xf]
      %v327 = vld [vmem:[%s1 + $0x10] sm:$0xf]
      %v328 = vld [vmem:[%s1 + $0x14] sm:$0xf]
      %v329 = vld [vmem:[%s1 + $0x18] sm:$0xf]
      %v330 = vld [vmem:[%s1 + $0x1c] sm:$0xf]
      %v331 = vld [vmem:[%s1 + $0x20] sm:$0xf]
      %v332 = vld [vmem:[%s1 + $0x24] sm:$0xf]
      %v333 = vld [vmem:[%s1 + $0x28] sm:$0xf]
      %v334 = vld [vmem:[%s1 + $0x2c] sm:$0xf]
      %v335 = vld [vmem:[%s1 + $0x30] sm:$0xf]
      %v336 = vld [vmem:[%s1 + $0x34] sm:$0xf]
      %v337 = vld [vmem:[%s1 + $0x38] sm:$0xf]
      %v338 = vld [vmem:[%s1 + $0x3c] sm:$0xf]
      %v339 = vld [vmem:[%s1 + $0x40] sm:$0xf]
      %v340 = vld [vmem:[%s1 + $0x44] sm:$0xf]
      %v341 = vld [vmem:[%s1 + $0x48] sm:$0xf]
      %v342 = vld [vmem:[%s1 + $0x4c] sm:$0xf]
      %v343 = vld [vmem:[%s1 + $0x50] sm:$0xf]
      %v344 = vld [vmem:[%s1 + $0x54] sm:$0xf]
      %v345 = vld [vmem:[%s1 + $0x58] sm:$0xf]
      %v346 = vld [vmem:[%s1 + $0x5c] sm:$0xf]
      %v347 = vld [vmem:[%s1 + $0x60] sm:$0xf]
      %v348 = vld [vmem:[%s1 + $0x64] sm:$0xf]
      %v349 = vld [vmem:[%s1 + $0x68] sm:$0xf]
      %v350 = vld [vmem:[%s1 + $0x6c] sm:$0xf]
      %v351 = vld [vmem:[%s1 + $0x70] sm:$0xf]
      %v352 = vld [vmem:[%s1 + $0x74] sm:$0xf]
      %v353 = vld [vmem:[%s1 + $0x78] sm:$0xf]
      %v354 = vld [vmem:[%s1 + $0x7c] sm:$0xf]
      %v355 = vld [vmem:[%s1 + $0x80] sm:$0xf]
      %v356 = vld [vmem:[%s1 + $0x84] sm:$0xf]
      %v357 = vld [vmem:[%s1 + $0x88] sm:$0xf]
      %v358 = vld [vmem:[%s1 + $0x8c] sm:$0xf]
      %v359 = vld [vmem:[%s1 + $0x90] sm:$0xf]
      %v360 = vld [vmem:[%s1 + $0x94] sm:$0xf]
      %v361 = vld [vmem:[%s1 + $0x98] sm:$0xf]
      %v362 = vld [vmem:[%s1 + $0x9c] sm:$0xf]
      %v363 = vld [vmem:[%s1 + $0xa0] sm:$0xf]
      %v364 = vld [vmem:[%s1 + $0xa4] sm:$0xf]
      %v365 = vld [vmem:[%s1 + $0xa8] sm:$0xf]
      %v366 = vld [vmem:[%s1 + $0xac] sm:$0xf]
      %v367 = vld [vmem:[%s1 + $0xb0] sm:$0xf]
      %v368 = vld [vmem:[%s1 + $0xb4] sm:$0xf]
      %v369 = vld [vmem:[%s1 + $0xb8] sm:$0xf]
      %v370 = vld [vmem:[%s1 + $0xbc] sm:$0xf]
      %v371 = vld [vmem:[%s1 + $0xc0] sm:$0xf]
      %v372 = vld [vmem:[%s1 + $0xc4] sm:$0xf]
      %v373 = vld [vmem:[%s1 + $0xc8] sm:$0xf]
      %v374 = vld [vmem:[%s1 + $0xcc] sm:$0xf]
      %v375 = vld [vmem:[%s1 + $0xd0] sm:$0xf]
      %v376 = vld [vmem:[%s1 + $0xd4] sm:$0xf]
      %v377 = vld [vmem:[%s1 + $0xd8] sm:$0xf]
      %v378 = vld [vmem:[%s1 + $0xdc] sm:$0xf]
      %v379 = vld [vmem:[%s1 + $0xe0] sm:$0xf]
      %v380 = vld [vmem:[%s1 + $0xe4] sm:$0xf]
      %v381 = vld [vmem:[%s1 + $0xe8] sm:$0xf]
      %v382 = vld [vmem:[%s1 + $0xec] sm:$0xf]
      %v383 = vld [vmem:[%s1 + $0xf0] sm:$0xf]
      %v384 = vld [vmem:[%s1 + $0xf4] sm:$0xf]
      %v385 = vld [vmem:[%s1 + $0xf8] sm:$0xf]
      %v386 = vld [vmem:[%s1 + $0xfc] sm:$0xf]
      %v387 = vld [vmem:[%s1 + $0x100] sm:$0xf]
      %v388 = vld [vmem:[%s1 + $0x104] sm:$0xf]
      %v389 = vld [vmem:[%s1 + $0x108] sm:$0xf]
      %v390 = vld [vmem:[%s1 + $0x10c] sm:$0xf]
      %v391 = vld [vmem:[%s1 + $0x110] sm:$0xf]
      %v392 = vld [vmem:[%s1 + $0x114] sm:$0xf]
      %v393 = vld [vmem:[%s1 + $0x118] sm:$0xf]
      %v394 = vld [vmem:[%s1 + $0x11c] sm:$0xf]
      %v395 = vld [vmem:[%s2] sm:$0x1]
      %v397 = vperm.slane %v395, 0
      %v495 = vunpack.c.l.b16 %v227
      %v496 = vunpack.c.h.b16 %v227
      %v497 = vunpack.c.l.b16 %v228
      %v498 = vunpack.c.h.b16 %v228
      %v499 = vunpack.c.l.b16 %v229
      %v500 = vunpack.c.l.b16 %v230
      %v501 = vunpack.c.h.b16 %v230
      %v502 = vunpack.c.l.b16 %v231
      %v503 = vunpack.c.h.b16 %v231
      %v504 = vunpack.c.l.b16 %v232
      %v505 = vunpack.c.l.b16 %v233
      %v506 = vunpack.c.h.b16 %v233
      %v507 = vunpack.c.l.b16 %v234
      %v508 = vunpack.c.h.b16 %v234
      %v509 = vunpack.c.l.b16 %v235
      %v510 = vunpack.c.l.b16 %v236
      %v511 = vunpack.c.h.b16 %v236
      %v512 = vunpack.c.l.b16 %v237
      %v513 = vunpack.c.h.b16 %v237
      %v514 = vunpack.c.l.b16 %v238
      %v515 = vunpack.c.l.b16 %v239
      %v516 = vunpack.c.h.b16 %v239
      %v517 = vunpack.c.l.b16 %v240
      %v518 = vunpack.c.h.b16 %v240
      %v519 = vunpack.c.l.b16 %v241
      %v520 = vunpack.c.l.b16 %v242
      %v521 = vunpack.c.h.b16 %v242
      %v522 = vunpack.c.l.b16 %v243
      %v523 = vunpack.c.h.b16 %v243
      %v524 = vunpack.c.l.b16 %v244
      %v525 = vunpack.c.l.b16 %v245
      %v526 = vunpack.c.h.b16 %v245
      %v527 = vunpack.c.l.b16 %v246
      %v528 = vunpack.c.h.b16 %v246
      %v529 = vunpack.c.l.b16 %v247
      %v530 = vunpack.c.l.b16 %v248
      %v531 = vunpack.c.h.b16 %v248
      %v532 = vunpack.c.l.b16 %v249
      %v533 = vunpack.c.h.b16 %v249
      %v534 = vunpack.c.l.b16 %v250
      %v535 = vunpack.c.l.b16 %v251
      %v536 = vunpack.c.h.b16 %v251
      %v537 = vunpack.c.l.b16 %v252
      %v538 = vunpack.c.h.b16 %v252
      %v539 = vunpack.c.l.b16 %v253
      %v540 = vunpack.c.l.b16 %v254
      %v541 = vunpack.c.h.b16 %v254
      %v542 = vunpack.c.l.b16 %v255
      %v543 = vunpack.c.h.b16 %v255
      %v544 = vunpack.c.l.b16 %v256
      %v545 = vunpack.c.l.b16 %v257
      %v546 = vunpack.c.h.b16 %v257
      %v547 = vunpack.c.l.b16 %v258
      %v548 = vunpack.c.h.b16 %v258
      %v549 = vunpack.c.l.b16 %v259
      %v550 = vunpack.c.l.b16 %v260
      %v551 = vunpack.c.h.b16 %v260
      %v552 = vunpack.c.l.b16 %v261
      %v553 = vunpack.c.h.b16 %v261
      %v554 = vunpack.c.l.b16 %v262
      %v555 = vunpack.c.l.b16 %v263
      %v556 = vunpack.c.h.b16 %v263
      %v557 = vunpack.c.l.b16 %v264
      %v558 = vunpack.c.h.b16 %v264
      %v559 = vunpack.c.l.b16 %v265
      %v560 = vunpack.c.l.b16 %v266
      %v561 = vunpack.c.h.b16 %v266
      %v562 = vunpack.c.l.b16 %v267
      %v563 = vunpack.c.h.b16 %v267
      %v564 = vunpack.c.l.b16 %v268
      %v565 = vunpack.c.l.b16 %v269
      %v566 = vunpack.c.h.b16 %v269
      %v567 = vunpack.c.l.b16 %v270
      %v568 = vunpack.c.h.b16 %v270
      %v569 = vunpack.c.l.b16 %v271
      %v570 = vunpack.c.l.b16 %v272
      %v571 = vunpack.c.h.b16 %v272
      %v572 = vunpack.c.l.b16 %v273
      %v573 = vunpack.c.h.b16 %v273
      %v574 = vunpack.c.l.b16 %v274
      %v575 = vunpack.c.l.b16 %v275
      %v576 = vunpack.c.h.b16 %v275
      %v577 = vunpack.c.l.b16 %v276
      %v578 = vunpack.c.h.b16 %v276
      %v579 = vunpack.c.l.b16 %v277
      %v580 = vunpack.c.l.b16 %v278
      %v581 = vunpack.c.h.b16 %v278
      %v582 = vunpack.c.l.b16 %v279
      %v583 = vunpack.c.h.b16 %v279
      %v584 = vunpack.c.l.b16 %v280
      %v585 = vunpack.c.l.b16 %v281
      %v586 = vunpack.c.h.b16 %v281
      %v587 = vunpack.c.l.b16 %v282
      %v588 = vunpack.c.h.b16 %v282
      %v589 = vunpack.c.l.b16 %v283
      %v590 = vunpack.c.l.b16 %v284
      %v591 = vunpack.c.h.b16 %v284
      %v592 = vunpack.c.l.b16 %v285
      %v593 = vunpack.c.h.b16 %v285
      %v594 = vunpack.c.l.b16 %v286
      %v595 = vunpack.c.l.b16 %v287
      %v596 = vunpack.c.h.b16 %v287
      %v597 = vunpack.c.l.b16 %v288
      %v598 = vunpack.c.h.b16 %v288
      %v599 = vunpack.c.l.b16 %v289
      %v600 = vunpack.c.l.b16 %v290
      %v601 = vunpack.c.h.b16 %v290
      %v602 = vunpack.c.l.b16 %v291
      %v603 = vunpack.c.h.b16 %v291
      %v604 = vunpack.c.l.b16 %v292
      %v605 = vunpack.c.l.b16 %v293
      %v606 = vunpack.c.h.b16 %v293
      %v607 = vunpack.c.l.b16 %v294
      %v608 = vunpack.c.h.b16 %v294
      %v609 = vunpack.c.l.b16 %v295
      %v610 = vunpack.c.l.b16 %v296
      %v611 = vunpack.c.h.b16 %v296
      %v612 = vunpack.c.l.b16 %v297
      %v613 = vunpack.c.h.b16 %v297
      %v614 = vunpack.c.l.b16 %v298
      %v615 = vunpack.c.l.b16 %v299
      %v616 = vunpack.c.h.b16 %v299
      %v617 = vunpack.c.l.b16 %v300
      %v618 = vunpack.c.h.b16 %v300
      %v619 = vunpack.c.l.b16 %v301
      %v620 = vunpack.c.l.b16 %v302
      %v621 = vunpack.c.h.b16 %v302
      %v622 = vunpack.c.l.b16 %v303
      %v623 = vunpack.c.h.b16 %v303
      %v624 = vunpack.c.l.b16 %v304
      %v625 = vunpack.c.l.b16 %v305
      %v626 = vunpack.c.h.b16 %v305
      %v627 = vunpack.c.l.b16 %v306
      %v628 = vunpack.c.h.b16 %v306
      %v629 = vunpack.c.l.b16 %v307
      %v630 = vunpack.c.l.b16 %v308
      %v631 = vunpack.c.h.b16 %v308
      %v632 = vunpack.c.l.b16 %v309
      %v633 = vunpack.c.h.b16 %v309
      %v634 = vunpack.c.l.b16 %v310
      %v635 = vunpack.c.l.b16 %v311
      %v636 = vunpack.c.h.b16 %v311
      %v637 = vunpack.c.l.b16 %v312
      %v638 = vunpack.c.h.b16 %v312
      %v639 = vunpack.c.l.b16 %v313
      %v640 = vunpack.c.l.b16 %v314
      %v641 = vunpack.c.h.b16 %v314
      %v642 = vunpack.c.l.b16 %v315
      %v643 = vunpack.c.h.b16 %v315
      %v644 = vunpack.c.l.b16 %v316
      %v645 = vunpack.c.l.b16 %v317
      %v646 = vunpack.c.h.b16 %v317
      %v647 = vunpack.c.l.b16 %v318
      %v648 = vunpack.c.h.b16 %v318
      %v649 = vunpack.c.l.b16 %v319
      %v650 = vunpack.c.l.b16 %v320
      %v651 = vunpack.c.h.b16 %v320
      %v652 = vunpack.c.l.b16 %v321
      %v653 = vunpack.c.h.b16 %v321
      %v654 = vunpack.c.l.b16 %v322
      %v655 = vpack.c.b16 %v500, %v495
      %v656 = vpack.c.b16 %v501, %v496
      %v657 = vpack.c.b16 %v502, %v497
      %v658 = vpack.c.b16 %v503, %v498
      %v659 = vpack.c.b16 %v504, %v499
      %v660 = vpack.c.b16 %v510, %v505
      %v661 = vpack.c.b16 %v511, %v506
      %v662 = vpack.c.b16 %v512, %v507
      %v663 = vpack.c.b16 %v513, %v508
      %v664 = vpack.c.b16 %v514, %v509
      %v665 = vpack.c.b16 %v520, %v515
      %v666 = vpack.c.b16 %v521, %v516
      %v667 = vpack.c.b16 %v522, %v517
      %v668 = vpack.c.b16 %v523, %v518
      %v669 = vpack.c.b16 %v524, %v519
      %v670 = vpack.c.b16 %v530, %v525
      %v671 = vpack.c.b16 %v531, %v526
      %v672 = vpack.c.b16 %v532, %v527
      %v673 = vpack.c.b16 %v533, %v528
      %v674 = vpack.c.b16 %v534, %v529
      %v675 = vpack.c.b16 %v540, %v535
      %v676 = vpack.c.b16 %v541, %v536
      %v677 = vpack.c.b16 %v542, %v537
      %v678 = vpack.c.b16 %v543, %v538
      %v679 = vpack.c.b16 %v544, %v539
      %v680 = vpack.c.b16 %v550, %v545
      %v681 = vpack.c.b16 %v551, %v546
      %v682 = vpack.c.b16 %v552, %v547
      %v683 = vpack.c.b16 %v553, %v548
      %v684 = vpack.c.b16 %v554, %v549
      %v685 = vpack.c.b16 %v560, %v555
      %v686 = vpack.c.b16 %v561, %v556
      %v687 = vpack.c.b16 %v562, %v557
      %v688 = vpack.c.b16 %v563, %v558
      %v689 = vpack.c.b16 %v564, %v559
      %v690 = vpack.c.b16 %v570, %v565
      %v691 = vpack.c.b16 %v571, %v566
      %v692 = vpack.c.b16 %v572, %v567
      %v693 = vpack.c.b16 %v573, %v568
      %v694 = vpack.c.b16 %v574, %v569
      %v695 = vpack.c.b16 %v580, %v575
      %v696 = vpack.c.b16 %v581, %v576
      %v697 = vpack.c.b16 %v582, %v577
      %v698 = vpack.c.b16 %v583, %v578
      %v699 = vpack.c.b16 %v584, %v579
      %v700 = vpack.c.b16 %v590, %v585
      %v701 = vpack.c.b16 %v591, %v586
      %v702 = vpack.c.b16 %v592, %v587
      %v703 = vpack.c.b16 %v593, %v588
      %v704 = vpack.c.b16 %v594, %v589
      %v705 = vpack.c.b16 %v600, %v595
      %v706 = vpack.c.b16 %v601, %v596
      %v707 = vpack.c.b16 %v602, %v597
      %v708 = vpack.c.b16 %v603, %v598
      %v709 = vpack.c.b16 %v604, %v599
      %v710 = vpack.c.b16 %v610, %v605
      %v711 = vpack.c.b16 %v611, %v606
      %v712 = vpack.c.b16 %v612, %v607
      %v713 = vpack.c.b16 %v613, %v608
      %v714 = vpack.c.b16 %v614, %v609
      %v715 = vpack.c.b16 %v620, %v615
      %v716 = vpack.c.b16 %v621, %v616
      %v717 = vpack.c.b16 %v622, %v617
      %v718 = vpack.c.b16 %v623, %v618
      %v719 = vpack.c.b16 %v624, %v619
      %v720 = vpack.c.b16 %v630, %v625
      %v721 = vpack.c.b16 %v631, %v626
      %v722 = vpack.c.b16 %v632, %v627
      %v723 = vpack.c.b16 %v633, %v628
      %v724 = vpack.c.b16 %v634, %v629
      %v725 = vpack.c.b16 %v640, %v635
      %v726 = vpack.c.b16 %v641, %v636
      %v727 = vpack.c.b16 %v642, %v637
      %v728 = vpack.c.b16 %v643, %v638
      %v729 = vpack.c.b16 %v644, %v639
      %v730 = vpack.c.b16 %v650, %v645
      %v731 = vpack.c.b16 %v651, %v646
      %v732 = vpack.c.b16 %v652, %v647
      %v733 = vpack.c.b16 %v653, %v648
      %v734 = vpack.c.b16 %v654, %v649
      %v871 = vunpack.c.l.b16 %v323
      %v872 = vunpack.c.l.b16 %v324
      %v873 = vunpack.c.l.b16 %v325
      %v874 = vunpack.c.l.b16 %v326
      %v875 = vunpack.c.l.b16 %v327
      %v876 = vunpack.c.l.b16 %v328
      %v877 = vunpack.c.l.b16 %v329
      %v878 = vunpack.c.l.b16 %v330
      %v879 = vunpack.c.l.b16 %v331
      %v880 = vunpack.c.l.b16 %v332
      %v881 = vunpack.c.l.b16 %v333
      %v882 = vunpack.c.l.b16 %v334
      %v883 = vunpack.c.l.b16 %v335
      %v884 = vunpack.c.l.b16 %v336
      %v885 = vunpack.c.l.b16 %v337
      %v886 = vunpack.c.l.b16 %v338
      %v887 = vunpack.c.l.b16 %v339
      %v888 = vunpack.c.l.b16 %v340
      %v889 = vunpack.c.l.b16 %v341
      %v890 = vunpack.c.l.b16 %v342
      %v891 = vunpack.c.l.b16 %v343
      %v892 = vunpack.c.l.b16 %v344
      %v893 = vunpack.c.l.b16 %v345
      %v894 = vunpack.c.l.b16 %v346
      %v895 = vunpack.c.l.b16 %v347
      %v896 = vunpack.c.l.b16 %v348
      %v897 = vunpack.c.l.b16 %v349
      %v898 = vunpack.c.l.b16 %v350
      %v899 = vunpack.c.l.b16 %v351
      %v900 = vunpack.c.l.b16 %v352
      %v901 = vunpack.c.l.b16 %v353
      %v902 = vunpack.c.l.b16 %v354
      %v903 = vunpack.c.l.b16 %v355
      %v904 = vunpack.c.l.b16 %v356
      %v905 = vunpack.c.l.b16 %v357
      %v906 = vunpack.c.l.b16 %v358
      %v907 = vunpack.c.l.b16 %v359
      %v908 = vunpack.c.l.b16 %v360
      %v909 = vunpack.c.l.b16 %v361
      %v910 = vunpack.c.l.b16 %v362
      %v911 = vunpack.c.l.b16 %v363
      %v912 = vunpack.c.l.b16 %v364
      %v913 = vunpack.c.l.b16 %v365
      %v914 = vunpack.c.l.b16 %v366
      %v915 = vunpack.c.l.b16 %v367
      %v916 = vunpack.c.l.b16 %v368
      %v917 = vunpack.c.l.b16 %v369
      %v918 = vunpack.c.l.b16 %v370
      %v919 = vunpack.c.l.b16 %v371
      %v920 = vunpack.c.l.b16 %v372
      %v921 = vunpack.c.l.b16 %v373
      %v922 = vunpack.c.l.b16 %v374
      %v923 = vunpack.c.l.b16 %v375
      %v924 = vunpack.c.l.b16 %v376
      %v925 = vunpack.c.l.b16 %v377
      %v926 = vunpack.c.l.b16 %v378
      %v927 = vunpack.c.l.b16 %v379
      %v928 = vunpack.c.l.b16 %v380
      %v929 = vunpack.c.l.b16 %v381
      %v930 = vunpack.c.l.b16 %v382
      %v931 = vunpack.c.l.b16 %v383
      %v932 = vunpack.c.l.b16 %v384
      %v933 = vunpack.c.l.b16 %v385
      %v934 = vunpack.c.l.b16 %v386
      %v935 = vunpack.c.l.b16 %v387
      %v936 = vunpack.c.l.b16 %v388
      %v937 = vunpack.c.l.b16 %v389
      %v938 = vunpack.c.l.b16 %v390
      %v939 = vunpack.c.l.b16 %v391
      %v940 = vunpack.c.l.b16 %v392
      %v941 = vunpack.c.l.b16 %v393
      %v942 = vunpack.c.l.b16 %v394
      %v943 = vpack.c.b16 %v872, %v871
      %v944 = vpack.c.b16 %v874, %v873
      %v945 = vpack.c.b16 %v876, %v875
      %v946 = vpack.c.b16 %v878, %v877
      %v947 = vpack.c.b16 %v880, %v879
      %v948 = vpack.c.b16 %v882, %v881
      %v949 = vpack.c.b16 %v884, %v883
      %v950 = vpack.c.b16 %v886, %v885
      %v951 = vpack.c.b16 %v888, %v887
      %v952 = vpack.c.b16 %v890, %v889
      %v953 = vpack.c.b16 %v892, %v891
      %v954 = vpack.c.b16 %v894, %v893
      %v955 = vpack.c.b16 %v896, %v895
      %v956 = vpack.c.b16 %v898, %v897
      %v957 = vpack.c.b16 %v900, %v899
      %v958 = vpack.c.b16 %v902, %v901
      %v959 = vpack.c.b16 %v904, %v903
      %v960 = vpack.c.b16 %v906, %v905
      %v961 = vpack.c.b16 %v908, %v907
      %v962 = vpack.c.b16 %v910, %v909
      %v963 = vpack.c.b16 %v912, %v911
      %v964 = vpack.c.b16 %v914, %v913
      %v965 = vpack.c.b16 %v916, %v915
      %v966 = vpack.c.b16 %v918, %v917
      %v967 = vpack.c.b16 %v920, %v919
      %v968 = vpack.c.b16 %v922, %v921
      %v969 = vpack.c.b16 %v924, %v923
      %v970 = vpack.c.b16 %v926, %v925
      %v971 = vpack.c.b16 %v928, %v927
      %v972 = vpack.c.b16 %v930, %v929
      %v973 = vpack.c.b16 %v932, %v931
      %v974 = vpack.c.b16 %v934, %v933
      %v975 = vpack.c.b16 %v936, %v935
      %v976 = vpack.c.b16 %v938, %v937
      %v977 = vpack.c.b16 %v940, %v939
      %v978 = vpack.c.b16 %v942, %v941
      %vm1015 = vcmask 523264
      %v1017 = vsel %vm1015, %v659, 0
      %v1020 = vsel %vm1015, %v664, 0
      %v1023 = vsel %vm1015, %v669, 0
      %v1026 = vsel %vm1015, %v674, 0
      %v1029 = vsel %vm1015, %v679, 0
      %v1032 = vsel %vm1015, %v684, 0
      %v1035 = vsel %vm1015, %v689, 0
      %v1038 = vsel %vm1015, %v694, 0
      %v1041 = vsel %vm1015, %v699, 0
      %v1044 = vsel %vm1015, %v704, 0
      %v1047 = vsel %vm1015, %v709, 0
      %v1050 = vsel %vm1015, %v714, 0
      %v1053 = vsel %vm1015, %v719, 0
      %v1056 = vsel %vm1015, %v724, 0
      %v1059 = vsel %vm1015, %v729, 0
      %v1062 = vsel %vm1015, %v734, 0
      %1064 = vmatpush.bf16.msra.mxu0 %v950
      %1065 = vmatpush.bf16.msra.mxu0 %v949
      %1066 = vmatpush.bf16.msra.mxu0 %v948
      %1067 = vmatpush.bf16.msra.mxu0 %v947
      %1068 = vmatpush.bf16.msra.mxu0 %v946
      %1069 = vmatpush.bf16.msra.mxu0 %v945
      %1070 = vmatpush.bf16.msra.mxu0 %v944
      %1071 = vmatpush.bf16.msra.mxu0 %v943
      %1072 = vmatmul.bf16.gmra.mxu0 %v655
      %v1073 = vpop.f32.mrf.mxu0
      %v1074 = vadd.f32 %v397, %v1073
      %v1075 = vpop.f32.mrf.mxu0
      %v1076 = vadd.f32 %v397, %v1075
      %1077 = vmatmul.bf16.gmra.mxu0 %v660
      %v1078 = vpop.f32.mrf.mxu0
      %v1079 = vadd.f32 %v397, %v1078
      %v1080 = vpop.f32.mrf.mxu0
      %v1081 = vadd.f32 %v397, %v1080
      %1082 = vmatmul.bf16.gmra.mxu0 %v665
      %v1083 = vpop.f32.mrf.mxu0
      %v1084 = vadd.f32 %v397, %v1083
      %v1085 = vpop.f32.mrf.mxu0
      %v1086 = vadd.f32 %v397, %v1085
      %1087 = vmatmul.bf16.gmra.mxu0 %v670
      %v1088 = vpop.f32.mrf.mxu0
      %v1089 = vadd.f32 %v397, %v1088
      %v1090 = vpop.f32.mrf.mxu0
      %v1091 = vadd.f32 %v397, %v1090
      %1092 = vmatmul.bf16.gmra.mxu0 %v675
      %v1093 = vpop.f32.mrf.mxu0
      %v1094 = vadd.f32 %v397, %v1093
      %v1095 = vpop.f32.mrf.mxu0
      %v1096 = vadd.f32 %v397, %v1095
      %1097 = vmatmul.bf16.gmra.mxu0 %v680
      %v1098 = vpop.f32.mrf.mxu0
      %v1099 = vadd.f32 %v397, %v1098
      %v1100 = vpop.f32.mrf.mxu0
      %v1101 = vadd.f32 %v397, %v1100
      %1102 = vmatmul.bf16.gmra.mxu0 %v685
      %v1103 = vpop.f32.mrf.mxu0
      %v1104 = vadd.f32 %v397, %v1103
      %v1105 = vpop.f32.mrf.mxu0
      %v1106 = vadd.f32 %v397, %v1105
      %1107 = vmatmul.bf16.gmra.mxu0 %v690
      %v1108 = vpop.f32.mrf.mxu0
      %v1109 = vadd.f32 %v397, %v1108
      %v1110 = vpop.f32.mrf.mxu0
      %v1111 = vadd.f32 %v397, %v1110
      %1112 = vmatmul.bf16.gmra.mxu0 %v695
      %v1113 = vpop.f32.mrf.mxu0
      %v1114 = vadd.f32 %v397, %v1113
      %v1115 = vpop.f32.mrf.mxu0
      %v1116 = vadd.f32 %v397, %v1115
      %1117 = vmatmul.bf16.gmra.mxu0 %v700
      %v1118 = vpop.f32.mrf.mxu0
      %v1119 = vadd.f32 %v397, %v1118
      %v1120 = vpop.f32.mrf.mxu0
      %v1121 = vadd.f32 %v397, %v1120
      %1122 = vmatmul.bf16.gmra.mxu0 %v705
      %v1123 = vpop.f32.mrf.mxu0
      %v1124 = vadd.f32 %v397, %v1123
      %v1125 = vpop.f32.mrf.mxu0
      %v1126 = vadd.f32 %v397, %v1125
      %1127 = vmatmul.bf16.gmra.mxu0 %v710
      %v1128 = vpop.f32.mrf.mxu0
      %v1129 = vadd.f32 %v397, %v1128
      %v1130 = vpop.f32.mrf.mxu0
      %v1131 = vadd.f32 %v397, %v1130
      %1132 = vmatmul.bf16.gmra.mxu0 %v715
      %v1133 = vpop.f32.mrf.mxu0
      %v1134 = vadd.f32 %v397, %v1133
      %v1135 = vpop.f32.mrf.mxu0
      %v1136 = vadd.f32 %v397, %v1135
      %1137 = vmatmul.bf16.gmra.mxu0 %v720
      %v1138 = vpop.f32.mrf.mxu0
      %v1139 = vadd.f32 %v397, %v1138
      %v1140 = vpop.f32.mrf.mxu0
      %v1141 = vadd.f32 %v397, %v1140
      %1142 = vmatmul.bf16.gmra.mxu0 %v725
      %v1143 = vpop.f32.mrf.mxu0
      %v1144 = vadd.f32 %v397, %v1143
      %v1145 = vpop.f32.mrf.mxu0
      %v1146 = vadd.f32 %v397, %v1145
      %1147 = vmatmul.bf16.gmra.mxu0 %v730
      %v1148 = vpop.f32.mrf.mxu0
      %v1149 = vadd.f32 %v397, %v1148
      %v1150 = vpop.f32.mrf.mxu0
      %v1151 = vadd.f32 %v397, %v1150
      %1152 = vdwg.mxu0
      %1153 = vmatpush.bf16.msra.mxu0 %v958
      %1154 = vmatpush.bf16.msra.mxu0 %v957
      %1155 = vmatpush.bf16.msra.mxu0 %v956
      %1156 = vmatpush.bf16.msra.mxu0 %v955
      %1157 = vmatpush.bf16.msra.mxu0 %v954
      %1158 = vmatpush.bf16.msra.mxu0 %v953
      %1159 = vmatpush.bf16.msra.mxu0 %v952
      %1160 = vmatpush.bf16.msra.mxu0 %v951
      %1161 = vmatmul.bf16.gmra.mxu0 %v656
      %v1162 = vpop.f32.mrf.mxu0
      %v1163 = vadd.f32 %v1074, %v1162
      %v1164 = vpop.f32.mrf.mxu0
      %v1165 = vadd.f32 %v1076, %v1164
      %1166 = vmatmul.bf16.gmra.mxu0 %v661
      %v1167 = vpop.f32.mrf.mxu0
      %v1168 = vadd.f32 %v1079, %v1167
      %v1169 = vpop.f32.mrf.mxu0
      %v1170 = vadd.f32 %v1081, %v1169
      %1171 = vmatmul.bf16.gmra.mxu0 %v666
      %v1172 = vpop.f32.mrf.mxu0
      %v1173 = vadd.f32 %v1084, %v1172
      %v1174 = vpop.f32.mrf.mxu0
      %v1175 = vadd.f32 %v1086, %v1174
      %1176 = vmatmul.bf16.gmra.mxu0 %v671
      %v1177 = vpop.f32.mrf.mxu0
      %v1178 = vadd.f32 %v1089, %v1177
      %v1179 = vpop.f32.mrf.mxu0
      %v1180 = vadd.f32 %v1091, %v1179
      %1181 = vmatmul.bf16.gmra.mxu0 %v676
      %v1182 = vpop.f32.mrf.mxu0
      %v1183 = vadd.f32 %v1094, %v1182
      %v1184 = vpop.f32.mrf.mxu0
      %v1185 = vadd.f32 %v1096, %v1184
      %1186 = vmatmul.bf16.gmra.mxu0 %v681
      %v1187 = vpop.f32.mrf.mxu0
      %v1188 = vadd.f32 %v1099, %v1187
      %v1189 = vpop.f32.mrf.mxu0
      %v1190 = vadd.f32 %v1101, %v1189
      %1191 = vmatmul.bf16.gmra.mxu0 %v686
      %v1192 = vpop.f32.mrf.mxu0
      %v1193 = vadd.f32 %v1104, %v1192
      %v1194 = vpop.f32.mrf.mxu0
      %v1195 = vadd.f32 %v1106, %v1194
      %1196 = vmatmul.bf16.gmra.mxu0 %v691
      %v1197 = vpop.f32.mrf.mxu0
      %v1198 = vadd.f32 %v1109, %v1197
      %v1199 = vpop.f32.mrf.mxu0
      %v1200 = vadd.f32 %v1111, %v1199
      %1201 = vmatmul.bf16.gmra.mxu0 %v696
      %v1202 = vpop.f32.mrf.mxu0
      %v1203 = vadd.f32 %v1114, %v1202
      %v1204 = vpop.f32.mrf.mxu0
      %v1205 = vadd.f32 %v1116, %v1204
      %1206 = vmatmul.bf16.gmra.mxu0 %v701
      %v1207 = vpop.f32.mrf.mxu0
      %v1208 = vadd.f32 %v1119, %v1207
      %v1209 = vpop.f32.mrf.mxu0
      %v1210 = vadd.f32 %v1121, %v1209
      %1211 = vmatmul.bf16.gmra.mxu0 %v706
      %v1212 = vpop.f32.mrf.mxu0
      %v1213 = vadd.f32 %v1124, %v1212
      %v1214 = vpop.f32.mrf.mxu0
      %v1215 = vadd.f32 %v1126, %v1214
      %1216 = vmatmul.bf16.gmra.mxu0 %v711
      %v1217 = vpop.f32.mrf.mxu0
      %v1218 = vadd.f32 %v1129, %v1217
      %v1219 = vpop.f32.mrf.mxu0
      %v1220 = vadd.f32 %v1131, %v1219
      %1221 = vmatmul.bf16.gmra.mxu0 %v716
      %v1222 = vpop.f32.mrf.mxu0
      %v1223 = vadd.f32 %v1134, %v1222
      %v1224 = vpop.f32.mrf.mxu0
      %v1225 = vadd.f32 %v1136, %v1224
      %1226 = vmatmul.bf16.gmra.mxu0 %v721
      %v1227 = vpop.f32.mrf.mxu0
      %v1228 = vadd.f32 %v1139, %v1227
      %v1229 = vpop.f32.mrf.mxu0
      %v1230 = vadd.f32 %v1141, %v1229
      %1231 = vmatmul.bf16.gmra.mxu0 %v726
      %v1232 = vpop.f32.mrf.mxu0
      %v1233 = vadd.f32 %v1144, %v1232
      %v1234 = vpop.f32.mrf.mxu0
      %v1235 = vadd.f32 %v1146, %v1234
      %1236 = vmatmul.bf16.gmra.mxu0 %v731
      %v1237 = vpop.f32.mrf.mxu0
      %v1238 = vadd.f32 %v1149, %v1237
      %v1239 = vpop.f32.mrf.mxu0
      %v1240 = vadd.f32 %v1151, %v1239
      %1241 = vdwg.mxu0
      %1242 = vmatpush.bf16.msra.mxu0 %v966
      %1243 = vmatpush.bf16.msra.mxu0 %v965
      %1244 = vmatpush.bf16.msra.mxu0 %v964
      %1245 = vmatpush.bf16.msra.mxu0 %v963
      %1246 = vmatpush.bf16.msra.mxu0 %v962
      %1247 = vmatpush.bf16.msra.mxu0 %v961
      %1248 = vmatpush.bf16.msra.mxu0 %v960
      %1249 = vmatpush.bf16.msra.mxu0 %v959
      %1250 = vmatmul.bf16.gmra.mxu0 %v657
      %v1251 = vpop.f32.mrf.mxu0
      %v1252 = vadd.f32 %v1163, %v1251
      %v1253 = vpop.f32.mrf.mxu0
      %v1254 = vadd.f32 %v1165, %v1253
      %1255 = vmatmul.bf16.gmra.mxu0 %v662
      %v1256 = vpop.f32.mrf.mxu0
      %v1257 = vadd.f32 %v1168, %v1256
      %v1258 = vpop.f32.mrf.mxu0
      %v1259 = vadd.f32 %v1170, %v1258
      %1260 = vmatmul.bf16.gmra.mxu0 %v667
      %v1261 = vpop.f32.mrf.mxu0
      %v1262 = vadd.f32 %v1173, %v1261
      %v1263 = vpop.f32.mrf.mxu0
      %v1264 = vadd.f32 %v1175, %v1263
      %1265 = vmatmul.bf16.gmra.mxu0 %v672
      %v1266 = vpop.f32.mrf.mxu0
      %v1267 = vadd.f32 %v1178, %v1266
      %v1268 = vpop.f32.mrf.mxu0
      %v1269 = vadd.f32 %v1180, %v1268
      %1270 = vmatmul.bf16.gmra.mxu0 %v677
      %v1271 = vpop.f32.mrf.mxu0
      %v1272 = vadd.f32 %v1183, %v1271
      %v1273 = vpop.f32.mrf.mxu0
      %v1274 = vadd.f32 %v1185, %v1273
      %1275 = vmatmul.bf16.gmra.mxu0 %v682
      %v1276 = vpop.f32.mrf.mxu0
      %v1277 = vadd.f32 %v1188, %v1276
      %v1278 = vpop.f32.mrf.mxu0
      %v1279 = vadd.f32 %v1190, %v1278
      %1280 = vmatmul.bf16.gmra.mxu0 %v687
      %v1281 = vpop.f32.mrf.mxu0
      %v1282 = vadd.f32 %v1193, %v1281
      %v1283 = vpop.f32.mrf.mxu0
      %v1284 = vadd.f32 %v1195, %v1283
      %1285 = vmatmul.bf16.gmra.mxu0 %v692
      %v1286 = vpop.f32.mrf.mxu0
      %v1287 = vadd.f32 %v1198, %v1286
      %v1288 = vpop.f32.mrf.mxu0
      %v1289 = vadd.f32 %v1200, %v1288
      %1290 = vmatmul.bf16.gmra.mxu0 %v697
      %v1291 = vpop.f32.mrf.mxu0
      %v1292 = vadd.f32 %v1203, %v1291
      %v1293 = vpop.f32.mrf.mxu0
      %v1294 = vadd.f32 %v1205, %v1293
      %1295 = vmatmul.bf16.gmra.mxu0 %v702
      %v1296 = vpop.f32.mrf.mxu0
      %v1297 = vadd.f32 %v1208, %v1296
      %v1298 = vpop.f32.mrf.mxu0
      %v1299 = vadd.f32 %v1210, %v1298
      %1300 = vmatmul.bf16.gmra.mxu0 %v707
      %v1301 = vpop.f32.mrf.mxu0
      %v1302 = vadd.f32 %v1213, %v1301
      %v1303 = vpop.f32.mrf.mxu0
      %v1304 = vadd.f32 %v1215, %v1303
      %1305 = vmatmul.bf16.gmra.mxu0 %v712
      %v1306 = vpop.f32.mrf.mxu0
      %v1307 = vadd.f32 %v1218, %v1306
      %v1308 = vpop.f32.mrf.mxu0
      %v1309 = vadd.f32 %v1220, %v1308
      %1310 = vmatmul.bf16.gmra.mxu0 %v717
      %v1311 = vpop.f32.mrf.mxu0
      %v1312 = vadd.f32 %v1223, %v1311
      %v1313 = vpop.f32.mrf.mxu0
      %v1314 = vadd.f32 %v1225, %v1313
      %1315 = vmatmul.bf16.gmra.mxu0 %v722
      %v1316 = vpop.f32.mrf.mxu0
      %v1317 = vadd.f32 %v1228, %v1316
      %v1318 = vpop.f32.mrf.mxu0
      %v1319 = vadd.f32 %v1230, %v1318
      %1320 = vmatmul.bf16.gmra.mxu0 %v727
      %v1321 = vpop.f32.mrf.mxu0
      %v1322 = vadd.f32 %v1233, %v1321
      %v1323 = vpop.f32.mrf.mxu0
      %v1324 = vadd.f32 %v1235, %v1323
      %1325 = vmatmul.bf16.gmra.mxu0 %v732
      %v1326 = vpop.f32.mrf.mxu0
      %v1327 = vadd.f32 %v1238, %v1326
      %v1328 = vpop.f32.mrf.mxu0
      %v1329 = vadd.f32 %v1240, %v1328
      %1330 = vdwg.mxu0
      %1331 = vmatpush.bf16.msra.mxu0 %v974
      %1332 = vmatpush.bf16.msra.mxu0 %v973
      %1333 = vmatpush.bf16.msra.mxu0 %v972
      %1334 = vmatpush.bf16.msra.mxu0 %v971
      %1335 = vmatpush.bf16.msra.mxu0 %v970
      %1336 = vmatpush.bf16.msra.mxu0 %v969
      %1337 = vmatpush.bf16.msra.mxu0 %v968
      %1338 = vmatpush.bf16.msra.mxu0 %v967
      %1339 = vmatmul.bf16.gmra.mxu0 %v658
      %v1340 = vpop.f32.mrf.mxu0
      %v1341 = vadd.f32 %v1252, %v1340
      %v1342 = vpop.f32.mrf.mxu0
      %v1343 = vadd.f32 %v1254, %v1342
      %1344 = vmatmul.bf16.gmra.mxu0 %v663
      %v1345 = vpop.f32.mrf.mxu0
      %v1346 = vadd.f32 %v1257, %v1345
      %v1347 = vpop.f32.mrf.mxu0
      %v1348 = vadd.f32 %v1259, %v1347
      %1349 = vmatmul.bf16.gmra.mxu0 %v668
      %v1350 = vpop.f32.mrf.mxu0
      %v1351 = vadd.f32 %v1262, %v1350
      %v1352 = vpop.f32.mrf.mxu0
      %v1353 = vadd.f32 %v1264, %v1352
      %1354 = vmatmul.bf16.gmra.mxu0 %v673
      %v1355 = vpop.f32.mrf.mxu0
      %v1356 = vadd.f32 %v1267, %v1355
      %v1357 = vpop.f32.mrf.mxu0
      %v1358 = vadd.f32 %v1269, %v1357
      %1359 = vmatmul.bf16.gmra.mxu0 %v678
      %v1360 = vpop.f32.mrf.mxu0
      %v1361 = vadd.f32 %v1272, %v1360
      %v1362 = vpop.f32.mrf.mxu0
      %v1363 = vadd.f32 %v1274, %v1362
      %1364 = vmatmul.bf16.gmra.mxu0 %v683
      %v1365 = vpop.f32.mrf.mxu0
      %v1366 = vadd.f32 %v1277, %v1365
      %v1367 = vpop.f32.mrf.mxu0
      %v1368 = vadd.f32 %v1279, %v1367
      %1369 = vmatmul.bf16.gmra.mxu0 %v688
      %v1370 = vpop.f32.mrf.mxu0
      %v1371 = vadd.f32 %v1282, %v1370
      %v1372 = vpop.f32.mrf.mxu0
      %v1373 = vadd.f32 %v1284, %v1372
      %1374 = vmatmul.bf16.gmra.mxu0 %v693
      %v1375 = vpop.f32.mrf.mxu0
      %v1376 = vadd.f32 %v1287, %v1375
      %v1377 = vpop.f32.mrf.mxu0
      %v1378 = vadd.f32 %v1289, %v1377
      %1379 = vmatmul.bf16.gmra.mxu0 %v698
      %v1380 = vpop.f32.mrf.mxu0
      %v1381 = vadd.f32 %v1292, %v1380
      %v1382 = vpop.f32.mrf.mxu0
      %v1383 = vadd.f32 %v1294, %v1382
      %1384 = vmatmul.bf16.gmra.mxu0 %v703
      %v1385 = vpop.f32.mrf.mxu0
      %v1386 = vadd.f32 %v1297, %v1385
      %v1387 = vpop.f32.mrf.mxu0
      %v1388 = vadd.f32 %v1299, %v1387
      %1389 = vmatmul.bf16.gmra.mxu0 %v708
      %v1390 = vpop.f32.mrf.mxu0
      %v1391 = vadd.f32 %v1302, %v1390
      %v1392 = vpop.f32.mrf.mxu0
      %v1393 = vadd.f32 %v1304, %v1392
      %1394 = vmatmul.bf16.gmra.mxu0 %v713
      %v1395 = vpop.f32.mrf.mxu0
      %v1396 = vadd.f32 %v1307, %v1395
      %v1397 = vpop.f32.mrf.mxu0
      %v1398 = vadd.f32 %v1309, %v1397
      %1399 = vmatmul.bf16.gmra.mxu0 %v718
      %v1400 = vpop.f32.mrf.mxu0
      %v1401 = vadd.f32 %v1312, %v1400
      %v1402 = vpop.f32.mrf.mxu0
      %v1403 = vadd.f32 %v1314, %v1402
      %1404 = vmatmul.bf16.gmra.mxu0 %v723
      %v1405 = vpop.f32.mrf.mxu0
      %v1406 = vadd.f32 %v1317, %v1405
      %v1407 = vpop.f32.mrf.mxu0
      %v1408 = vadd.f32 %v1319, %v1407
      %1409 = vmatmul.bf16.gmra.mxu0 %v728
      %v1410 = vpop.f32.mrf.mxu0
      %v1411 = vadd.f32 %v1322, %v1410
      %v1412 = vpop.f32.mrf.mxu0
      %v1413 = vadd.f32 %v1324, %v1412
      %1414 = vmatmul.bf16.gmra.mxu0 %v733
      %v1415 = vpop.f32.mrf.mxu0
      %v1416 = vadd.f32 %v1327, %v1415
      %v1417 = vpop.f32.mrf.mxu0
      %v1418 = vadd.f32 %v1329, %v1417
      %1419 = vdwg.mxu0
      %1420 = vmatpush.bf16.msra.mxu0 0
      %1421 = vmatpush.bf16.msra.mxu0 0
      %1422 = vmatpush.bf16.msra.mxu0 0
      %1423 = vmatpush.bf16.msra.mxu0 0
      %1424 = vmatpush.bf16.msra.mxu0 %v978
      %1425 = vmatpush.bf16.msra.mxu0 %v977
      %1426 = vmatpush.bf16.msra.mxu0 %v976
      %1427 = vmatpush.bf16.msra.mxu0 %v975
      %1428 = vmatmul.bf16.gmra.mxu0 %v1017
      %v1429 = vpop.f32.mrf.mxu0
      %v1430 = vadd.f32 %v1341, %v1429
      %v1431 = vpop.f32.mrf.mxu0
      %v1432 = vadd.f32 %v1343, %v1431
      %1433 = vmatmul.bf16.gmra.mxu0 %v1020
      %v1434 = vpop.f32.mrf.mxu0
      %v1435 = vadd.f32 %v1346, %v1434
      %v1436 = vpop.f32.mrf.mxu0
      %v1437 = vadd.f32 %v1348, %v1436
      %1438 = vmatmul.bf16.gmra.mxu0 %v1023
      %v1439 = vpop.f32.mrf.mxu0
      %v1440 = vadd.f32 %v1351, %v1439
      %v1441 = vpop.f32.mrf.mxu0
      %v1442 = vadd.f32 %v1353, %v1441
      %1443 = vmatmul.bf16.gmra.mxu0 %v1026
      %v1444 = vpop.f32.mrf.mxu0
      %v1445 = vadd.f32 %v1356, %v1444
      %v1446 = vpop.f32.mrf.mxu0
      %v1447 = vadd.f32 %v1358, %v1446
      %1448 = vmatmul.bf16.gmra.mxu0 %v1029
      %v1449 = vpop.f32.mrf.mxu0
      %v1450 = vadd.f32 %v1361, %v1449
      %v1451 = vpop.f32.mrf.mxu0
      %v1452 = vadd.f32 %v1363, %v1451
      %1453 = vmatmul.bf16.gmra.mxu0 %v1032
      %v1454 = vpop.f32.mrf.mxu0
      %v1455 = vadd.f32 %v1366, %v1454
      %v1456 = vpop.f32.mrf.mxu0
      %v1457 = vadd.f32 %v1368, %v1456
      %1458 = vmatmul.bf16.gmra.mxu0 %v1035
      %v1459 = vpop.f32.mrf.mxu0
      %v1460 = vadd.f32 %v1371, %v1459
      %v1461 = vpop.f32.mrf.mxu0
      %v1462 = vadd.f32 %v1373, %v1461
      %1463 = vmatmul.bf16.gmra.mxu0 %v1038
      %v1464 = vpop.f32.mrf.mxu0
      %v1465 = vadd.f32 %v1376, %v1464
      %v1466 = vpop.f32.mrf.mxu0
      %v1467 = vadd.f32 %v1378, %v1466
      %1468 = vmatmul.bf16.gmra.mxu0 %v1041
      %v1469 = vpop.f32.mrf.mxu0
      %v1470 = vadd.f32 %v1381, %v1469
      %v1471 = vpop.f32.mrf.mxu0
      %v1472 = vadd.f32 %v1383, %v1471
      %1473 = vmatmul.bf16.gmra.mxu0 %v1044
      %v1474 = vpop.f32.mrf.mxu0
      %v1475 = vadd.f32 %v1386, %v1474
      %v1476 = vpop.f32.mrf.mxu0
      %v1477 = vadd.f32 %v1388, %v1476
      %1478 = vmatmul.bf16.gmra.mxu0 %v1047
      %v1479 = vpop.f32.mrf.mxu0
      %v1480 = vadd.f32 %v1391, %v1479
      %v1481 = vpop.f32.mrf.mxu0
      %v1482 = vadd.f32 %v1393, %v1481
      %1483 = vmatmul.bf16.gmra.mxu0 %v1050
      %v1484 = vpop.f32.mrf.mxu0
      %v1485 = vadd.f32 %v1396, %v1484
      %v1486 = vpop.f32.mrf.mxu0
      %v1487 = vadd.f32 %v1398, %v1486
      %1488 = vmatmul.bf16.gmra.mxu0 %v1053
      %v1489 = vpop.f32.mrf.mxu0
      %v1490 = vadd.f32 %v1401, %v1489
      %v1491 = vpop.f32.mrf.mxu0
      %v1492 = vadd.f32 %v1403, %v1491
      %1493 = vmatmul.bf16.gmra.mxu0 %v1056
      %v1494 = vpop.f32.mrf.mxu0
      %v1495 = vadd.f32 %v1406, %v1494
      %v1496 = vpop.f32.mrf.mxu0
      %v1497 = vadd.f32 %v1408, %v1496
      %1498 = vmatmul.bf16.gmra.mxu0 %v1059
      %v1499 = vpop.f32.mrf.mxu0
      %v1500 = vadd.f32 %v1411, %v1499
      %v1501 = vpop.f32.mrf.mxu0
      %v1502 = vadd.f32 %v1413, %v1501
      %1503 = vmatmul.bf16.gmra.mxu0 %v1062
      %v1504 = vpop.f32.mrf.mxu0
      %v1505 = vadd.f32 %v1416, %v1504
      %v1506 = vpop.f32.mrf.mxu0
      %v1507 = vadd.f32 %v1418, %v1506
      %1508 = vdwg.mxu0
      %vm1509 = vcmp.ge.f32.partialorder %v1430, 0.0
      %vm1510 = vcmp.ge.f32.partialorder %v1432, 0.0
      %vm1511 = vcmp.ge.f32.partialorder %v1435, 0.0
      %vm1512 = vcmp.ge.f32.partialorder %v1437, 0.0
      %vm1513 = vcmp.ge.f32.partialorder %v1440, 0.0
      %vm1514 = vcmp.ge.f32.partialorder %v1442, 0.0
      %vm1515 = vcmp.ge.f32.partialorder %v1445, 0.0
      %vm1516 = vcmp.ge.f32.partialorder %v1447, 0.0
      %vm1517 = vcmp.ge.f32.partialorder %v1450, 0.0
      %vm1518 = vcmp.ge.f32.partialorder %v1452, 0.0
      %vm1519 = vcmp.ge.f32.partialorder %v1455, 0.0
      %vm1520 = vcmp.ge.f32.partialorder %v1457, 0.0
      %vm1521 = vcmp.ge.f32.partialorder %v1460, 0.0
      %vm1522 = vcmp.ge.f32.partialorder %v1462, 0.0
      %vm1523 = vcmp.ge.f32.partialorder %v1465, 0.0
      %vm1524 = vcmp.ge.f32.partialorder %v1467, 0.0
      %vm1525 = vcmp.ge.f32.partialorder %v1470, 0.0
      %vm1526 = vcmp.ge.f32.partialorder %v1472, 0.0
      %vm1527 = vcmp.ge.f32.partialorder %v1475, 0.0
      %vm1528 = vcmp.ge.f32.partialorder %v1477, 0.0
      %vm1529 = vcmp.ge.f32.partialorder %v1480, 0.0
      %vm1530 = vcmp.ge.f32.partialorder %v1482, 0.0
      %vm1531 = vcmp.ge.f32.partialorder %v1485, 0.0
      %vm1532 = vcmp.ge.f32.partialorder %v1487, 0.0
      %vm1533 = vcmp.ge.f32.partialorder %v1490, 0.0
      %vm1534 = vcmp.ge.f32.partialorder %v1492, 0.0
      %vm1535 = vcmp.ge.f32.partialorder %v1495, 0.0
      %vm1536 = vcmp.ge.f32.partialorder %v1497, 0.0
      %vm1537 = vcmp.ge.f32.partialorder %v1500, 0.0
      %vm1538 = vcmp.ge.f32.partialorder %v1502, 0.0
      %vm1539 = vcmp.ge.f32.partialorder %v1505, 0.0
      %vm1540 = vcmp.ge.f32.partialorder %v1507, 0.0
      %v1541 = vmul.f32 %v1430, 0.25
      %v1542 = vmul.f32 %v1432, 0.25
      %v1543 = vmul.f32 %v1435, 0.25
      %v1544 = vmul.f32 %v1437, 0.25
      %v1545 = vmul.f32 %v1440, 0.25
      %v1546 = vmul.f32 %v1442, 0.25
      %v1547 = vmul.f32 %v1445, 0.25
      %v1548 = vmul.f32 %v1447, 0.25
      %v1549 = vmul.f32 %v1450, 0.25
      %v1550 = vmul.f32 %v1452, 0.25
      %v1551 = vmul.f32 %v1455, 0.25
      %v1552 = vmul.f32 %v1457, 0.25
      %v1553 = vmul.f32 %v1460, 0.25
      %v1554 = vmul.f32 %v1462, 0.25
      %v1555 = vmul.f32 %v1465, 0.25
      %v1556 = vmul.f32 %v1467, 0.25
      %v1557 = vmul.f32 %v1470, 0.25
      %v1558 = vmul.f32 %v1472, 0.25
      %v1559 = vmul.f32 %v1475, 0.25
      %v1560 = vmul.f32 %v1477, 0.25
      %v1561 = vmul.f32 %v1480, 0.25
      %v1562 = vmul.f32 %v1482, 0.25
      %v1563 = vmul.f32 %v1485, 0.25
      %v1564 = vmul.f32 %v1487, 0.25
      %v1565 = vmul.f32 %v1490, 0.25
      %v1566 = vmul.f32 %v1492, 0.25
      %v1567 = vmul.f32 %v1495, 0.25
      %v1568 = vmul.f32 %v1497, 0.25
      %v1569 = vmul.f32 %v1500, 0.25
      %v1570 = vmul.f32 %v1502, 0.25
      %v1571 = vmul.f32 %v1505, 0.25
      %v1572 = vmul.f32 %v1507, 0.25
      %v1573 = vsel %vm1509, %v1430, %v1541
      %v1574 = vsel %vm1510, %v1432, %v1542
      %v1575 = vsel %vm1511, %v1435, %v1543
      %v1576 = vsel %vm1512, %v1437, %v1544
      %v1577 = vsel %vm1513, %v1440, %v1545
      %v1578 = vsel %vm1514, %v1442, %v1546
      %v1579 = vsel %vm1515, %v1445, %v1547
      %v1580 = vsel %vm1516, %v1447, %v1548
      %v1581 = vsel %vm1517, %v1450, %v1549
      %v1582 = vsel %vm1518, %v1452, %v1550
      %v1583 = vsel %vm1519, %v1455, %v1551
      %v1584 = vsel %vm1520, %v1457, %v1552
      %v1585 = vsel %vm1521, %v1460, %v1553
      %v1586 = vsel %vm1522, %v1462, %v1554
      %v1587 = vsel %vm1523, %v1465, %v1555
      %v1588 = vsel %vm1524, %v1467, %v1556
      %v1589 = vsel %vm1525, %v1470, %v1557
      %v1590 = vsel %vm1526, %v1472, %v1558
      %v1591 = vsel %vm1527, %v1475, %v1559
      %v1592 = vsel %vm1528, %v1477, %v1560
      %v1593 = vsel %vm1529, %v1480, %v1561
      %v1594 = vsel %vm1530, %v1482, %v1562
      %v1595 = vsel %vm1531, %v1485, %v1563
      %v1596 = vsel %vm1532, %v1487, %v1564
      %v1597 = vsel %vm1533, %v1490, %v1565
      %v1598 = vsel %vm1534, %v1492, %v1566
      %v1599 = vsel %vm1535, %v1495, %v1567
      %v1600 = vsel %vm1536, %v1497, %v1568
      %v1601 = vsel %vm1537, %v1500, %v1569
      %v1602 = vsel %vm1538, %v1502, %v1570
      %v1603 = vsel %vm1539, %v1505, %v1571
      %v1604 = vsel %vm1540, %v1507, %v1572
      %v1605 = vld [vmem:[%s218] sm:$0xf]
      %v1606 = vld [vmem:[%s218 + $0x4] sm:$0xf]
      %v1607 = vld [vmem:[%s218 + $0x8] sm:$0xf]
      %v1608 = vld [vmem:[%s218 + $0xc] sm:$0xf]
      %v1609 = vld [vmem:[%s218 + $0x10] sm:$0xf]
      %v1610 = vld [vmem:[%s218 + $0x14] sm:$0xf]
      %v1611 = vld [vmem:[%s218 + $0x18] sm:$0xf]
      %v1612 = vld [vmem:[%s218 + $0x1c] sm:$0xf]
      %v1613 = vld [vmem:[%s218 + $0x20] sm:$0xf]
      %v1614 = vld [vmem:[%s218 + $0x24] sm:$0xf]
      %v1615 = vld [vmem:[%s218 + $0x28] sm:$0xf]
      %v1616 = vld [vmem:[%s218 + $0x2c] sm:$0xf]
      %v1617 = vld [vmem:[%s218 + $0x30] sm:$0xf]
      %v1618 = vld [vmem:[%s218 + $0x34] sm:$0xf]
      %v1619 = vld [vmem:[%s218 + $0x38] sm:$0xf]
      %v1620 = vld [vmem:[%s218 + $0x3c] sm:$0xf]
      %v1621 = vld [vmem:[%s218 + $0x40] sm:$0xf]
      %v1622 = vld [vmem:[%s218 + $0x44] sm:$0xf]
      %v1623 = vld [vmem:[%s218 + $0x48] sm:$0xf]
      %v1624 = vld [vmem:[%s218 + $0x4c] sm:$0xf]
      %v1625 = vld [vmem:[%s218 + $0x50] sm:$0xf]
      %v1626 = vld [vmem:[%s218 + $0x54] sm:$0xf]
      %v1627 = vld [vmem:[%s218 + $0x58] sm:$0xf]
      %v1628 = vld [vmem:[%s218 + $0x5c] sm:$0xf]
      %v1629 = vld [vmem:[%s218 + $0x60] sm:$0xf]
      %v1630 = vld [vmem:[%s218 + $0x64] sm:$0xf]
      %v1631 = vld [vmem:[%s218 + $0x68] sm:$0xf]
      %v1632 = vld [vmem:[%s218 + $0x6c] sm:$0xf]
      %v1633 = vld [vmem:[%s218 + $0x70] sm:$0xf]
      %v1634 = vld [vmem:[%s218 + $0x74] sm:$0xf]
      %v1635 = vld [vmem:[%s218 + $0x78] sm:$0xf]
      %v1636 = vld [vmem:[%s218 + $0x7c] sm:$0xf]
      %v1637 = vunpack.c.l.bf16 %v1605
      %v1638 = vunpack.c.l.bf16 %v1606
      %v1639 = vunpack.c.l.bf16 %v1607
      %v1640 = vunpack.c.l.bf16 %v1608
      %v1641 = vunpack.c.l.bf16 %v1609
      %v1642 = vunpack.c.l.bf16 %v1610
      %v1643 = vunpack.c.l.bf16 %v1611
      %v1644 = vunpack.c.l.bf16 %v1612
      %v1645 = vunpack.c.l.bf16 %v1613
      %v1646 = vunpack.c.l.bf16 %v1614
      %v1647 = vunpack.c.l.bf16 %v1615
      %v1648 = vunpack.c.l.bf16 %v1616
      %v1649 = vunpack.c.l.bf16 %v1617
      %v1650 = vunpack.c.l.bf16 %v1618
      %v1651 = vunpack.c.l.bf16 %v1619
      %v1652 = vunpack.c.l.bf16 %v1620
      %v1653 = vunpack.c.l.bf16 %v1621
      %v1654 = vunpack.c.l.bf16 %v1622
      %v1655 = vunpack.c.l.bf16 %v1623
      %v1656 = vunpack.c.l.bf16 %v1624
      %v1657 = vunpack.c.l.bf16 %v1625
      %v1658 = vunpack.c.l.bf16 %v1626
      %v1659 = vunpack.c.l.bf16 %v1627
      %v1660 = vunpack.c.l.bf16 %v1628
      %v1661 = vunpack.c.l.bf16 %v1629
      %v1662 = vunpack.c.l.bf16 %v1630
      %v1663 = vunpack.c.l.bf16 %v1631
      %v1664 = vunpack.c.l.bf16 %v1632
      %v1665 = vunpack.c.l.bf16 %v1633
      %v1666 = vunpack.c.l.bf16 %v1634
      %v1667 = vunpack.c.l.bf16 %v1635
      %v1668 = vunpack.c.l.bf16 %v1636
      %v1669 = vmul.f32 %v1637, -1.0
      %v1670 = vmul.f32 %v1638, -1.0
      %v1671 = vmul.f32 %v1639, -1.0
      %v1672 = vmul.f32 %v1640, -1.0
      %v1673 = vmul.f32 %v1641, -1.0
      %v1674 = vmul.f32 %v1642, -1.0
      %v1675 = vmul.f32 %v1643, -1.0
      %v1676 = vmul.f32 %v1644, -1.0
      %v1677 = vmul.f32 %v1645, -1.0
      %v1678 = vmul.f32 %v1646, -1.0
      %v1679 = vmul.f32 %v1647, -1.0
      %v1680 = vmul.f32 %v1648, -1.0
      %v1681 = vmul.f32 %v1649, -1.0
      %v1682 = vmul.f32 %v1650, -1.0
      %v1683 = vmul.f32 %v1651, -1.0
      %v1684 = vmul.f32 %v1652, -1.0
      %v1685 = vmul.f32 %v1653, -1.0
      %v1686 = vmul.f32 %v1654, -1.0
      %v1687 = vmul.f32 %v1655, -1.0
      %v1688 = vmul.f32 %v1656, -1.0
      %v1689 = vmul.f32 %v1657, -1.0
      %v1690 = vmul.f32 %v1658, -1.0
      %v1691 = vmul.f32 %v1659, -1.0
      %v1692 = vmul.f32 %v1660, -1.0
      %v1693 = vmul.f32 %v1661, -1.0
      %v1694 = vmul.f32 %v1662, -1.0
      %v1695 = vmul.f32 %v1663, -1.0
      %v1696 = vmul.f32 %v1664, -1.0
      %v1697 = vmul.f32 %v1665, -1.0
      %v1698 = vmul.f32 %v1666, -1.0
      %v1699 = vmul.f32 %v1667, -1.0
      %v1700 = vmul.f32 %v1668, -1.0
      %v1701 = vadd.f32 %v1573, %v1669
      %v1702 = vadd.f32 %v1574, %v1670
      %v1703 = vadd.f32 %v1575, %v1671
      %v1704 = vadd.f32 %v1576, %v1672
      %v1705 = vadd.f32 %v1577, %v1673
      %v1706 = vadd.f32 %v1578, %v1674
      %v1707 = vadd.f32 %v1579, %v1675
      %v1708 = vadd.f32 %v1580, %v1676
      %v1709 = vadd.f32 %v1581, %v1677
      %v1710 = vadd.f32 %v1582, %v1678
      %v1711 = vadd.f32 %v1583, %v1679
      %v1712 = vadd.f32 %v1584, %v1680
      %v1713 = vadd.f32 %v1585, %v1681
      %v1714 = vadd.f32 %v1586, %v1682
      %v1715 = vadd.f32 %v1587, %v1683
      %v1716 = vadd.f32 %v1588, %v1684
      %v1717 = vadd.f32 %v1589, %v1685
      %v1718 = vadd.f32 %v1590, %v1686
      %v1719 = vadd.f32 %v1591, %v1687
      %v1720 = vadd.f32 %v1592, %v1688
      %v1721 = vadd.f32 %v1593, %v1689
      %v1722 = vadd.f32 %v1594, %v1690
      %v1723 = vadd.f32 %v1595, %v1691
      %v1724 = vadd.f32 %v1596, %v1692
      %v1725 = vadd.f32 %v1597, %v1693
      %v1726 = vadd.f32 %v1598, %v1694
      %v1727 = vadd.f32 %v1599, %v1695
      %v1728 = vadd.f32 %v1600, %v1696
      %v1729 = vadd.f32 %v1601, %v1697
      %v1730 = vadd.f32 %v1602, %v1698
      %v1731 = vadd.f32 %v1603, %v1699
      %v1732 = vadd.f32 %v1604, %v1700
      %v1733 = vpack.c.bf16 %v1701, %v1701
      %v1734 = vpack.c.bf16 %v1702, %v1702
      %v1735 = vpack.c.bf16 %v1703, %v1703
      %v1736 = vpack.c.bf16 %v1704, %v1704
      %v1737 = vpack.c.bf16 %v1705, %v1705
      %v1738 = vpack.c.bf16 %v1706, %v1706
      %v1739 = vpack.c.bf16 %v1707, %v1707
      %v1740 = vpack.c.bf16 %v1708, %v1708
      %v1741 = vpack.c.bf16 %v1709, %v1709
      %v1742 = vpack.c.bf16 %v1710, %v1710
      %v1743 = vpack.c.bf16 %v1711, %v1711
      %v1744 = vpack.c.bf16 %v1712, %v1712
      %v1745 = vpack.c.bf16 %v1713, %v1713
      %v1746 = vpack.c.bf16 %v1714, %v1714
      %v1747 = vpack.c.bf16 %v1715, %v1715
      %v1748 = vpack.c.bf16 %v1716, %v1716
      %v1749 = vpack.c.bf16 %v1717, %v1717
      %v1750 = vpack.c.bf16 %v1718, %v1718
      %v1751 = vpack.c.bf16 %v1719, %v1719
      %v1752 = vpack.c.bf16 %v1720, %v1720
      %v1753 = vpack.c.bf16 %v1721, %v1721
      %v1754 = vpack.c.bf16 %v1722, %v1722
      %v1755 = vpack.c.bf16 %v1723, %v1723
      %v1756 = vpack.c.bf16 %v1724, %v1724
      %v1757 = vpack.c.bf16 %v1725, %v1725
      %v1758 = vpack.c.bf16 %v1726, %v1726
      %v1759 = vpack.c.bf16 %v1727, %v1727
      %v1760 = vpack.c.bf16 %v1728, %v1728
      %v1761 = vpack.c.bf16 %v1729, %v1729
      %v1762 = vpack.c.bf16 %v1730, %v1730
      %v1763 = vpack.c.bf16 %v1731, %v1731
      %v1764 = vpack.c.bf16 %v1732, %v1732
      %vm1765 = vcmask 125952
      %1766 = vst.msk [vmem:[%s224] sm:$0xf] %vm1765, %v1733
      %1767 = vst.msk [vmem:[%s224 + $0x4] sm:$0xf] %vm1765, %v1734
      %1768 = vst.msk [vmem:[%s224 + $0x8] sm:$0xf] %vm1765, %v1735
      %1769 = vst.msk [vmem:[%s224 + $0xc] sm:$0xf] %vm1765, %v1736
      %1770 = vst.msk [vmem:[%s224 + $0x10] sm:$0xf] %vm1765, %v1737
      %1771 = vst.msk [vmem:[%s224 + $0x14] sm:$0xf] %vm1765, %v1738
      %1772 = vst.msk [vmem:[%s224 + $0x18] sm:$0xf] %vm1765, %v1739
      %1773 = vst.msk [vmem:[%s224 + $0x1c] sm:$0xf] %vm1765, %v1740
      %1774 = vst.msk [vmem:[%s224 + $0x20] sm:$0xf] %vm1765, %v1741
      %1775 = vst.msk [vmem:[%s224 + $0x24] sm:$0xf] %vm1765, %v1742
      %1776 = vst.msk [vmem:[%s224 + $0x28] sm:$0xf] %vm1765, %v1743
      %1777 = vst.msk [vmem:[%s224 + $0x2c] sm:$0xf] %vm1765, %v1744
      %1778 = vst.msk [vmem:[%s224 + $0x30] sm:$0xf] %vm1765, %v1745
      %1779 = vst.msk [vmem:[%s224 + $0x34] sm:$0xf] %vm1765, %v1746
      %1780 = vst.msk [vmem:[%s224 + $0x38] sm:$0xf] %vm1765, %v1747
      %1781 = vst.msk [vmem:[%s224 + $0x3c] sm:$0xf] %vm1765, %v1748
      %1782 = vst.msk [vmem:[%s224 + $0x40] sm:$0xf] %vm1765, %v1749
      %1783 = vst.msk [vmem:[%s224 + $0x44] sm:$0xf] %vm1765, %v1750
      %1784 = vst.msk [vmem:[%s224 + $0x48] sm:$0xf] %vm1765, %v1751
      %1785 = vst.msk [vmem:[%s224 + $0x4c] sm:$0xf] %vm1765, %v1752
      %1786 = vst.msk [vmem:[%s224 + $0x50] sm:$0xf] %vm1765, %v1753
      %1787 = vst.msk [vmem:[%s224 + $0x54] sm:$0xf] %vm1765, %v1754
      %1788 = vst.msk [vmem:[%s224 + $0x58] sm:$0xf] %vm1765, %v1755
      %1789 = vst.msk [vmem:[%s224 + $0x5c] sm:$0xf] %vm1765, %v1756
      %1790 = vst.msk [vmem:[%s224 + $0x60] sm:$0xf] %vm1765, %v1757
      %1791 = vst.msk [vmem:[%s224 + $0x64] sm:$0xf] %vm1765, %v1758
      %1792 = vst.msk [vmem:[%s224 + $0x68] sm:$0xf] %vm1765, %v1759
      %1793 = vst.msk [vmem:[%s224 + $0x6c] sm:$0xf] %vm1765, %v1760
      %1794 = vst.msk [vmem:[%s224 + $0x70] sm:$0xf] %vm1765, %v1761
      %1795 = vst.msk [vmem:[%s224 + $0x74] sm:$0xf] %vm1765, %v1762
      %1796 = vst.msk [vmem:[%s224 + $0x78] sm:$0xf] %vm1765, %v1763
      %1797 = vst.msk [vmem:[%s224 + $0x7c] sm:$0xf] %vm1765, %v1764
      %s1798 = smul.u32 32, %s15
      %p1799 = scmp.lt.s32.totalorder %s1798, 63
      %s1800 = scalar_select %p1799, %s1798, 63
      %s1801 = smul.addr %s1800, 4
      %s1802 = scalar_lea.vmem %s4, %s1801
      // Predicated region
      $region37: #{net2_forward.15} parent=35 // pred_check
        %p1803 = pneg %p127
      $region38: #{net2_forward.15} parent=35 // pred_check_branch
        %1805 = sbr.rel (%p1803) target = $region40
      $region39: #{net2_forward.15} parent=35 // pred_region
        %s1806 = smul.u32 32, %s15
      $region40: #{net2_forward.15} parent=35 // pred_fallthru
        _
    $region36: #{net2_forward.15} parent=5 // pred_fallthru
      _
    %p1807 = scmp.le.s32.totalorder 2, %s10
    // Predicated region
    $region41: #{net2_forward.15} parent=5 // pred_check
      %p1808 = pneg %p1807
    $region42: #{net2_forward.15} parent=5 // pred_check_branch
      %1810 = sbr.rel (%p1808) target = $region44
    $region43: #{net2_forward.15} parent=5 // pred_region
      %s1811 = ssub.s32 %s10, 2
      // Predicated region
      $region45: #{net2_forward.15} parent=43 // pred_check
        %p1812 = pneg %p133
      $region46: #{net2_forward.15} parent=43 // pred_check_branch
        %1814 = sbr.rel (%p1812) target = $region48
      $region47: #{net2_forward.15} parent=43 // pred_region
        %s1815 = smul.u32 32, %s16
        %p1816 = scmp.lt.s32.totalorder %s1815, 63
        %s1817 = scalar_select %p1816, %s1815, 63
        %s1818 = smul.addr %s1817, 4
        %s1819 = scalar_lea.vmem %s4, %s1818
      $region48: #{net2_forward.15} parent=43 // pred_fallthru
        _
    $region44: #{net2_forward.15} parent=5 // pred_fallthru
      _
  $region6: #{net2_forward.15} parent=0 // loop_footer
    %s14 = sadd.s32 1, %s10
  $region7: #{net2_forward.15} parent=0 // loop_footer_branch
    %9 = sbr.rel target = $region3
  $region8: #{net2_forward.15} parent=0 // loop_exit
    _

// kernel: net2_forward.16
$region0: #{net2_forward.16}
  #allocation0 [shape = 'u32[]', space=smem, size = 0x4, offset = 0x4, fixed_abs, tag = 'smem constant byte address 0x4 - core index']
  #allocation1 [shape = 'u32[72,128]{1,0:T(1,128)}', space=vmem, size = 0x9000, scoped, tag = 'internal scratch']
  %s0 = inlined_call_operand.vmem [shape: bf16[512,144], index: 0, kind: input, shape index: {}]
  %s1 = inlined_call_operand.vmem [shape: bf16[144,64], index: 1, kind: input, shape index: {}]
  %s2 = inlined_call_operand.vmem [shape: f32[1,64], index: 2, kind: input, shape index: {}]
  %s3 = inlined_call_operand.vmem [shape: bf16[512,64], index: 3, kind: input, shape index: {}]
  %s4 = inlined_call_operand.vmem [shape: bf16[512,64], index: 4, kind: output, shape index: {}]
  %s5 = sld [smem:[#allocation0]]
  $region49: #{net2_forward.16} parent=0
    _
  %s7 = ssub.s32 1, %s5
  %s8 = scalar_select 0, %s7, %s5
  loop: start=0, step=1, limit=4
  $region2: #{net2_forward.16} parent=0 // loop_pre_header
    _
  $region3: #{net2_forward.16} parent=0 // loop_header
    %s10 = sphi 0, %s14
    %p11 = scmp.ge.s32.totalorder %s10, 4
    %s20 = sphi 0, %s22
    %s23 = sphi 0, %s20
    %s24 = sphi 0, %s23
    %s40 = sphi 0, %s24
    %s44 = sphi 0, %s44
    %s46 = sphi 0, %s44
    %s47 = sphi 0, %s46
    %s61 = sphi 0, %s47
    %s65 = sphi 0, %s65
    %s67 = sphi 0, %s65
    %s68 = sphi 0, %s67
    %s82 = sphi 0, %s68
    %s88 = sphi 0, %s90
    %s91 = sphi 0, %s88
    %s92 = sphi 0, %s91
    %s108 = sphi 0, %s92
    %s114 = sphi 0, %s116
    %s117 = sphi 0, %s114
    %s118 = sphi 0, %s117
    %s134 = sphi 0, %s118
  $region4: #{net2_forward.16} parent=0 // loop_header_branch
    %13 = sbr.rel (%p11) target = $region8
  $region5: #{net2_forward.16} parent=0 // loop_body
    %s15 = ssub.s32 %s10, 1
    %s16 = ssub.s32 %s10, 2
    %s17 = sadd.s32 %s10, 1
    %s18 = ssub.s32 %s10, %s17
    %p19 = scmp.eq.s32.totalorder %s18, 0
    %s21 = sadd.s32 %s20, 1
    %s22 = scalar_select %p19, %s20, %s21
    %p25 = pneg %p19
    %p26 = scmp.eq.s32.totalorder %s10, 1
    %p27 = por %p25, %p26
    %p28 = scmp.ne.s32.totalorder %s20, %s23
    %p29 = scmp.eq.s32.totalorder %s10, 0
    %p30 = por %p28, %p29
    %p31 = scmp.ne.s32.totalorder %s20, %s23
    %p32 = scmp.eq.s32.totalorder %s15, 1
    %p33 = por %p31, %p32
    %p34 = scmp.ne.s32.totalorder %s23, %s24
    %p35 = scmp.eq.s32.totalorder %s15, 0
    %p36 = por %p34, %p35
    %p37 = scmp.ne.s32.totalorder %s23, %s24
    %p38 = scmp.eq.s32.totalorder %s16, 1
    %p39 = por %p37, %p38
    %p41 = scmp.ne.s32.totalorder %s24, %s40
    %p42 = scmp.eq.s32.totalorder %s16, 0
    %p43 = por %p41, %p42
    %s45 = sadd.s32 %s44, 1
    %p48 = scmp.eq.s32.totalorder %s10, 1
    %p49 = scmp.ne.s32.totalorder %s44, %s46
    %p50 = scmp.eq.s32.totalorder %s10, 0
    %p51 = por %p49, %p50
    %p52 = scmp.ne.s32.totalorder %s44, %s46
    %p53 = scmp.eq.s32.totalorder %s15, 1
    %p54 = por %p52, %p53
    %p55 = scmp.ne.s32.totalorder %s46, %s47
    %p56 = scmp.eq.s32.totalorder %s15, 0
    %p57 = por %p55, %p56
    %p58 = scmp.ne.s32.totalorder %s46, %s47
    %p59 = scmp.eq.s32.totalorder %s16, 1
    %p60 = por %p58, %p59
    %p62 = scmp.ne.s32.totalorder %s47, %s61
    %p63 = scmp.eq.s32.totalorder %s16, 0
    %p64 = por %p62, %p63
    %s66 = sadd.s32 %s65, 1
    %p69 = scmp.eq.s32.totalorder %s10, 1
    %p70 = scmp.ne.s32.totalorder %s65, %s67
    %p71 = scmp.eq.s32.totalorder %s10, 0
    %p72 = por %p70, %p71
    %p73 = scmp.ne.s32.totalorder %s65, %s67
    %p74 = scmp.eq.s32.totalorder %s15, 1
    %p75 = por %p73, %p74
    %p76 = scmp.ne.s32.totalorder %s67, %s68
    %p77 = scmp.eq.s32.totalorder %s15, 0
    %p78 = por %p76, %p77
    %p79 = scmp.ne.s32.totalorder %s67, %s68
    %p80 = scmp.eq.s32.totalorder %s16, 1
    %p81 = por %p79, %p80
    %p83 = scmp.ne.s32.totalorder %s68, %s82
    %p84 = scmp.eq.s32.totalorder %s16, 0
    %p85 = por %p83, %p84
    %s86 = ssub.s32 %s10, %s17
    %p87 = scmp.eq.s32.totalorder %s86, 0
    %s89 = sadd.s32 %s88, 1
    %s90 = scalar_select %p87, %s88, %s89
    %p93 = pneg %p87
    %p94 = scmp.eq.s32.totalorder %s10, 1
    %p95 = por %p93, %p94
    %p96 = scmp.ne.s32.totalorder %s88, %s91
    %p97 = scmp.eq.s32.totalorder %s10, 0
    %p98 = por %p96, %p97
    %p99 = scmp.ne.s32.totalorder %s88, %s91
    %p100 = scmp.eq.s32.totalorder %s15, 1
    %p101 = por %p99, %p100
    %p102 = scmp.ne.s32.totalorder %s91, %s92
    %p103 = scmp.eq.s32.totalorder %s15, 0
    %p104 = por %p102, %p103
    %p105 = scmp.ne.s32.totalorder %s91, %s92
    %p106 = scmp.eq.s32.totalorder %s16, 1
    %p107 = por %p105, %p106
    %p109 = scmp.ne.s32.totalorder %s92, %s108
    %p110 = scmp.eq.s32.totalorder %s16, 0
    %p111 = por %p109, %p110
    %s112 = ssub.s32 %s10, %s17
    %p113 = scmp.eq.s32.totalorder %s112, 0
    %s115 = sadd.s32 %s114, 1
    %s116 = scalar_select %p113, %s114, %s115
    %p119 = pneg %p113
    %p120 = scmp.eq.s32.totalorder %s10, 1
    %p121 = por %p119, %p120
    %p122 = scmp.ne.s32.totalorder %s114, %s117
    %p123 = scmp.eq.s32.totalorder %s10, 0
    %p124 = por %p122, %p123
    %p125 = scmp.ne.s32.totalorder %s114, %s117
    %p126 = scmp.eq.s32.totalorder %s15, 1
    %p127 = por %p125, %p126
    %p128 = scmp.ne.s32.totalorder %s117, %s118
    %p129 = scmp.eq.s32.totalorder %s15, 0
    %p130 = por %p128, %p129
    %p131 = scmp.ne.s32.totalorder %s117, %s118
    %p132 = scmp.eq.s32.totalorder %s16, 1
    %p133 = por %p131, %p132
    %p135 = scmp.ne.s32.totalorder %s118, %s134
    %p136 = scmp.eq.s32.totalorder %s16, 0
    %p137 = por %p135, %p136
    %p138 = scmp.le.s32.totalorder 1, %s10
    %p139 = scmp.lt.s32.totalorder %s10, 3
    %p140 = pnand %p138, %p139
    %p141 = pneg %p140
    // Predicated region
    $region9: #{net2_forward.16} parent=5 // pred_check
      _
    $region10: #{net2_forward.16} parent=5 // pred_check_branch
      %143 = sbr.rel (%p140) target = $region12
    $region11: #{net2_forward.16} parent=5 // pred_region
      %s144 = ssub.s32 %s10, 1
      // Predicated region
      $region13: #{net2_forward.16} parent=11 // pred_check
        %p145 = pneg %p57
      $region14: #{net2_forward.16} parent=11 // pred_check_branch
        %147 = sbr.rel (%p145) target = $region16
      $region15: #{net2_forward.16} parent=11 // pred_region
        _
      $region16: #{net2_forward.16} parent=11 // pred_fallthru
        _
      // Predicated region
      $region17: #{net2_forward.16} parent=11 // pred_check
        %p148 = pneg %p78
      $region18: #{net2_forward.16} parent=11 // pred_check_branch
        %150 = sbr.rel (%p148) target = $region20
      $region19: #{net2_forward.16} parent=11 // pred_region
        _
      $region20: #{net2_forward.16} parent=11 // pred_fallthru
        _
    $region12: #{net2_forward.16} parent=5 // pred_fallthru
      _
    %p151 = scmp.lt.s32.totalorder %s10, 2
    // Predicated region
    $region21: #{net2_forward.16} parent=5 // pred_check
      %p152 = pneg %p151
    $region22: #{net2_forward.16} parent=5 // pred_check_branch
      %154 = sbr.rel (%p152) target = $region24
    $region23: #{net2_forward.16} parent=5 // pred_region
      // Predicated region
      $region25: #{net2_forward.16} parent=23 // pred_check
        %p155 = pneg %p30
      $region26: #{net2_forward.16} parent=23 // pred_check_branch
        %157 = sbr.rel (%p155) target = $region28
      $region27: #{net2_forward.16} parent=23 // pred_region
        %s158 = smul.u32 32, %s10
        %p159 = scmp.lt.s32.totalorder %s158, 63
        %s160 = scalar_select %p159, %s158, 63
        %s161 = smul.addr %s160, 2
        %s162 = smul.addr %s161, 4
        %s163 = scalar_lea.vmem %s0, %s162
        %s164 = smul.u32 32, %s10
      $region28: #{net2_forward.16} parent=23 // pred_fallthru
        _
      // Predicated region
      $region29: #{net2_forward.16} parent=23 // pred_check
        %p165 = pneg %p98
      $region30: #{net2_forward.16} parent=23 // pred_check_branch
        %167 = sbr.rel (%p165) target = $region32
      $region31: #{net2_forward.16} parent=23 // pred_region
        %s168 = smul.u32 32, %s10
        %p169 = scmp.lt.s32.totalorder %s168, 63
        %s170 = scalar_select %p169, %s168, 63
        %s171 = smul.addr %s170, 4
        %s172 = scalar_lea.vmem %s3, %s171
        %s173 = smul.u32 32, %s10
      $region32: #{net2_forward.16} parent=23 // pred_fallthru
        _
    $region24: #{net2_forward.16} parent=5 // pred_fallthru
      _
    %p174 = scmp.le.s32.totalorder 1, %s10
    %p175 = scmp.lt.s32.totalorder %s10, 3
    %p176 = pnand %p174, %p175
    %p177 = pneg %p176
    // Predicated region
    $region33: #{net2_forward.16} parent=5 // pred_check
      _
    $region34: #{net2_forward.16} parent=5 // pred_check_branch
      %179 = sbr.rel (%p176) target = $region36
    $region35: #{net2_forward.16} parent=5 // pred_region
      %s180 = ssub.s32 %s10, 1
      %s181 = smul.u32 32, %s15
      %p182 = scmp.lt.s32.totalorder %s181, 63
      %s183 = scalar_select %p182, %s181, 63
      %s184 = smul.addr %s183, 2
      %s185 = smul.addr %s184, 4
      %s186 = scalar_lea.vmem %s0, %s185
      %p187 = pneg %p36
      %p188 = pneg %p33
      %p189 = pneg %p57
      %p190 = pneg %p54
      %p191 = pneg %p78
      %p192 = pneg %p75
      %s193 = smul.u32 32, %s15
      %p194 = scmp.lt.s32.totalorder %s193, 63
      %s195 = scalar_select %p194, %s193, 63
      %s196 = smul.addr %s195, 4
      %s197 = scalar_lea.vmem %s3, %s196
      %p198 = pneg %p104
      %p199 = pneg %p101
      %p200 = pneg %p130
      %p201 = pneg %p127
      %s202 = smul.u32 32, %s15
      %p203 = scmp.lt.s32.totalorder %s202, 63
      %s204 = scalar_select %p203, %s202, 63
      %s205 = smul.addr %s204, 4
      %s206 = scalar_lea.vmem %s4, %s205
      %s207 = smul.u32 32, %s15
      %p208 = scmp.lt.s32.totalorder %s207, 63
      %s209 = scalar_select %p208, %s207, 63
      %s210 = smul.addr %s209, 2
      %s211 = smul.addr %s210, 4
      %s212 = scalar_lea.vmem %s0, %s211
      %s213 = smul.u32 32, %s15
      %s214 = smul.u32 32, %s15
      %p215 = scmp.lt.s32.totalorder %s214, 63
      %s216 = scalar_select %p215, %s214, 63
      %s217 = smul.addr %s216, 4
      %s218 = scalar_lea.vmem %s3, %s217
      %s219 = smul.u32 32, %s15
      %s220 = smul.u32 32, %s15
      %p221 = scmp.lt.s32.totalorder %s220, 63
      %s222 = scalar_select %p221, %s220, 63
      %s223 = smul.addr %s222, 4
      %s224 = scalar_lea.vmem %s4, %s223
      %s225 = smul.u32 32, %s15
      %v227 = vld [vmem:[%s212] sm:$0xff]
      %v228 = vld [vmem:[%s212 + $0x8] sm:$0xff]
      %v229 = vld [vmem:[%s212 + $0x10] sm:$0xff]
      %v230 = vld [vmem:[%s212 + $0x18] sm:$0xff]
      %v231 = vld [vmem:[%s212 + $0x20] sm:$0xff]
      %v232 = vld [vmem:[%s212 + $0x28] sm:$0xff]
      %v233 = vld [vmem:[%s212 + $0x30] sm:$0xff]
      %v234 = vld [vmem:[%s212 + $0x38] sm:$0xff]
      %v235 = vld [vmem:[%s212 + $0x40] sm:$0xff]
      %v236 = vld [vmem:[%s212 + $0x48] sm:$0xff]
      %v237 = vld [vmem:[%s212 + $0x50] sm:$0xff]
      %v238 = vld [vmem:[%s212 + $0x58] sm:$0xff]
      %v239 = vld [vmem:[%s212 + $0x60] sm:$0xff]
      %v240 = vld [vmem:[%s212 + $0x68] sm:$0xff]
      %v241 = vld [vmem:[%s212 + $0x70] sm:$0xff]
      %v242 = vld [vmem:[%s212 + $0x78] sm:$0xff]
      %v243 = vld [vmem:[%s212 + $0x80] sm:$0xff]
      %v244 = vld [vmem:[%s212 + $0x88] sm:$0xff]
      %v245 = vld [vmem:[%s212 + $0x90] sm:$0xff]
      %v246 = vld [vmem:[%s212 + $0x98] sm:$0xff]
      %v247 = vld [vmem:[%s212 + $0xa0] sm:$0xff]
      %v248 = vld [vmem:[%s212 + $0xa8] sm:$0xff]
      %v249 = vld [vmem:[%s212 + $0xb0] sm:$0xff]
      %v250 = vld [vmem:[%s212 + $0xb8] sm:$0xff]
      %v251 = vld [vmem:[%s212 + $0xc0] sm:$0xff]
      %v252 = vld [vmem:[%s212 + $0xc8] sm:$0xff]
      %v253 = vld [vmem:[%s212 + $0xd0] sm:$0xff]
      %v254 = vld [vmem:[%s212 + $0xd8] sm:$0xff]
      %v255 = vld [vmem:[%s212 + $0xe0] sm:$0xff]
      %v256 = vld [vmem:[%s212 + $0xe8] sm:$0xff]
      %v257 = vld [vmem:[%s212 + $0xf0] sm:$0xff]
      %v258 = vld [vmem:[%s212 + $0xf8] sm:$0xff]
      %v259 = vld [vmem:[%s1] sm:$0xf]
      %v260 = vld [vmem:[%s1 + $0x4] sm:$0xf]
      %v261 = vld [vmem:[%s1 + $0x8] sm:$0xf]
      %v262 = vld [vmem:[%s1 + $0xc] sm:$0xf]
      %v263 = vld [vmem:[%s1 + $0x10] sm:$0xf]
      %v264 = vld [vmem:[%s1 + $0x14] sm:$0xf]
      %v265 = vld [vmem:[%s1 + $0x18] sm:$0xf]
      %v266 = vld [vmem:[%s1 + $0x1c] sm:$0xf]
      %v267 = vld [vmem:[%s1 + $0x20] sm:$0xf]
      %v268 = vld [vmem:[%s1 + $0x24] sm:$0xf]
      %v269 = vld [vmem:[%s1 + $0x28] sm:$0xf]
      %v270 = vld [vmem:[%s1 + $0x2c] sm:$0xf]
      %v271 = vld [vmem:[%s1 + $0x30] sm:$0xf]
      %v272 = vld [vmem:[%s1 + $0x34] sm:$0xf]
      %v273 = vld [vmem:[%s1 + $0x38] sm:$0xf]
      %v274 = vld [vmem:[%s1 + $0x3c] sm:$0xf]
      %v275 = vld [vmem:[%s1 + $0x40] sm:$0xf]
      %v276 = vld [vmem:[%s1 + $0x44] sm:$0xf]
      %v277 = vld [vmem:[%s2] sm:$0x1]
      %v279 = vperm.slane %v277, 0
      %v313 = vunpack.c.l.b16 %v227
      %v314 = vunpack.c.h.b16 %v227
      %v315 = vunpack.c.l.b16 %v228
      %v316 = vunpack.c.h.b16 %v228
      %v317 = vunpack.c.l.b16 %v229
      %v318 = vunpack.c.h.b16 %v229
      %v319 = vunpack.c.l.b16 %v230
      %v320 = vunpack.c.h.b16 %v230
      %v321 = vunpack.c.l.b16 %v231
      %v322 = vunpack.c.h.b16 %v231
      %v323 = vunpack.c.l.b16 %v232
      %v324 = vunpack.c.h.b16 %v232
      %v325 = vunpack.c.l.b16 %v233
      %v326 = vunpack.c.h.b16 %v233
      %v327 = vunpack.c.l.b16 %v234
      %v328 = vunpack.c.h.b16 %v234
      %v329 = vunpack.c.l.b16 %v235
      %v330 = vunpack.c.h.b16 %v235
      %v331 = vunpack.c.l.b16 %v236
      %v332 = vunpack.c.h.b16 %v236
      %v333 = vunpack.c.l.b16 %v237
      %v334 = vunpack.c.h.b16 %v237
      %v335 = vunpack.c.l.b16 %v238
      %v336 = vunpack.c.h.b16 %v238
      %v337 = vunpack.c.l.b16 %v239
      %v338 = vunpack.c.h.b16 %v239
      %v339 = vunpack.c.l.b16 %v240
      %v340 = vunpack.c.h.b16 %v240
      %v341 = vunpack.c.l.b16 %v241
      %v342 = vunpack.c.h.b16 %v241
      %v343 = vunpack.c.l.b16 %v242
      %v344 = vunpack.c.h.b16 %v242
      %v345 = vunpack.c.l.b16 %v243
      %v346 = vunpack.c.h.b16 %v243
      %v347 = vunpack.c.l.b16 %v244
      %v348 = vunpack.c.h.b16 %v244
      %v349 = vunpack.c.l.b16 %v245
      %v350 = vunpack.c.h.b16 %v245
      %v351 = vunpack.c.l.b16 %v246
      %v352 = vunpack.c.h.b16 %v246
      %v353 = vunpack.c.l.b16 %v247
      %v354 = vunpack.c.h.b16 %v247
      %v355 = vunpack.c.l.b16 %v248
      %v356 = vunpack.c.h.b16 %v248
      %v357 = vunpack.c.l.b16 %v249
      %v358 = vunpack.c.h.b16 %v249
      %v359 = vunpack.c.l.b16 %v250
      %v360 = vunpack.c.h.b16 %v250
      %v361 = vunpack.c.l.b16 %v251
      %v362 = vunpack.c.h.b16 %v251
      %v363 = vunpack.c.l.b16 %v252
      %v364 = vunpack.c.h.b16 %v252
      %v365 = vunpack.c.l.b16 %v253
      %v366 = vunpack.c.h.b16 %v253
      %v367 = vunpack.c.l.b16 %v254
      %v368 = vunpack.c.h.b16 %v254
      %v369 = vunpack.c.l.b16 %v255
      %v370 = vunpack.c.h.b16 %v255
      %v371 = vunpack.c.l.b16 %v256
      %v372 = vunpack.c.h.b16 %v256
      %v373 = vunpack.c.l.b16 %v257
      %v374 = vunpack.c.h.b16 %v257
      %v375 = vunpack.c.l.b16 %v258
      %v376 = vunpack.c.h.b16 %v258
      %v377 = vpack.c.b16 %v315, %v313
      %v378 = vpack.c.b16 %v316, %v314
      %v379 = vpack.c.b16 %v319, %v317
      %v380 = vpack.c.b16 %v320, %v318
      %v381 = vpack.c.b16 %v323, %v321
      %v382 = vpack.c.b16 %v324, %v322
      %v383 = vpack.c.b16 %v327, %v325
      %v384 = vpack.c.b16 %v328, %v326
      %v385 = vpack.c.b16 %v331, %v329
      %v386 = vpack.c.b16 %v332, %v330
      %v387 = vpack.c.b16 %v335, %v333
      %v388 = vpack.c.b16 %v336, %v334
      %v389 = vpack.c.b16 %v339, %v337
      %v390 = vpack.c.b16 %v340, %v338
      %v391 = vpack.c.b16 %v343, %v341
      %v392 = vpack.c.b16 %v344, %v342
      %v393 = vpack.c.b16 %v347, %v345
      %v394 = vpack.c.b16 %v348, %v346
      %v395 = vpack.c.b16 %v351, %v349
      %v396 = vpack.c.b16 %v352, %v350
      %v397 = vpack.c.b16 %v355, %v353
      %v398 = vpack.c.b16 %v356, %v354
      %v399 = vpack.c.b16 %v359, %v357
      %v400 = vpack.c.b16 %v360, %v358
      %v401 = vpack.c.b16 %v363, %v361
      %v402 = vpack.c.b16 %v364, %v362
      %v403 = vpack.c.b16 %v367, %v365
      %v404 = vpack.c.b16 %v368, %v366
      %v405 = vpack.c.b16 %v371, %v369
      %v406 = vpack.c.b16 %v372, %v370
      %v407 = vpack.c.b16 %v375, %v373
      %v408 = vpack.c.b16 %v376, %v374
      %v443 = vunpack.c.l.b16 %v259
      %v444 = vunpack.c.l.b16 %v260
      %v445 = vunpack.c.l.b16 %v261
      %v446 = vunpack.c.l.b16 %v262
      %v447 = vunpack.c.l.b16 %v263
      %v448 = vunpack.c.l.b16 %v264
      %v449 = vunpack.c.l.b16 %v265
      %v450 = vunpack.c.l.b16 %v266
      %v451 = vunpack.c.l.b16 %v267
      %v452 = vunpack.c.l.b16 %v268
      %v453 = vunpack.c.l.b16 %v269
      %v454 = vunpack.c.l.b16 %v270
      %v455 = vunpack.c.l.b16 %v271
      %v456 = vunpack.c.l.b16 %v272
      %v457 = vunpack.c.l.b16 %v273
      %v458 = vunpack.c.l.b16 %v274
      %v459 = vunpack.c.l.b16 %v275
      %v460 = vunpack.c.l.b16 %v276
      %v461 = vpack.c.b16 %v444, %v443
      %v462 = vpack.c.b16 %v446, %v445
      %v463 = vpack.c.b16 %v448, %v447
      %v464 = vpack.c.b16 %v450, %v449
      %v465 = vpack.c.b16 %v452, %v451
      %v466 = vpack.c.b16 %v454, %v453
      %v467 = vpack.c.b16 %v456, %v455
      %v468 = vpack.c.b16 %v458, %v457
      %v469 = vpack.c.b16 %v460, %v459
      %vm479 = vcmask 130048
      %v481 = vsel %vm479, %v378, 0
      %v484 = vsel %vm479, %v380, 0
      %v487 = vsel %vm479, %v382, 0
      %v490 = vsel %vm479, %v384, 0
      %v493 = vsel %vm479, %v386, 0
      %v496 = vsel %vm479, %v388, 0
      %v499 = vsel %vm479, %v390, 0
      %v502 = vsel %vm479, %v392, 0
      %v505 = vsel %vm479, %v394, 0
      %v508 = vsel %vm479, %v396, 0
      %v511 = vsel %vm479, %v398, 0
      %v514 = vsel %vm479, %v400, 0
      %v517 = vsel %vm479, %v402, 0
      %v520 = vsel %vm479, %v404, 0
      %v523 = vsel %vm479, %v406, 0
      %v526 = vsel %vm479, %v408, 0
      %528 = vmatpush.bf16.msra.mxu0 %v468
      %529 = vmatpush.bf16.msra.mxu0 %v467
      %530 = vmatpush.bf16.msra.mxu0 %v466
      %531 = vmatpush.bf16.msra.mxu0 %v465
      %532 = vmatpush.bf16.msra.mxu0 %v464
      %533 = vmatpush.bf16.msra.mxu0 %v463
      %534 = vmatpush.bf16.msra.mxu0 %v462
      %535 = vmatpush.bf16.msra.mxu0 %v461
      %536 = vmatmul.bf16.gmra.mxu0 %v377
      %v537 = vpop.f32.mrf.mxu0
      %v538 = vadd.f32 %v279, %v537
      %v539 = vpop.f32.mrf.mxu0
      %v540 = vadd.f32 %v279, %v539
      %541 = vmatmul.bf16.gmra.mxu0 %v379
      %v542 = vpop.f32.mrf.mxu0
      %v543 = vadd.f32 %v279, %v542
      %v544 = vpop.f32.mrf.mxu0
      %v545 = vadd.f32 %v279, %v544
      %546 = vmatmul.bf16.gmra.mxu0 %v381
      %v547 = vpop.f32.mrf.mxu0
      %v548 = vadd.f32 %v279, %v547
      %v549 = vpop.f32.mrf.mxu0
      %v550 = vadd.f32 %v279, %v549
      %551 = vmatmul.bf16.gmra.mxu0 %v383
      %v552 = vpop.f32.mrf.mxu0
      %v553 = vadd.f32 %v279, %v552
      %v554 = vpop.f32.mrf.mxu0
      %v555 = vadd.f32 %v279, %v554
      %556 = vmatmul.bf16.gmra.mxu0 %v385
      %v557 = vpop.f32.mrf.mxu0
      %v558 = vadd.f32 %v279, %v557
      %v559 = vpop.f32.mrf.mxu0
      %v560 = vadd.f32 %v279, %v559
      %561 = vmatmul.bf16.gmra.mxu0 %v387
      %v562 = vpop.f32.mrf.mxu0
      %v563 = vadd.f32 %v279, %v562
      %v564 = vpop.f32.mrf.mxu0
      %v565 = vadd.f32 %v279, %v564
      %566 = vmatmul.bf16.gmra.mxu0 %v389
      %v567 = vpop.f32.mrf.mxu0
      %v568 = vadd.f32 %v279, %v567
      %v569 = vpop.f32.mrf.mxu0
      %v570 = vadd.f32 %v279, %v569
      %571 = vmatmul.bf16.gmra.mxu0 %v391
      %v572 = vpop.f32.mrf.mxu0
      %v573 = vadd.f32 %v279, %v572
      %v574 = vpop.f32.mrf.mxu0
      %v575 = vadd.f32 %v279, %v574
      %576 = vmatmul.bf16.gmra.mxu0 %v393
      %v577 = vpop.f32.mrf.mxu0
      %v578 = vadd.f32 %v279, %v577
      %v579 = vpop.f32.mrf.mxu0
      %v580 = vadd.f32 %v279, %v579
      %581 = vmatmul.bf16.gmra.mxu0 %v395
      %v582 = vpop.f32.mrf.mxu0
      %v583 = vadd.f32 %v279, %v582
      %v584 = vpop.f32.mrf.mxu0
      %v585 = vadd.f32 %v279, %v584
      %586 = vmatmul.bf16.gmra.mxu0 %v397
      %v587 = vpop.f32.mrf.mxu0
      %v588 = vadd.f32 %v279, %v587
      %v589 = vpop.f32.mrf.mxu0
      %v590 = vadd.f32 %v279, %v589
      %591 = vmatmul.bf16.gmra.mxu0 %v399
      %v592 = vpop.f32.mrf.mxu0
      %v593 = vadd.f32 %v279, %v592
      %v594 = vpop.f32.mrf.mxu0
      %v595 = vadd.f32 %v279, %v594
      %596 = vmatmul.bf16.gmra.mxu0 %v401
      %v597 = vpop.f32.mrf.mxu0
      %v598 = vadd.f32 %v279, %v597
      %v599 = vpop.f32.mrf.mxu0
      %v600 = vadd.f32 %v279, %v599
      %601 = vmatmul.bf16.gmra.mxu0 %v403
      %v602 = vpop.f32.mrf.mxu0
      %v603 = vadd.f32 %v279, %v602
      %v604 = vpop.f32.mrf.mxu0
      %v605 = vadd.f32 %v279, %v604
      %606 = vmatmul.bf16.gmra.mxu0 %v405
      %v607 = vpop.f32.mrf.mxu0
      %v608 = vadd.f32 %v279, %v607
      %v609 = vpop.f32.mrf.mxu0
      %v610 = vadd.f32 %v279, %v609
      %611 = vmatmul.bf16.gmra.mxu0 %v407
      %v612 = vpop.f32.mrf.mxu0
      %v613 = vadd.f32 %v279, %v612
      %v614 = vpop.f32.mrf.mxu0
      %v615 = vadd.f32 %v279, %v614
      %616 = vdwg.mxu0
      %617 = vmatpush.bf16.msra.mxu0 0
      %618 = vmatpush.bf16.msra.mxu0 0
      %619 = vmatpush.bf16.msra.mxu0 0
      %620 = vmatpush.bf16.msra.mxu0 0
      %621 = vmatpush.bf16.msra.mxu0 0
      %622 = vmatpush.bf16.msra.mxu0 0
      %623 = vmatpush.bf16.msra.mxu0 0
      %624 = vmatpush.bf16.msra.mxu0 %v469
      %625 = vmatmul.bf16.gmra.mxu0 %v481
      %v626 = vpop.f32.mrf.mxu0
      %v627 = vadd.f32 %v538, %v626
      %v628 = vpop.f32.mrf.mxu0
      %v629 = vadd.f32 %v540, %v628
      %630 = vmatmul.bf16.gmra.mxu0 %v484
      %v631 = vpop.f32.mrf.mxu0
      %v632 = vadd.f32 %v543, %v631
      %v633 = vpop.f32.mrf.mxu0
      %v634 = vadd.f32 %v545, %v633
      %635 = vmatmul.bf16.gmra.mxu0 %v487
      %v636 = vpop.f32.mrf.mxu0
      %v637 = vadd.f32 %v548, %v636
      %v638 = vpop.f32.mrf.mxu0
      %v639 = vadd.f32 %v550, %v638
      %640 = vmatmul.bf16.gmra.mxu0 %v490
      %v641 = vpop.f32.mrf.mxu0
      %v642 = vadd.f32 %v553, %v641
      %v643 = vpop.f32.mrf.mxu0
      %v644 = vadd.f32 %v555, %v643
      %645 = vmatmul.bf16.gmra.mxu0 %v493
      %v646 = vpop.f32.mrf.mxu0
      %v647 = vadd.f32 %v558, %v646
      %v648 = vpop.f32.mrf.mxu0
      %v649 = vadd.f32 %v560, %v648
      %650 = vmatmul.bf16.gmra.mxu0 %v496
      %v651 = vpop.f32.mrf.mxu0
      %v652 = vadd.f32 %v563, %v651
      %v653 = vpop.f32.mrf.mxu0
      %v654 = vadd.f32 %v565, %v653
      %655 = vmatmul.bf16.gmra.mxu0 %v499
      %v656 = vpop.f32.mrf.mxu0
      %v657 = vadd.f32 %v568, %v656
      %v658 = vpop.f32.mrf.mxu0
      %v659 = vadd.f32 %v570, %v658
      %660 = vmatmul.bf16.gmra.mxu0 %v502
      %v661 = vpop.f32.mrf.mxu0
      %v662 = vadd.f32 %v573, %v661
      %v663 = vpop.f32.mrf.mxu0
      %v664 = vadd.f32 %v575, %v663
      %665 = vmatmul.bf16.gmra.mxu0 %v505
      %v666 = vpop.f32.mrf.mxu0
      %v667 = vadd.f32 %v578, %v666
      %v668 = vpop.f32.mrf.mxu0
      %v669 = vadd.f32 %v580, %v668
      %670 = vmatmul.bf16.gmra.mxu0 %v508
      %v671 = vpop.f32.mrf.mxu0
      %v672 = vadd.f32 %v583, %v671
      %v673 = vpop.f32.mrf.mxu0
      %v674 = vadd.f32 %v585, %v673
      %675 = vmatmul.bf16.gmra.mxu0 %v511
      %v676 = vpop.f32.mrf.mxu0
      %v677 = vadd.f32 %v588, %v676
      %v678 = vpop.f32.mrf.mxu0
      %v679 = vadd.f32 %v590, %v678
      %680 = vmatmul.bf16.gmra.mxu0 %v514
      %v681 = vpop.f32.mrf.mxu0
      %v682 = vadd.f32 %v593, %v681
      %v683 = vpop.f32.mrf.mxu0
      %v684 = vadd.f32 %v595, %v683
      %685 = vmatmul.bf16.gmra.mxu0 %v517
      %v686 = vpop.f32.mrf.mxu0
      %v687 = vadd.f32 %v598, %v686
      %v688 = vpop.f32.mrf.mxu0
      %v689 = vadd.f32 %v600, %v688
      %690 = vmatmul.bf16.gmra.mxu0 %v520
      %v691 = vpop.f32.mrf.mxu0
      %v692 = vadd.f32 %v603, %v691
      %v693 = vpop.f32.mrf.mxu0
      %v694 = vadd.f32 %v605, %v693
      %695 = vmatmul.bf16.gmra.mxu0 %v523
      %v696 = vpop.f32.mrf.mxu0
      %v697 = vadd.f32 %v608, %v696
      %v698 = vpop.f32.mrf.mxu0
      %v699 = vadd.f32 %v610, %v698
      %700 = vmatmul.bf16.gmra.mxu0 %v526
      %v701 = vpop.f32.mrf.mxu0
      %v702 = vadd.f32 %v613, %v701
      %v703 = vpop.f32.mrf.mxu0
      %v704 = vadd.f32 %v615, %v703
      %705 = vdwg.mxu0
      %vm706 = vcmp.ge.f32.partialorder %v627, 0.0
      %vm707 = vcmp.ge.f32.partialorder %v629, 0.0
      %vm708 = vcmp.ge.f32.partialorder %v632, 0.0
      %vm709 = vcmp.ge.f32.partialorder %v634, 0.0
      %vm710 = vcmp.ge.f32.partialorder %v637, 0.0
      %vm711 = vcmp.ge.f32.partialorder %v639, 0.0
      %vm712 = vcmp.ge.f32.partialorder %v642, 0.0
      %vm713 = vcmp.ge.f32.partialorder %v644, 0.0
      %vm714 = vcmp.ge.f32.partialorder %v647, 0.0
      %vm715 = vcmp.ge.f32.partialorder %v649, 0.0
      %vm716 = vcmp.ge.f32.partialorder %v652, 0.0
      %vm717 = vcmp.ge.f32.partialorder %v654, 0.0
      %vm718 = vcmp.ge.f32.partialorder %v657, 0.0
      %vm719 = vcmp.ge.f32.partialorder %v659, 0.0
      %vm720 = vcmp.ge.f32.partialorder %v662, 0.0
      %vm721 = vcmp.ge.f32.partialorder %v664, 0.0
      %vm722 = vcmp.ge.f32.partialorder %v667, 0.0
      %vm723 = vcmp.ge.f32.partialorder %v669, 0.0
      %vm724 = vcmp.ge.f32.partialorder %v672, 0.0
      %vm725 = vcmp.ge.f32.partialorder %v674, 0.0
      %vm726 = vcmp.ge.f32.partialorder %v677, 0.0
      %vm727 = vcmp.ge.f32.partialorder %v679, 0.0
      %vm728 = vcmp.ge.f32.partialorder %v682, 0.0
      %vm729 = vcmp.ge.f32.partialorder %v684, 0.0
      %vm730 = vcmp.ge.f32.partialorder %v687, 0.0
      %vm731 = vcmp.ge.f32.partialorder %v689, 0.0
      %vm732 = vcmp.ge.f32.partialorder %v692, 0.0
      %vm733 = vcmp.ge.f32.partialorder %v694, 0.0
      %vm734 = vcmp.ge.f32.partialorder %v697, 0.0
      %vm735 = vcmp.ge.f32.partialorder %v699, 0.0
      %vm736 = vcmp.ge.f32.partialorder %v702, 0.0
      %vm737 = vcmp.ge.f32.partialorder %v704, 0.0
      %v738 = vmul.f32 %v627, 0.25
      %v739 = vmul.f32 %v629, 0.25
      %v740 = vmul.f32 %v632, 0.25
      %v741 = vmul.f32 %v634, 0.25
      %v742 = vmul.f32 %v637, 0.25
      %v743 = vmul.f32 %v639, 0.25
      %v744 = vmul.f32 %v642, 0.25
      %v745 = vmul.f32 %v644, 0.25
      %v746 = vmul.f32 %v647, 0.25
      %v747 = vmul.f32 %v649, 0.25
      %v748 = vmul.f32 %v652, 0.25
      %v749 = vmul.f32 %v654, 0.25
      %v750 = vmul.f32 %v657, 0.25
      %v751 = vmul.f32 %v659, 0.25
      %v752 = vmul.f32 %v662, 0.25
      %v753 = vmul.f32 %v664, 0.25
      %v754 = vmul.f32 %v667, 0.25
      %v755 = vmul.f32 %v669, 0.25
      %v756 = vmul.f32 %v672, 0.25
      %v757 = vmul.f32 %v674, 0.25
      %v758 = vmul.f32 %v677, 0.25
      %v759 = vmul.f32 %v679, 0.25
      %v760 = vmul.f32 %v682, 0.25
      %v761 = vmul.f32 %v684, 0.25
      %v762 = vmul.f32 %v687, 0.25
      %v763 = vmul.f32 %v689, 0.25
      %v764 = vmul.f32 %v692, 0.25
      %v765 = vmul.f32 %v694, 0.25
      %v766 = vmul.f32 %v697, 0.25
      %v767 = vmul.f32 %v699, 0.25
      %v768 = vmul.f32 %v702, 0.25
      %v769 = vmul.f32 %v704, 0.25
      %v770 = vsel %vm706, %v627, %v738
      %v771 = vsel %vm707, %v629, %v739
      %v772 = vsel %vm708, %v632, %v740
      %v773 = vsel %vm709, %v634, %v741
      %v774 = vsel %vm710, %v637, %v742
      %v775 = vsel %vm711, %v639, %v743
      %v776 = vsel %vm712, %v642, %v744
      %v777 = vsel %vm713, %v644, %v745
      %v778 = vsel %vm714, %v647, %v746
      %v779 = vsel %vm715, %v649, %v747
      %v780 = vsel %vm716, %v652, %v748
      %v781 = vsel %vm717, %v654, %v749
      %v782 = vsel %vm718, %v657, %v750
      %v783 = vsel %vm719, %v659, %v751
      %v784 = vsel %vm720, %v662, %v752
      %v785 = vsel %vm721, %v664, %v753
      %v786 = vsel %vm722, %v667, %v754
      %v787 = vsel %vm723, %v669, %v755
      %v788 = vsel %vm724, %v672, %v756
      %v789 = vsel %vm725, %v674, %v757
      %v790 = vsel %vm726, %v677, %v758
      %v791 = vsel %vm727, %v679, %v759
      %v792 = vsel %vm728, %v682, %v760
      %v793 = vsel %vm729, %v684, %v761
      %v794 = vsel %vm730, %v687, %v762
      %v795 = vsel %vm731, %v689, %v763
      %v796 = vsel %vm732, %v692, %v764
      %v797 = vsel %vm733, %v694, %v765
      %v798 = vsel %vm734, %v697, %v766
      %v799 = vsel %vm735, %v699, %v767
      %v800 = vsel %vm736, %v702, %v768
      %v801 = vsel %vm737, %v704, %v769
      %v802 = vld [vmem:[%s218] sm:$0xf]
      %v803 = vld [vmem:[%s218 + $0x4] sm:$0xf]
      %v804 = vld [vmem:[%s218 + $0x8] sm:$0xf]
      %v805 = vld [vmem:[%s218 + $0xc] sm:$0xf]
      %v806 = vld [vmem:[%s218 + $0x10] sm:$0xf]
      %v807 = vld [vmem:[%s218 + $0x14] sm:$0xf]
      %v808 = vld [vmem:[%s218 + $0x18] sm:$0xf]
      %v809 = vld [vmem:[%s218 + $0x1c] sm:$0xf]
      %v810 = vld [vmem:[%s218 + $0x20] sm:$0xf]
      %v811 = vld [vmem:[%s218 + $0x24] sm:$0xf]
      %v812 = vld [vmem:[%s218 + $0x28] sm:$0xf]
      %v813 = vld [vmem:[%s218 + $0x2c] sm:$0xf]
      %v814 = vld [vmem:[%s218 + $0x30] sm:$0xf]
      %v815 = vld [vmem:[%s218 + $0x34] sm:$0xf]
      %v816 = vld [vmem:[%s218 + $0x38] sm:$0xf]
      %v817 = vld [vmem:[%s218 + $0x3c] sm:$0xf]
      %v818 = vld [vmem:[%s218 + $0x40] sm:$0xf]
      %v819 = vld [vmem:[%s218 + $0x44] sm:$0xf]
      %v820 = vld [vmem:[%s218 + $0x48] sm:$0xf]
      %v821 = vld [vmem:[%s218 + $0x4c] sm:$0xf]
      %v822 = vld [vmem:[%s218 + $0x50] sm:$0xf]
      %v823 = vld [vmem:[%s218 + $0x54] sm:$0xf]
      %v824 = vld [vmem:[%s218 + $0x58] sm:$0xf]
      %v825 = vld [vmem:[%s218 + $0x5c] sm:$0xf]
      %v826 = vld [vmem:[%s218 + $0x60] sm:$0xf]
      %v827 = vld [vmem:[%s218 + $0x64] sm:$0xf]
      %v828 = vld [vmem:[%s218 + $0x68] sm:$0xf]
      %v829 = vld [vmem:[%s218 + $0x6c] sm:$0xf]
      %v830 = vld [vmem:[%s218 + $0x70] sm:$0xf]
      %v831 = vld [vmem:[%s218 + $0x74] sm:$0xf]
      %v832 = vld [vmem:[%s218 + $0x78] sm:$0xf]
      %v833 = vld [vmem:[%s218 + $0x7c] sm:$0xf]
      %v834 = vunpack.c.l.bf16 %v802
      %v835 = vunpack.c.l.bf16 %v803
      %v836 = vunpack.c.l.bf16 %v804
      %v837 = vunpack.c.l.bf16 %v805
      %v838 = vunpack.c.l.bf16 %v806
      %v839 = vunpack.c.l.bf16 %v807
      %v840 = vunpack.c.l.bf16 %v808
      %v841 = vunpack.c.l.bf16 %v809
      %v842 = vunpack.c.l.bf16 %v810
      %v843 = vunpack.c.l.bf16 %v811
      %v844 = vunpack.c.l.bf16 %v812
      %v845 = vunpack.c.l.bf16 %v813
      %v846 = vunpack.c.l.bf16 %v814
      %v847 = vunpack.c.l.bf16 %v815
      %v848 = vunpack.c.l.bf16 %v816
      %v849 = vunpack.c.l.bf16 %v817
      %v850 = vunpack.c.l.bf16 %v818
      %v851 = vunpack.c.l.bf16 %v819
      %v852 = vunpack.c.l.bf16 %v820
      %v853 = vunpack.c.l.bf16 %v821
      %v854 = vunpack.c.l.bf16 %v822
      %v855 = vunpack.c.l.bf16 %v823
      %v856 = vunpack.c.l.bf16 %v824
      %v857 = vunpack.c.l.bf16 %v825
      %v858 = vunpack.c.l.bf16 %v826
      %v859 = vunpack.c.l.bf16 %v827
      %v860 = vunpack.c.l.bf16 %v828
      %v861 = vunpack.c.l.bf16 %v829
      %v862 = vunpack.c.l.bf16 %v830
      %v863 = vunpack.c.l.bf16 %v831
      %v864 = vunpack.c.l.bf16 %v832
      %v865 = vunpack.c.l.bf16 %v833
      %v866 = vadd.f32 %v770, %v834
      %v867 = vadd.f32 %v771, %v835
      %v868 = vadd.f32 %v772, %v836
      %v869 = vadd.f32 %v773, %v837
      %v870 = vadd.f32 %v774, %v838
      %v871 = vadd.f32 %v775, %v839
      %v872 = vadd.f32 %v776, %v840
      %v873 = vadd.f32 %v777, %v841
      %v874 = vadd.f32 %v778, %v842
      %v875 = vadd.f32 %v779, %v843
      %v876 = vadd.f32 %v780, %v844
      %v877 = vadd.f32 %v781, %v845
      %v878 = vadd.f32 %v782, %v846
      %v879 = vadd.f32 %v783, %v847
      %v880 = vadd.f32 %v784, %v848
      %v881 = vadd.f32 %v785, %v849
      %v882 = vadd.f32 %v786, %v850
      %v883 = vadd.f32 %v787, %v851
      %v884 = vadd.f32 %v788, %v852
      %v885 = vadd.f32 %v789, %v853
      %v886 = vadd.f32 %v790, %v854
      %v887 = vadd.f32 %v791, %v855
      %v888 = vadd.f32 %v792, %v856
      %v889 = vadd.f32 %v793, %v857
      %v890 = vadd.f32 %v794, %v858
      %v891 = vadd.f32 %v795, %v859
      %v892 = vadd.f32 %v796, %v860
      %v893 = vadd.f32 %v797, %v861
      %v894 = vadd.f32 %v798, %v862
      %v895 = vadd.f32 %v799, %v863
      %v896 = vadd.f32 %v800, %v864
      %v897 = vadd.f32 %v801, %v865
      %v898 = vpack.c.bf16 %v866, %v866
      %v899 = vpack.c.bf16 %v867, %v867
      %v900 = vpack.c.bf16 %v868, %v868
      %v901 = vpack.c.bf16 %v869, %v869
      %v902 = vpack.c.bf16 %v870, %v870
      %v903 = vpack.c.bf16 %v871, %v871
      %v904 = vpack.c.bf16 %v872, %v872
      %v905 = vpack.c.bf16 %v873, %v873
      %v906 = vpack.c.bf16 %v874, %v874
      %v907 = vpack.c.bf16 %v875, %v875
      %v908 = vpack.c.bf16 %v876, %v876
      %v909 = vpack.c.bf16 %v877, %v877
      %v910 = vpack.c.bf16 %v878, %v878
      %v911 = vpack.c.bf16 %v879, %v879
      %v912 = vpack.c.bf16 %v880, %v880
      %v913 = vpack.c.bf16 %v881, %v881
      %v914 = vpack.c.bf16 %v882, %v882
      %v915 = vpack.c.bf16 %v883, %v883
      %v916 = vpack.c.bf16 %v884, %v884
      %v917 = vpack.c.bf16 %v885, %v885
      %v918 = vpack.c.bf16 %v886, %v886
      %v919 = vpack.c.bf16 %v887, %v887
      %v920 = vpack.c.bf16 %v888, %v888
      %v921 = vpack.c.bf16 %v889, %v889
      %v922 = vpack.c.bf16 %v890, %v890
      %v923 = vpack.c.bf16 %v891, %v891
      %v924 = vpack.c.bf16 %v892, %v892
      %v925 = vpack.c.bf16 %v893, %v893
      %v926 = vpack.c.bf16 %v894, %v894
      %v927 = vpack.c.bf16 %v895, %v895
      %v928 = vpack.c.bf16 %v896, %v896
      %v929 = vpack.c.bf16 %v897, %v897
      %vm930 = vcmask 519168
      %931 = vst.msk [vmem:[%s224] sm:$0xf] %vm930, %v898
      %932 = vst.msk [vmem:[%s224 + $0x4] sm:$0xf] %vm930, %v899
      %933 = vst.msk [vmem:[%s224 + $0x8] sm:$0xf] %vm930, %v900
      %934 = vst.msk [vmem:[%s224 + $0xc] sm:$0xf] %vm930, %v901
      %935 = vst.msk [vmem:[%s224 + $0x10] sm:$0xf] %vm930, %v902
      %936 = vst.msk [vmem:[%s224 + $0x14] sm:$0xf] %vm930, %v903
      %937 = vst.msk [vmem:[%s224 + $0x18] sm:$0xf] %vm930, %v904
      %938 = vst.msk [vmem:[%s224 + $0x1c] sm:$0xf] %vm930, %v905
      %939 = vst.msk [vmem:[%s224 + $0x20] sm:$0xf] %vm930, %v906
      %940 = vst.msk [vmem:[%s224 + $0x24] sm:$0xf] %vm930, %v907
      %941 = vst.msk [vmem:[%s224 + $0x28] sm:$0xf] %vm930, %v908
      %942 = vst.msk [vmem:[%s224 + $0x2c] sm:$0xf] %vm930, %v909
      %943 = vst.msk [vmem:[%s224 + $0x30] sm:$0xf] %vm930, %v910
      %944 = vst.msk [vmem:[%s224 + $0x34] sm:$0xf] %vm930, %v911
      %945 = vst.msk [vmem:[%s224 + $0x38] sm:$0xf] %vm930, %v912
      %946 = vst.msk [vmem:[%s224 + $0x3c] sm:$0xf] %vm930, %v913
      %947 = vst.msk [vmem:[%s224 + $0x40] sm:$0xf] %vm930, %v914
      %948 = vst.msk [vmem:[%s224 + $0x44] sm:$0xf] %vm930, %v915
      %949 = vst.msk [vmem:[%s224 + $0x48] sm:$0xf] %vm930, %v916
      %950 = vst.msk [vmem:[%s224 + $0x4c] sm:$0xf] %vm930, %v917
      %951 = vst.msk [vmem:[%s224 + $0x50] sm:$0xf] %vm930, %v918
      %952 = vst.msk [vmem:[%s224 + $0x54] sm:$0xf] %vm930, %v919
      %953 = vst.msk [vmem:[%s224 + $0x58] sm:$0xf] %vm930, %v920
      %954 = vst.msk [vmem:[%s224 + $0x5c] sm:$0xf] %vm930, %v921
      %955 = vst.msk [vmem:[%s224 + $0x60] sm:$0xf] %vm930, %v922
      %956 = vst.msk [vmem:[%s224 + $0x64] sm:$0xf] %vm930, %v923
      %957 = vst.msk [vmem:[%s224 + $0x68] sm:$0xf] %vm930, %v924
      %958 = vst.msk [vmem:[%s224 + $0x6c] sm:$0xf] %vm930, %v925
      %959 = vst.msk [vmem:[%s224 + $0x70] sm:$0xf] %vm930, %v926
      %960 = vst.msk [vmem:[%s224 + $0x74] sm:$0xf] %vm930, %v927
      %961 = vst.msk [vmem:[%s224 + $0x78] sm:$0xf] %vm930, %v928
      %962 = vst.msk [vmem:[%s224 + $0x7c] sm:$0xf] %vm930, %v929
      %s963 = smul.u32 32, %s15
      %p964 = scmp.lt.s32.totalorder %s963, 63
      %s965 = scalar_select %p964, %s963, 63
      %s966 = smul.addr %s965, 4
      %s967 = scalar_lea.vmem %s4, %s966
      // Predicated region
      $region37: #{net2_forward.16} parent=35 // pred_check
        %p968 = pneg %p127
      $region38: #{net2_forward.16} parent=35 // pred_check_branch
        %970 = sbr.rel (%p968) target = $region40
      $region39: #{net2_forward.16} parent=35 // pred_region
        %s971 = smul.u32 32, %s15
      $region40: #{net2_forward.16} parent=35 // pred_fallthru
        _
    $region36: #{net2_forward.16} parent=5 // pred_fallthru
      _
    %p972 = scmp.le.s32.totalorder 2, %s10
    // Predicated region
    $region41: #{net2_forward.16} parent=5 // pred_check
      %p973 = pneg %p972
    $region42: #{net2_forward.16} parent=5 // pred_check_branch
      %975 = sbr.rel (%p973) target = $region44
    $region43: #{net2_forward.16} parent=5 // pred_region
      %s976 = ssub.s32 %s10, 2
      // Predicated region
      $region45: #{net2_forward.16} parent=43 // pred_check
        %p977 = pneg %p133
      $region46: #{net2_forward.16} parent=43 // pred_check_branch
        %979 = sbr.rel (%p977) target = $region48
      $region47: #{net2_forward.16} parent=43 // pred_region
        %s980 = smul.u32 32, %s16
        %p981 = scmp.lt.s32.totalorder %s980, 63
        %s982 = scalar_select %p981, %s980, 63
        %s983 = smul.addr %s982, 4
        %s984 = scalar_lea.vmem %s4, %s983
      $region48: #{net2_forward.16} parent=43 // pred_fallthru
        _
    $region44: #{net2_forward.16} parent=5 // pred_fallthru
      _
  $region6: #{net2_forward.16} parent=0 // loop_footer
    %s14 = sadd.s32 1, %s10
  $region7: #{net2_forward.16} parent=0 // loop_footer_branch
    %9 = sbr.rel target = $region3
  $region8: #{net2_forward.16} parent=0 // loop_exit
    _

// kernel: net2_forward.17
$region0: #{net2_forward.17}
  #allocation0 [shape = 'u32[]', space=smem, size = 0x4, offset = 0x4, fixed_abs, tag = 'smem constant byte address 0x4 - core index']
  #allocation1 [shape = 'u32[72,128]{1,0:T(1,128)}', space=vmem, size = 0x9000, scoped, tag = 'internal scratch']
  %s0 = inlined_call_operand.vmem [shape: bf16[512,576], index: 0, kind: input, shape index: {}]
  %s1 = inlined_call_operand.vmem [shape: bf16[576,16], index: 1, kind: input, shape index: {}]
  %s2 = inlined_call_operand.vmem [shape: f32[1,16], index: 2, kind: input, shape index: {}]
  %s3 = inlined_call_operand.vmem [shape: bf16[512,16], index: 3, kind: output, shape index: {}]
  %s4 = sld [smem:[#allocation0]]
  $region45: #{net2_forward.17} parent=0
    _
  %s6 = ssub.s32 1, %s4
  %s7 = scalar_select 0, %s6, %s4
  loop: start=0, step=1, limit=4
  $region2: #{net2_forward.17} parent=0 // loop_pre_header
    _
  $region3: #{net2_forward.17} parent=0 // loop_header
    %s9 = sphi 0, %s13
    %p10 = scmp.ge.s32.totalorder %s9, 4
    %s19 = sphi 0, %s21
    %s22 = sphi 0, %s19
    %s23 = sphi 0, %s22
    %s39 = sphi 0, %s23
    %s43 = sphi 0, %s43
    %s45 = sphi 0, %s43
    %s46 = sphi 0, %s45
    %s60 = sphi 0, %s46
    %s64 = sphi 0, %s64
    %s66 = sphi 0, %s64
    %s67 = sphi 0, %s66
    %s81 = sphi 0, %s67
    %s87 = sphi 0, %s89
    %s90 = sphi 0, %s87
    %s91 = sphi 0, %s90
    %s107 = sphi 0, %s91
  $region4: #{net2_forward.17} parent=0 // loop_header_branch
    %12 = sbr.rel (%p10) target = $region8
  $region5: #{net2_forward.17} parent=0 // loop_body
    %s14 = ssub.s32 %s9, 1
    %s15 = ssub.s32 %s9, 2
    %s16 = sadd.s32 %s9, 1
    %s17 = ssub.s32 %s9, %s16
    %p18 = scmp.eq.s32.totalorder %s17, 0
    %s20 = sadd.s32 %s19, 1
    %s21 = scalar_select %p18, %s19, %s20
    %p24 = pneg %p18
    %p25 = scmp.eq.s32.totalorder %s9, 1
    %p26 = por %p24, %p25
    %p27 = scmp.ne.s32.totalorder %s19, %s22
    %p28 = scmp.eq.s32.totalorder %s9, 0
    %p29 = por %p27, %p28
    %p30 = scmp.ne.s32.totalorder %s19, %s22
    %p31 = scmp.eq.s32.totalorder %s14, 1
    %p32 = por %p30, %p31
    %p33 = scmp.ne.s32.totalorder %s22, %s23
    %p34 = scmp.eq.s32.totalorder %s14, 0
    %p35 = por %p33, %p34
    %p36 = scmp.ne.s32.totalorder %s22, %s23
    %p37 = scmp.eq.s32.totalorder %s15, 1
    %p38 = por %p36, %p37
    %p40 = scmp.ne.s32.totalorder %s23, %s39
    %p41 = scmp.eq.s32.totalorder %s15, 0
    %p42 = por %p40, %p41
    %s44 = sadd.s32 %s43, 1
    %p47 = scmp.eq.s32.totalorder %s9, 1
    %p48 = scmp.ne.s32.totalorder %s43, %s45
    %p49 = scmp.eq.s32.totalorder %s9, 0
    %p50 = por %p48, %p49
    %p51 = scmp.ne.s32.totalorder %s43, %s45
    %p52 = scmp.eq.s32.totalorder %s14, 1
    %p53 = por %p51, %p52
    %p54 = scmp.ne.s32.totalorder %s45, %s46
    %p55 = scmp.eq.s32.totalorder %s14, 0
    %p56 = por %p54, %p55
    %p57 = scmp.ne.s32.totalorder %s45, %s46
    %p58 = scmp.eq.s32.totalorder %s15, 1
    %p59 = por %p57, %p58
    %p61 = scmp.ne.s32.totalorder %s46, %s60
    %p62 = scmp.eq.s32.totalorder %s15, 0
    %p63 = por %p61, %p62
    %s65 = sadd.s32 %s64, 1
    %p68 = scmp.eq.s32.totalorder %s9, 1
    %p69 = scmp.ne.s32.totalorder %s64, %s66
    %p70 = scmp.eq.s32.totalorder %s9, 0
    %p71 = por %p69, %p70
    %p72 = scmp.ne.s32.totalorder %s64, %s66
    %p73 = scmp.eq.s32.totalorder %s14, 1
    %p74 = por %p72, %p73
    %p75 = scmp.ne.s32.totalorder %s66, %s67
    %p76 = scmp.eq.s32.totalorder %s14, 0
    %p77 = por %p75, %p76
    %p78 = scmp.ne.s32.totalorder %s66, %s67
    %p79 = scmp.eq.s32.totalorder %s15, 1
    %p80 = por %p78, %p79
    %p82 = scmp.ne.s32.totalorder %s67, %s81
    %p83 = scmp.eq.s32.totalorder %s15, 0
    %p84 = por %p82, %p83
    %s85 = ssub.s32 %s9, %s16
    %p86 = scmp.eq.s32.totalorder %s85, 0
    %s88 = sadd.s32 %s87, 1
    %s89 = scalar_select %p86, %s87, %s88
    %p92 = pneg %p86
    %p93 = scmp.eq.s32.totalorder %s9, 1
    %p94 = por %p92, %p93
    %p95 = scmp.ne.s32.totalorder %s87, %s90
    %p96 = scmp.eq.s32.totalorder %s9, 0
    %p97 = por %p95, %p96
    %p98 = scmp.ne.s32.totalorder %s87, %s90
    %p99 = scmp.eq.s32.totalorder %s14, 1
    %p100 = por %p98, %p99
    %p101 = scmp.ne.s32.totalorder %s90, %s91
    %p102 = scmp.eq.s32.totalorder %s14, 0
    %p103 = por %p101, %p102
    %p104 = scmp.ne.s32.totalorder %s90, %s91
    %p105 = scmp.eq.s32.totalorder %s15, 1
    %p106 = por %p104, %p105
    %p108 = scmp.ne.s32.totalorder %s91, %s107
    %p109 = scmp.eq.s32.totalorder %s15, 0
    %p110 = por %p108, %p109
    %p111 = scmp.le.s32.totalorder 1, %s9
    %p112 = scmp.lt.s32.totalorder %s9, 3
    %p113 = pnand %p111, %p112
    %p114 = pneg %p113
    // Predicated region
    $region9: #{net2_forward.17} parent=5 // pred_check
      _
    $region10: #{net2_forward.17} parent=5 // pred_check_branch
      %116 = sbr.rel (%p113) target = $region12
    $region11: #{net2_forward.17} parent=5 // pred_region
      %s117 = ssub.s32 %s9, 1
      // Predicated region
      $region13: #{net2_forward.17} parent=11 // pred_check
        %p118 = pneg %p56
      $region14: #{net2_forward.17} parent=11 // pred_check_branch
        %120 = sbr.rel (%p118) target = $region16
      $region15: #{net2_forward.17} parent=11 // pred_region
        _
      $region16: #{net2_forward.17} parent=11 // pred_fallthru
        _
      // Predicated region
      $region17: #{net2_forward.17} parent=11 // pred_check
        %p121 = pneg %p77
      $region18: #{net2_forward.17} parent=11 // pred_check_branch
        %123 = sbr.rel (%p121) target = $region20
      $region19: #{net2_forward.17} parent=11 // pred_region
        _
      $region20: #{net2_forward.17} parent=11 // pred_fallthru
        _
    $region12: #{net2_forward.17} parent=5 // pred_fallthru
      _
    %p124 = scmp.lt.s32.totalorder %s9, 2
    // Predicated region
    $region21: #{net2_forward.17} parent=5 // pred_check
      %p125 = pneg %p124
    $region22: #{net2_forward.17} parent=5 // pred_check_branch
      %127 = sbr.rel (%p125) target = $region24
    $region23: #{net2_forward.17} parent=5 // pred_region
      // Predicated region
      $region25: #{net2_forward.17} parent=23 // pred_check
        %p128 = pneg %p29
      $region26: #{net2_forward.17} parent=23 // pred_check_branch
        %130 = sbr.rel (%p128) target = $region28
      $region27: #{net2_forward.17} parent=23 // pred_region
        %s131 = smul.u32 32, %s9
        %p132 = scmp.lt.s32.totalorder %s131, 63
        %s133 = scalar_select %p132, %s131, 63
        %s134 = smul.addr %s133, 5
        %s135 = smul.addr %s134, 4
        %s136 = scalar_lea.vmem %s0, %s135
        %s137 = smul.u32 32, %s9
      $region28: #{net2_forward.17} parent=23 // pred_fallthru
        _
    $region24: #{net2_forward.17} parent=5 // pred_fallthru
      _
    %p138 = scmp.le.s32.totalorder 1, %s9
    %p139 = scmp.lt.s32.totalorder %s9, 3
    %p140 = pnand %p138, %p139
    %p141 = pneg %p140
    // Predicated region
    $region29: #{net2_forward.17} parent=5 // pred_check
      _
    $region30: #{net2_forward.17} parent=5 // pred_check_branch
      %143 = sbr.rel (%p140) target = $region32
    $region31: #{net2_forward.17} parent=5 // pred_region
      %s144 = ssub.s32 %s9, 1
      %s145 = smul.u32 32, %s14
      %p146 = scmp.lt.s32.totalorder %s145, 63
      %s147 = scalar_select %p146, %s145, 63
      %s148 = smul.addr %s147, 5
      %s149 = smul.addr %s148, 4
      %s150 = scalar_lea.vmem %s0, %s149
      %p151 = pneg %p35
      %p152 = pneg %p32
      %p153 = pneg %p56
      %p154 = pneg %p53
      %p155 = pneg %p77
      %p156 = pneg %p74
      %p157 = pneg %p103
      %p158 = pneg %p100
      %s159 = smul.u32 32, %s14
      %p160 = scmp.lt.s32.totalorder %s159, 63
      %s161 = scalar_select %p160, %s159, 63
      %s162 = smul.addr %s161, 4
      %s163 = scalar_lea.vmem %s3, %s162
      %s164 = smul.u32 32, %s14
      %p165 = scmp.lt.s32.totalorder %s164, 63
      %s166 = scalar_select %p165, %s164, 63
      %s167 = smul.addr %s166, 5
      %s168 = smul.addr %s167, 4
      %s169 = scalar_lea.vmem %s0, %s168
      %s170 = smul.u32 32, %s14
      %s171 = smul.u32 32, %s14
      %p172 = scmp.lt.s32.totalorder %s171, 63
      %s173 = scalar_select %p172, %s171, 63
      %s174 = smul.addr %s173, 4
      %s175 = scalar_lea.vmem %s3, %s174
      %s176 = smul.u32 32, %s14
      %v178 = vld [vmem:[%s169] sm:$0xff]
      %v179 = vld [vmem:[%s169 + $0x8] sm:$0xff]
      %v180 = vld [vmem:[%s169 + $0x10] sm:$0xf]
      %v181 = vld [vmem:[%s169 + $0x14] sm:$0xff]
      %v182 = vld [vmem:[%s169 + $0x1c] sm:$0xff]
      %v183 = vld [vmem:[%s169 + $0x24] sm:$0xf]
      %v184 = vld [vmem:[%s169 + $0x28] sm:$0xff]
      %v185 = vld [vmem:[%s169 + $0x30] sm:$0xff]
      %v186 = vld [vmem:[%s169 + $0x38] sm:$0xf]
      %v187 = vld [vmem:[%s169 + $0x3c] sm:$0xff]
      %v188 = vld [vmem:[%s169 + $0x44] sm:$0xff]
      %v189 = vld [vmem:[%s169 + $0x4c] sm:$0xf]
      %v190 = vld [vmem:[%s169 + $0x50] sm:$0xff]
      %v191 = vld [vmem:[%s169 + $0x58] sm:$0xff]
      %v192 = vld [vmem:[%s169 + $0x60] sm:$0xf]
      %v193 = vld [vmem:[%s169 + $0x64] sm:$0xff]
      %v194 = vld [vmem:[%s169 + $0x6c] sm:$0xff]
      %v195 = vld [vmem:[%s169 + $0x74] sm:$0xf]
      %v196 = vld [vmem:[%s169 + $0x78] sm:$0xff]
      %v197 = vld [vmem:[%s169 + $0x80] sm:$0xff]
      %v198 = vld [vmem:[%s169 + $0x88] sm:$0xf]
      %v199 = vld [vmem:[%s169 + $0x8c] sm:$0xff]
      %v200 = vld [vmem:[%s169 + $0x94] sm:$0xff]
      %v201 = vld [vmem:[%s169 + $0x9c] sm:$0xf]
      %v202 = vld [vmem:[%s169 + $0xa0] sm:$0xff]
      %v203 = vld [vmem:[%s169 + $0xa8] sm:$0xff]
      %v204 = vld [vmem:[%s169 + $0xb0] sm:$0xf]
      %v205 = vld [vmem:[%s169 + $0xb4] sm:$0xff]
      %v206 = vld [vmem:[%s169 + $0xbc] sm:$0xff]
      %v207 = vld [vmem:[%s169 + $0xc4] sm:$0xf]
      %v208 = vld [vmem:[%s169 + $0xc8] sm:$0xff]
      %v209 = vld [vmem:[%s169 + $0xd0] sm:$0xff]
      %v210 = vld [vmem:[%s169 + $0xd8] sm:$0xf]
      %v211 = vld [vmem:[%s169 + $0xdc] sm:$0xff]
      %v212 = vld [vmem:[%s169 + $0xe4] sm:$0xff]
      %v213 = vld [vmem:[%s169 + $0xec] sm:$0xf]
      %v214 = vld [vmem:[%s169 + $0xf0] sm:$0xff]
      %v215 = vld [vmem:[%s169 + $0xf8] sm:$0xff]
      %v216 = vld [vmem:[%s169 + $0x100] sm:$0xf]
      %v217 = vld [vmem:[%s169 + $0x104] sm:$0xff]
      %v218 = vld [vmem:[%s169 + $0x10c] sm:$0xff]
      %v219 = vld [vmem:[%s169 + $0x114] sm:$0xf]
      %v220 = vld [vmem:[%s169 + $0x118] sm:$0xff]
      %v221 = vld [vmem:[%s169 + $0x120] sm:$0xff]
      %v222 = vld [vmem:[%s169 + $0x128] sm:$0xf]
      %v223 = vld [vmem:[%s169 + $0x12c] sm:$0xff]
      %v224 = vld [vmem:[%s169 + $0x134] sm:$0xff]
      %v225 = vld [vmem:[%s169 + $0x13c] sm:$0xf]
      %v226 = vld [vmem:[%s169 + $0x140] sm:$0xff]
      %v227 = vld [vmem:[%s169 + $0x148] sm:$0xff]
      %v228 = vld [vmem:[%s169 + $0x150] sm:$0xf]
      %v229 = vld [vmem:[%s169 + $0x154] sm:$0xff]
      %v230 = vld [vmem:[%s169 + $0x15c] sm:$0xff]
      %v231 = vld [vmem:[%s169 + $0x164] sm:$0xf]
      %v232 = vld [vmem:[%s169 + $0x168] sm:$0xff]
      %v233 = vld [vmem:[%s169 + $0x170] sm:$0xff]
      %v234 = vld [vmem:[%s169 + $0x178] sm:$0xf]
      %v235 = vld [vmem:[%s169 + $0x17c] sm:$0xff]
      %v236 = vld [vmem:[%s169 + $0x184] sm:$0xff]
      %v237 = vld [vmem:[%s169 + $0x18c] sm:$0xf]
      %v238 = vld [vmem:[%s169 + $0x190] sm:$0xff]
      %v239 = vld [vmem:[%s169 + $0x198] sm:$0xff]
      %v240 = vld [vmem:[%s169 + $0x1a0] sm:$0xf]
      %v241 = vld [vmem:[%s169 + $0x1a4] sm:$0xff]
      %v242 = vld [vmem:[%s169 + $0x1ac] sm:$0xff]
      %v243 = vld [vmem:[%s169 + $0x1b4] sm:$0xf]
      %v244 = vld [vmem:[%s169 + $0x1b8] sm:$0xff]
      %v245 = vld [vmem:[%s169 + $0x1c0] sm:$0xff]
      %v246 = vld [vmem:[%s169 + $0x1c8] sm:$0xf]
      %v247 = vld [vmem:[%s169 + $0x1cc] sm:$0xff]
      %v248 = vld [vmem:[%s169 + $0x1d4] sm:$0xff]
      %v249 = vld [vmem:[%s169 + $0x1dc] sm:$0xf]
      %v250 = vld [vmem:[%s169 + $0x1e0] sm:$0xff]
      %v251 = vld [vmem:[%s169 + $0x1e8] sm:$0xff]
      %v252 = vld [vmem:[%s169 + $0x1f0] sm:$0xf]
      %v253 = vld [vmem:[%s169 + $0x1f4] sm:$0xff]
      %v254 = vld [vmem:[%s169 + $0x1fc] sm:$0xff]
      %v255 = vld [vmem:[%s169 + $0x204] sm:$0xf]
      %v256 = vld [vmem:[%s169 + $0x208] sm:$0xff]
      %v257 = vld [vmem:[%s169 + $0x210] sm:$0xff]
      %v258 = vld [vmem:[%s169 + $0x218] sm:$0xf]
      %v259 = vld [vmem:[%s169 + $0x21c] sm:$0xff]
      %v260 = vld [vmem:[%s169 + $0x224] sm:$0xff]
      %v261 = vld [vmem:[%s169 + $0x22c] sm:$0xf]
      %v262 = vld [vmem:[%s169 + $0x230] sm:$0xff]
      %v263 = vld [vmem:[%s169 + $0x238] sm:$0xff]
      %v264 = vld [vmem:[%s169 + $0x240] sm:$0xf]
      %v265 = vld [vmem:[%s169 + $0x244] sm:$0xff]
      %v266 = vld [vmem:[%s169 + $0x24c] sm:$0xff]
      %v267 = vld [vmem:[%s169 + $0x254] sm:$0xf]
      %v268 = vld [vmem:[%s169 + $0x258] sm:$0xff]
      %v269 = vld [vmem:[%s169 + $0x260] sm:$0xff]
      %v270 = vld [vmem:[%s169 + $0x268] sm:$0xf]
      %v271 = vld [vmem:[%s169 + $0x26c] sm:$0xff]
      %v272 = vld [vmem:[%s169 + $0x274] sm:$0xff]
      %v273 = vld [vmem:[%s169 + $0x27c] sm:$0xf]
      %v274 = vld [vmem:[%s1] sm:$0xf]
      %v275 = vld [vmem:[%s1 + $0x4] sm:$0xf]
      %v276 = vld [vmem:[%s1 + $0x8] sm:$0xf]
      %v277 = vld [vmem:[%s1 + $0xc] sm:$0xf]
      %v278 = vld [vmem:[%s1 + $0x10] sm:$0xf]
      %v279 = vld [vmem:[%s1 + $0x14] sm:$0xf]
      %v280 = vld [vmem:[%s1 + $0x18] sm:$0xf]
      %v281 = vld [vmem:[%s1 + $0x1c] sm:$0xf]
      %v282 = vld [vmem:[%s1 + $0x20] sm:$0xf]
      %v283 = vld [vmem:[%s1 + $0x24] sm:$0xf]
      %v284 = vld [vmem:[%s1 + $0x28] sm:$0xf]
      %v285 = vld [vmem:[%s1 + $0x2c] sm:$0xf]
      %v286 = vld [vmem:[%s1 + $0x30] sm:$0xf]
      %v287 = vld [vmem:[%s1 + $0x34] sm:$0xf]
      %v288 = vld [vmem:[%s1 + $0x38] sm:$0xf]
      %v289 = vld [vmem:[%s1 + $0x3c] sm:$0xf]
      %v290 = vld [vmem:[%s1 + $0x40] sm:$0xf]
      %v291 = vld [vmem:[%s1 + $0x44] sm:$0xf]
      %v292 = vld [vmem:[%s1 + $0x48] sm:$0xf]
      %v293 = vld [vmem:[%s1 + $0x4c] sm:$0xf]
      %v294 = vld [vmem:[%s1 + $0x50] sm:$0xf]
      %v295 = vld [vmem:[%s1 + $0x54] sm:$0xf]
      %v296 = vld [vmem:[%s1 + $0x58] sm:$0xf]
      %v297 = vld [vmem:[%s1 + $0x5c] sm:$0xf]
      %v298 = vld [vmem:[%s1 + $0x60] sm:$0xf]
      %v299 = vld [vmem:[%s1 + $0x64] sm:$0xf]
      %v300 = vld [vmem:[%s1 + $0x68] sm:$0xf]
      %v301 = vld [vmem:[%s1 + $0x6c] sm:$0xf]
      %v302 = vld [vmem:[%s1 + $0x70] sm:$0xf]
      %v303 = vld [vmem:[%s1 + $0x74] sm:$0xf]
      %v304 = vld [vmem:[%s1 + $0x78] sm:$0xf]
      %v305 = vld [vmem:[%s1 + $0x7c] sm:$0xf]
      %v306 = vld [vmem:[%s1 + $0x80] sm:$0xf]
      %v307 = vld [vmem:[%s1 + $0x84] sm:$0xf]
      %v308 = vld [vmem:[%s1 + $0x88] sm:$0xf]
      %v309 = vld [vmem:[%s1 + $0x8c] sm:$0xf]
      %v310 = vld [vmem:[%s1 + $0x90] sm:$0xf]
      %v311 = vld [vmem:[%s1 + $0x94] sm:$0xf]
      %v312 = vld [vmem:[%s1 + $0x98] sm:$0xf]
      %v313 = vld [vmem:[%s1 + $0x9c] sm:$0xf]
      %v314 = vld [vmem:[%s1 + $0xa0] sm:$0xf]
      %v315 = vld [vmem:[%s1 + $0xa4] sm:$0xf]
      %v316 = vld [vmem:[%s1 + $0xa8] sm:$0xf]
      %v317 = vld [vmem:[%s1 + $0xac] sm:$0xf]
      %v318 = vld [vmem:[%s1 + $0xb0] sm:$0xf]
      %v319 = vld [vmem:[%s1 + $0xb4] sm:$0xf]
      %v320 = vld [vmem:[%s1 + $0xb8] sm:$0xf]
      %v321 = vld [vmem:[%s1 + $0xbc] sm:$0xf]
      %v322 = vld [vmem:[%s1 + $0xc0] sm:$0xf]
      %v323 = vld [vmem:[%s1 + $0xc4] sm:$0xf]
      %v324 = vld [vmem:[%s1 + $0xc8] sm:$0xf]
      %v325 = vld [vmem:[%s1 + $0xcc] sm:$0xf]
      %v326 = vld [vmem:[%s1 + $0xd0] sm:$0xf]
      %v327 = vld [vmem:[%s1 + $0xd4] sm:$0xf]
      %v328 = vld [vmem:[%s1 + $0xd8] sm:$0xf]
      %v329 = vld [vmem:[%s1 + $0xdc] sm:$0xf]
      %v330 = vld [vmem:[%s1 + $0xe0] sm:$0xf]
      %v331 = vld [vmem:[%s1 + $0xe4] sm:$0xf]
      %v332 = vld [vmem:[%s1 + $0xe8] sm:$0xf]
      %v333 = vld [vmem:[%s1 + $0xec] sm:$0xf]
      %v334 = vld [vmem:[%s1 + $0xf0] sm:$0xf]
      %v335 = vld [vmem:[%s1 + $0xf4] sm:$0xf]
      %v336 = vld [vmem:[%s1 + $0xf8] sm:$0xf]
      %v337 = vld [vmem:[%s1 + $0xfc] sm:$0xf]
      %v338 = vld [vmem:[%s1 + $0x100] sm:$0xf]
      %v339 = vld [vmem:[%s1 + $0x104] sm:$0xf]
      %v340 = vld [vmem:[%s1 + $0x108] sm:$0xf]
      %v341 = vld [vmem:[%s1 + $0x10c] sm:$0xf]
      %v342 = vld [vmem:[%s1 + $0x110] sm:$0xf]
      %v343 = vld [vmem:[%s1 + $0x114] sm:$0xf]
      %v344 = vld [vmem:[%s1 + $0x118] sm:$0xf]
      %v345 = vld [vmem:[%s1 + $0x11c] sm:$0xf]
      %v346 = vld [vmem:[%s2] sm:$0x1]
      %v348 = vperm.slane %v346, 0
      %v446 = vunpack.c.l.b16 %v178
      %v447 = vunpack.c.h.b16 %v178
      %v448 = vunpack.c.l.b16 %v179
      %v449 = vunpack.c.h.b16 %v179
      %v450 = vunpack.c.l.b16 %v180
      %v451 = vunpack.c.l.b16 %v181
      %v452 = vunpack.c.h.b16 %v181
      %v453 = vunpack.c.l.b16 %v182
      %v454 = vunpack.c.h.b16 %v182
      %v455 = vunpack.c.l.b16 %v183
      %v456 = vunpack.c.l.b16 %v184
      %v457 = vunpack.c.h.b16 %v184
      %v458 = vunpack.c.l.b16 %v185
      %v459 = vunpack.c.h.b16 %v185
      %v460 = vunpack.c.l.b16 %v186
      %v461 = vunpack.c.l.b16 %v187
      %v462 = vunpack.c.h.b16 %v187
      %v463 = vunpack.c.l.b16 %v188
      %v464 = vunpack.c.h.b16 %v188
      %v465 = vunpack.c.l.b16 %v189
      %v466 = vunpack.c.l.b16 %v190
      %v467 = vunpack.c.h.b16 %v190
      %v468 = vunpack.c.l.b16 %v191
      %v469 = vunpack.c.h.b16 %v191
      %v470 = vunpack.c.l.b16 %v192
      %v471 = vunpack.c.l.b16 %v193
      %v472 = vunpack.c.h.b16 %v193
      %v473 = vunpack.c.l.b16 %v194
      %v474 = vunpack.c.h.b16 %v194
      %v475 = vunpack.c.l.b16 %v195
      %v476 = vunpack.c.l.b16 %v196
      %v477 = vunpack.c.h.b16 %v196
      %v478 = vunpack.c.l.b16 %v197
      %v479 = vunpack.c.h.b16 %v197
      %v480 = vunpack.c.l.b16 %v198
      %v481 = vunpack.c.l.b16 %v199
      %v482 = vunpack.c.h.b16 %v199
      %v483 = vunpack.c.l.b16 %v200
      %v484 = vunpack.c.h.b16 %v200
      %v485 = vunpack.c.l.b16 %v201
      %v486 = vunpack.c.l.b16 %v202
      %v487 = vunpack.c.h.b16 %v202
      %v488 = vunpack.c.l.b16 %v203
      %v489 = vunpack.c.h.b16 %v203
      %v490 = vunpack.c.l.b16 %v204
      %v491 = vunpack.c.l.b16 %v205
      %v492 = vunpack.c.h.b16 %v205
      %v493 = vunpack.c.l.b16 %v206
      %v494 = vunpack.c.h.b16 %v206
      %v495 = vunpack.c.l.b16 %v207
      %v496 = vunpack.c.l.b16 %v208
      %v497 = vunpack.c.h.b16 %v208
      %v498 = vunpack.c.l.b16 %v209
      %v499 = vunpack.c.h.b16 %v209
      %v500 = vunpack.c.l.b16 %v210
      %v501 = vunpack.c.l.b16 %v211
      %v502 = vunpack.c.h.b16 %v211
      %v503 = vunpack.c.l.b16 %v212
      %v504 = vunpack.c.h.b16 %v212
      %v505 = vunpack.c.l.b16 %v213
      %v506 = vunpack.c.l.b16 %v214
      %v507 = vunpack.c.h.b16 %v214
      %v508 = vunpack.c.l.b16 %v215
      %v509 = vunpack.c.h.b16 %v215
      %v510 = vunpack.c.l.b16 %v216
      %v511 = vunpack.c.l.b16 %v217
      %v512 = vunpack.c.h.b16 %v217
      %v513 = vunpack.c.l.b16 %v218
      %v514 = vunpack.c.h.b16 %v218
      %v515 = vunpack.c.l.b16 %v219
      %v516 = vunpack.c.l.b16 %v220
      %v517 = vunpack.c.h.b16 %v220
      %v518 = vunpack.c.l.b16 %v221
      %v519 = vunpack.c.h.b16 %v221
      %v520 = vunpack.c.l.b16 %v222
      %v521 = vunpack.c.l.b16 %v223
      %v522 = vunpack.c.h.b16 %v223
      %v523 = vunpack.c.l.b16 %v224
      %v524 = vunpack.c.h.b16 %v224
      %v525 = vunpack.c.l.b16 %v225
      %v526 = vunpack.c.l.b16 %v226
      %v527 = vunpack.c.h.b16 %v226
      %v528 = vunpack.c.l.b16 %v227
      %v529 = vunpack.c.h.b16 %v227
      %v530 = vunpack.c.l.b16 %v228
      %v531 = vunpack.c.l.b16 %v229
      %v532 = vunpack.c.h.b16 %v229
      %v533 = vunpack.c.l.b16 %v230
      %v534 = vunpack.c.h.b16 %v230
      %v535 = vunpack.c.l.b16 %v231
      %v536 = vunpack.c.l.b16 %v232
      %v537 = vunpack.c.h.b16 %v232
      %v538 = vunpack.c.l.b16 %v233
      %v539 = vunpack.c.h.b16 %v233
      %v540 = vunpack.c.l.b16 %v234
      %v541 = vunpack.c.l.b16 %v235
      %v542 = vunpack.c.h.b16 %v235
      %v543 = vunpack.c.l.b16 %v236
      %v544 = vunpack.c.h.b16 %v236
      %v545 = vunpack.c.l.b16 %v237
      %v546 = vunpack.c.l.b16 %v238
      %v547 = vunpack.c.h.b16 %v238
      %v548 = vunpack.c.l.b16 %v239
      %v549 = vunpack.c.h.b16 %v239
      %v550 = vunpack.c.l.b16 %v240
      %v551 = vunpack.c.l.b16 %v241
      %v552 = vunpack.c.h.b16 %v241
      %v553 = vunpack.c.l.b16 %v242
      %v554 = vunpack.c.h.b16 %v242
      %v555 = vunpack.c.l.b16 %v243
      %v556 = vunpack.c.l.b16 %v244
      %v557 = vunpack.c.h.b16 %v244
      %v558 = vunpack.c.l.b16 %v245
      %v559 = vunpack.c.h.b16 %v245
      %v560 = vunpack.c.l.b16 %v246
      %v561 = vunpack.c.l.b16 %v247
      %v562 = vunpack.c.h.b16 %v247
      %v563 = vunpack.c.l.b16 %v248
      %v564 = vunpack.c.h.b16 %v248
      %v565 = vunpack.c.l.b16 %v249
      %v566 = vunpack.c.l.b16 %v250
      %v567 = vunpack.c.h.b16 %v250
      %v568 = vunpack.c.l.b16 %v251
      %v569 = vunpack.c.h.b16 %v251
      %v570 = vunpack.c.l.b16 %v252
      %v571 = vunpack.c.l.b16 %v253
      %v572 = vunpack.c.h.b16 %v253
      %v573 = vunpack.c.l.b16 %v254
      %v574 = vunpack.c.h.b16 %v254
      %v575 = vunpack.c.l.b16 %v255
      %v576 = vunpack.c.l.b16 %v256
      %v577 = vunpack.c.h.b16 %v256
      %v578 = vunpack.c.l.b16 %v257
      %v579 = vunpack.c.h.b16 %v257
      %v580 = vunpack.c.l.b16 %v258
      %v581 = vunpack.c.l.b16 %v259
      %v582 = vunpack.c.h.b16 %v259
      %v583 = vunpack.c.l.b16 %v260
      %v584 = vunpack.c.h.b16 %v260
      %v585 = vunpack.c.l.b16 %v261
      %v586 = vunpack.c.l.b16 %v262
      %v587 = vunpack.c.h.b16 %v262
      %v588 = vunpack.c.l.b16 %v263
      %v589 = vunpack.c.h.b16 %v263
      %v590 = vunpack.c.l.b16 %v264
      %v591 = vunpack.c.l.b16 %v265
      %v592 = vunpack.c.h.b16 %v265
      %v593 = vunpack.c.l.b16 %v266
      %v594 = vunpack.c.h.b16 %v266
      %v595 = vunpack.c.l.b16 %v267
      %v596 = vunpack.c.l.b16 %v268
      %v597 = vunpack.c.h.b16 %v268
      %v598 = vunpack.c.l.b16 %v269
      %v599 = vunpack.c.h.b16 %v269
      %v600 = vunpack.c.l.b16 %v270
      %v601 = vunpack.c.l.b16 %v271
      %v602 = vunpack.c.h.b16 %v271
      %v603 = vunpack.c.l.b16 %v272
      %v604 = vunpack.c.h.b16 %v272
      %v605 = vunpack.c.l.b16 %v273
      %v606 = vpack.c.b16 %v451, %v446
      %v607 = vpack.c.b16 %v452, %v447
      %v608 = vpack.c.b16 %v453, %v448
      %v609 = vpack.c.b16 %v454, %v449
      %v610 = vpack.c.b16 %v455, %v450
      %v611 = vpack.c.b16 %v461, %v456
      %v612 = vpack.c.b16 %v462, %v457
      %v613 = vpack.c.b16 %v463, %v458
      %v614 = vpack.c.b16 %v464, %v459
      %v615 = vpack.c.b16 %v465, %v460
      %v616 = vpack.c.b16 %v471, %v466
      %v617 = vpack.c.b16 %v472, %v467
      %v618 = vpack.c.b16 %v473, %v468
      %v619 = vpack.c.b16 %v474, %v469
      %v620 = vpack.c.b16 %v475, %v470
      %v621 = vpack.c.b16 %v481, %v476
      %v622 = vpack.c.b16 %v482, %v477
      %v623 = vpack.c.b16 %v483, %v478
      %v624 = vpack.c.b16 %v484, %v479
      %v625 = vpack.c.b16 %v485, %v480
      %v626 = vpack.c.b16 %v491, %v486
      %v627 = vpack.c.b16 %v492, %v487
      %v628 = vpack.c.b16 %v493, %v488
      %v629 = vpack.c.b16 %v494, %v489
      %v630 = vpack.c.b16 %v495, %v490
      %v631 = vpack.c.b16 %v501, %v496
      %v632 = vpack.c.b16 %v502, %v497
      %v633 = vpack.c.b16 %v503, %v498
      %v634 = vpack.c.b16 %v504, %v499
      %v635 = vpack.c.b16 %v505, %v500
      %v636 = vpack.c.b16 %v511, %v506
      %v637 = vpack.c.b16 %v512, %v507
      %v638 = vpack.c.b16 %v513, %v508
      %v639 = vpack.c.b16 %v514, %v509
      %v640 = vpack.c.b16 %v515, %v510
      %v641 = vpack.c.b16 %v521, %v516
      %v642 = vpack.c.b16 %v522, %v517
      %v643 = vpack.c.b16 %v523, %v518
      %v644 = vpack.c.b16 %v524, %v519
      %v645 = vpack.c.b16 %v525, %v520
      %v646 = vpack.c.b16 %v531, %v526
      %v647 = vpack.c.b16 %v532, %v527
      %v648 = vpack.c.b16 %v533, %v528
      %v649 = vpack.c.b16 %v534, %v529
      %v650 = vpack.c.b16 %v535, %v530
      %v651 = vpack.c.b16 %v541, %v536
      %v652 = vpack.c.b16 %v542, %v537
      %v653 = vpack.c.b16 %v543, %v538
      %v654 = vpack.c.b16 %v544, %v539
      %v655 = vpack.c.b16 %v545, %v540
      %v656 = vpack.c.b16 %v551, %v546
      %v657 = vpack.c.b16 %v552, %v547
      %v658 = vpack.c.b16 %v553, %v548
      %v659 = vpack.c.b16 %v554, %v549
      %v660 = vpack.c.b16 %v555, %v550
      %v661 = vpack.c.b16 %v561, %v556
      %v662 = vpack.c.b16 %v562, %v557
      %v663 = vpack.c.b16 %v563, %v558
      %v664 = vpack.c.b16 %v564, %v559
      %v665 = vpack.c.b16 %v565, %v560
      %v666 = vpack.c.b16 %v571, %v566
      %v667 = vpack.c.b16 %v572, %v567
      %v668 = vpack.c.b16 %v573, %v568
      %v669 = vpack.c.b16 %v574, %v569
      %v670 = vpack.c.b16 %v575, %v570
      %v671 = vpack.c.b16 %v581, %v576
      %v672 = vpack.c.b16 %v582, %v577
      %v673 = vpack.c.b16 %v583, %v578
      %v674 = vpack.c.b16 %v584, %v579
      %v675 = vpack.c.b16 %v585, %v580
      %v676 = vpack.c.b16 %v591, %v586
      %v677 = vpack.c.b16 %v592, %v587
      %v678 = vpack.c.b16 %v593, %v588
      %v679 = vpack.c.b16 %v594, %v589
      %v680 = vpack.c.b16 %v595, %v590
      %v681 = vpack.c.b16 %v601, %v596
      %v682 = vpack.c.b16 %v602, %v597
      %v683 = vpack.c.b16 %v603, %v598
      %v684 = vpack.c.b16 %v604, %v599
      %v685 = vpack.c.b16 %v605, %v600
      %v822 = vunpack.c.l.b16 %v274
      %v823 = vunpack.c.l.b16 %v275
      %v824 = vunpack.c.l.b16 %v276
      %v825 = vunpack.c.l.b16 %v277
      %v826 = vunpack.c.l.b16 %v278
      %v827 = vunpack.c.l.b16 %v279
      %v828 = vunpack.c.l.b16 %v280
      %v829 = vunpack.c.l.b16 %v281
      %v830 = vunpack.c.l.b16 %v282
      %v831 = vunpack.c.l.b16 %v283
      %v832 = vunpack.c.l.b16 %v284
      %v833 = vunpack.c.l.b16 %v285
      %v834 = vunpack.c.l.b16 %v286
      %v835 = vunpack.c.l.b16 %v287
      %v836 = vunpack.c.l.b16 %v288
      %v837 = vunpack.c.l.b16 %v289
      %v838 = vunpack.c.l.b16 %v290
      %v839 = vunpack.c.l.b16 %v291
      %v840 = vunpack.c.l.b16 %v292
      %v841 = vunpack.c.l.b16 %v293
      %v842 = vunpack.c.l.b16 %v294
      %v843 = vunpack.c.l.b16 %v295
      %v844 = vunpack.c.l.b16 %v296
      %v845 = vunpack.c.l.b16 %v297
      %v846 = vunpack.c.l.b16 %v298
      %v847 = vunpack.c.l.b16 %v299
      %v848 = vunpack.c.l.b16 %v300
      %v849 = vunpack.c.l.b16 %v301
      %v850 = vunpack.c.l.b16 %v302
      %v851 = vunpack.c.l.b16 %v303
      %v852 = vunpack.c.l.b16 %v304
      %v853 = vunpack.c.l.b16 %v305
      %v854 = vunpack.c.l.b16 %v306
      %v855 = vunpack.c.l.b16 %v307
      %v856 = vunpack.c.l.b16 %v308
      %v857 = vunpack.c.l.b16 %v309
      %v858 = vunpack.c.l.b16 %v310
      %v859 = vunpack.c.l.b16 %v311
      %v860 = vunpack.c.l.b16 %v312
      %v861 = vunpack.c.l.b16 %v313
      %v862 = vunpack.c.l.b16 %v314
      %v863 = vunpack.c.l.b16 %v315
      %v864 = vunpack.c.l.b16 %v316
      %v865 = vunpack.c.l.b16 %v317
      %v866 = vunpack.c.l.b16 %v318
      %v867 = vunpack.c.l.b16 %v319
      %v868 = vunpack.c.l.b16 %v320
      %v869 = vunpack.c.l.b16 %v321
      %v870 = vunpack.c.l.b16 %v322
      %v871 = vunpack.c.l.b16 %v323
      %v872 = vunpack.c.l.b16 %v324
      %v873 = vunpack.c.l.b16 %v325
      %v874 = vunpack.c.l.b16 %v326
      %v875 = vunpack.c.l.b16 %v327
      %v876 = vunpack.c.l.b16 %v328
      %v877 = vunpack.c.l.b16 %v329
      %v878 = vunpack.c.l.b16 %v330
      %v879 = vunpack.c.l.b16 %v331
      %v880 = vunpack.c.l.b16 %v332
      %v881 = vunpack.c.l.b16 %v333
      %v882 = vunpack.c.l.b16 %v334
      %v883 = vunpack.c.l.b16 %v335
      %v884 = vunpack.c.l.b16 %v336
      %v885 = vunpack.c.l.b16 %v337
      %v886 = vunpack.c.l.b16 %v338
      %v887 = vunpack.c.l.b16 %v339
      %v888 = vunpack.c.l.b16 %v340
      %v889 = vunpack.c.l.b16 %v341
      %v890 = vunpack.c.l.b16 %v342
      %v891 = vunpack.c.l.b16 %v343
      %v892 = vunpack.c.l.b16 %v344
      %v893 = vunpack.c.l.b16 %v345
      %v894 = vpack.c.b16 %v823, %v822
      %v895 = vpack.c.b16 %v825, %v824
      %v896 = vpack.c.b16 %v827, %v826
      %v897 = vpack.c.b16 %v829, %v828
      %v898 = vpack.c.b16 %v831, %v830
      %v899 = vpack.c.b16 %v833, %v832
      %v900 = vpack.c.b16 %v835, %v834
      %v901 = vpack.c.b16 %v837, %v836
      %v902 = vpack.c.b16 %v839, %v838
      %v903 = vpack.c.b16 %v841, %v840
      %v904 = vpack.c.b16 %v843, %v842
      %v905 = vpack.c.b16 %v845, %v844
      %v906 = vpack.c.b16 %v847, %v846
      %v907 = vpack.c.b16 %v849, %v848
      %v908 = vpack.c.b16 %v851, %v850
      %v909 = vpack.c.b16 %v853, %v852
      %v910 = vpack.c.b16 %v855, %v854
      %v911 = vpack.c.b16 %v857, %v856
      %v912 = vpack.c.b16 %v859, %v858
      %v913 = vpack.c.b16 %v861, %v860
      %v914 = vpack.c.b16 %v863, %v862
      %v915 = vpack.c.b16 %v865, %v864
      %v916 = vpack.c.b16 %v867, %v866
      %v917 = vpack.c.b16 %v869, %v868
      %v918 = vpack.c.b16 %v871, %v870
      %v919 = vpack.c.b16 %v873, %v872
      %v920 = vpack.c.b16 %v875, %v874
      %v921 = vpack.c.b16 %v877, %v876
      %v922 = vpack.c.b16 %v879, %v878
      %v923 = vpack.c.b16 %v881, %v880
      %v924 = vpack.c.b16 %v883, %v882
      %v925 = vpack.c.b16 %v885, %v884
      %v926 = vpack.c.b16 %v887, %v886
      %v927 = vpack.c.b16 %v889, %v888
      %v928 = vpack.c.b16 %v891, %v890
      %v929 = vpack.c.b16 %v893, %v892
      %vm966 = vcmask 523264
      %v968 = vsel %vm966, %v610, 0
      %v971 = vsel %vm966, %v615, 0
      %v974 = vsel %vm966, %v620, 0
      %v977 = vsel %vm966, %v625, 0
      %v980 = vsel %vm966, %v630, 0
      %v983 = vsel %vm966, %v635, 0
      %v986 = vsel %vm966, %v640, 0
      %v989 = vsel %vm966, %v645, 0
      %v992 = vsel %vm966, %v650, 0
      %v995 = vsel %vm966, %v655, 0
      %v998 = vsel %vm966, %v660, 0
      %v1001 = vsel %vm966, %v665, 0
      %v1004 = vsel %vm966, %v670, 0
      %v1007 = vsel %vm966, %v675, 0
      %v1010 = vsel %vm966, %v680, 0
      %v1013 = vsel %vm966, %v685, 0
      %1015 = vmatpush.bf16.msra.mxu0 %v901
      %1016 = vmatpush.bf16.msra.mxu0 %v900
      %1017 = vmatpush.bf16.msra.mxu0 %v899
      %1018 = vmatpush.bf16.msra.mxu0 %v898
      %1019 = vmatpush.bf16.msra.mxu0 %v897
      %1020 = vmatpush.bf16.msra.mxu0 %v896
      %1021 = vmatpush.bf16.msra.mxu0 %v895
      %1022 = vmatpush.bf16.msra.mxu0 %v894
      %1023 = vmatmul.bf16.gmra.mxu0 %v606
      %v1024 = vpop.f32.mrf.mxu0
      %v1025 = vadd.f32 %v348, %v1024
      %v1026 = vpop.f32.mrf.mxu0
      %v1027 = vadd.f32 %v348, %v1026
      %1028 = vmatmul.bf16.gmra.mxu0 %v611
      %v1029 = vpop.f32.mrf.mxu0
      %v1030 = vadd.f32 %v348, %v1029
      %v1031 = vpop.f32.mrf.mxu0
      %v1032 = vadd.f32 %v348, %v1031
      %1033 = vmatmul.bf16.gmra.mxu0 %v616
      %v1034 = vpop.f32.mrf.mxu0
      %v1035 = vadd.f32 %v348, %v1034
      %v1036 = vpop.f32.mrf.mxu0
      %v1037 = vadd.f32 %v348, %v1036
      %1038 = vmatmul.bf16.gmra.mxu0 %v621
      %v1039 = vpop.f32.mrf.mxu0
      %v1040 = vadd.f32 %v348, %v1039
      %v1041 = vpop.f32.mrf.mxu0
      %v1042 = vadd.f32 %v348, %v1041
      %1043 = vmatmul.bf16.gmra.mxu0 %v626
      %v1044 = vpop.f32.mrf.mxu0
      %v1045 = vadd.f32 %v348, %v1044
      %v1046 = vpop.f32.mrf.mxu0
      %v1047 = vadd.f32 %v348, %v1046
      %1048 = vmatmul.bf16.gmra.mxu0 %v631
      %v1049 = vpop.f32.mrf.mxu0
      %v1050 = vadd.f32 %v348, %v1049
      %v1051 = vpop.f32.mrf.mxu0
      %v1052 = vadd.f32 %v348, %v1051
      %1053 = vmatmul.bf16.gmra.mxu0 %v636
      %v1054 = vpop.f32.mrf.mxu0
      %v1055 = vadd.f32 %v348, %v1054
      %v1056 = vpop.f32.mrf.mxu0
      %v1057 = vadd.f32 %v348, %v1056
      %1058 = vmatmul.bf16.gmra.mxu0 %v641
      %v1059 = vpop.f32.mrf.mxu0
      %v1060 = vadd.f32 %v348, %v1059
      %v1061 = vpop.f32.mrf.mxu0
      %v1062 = vadd.f32 %v348, %v1061
      %1063 = vmatmul.bf16.gmra.mxu0 %v646
      %v1064 = vpop.f32.mrf.mxu0
      %v1065 = vadd.f32 %v348, %v1064
      %v1066 = vpop.f32.mrf.mxu0
      %v1067 = vadd.f32 %v348, %v1066
      %1068 = vmatmul.bf16.gmra.mxu0 %v651
      %v1069 = vpop.f32.mrf.mxu0
      %v1070 = vadd.f32 %v348, %v1069
      %v1071 = vpop.f32.mrf.mxu0
      %v1072 = vadd.f32 %v348, %v1071
      %1073 = vmatmul.bf16.gmra.mxu0 %v656
      %v1074 = vpop.f32.mrf.mxu0
      %v1075 = vadd.f32 %v348, %v1074
      %v1076 = vpop.f32.mrf.mxu0
      %v1077 = vadd.f32 %v348, %v1076
      %1078 = vmatmul.bf16.gmra.mxu0 %v661
      %v1079 = vpop.f32.mrf.mxu0
      %v1080 = vadd.f32 %v348, %v1079
      %v1081 = vpop.f32.mrf.mxu0
      %v1082 = vadd.f32 %v348, %v1081
      %1083 = vmatmul.bf16.gmra.mxu0 %v666
      %v1084 = vpop.f32.mrf.mxu0
      %v1085 = vadd.f32 %v348, %v1084
      %v1086 = vpop.f32.mrf.mxu0
      %v1087 = vadd.f32 %v348, %v1086
      %1088 = vmatmul.bf16.gmra.mxu0 %v671
      %v1089 = vpop.f32.mrf.mxu0
      %v1090 = vadd.f32 %v348, %v1089
      %v1091 = vpop.f32.mrf.mxu0
      %v1092 = vadd.f32 %v348, %v1091
      %1093 = vmatmul.bf16.gmra.mxu0 %v676
      %v1094 = vpop.f32.mrf.mxu0
      %v1095 = vadd.f32 %v348, %v1094
      %v1096 = vpop.f32.mrf.mxu0
      %v1097 = vadd.f32 %v348, %v1096
      %1098 = vmatmul.bf16.gmra.mxu0 %v681
      %v1099 = vpop.f32.mrf.mxu0
      %v1100 = vadd.f32 %v348, %v1099
      %v1101 = vpop.f32.mrf.mxu0
      %v1102 = vadd.f32 %v348, %v1101
      %1103 = vdwg.mxu0
      %1104 = vmatpush.bf16.msra.mxu0 %v909
      %1105 = vmatpush.bf16.msra.mxu0 %v908
      %1106 = vmatpush.bf16.msra.mxu0 %v907
      %1107 = vmatpush.bf16.msra.mxu0 %v906
      %1108 = vmatpush.bf16.msra.mxu0 %v905
      %1109 = vmatpush.bf16.msra.mxu0 %v904
      %1110 = vmatpush.bf16.msra.mxu0 %v903
      %1111 = vmatpush.bf16.msra.mxu0 %v902
      %1112 = vmatmul.bf16.gmra.mxu0 %v607
      %v1113 = vpop.f32.mrf.mxu0
      %v1114 = vadd.f32 %v1025, %v1113
      %v1115 = vpop.f32.mrf.mxu0
      %v1116 = vadd.f32 %v1027, %v1115
      %1117 = vmatmul.bf16.gmra.mxu0 %v612
      %v1118 = vpop.f32.mrf.mxu0
      %v1119 = vadd.f32 %v1030, %v1118
      %v1120 = vpop.f32.mrf.mxu0
      %v1121 = vadd.f32 %v1032, %v1120
      %1122 = vmatmul.bf16.gmra.mxu0 %v617
      %v1123 = vpop.f32.mrf.mxu0
      %v1124 = vadd.f32 %v1035, %v1123
      %v1125 = vpop.f32.mrf.mxu0
      %v1126 = vadd.f32 %v1037, %v1125
      %1127 = vmatmul.bf16.gmra.mxu0 %v622
      %v1128 = vpop.f32.mrf.mxu0
      %v1129 = vadd.f32 %v1040, %v1128
      %v1130 = vpop.f32.mrf.mxu0
      %v1131 = vadd.f32 %v1042, %v1130
      %1132 = vmatmul.bf16.gmra.mxu0 %v627
      %v1133 = vpop.f32.mrf.mxu0
      %v1134 = vadd.f32 %v1045, %v1133
      %v1135 = vpop.f32.mrf.mxu0
      %v1136 = vadd.f32 %v1047, %v1135
      %1137 = vmatmul.bf16.gmra.mxu0 %v632
      %v1138 = vpop.f32.mrf.mxu0
      %v1139 = vadd.f32 %v1050, %v1138
      %v1140 = vpop.f32.mrf.mxu0
      %v1141 = vadd.f32 %v1052, %v1140
      %1142 = vmatmul.bf16.gmra.mxu0 %v637
      %v1143 = vpop.f32.mrf.mxu0
      %v1144 = vadd.f32 %v1055, %v1143
      %v1145 = vpop.f32.mrf.mxu0
      %v1146 = vadd.f32 %v1057, %v1145
      %1147 = vmatmul.bf16.gmra.mxu0 %v642
      %v1148 = vpop.f32.mrf.mxu0
      %v1149 = vadd.f32 %v1060, %v1148
      %v1150 = vpop.f32.mrf.mxu0
      %v1151 = vadd.f32 %v1062, %v1150
      %1152 = vmatmul.bf16.gmra.mxu0 %v647
      %v1153 = vpop.f32.mrf.mxu0
      %v1154 = vadd.f32 %v1065, %v1153
      %v1155 = vpop.f32.mrf.mxu0
      %v1156 = vadd.f32 %v1067, %v1155
      %1157 = vmatmul.bf16.gmra.mxu0 %v652
      %v1158 = vpop.f32.mrf.mxu0
      %v1159 = vadd.f32 %v1070, %v1158
      %v1160 = vpop.f32.mrf.mxu0
      %v1161 = vadd.f32 %v1072, %v1160
      %1162 = vmatmul.bf16.gmra.mxu0 %v657
      %v1163 = vpop.f32.mrf.mxu0
      %v1164 = vadd.f32 %v1075, %v1163
      %v1165 = vpop.f32.mrf.mxu0
      %v1166 = vadd.f32 %v1077, %v1165
      %1167 = vmatmul.bf16.gmra.mxu0 %v662
      %v1168 = vpop.f32.mrf.mxu0
      %v1169 = vadd.f32 %v1080, %v1168
      %v1170 = vpop.f32.mrf.mxu0
      %v1171 = vadd.f32 %v1082, %v1170
      %1172 = vmatmul.bf16.gmra.mxu0 %v667
      %v1173 = vpop.f32.mrf.mxu0
      %v1174 = vadd.f32 %v1085, %v1173
      %v1175 = vpop.f32.mrf.mxu0
      %v1176 = vadd.f32 %v1087, %v1175
      %1177 = vmatmul.bf16.gmra.mxu0 %v672
      %v1178 = vpop.f32.mrf.mxu0
      %v1179 = vadd.f32 %v1090, %v1178
      %v1180 = vpop.f32.mrf.mxu0
      %v1181 = vadd.f32 %v1092, %v1180
      %1182 = vmatmul.bf16.gmra.mxu0 %v677
      %v1183 = vpop.f32.mrf.mxu0
      %v1184 = vadd.f32 %v1095, %v1183
      %v1185 = vpop.f32.mrf.mxu0
      %v1186 = vadd.f32 %v1097, %v1185
      %1187 = vmatmul.bf16.gmra.mxu0 %v682
      %v1188 = vpop.f32.mrf.mxu0
      %v1189 = vadd.f32 %v1100, %v1188
      %v1190 = vpop.f32.mrf.mxu0
      %v1191 = vadd.f32 %v1102, %v1190
      %1192 = vdwg.mxu0
      %1193 = vmatpush.bf16.msra.mxu0 %v917
      %1194 = vmatpush.bf16.msra.mxu0 %v916
      %1195 = vmatpush.bf16.msra.mxu0 %v915
      %1196 = vmatpush.bf16.msra.mxu0 %v914
      %1197 = vmatpush.bf16.msra.mxu0 %v913
      %1198 = vmatpush.bf16.msra.mxu0 %v912
      %1199 = vmatpush.bf16.msra.mxu0 %v911
      %1200 = vmatpush.bf16.msra.mxu0 %v910
      %1201 = vmatmul.bf16.gmra.mxu0 %v608
      %v1202 = vpop.f32.mrf.mxu0
      %v1203 = vadd.f32 %v1114, %v1202
      %v1204 = vpop.f32.mrf.mxu0
      %v1205 = vadd.f32 %v1116, %v1204
      %1206 = vmatmul.bf16.gmra.mxu0 %v613
      %v1207 = vpop.f32.mrf.mxu0
      %v1208 = vadd.f32 %v1119, %v1207
      %v1209 = vpop.f32.mrf.mxu0
      %v1210 = vadd.f32 %v1121, %v1209
      %1211 = vmatmul.bf16.gmra.mxu0 %v618
      %v1212 = vpop.f32.mrf.mxu0
      %v1213 = vadd.f32 %v1124, %v1212
      %v1214 = vpop.f32.mrf.mxu0
      %v1215 = vadd.f32 %v1126, %v1214
      %1216 = vmatmul.bf16.gmra.mxu0 %v623
      %v1217 = vpop.f32.mrf.mxu0
      %v1218 = vadd.f32 %v1129, %v1217
      %v1219 = vpop.f32.mrf.mxu0
      %v1220 = vadd.f32 %v1131, %v1219
      %1221 = vmatmul.bf16.gmra.mxu0 %v628
      %v1222 = vpop.f32.mrf.mxu0
      %v1223 = vadd.f32 %v1134, %v1222
      %v1224 = vpop.f32.mrf.mxu0
      %v1225 = vadd.f32 %v1136, %v1224
      %1226 = vmatmul.bf16.gmra.mxu0 %v633
      %v1227 = vpop.f32.mrf.mxu0
      %v1228 = vadd.f32 %v1139, %v1227
      %v1229 = vpop.f32.mrf.mxu0
      %v1230 = vadd.f32 %v1141, %v1229
      %1231 = vmatmul.bf16.gmra.mxu0 %v638
      %v1232 = vpop.f32.mrf.mxu0
      %v1233 = vadd.f32 %v1144, %v1232
      %v1234 = vpop.f32.mrf.mxu0
      %v1235 = vadd.f32 %v1146, %v1234
      %1236 = vmatmul.bf16.gmra.mxu0 %v643
      %v1237 = vpop.f32.mrf.mxu0
      %v1238 = vadd.f32 %v1149, %v1237
      %v1239 = vpop.f32.mrf.mxu0
      %v1240 = vadd.f32 %v1151, %v1239
      %1241 = vmatmul.bf16.gmra.mxu0 %v648
      %v1242 = vpop.f32.mrf.mxu0
      %v1243 = vadd.f32 %v1154, %v1242
      %v1244 = vpop.f32.mrf.mxu0
      %v1245 = vadd.f32 %v1156, %v1244
      %1246 = vmatmul.bf16.gmra.mxu0 %v653
      %v1247 = vpop.f32.mrf.mxu0
      %v1248 = vadd.f32 %v1159, %v1247
      %v1249 = vpop.f32.mrf.mxu0
      %v1250 = vadd.f32 %v1161, %v1249
      %1251 = vmatmul.bf16.gmra.mxu0 %v658
      %v1252 = vpop.f32.mrf.mxu0
      %v1253 = vadd.f32 %v1164, %v1252
      %v1254 = vpop.f32.mrf.mxu0
      %v1255 = vadd.f32 %v1166, %v1254
      %1256 = vmatmul.bf16.gmra.mxu0 %v663
      %v1257 = vpop.f32.mrf.mxu0
      %v1258 = vadd.f32 %v1169, %v1257
      %v1259 = vpop.f32.mrf.mxu0
      %v1260 = vadd.f32 %v1171, %v1259
      %1261 = vmatmul.bf16.gmra.mxu0 %v668
      %v1262 = vpop.f32.mrf.mxu0
      %v1263 = vadd.f32 %v1174, %v1262
      %v1264 = vpop.f32.mrf.mxu0
      %v1265 = vadd.f32 %v1176, %v1264
      %1266 = vmatmul.bf16.gmra.mxu0 %v673
      %v1267 = vpop.f32.mrf.mxu0
      %v1268 = vadd.f32 %v1179, %v1267
      %v1269 = vpop.f32.mrf.mxu0
      %v1270 = vadd.f32 %v1181, %v1269
      %1271 = vmatmul.bf16.gmra.mxu0 %v678
      %v1272 = vpop.f32.mrf.mxu0
      %v1273 = vadd.f32 %v1184, %v1272
      %v1274 = vpop.f32.mrf.mxu0
      %v1275 = vadd.f32 %v1186, %v1274
      %1276 = vmatmul.bf16.gmra.mxu0 %v683
      %v1277 = vpop.f32.mrf.mxu0
      %v1278 = vadd.f32 %v1189, %v1277
      %v1279 = vpop.f32.mrf.mxu0
      %v1280 = vadd.f32 %v1191, %v1279
      %1281 = vdwg.mxu0
      %1282 = vmatpush.bf16.msra.mxu0 %v925
      %1283 = vmatpush.bf16.msra.mxu0 %v924
      %1284 = vmatpush.bf16.msra.mxu0 %v923
      %1285 = vmatpush.bf16.msra.mxu0 %v922
      %1286 = vmatpush.bf16.msra.mxu0 %v921
      %1287 = vmatpush.bf16.msra.mxu0 %v920
      %1288 = vmatpush.bf16.msra.mxu0 %v919
      %1289 = vmatpush.bf16.msra.mxu0 %v918
      %1290 = vmatmul.bf16.gmra.mxu0 %v609
      %v1291 = vpop.f32.mrf.mxu0
      %v1292 = vadd.f32 %v1203, %v1291
      %v1293 = vpop.f32.mrf.mxu0
      %v1294 = vadd.f32 %v1205, %v1293
      %1295 = vmatmul.bf16.gmra.mxu0 %v614
      %v1296 = vpop.f32.mrf.mxu0
      %v1297 = vadd.f32 %v1208, %v1296
      %v1298 = vpop.f32.mrf.mxu0
      %v1299 = vadd.f32 %v1210, %v1298
      %1300 = vmatmul.bf16.gmra.mxu0 %v619
      %v1301 = vpop.f32.mrf.mxu0
      %v1302 = vadd.f32 %v1213, %v1301
      %v1303 = vpop.f32.mrf.mxu0
      %v1304 = vadd.f32 %v1215, %v1303
      %1305 = vmatmul.bf16.gmra.mxu0 %v624
      %v1306 = vpop.f32.mrf.mxu0
      %v1307 = vadd.f32 %v1218, %v1306
      %v1308 = vpop.f32.mrf.mxu0
      %v1309 = vadd.f32 %v1220, %v1308
      %1310 = vmatmul.bf16.gmra.mxu0 %v629
      %v1311 = vpop.f32.mrf.mxu0
      %v1312 = vadd.f32 %v1223, %v1311
      %v1313 = vpop.f32.mrf.mxu0
      %v1314 = vadd.f32 %v1225, %v1313
      %1315 = vmatmul.bf16.gmra.mxu0 %v634
      %v1316 = vpop.f32.mrf.mxu0
      %v1317 = vadd.f32 %v1228, %v1316
      %v1318 = vpop.f32.mrf.mxu0
      %v1319 = vadd.f32 %v1230, %v1318
      %1320 = vmatmul.bf16.gmra.mxu0 %v639
      %v1321 = vpop.f32.mrf.mxu0
      %v1322 = vadd.f32 %v1233, %v1321
      %v1323 = vpop.f32.mrf.mxu0
      %v1324 = vadd.f32 %v1235, %v1323
      %1325 = vmatmul.bf16.gmra.mxu0 %v644
      %v1326 = vpop.f32.mrf.mxu0
      %v1327 = vadd.f32 %v1238, %v1326
      %v1328 = vpop.f32.mrf.mxu0
      %v1329 = vadd.f32 %v1240, %v1328
      %1330 = vmatmul.bf16.gmra.mxu0 %v649
      %v1331 = vpop.f32.mrf.mxu0
      %v1332 = vadd.f32 %v1243, %v1331
      %v1333 = vpop.f32.mrf.mxu0
      %v1334 = vadd.f32 %v1245, %v1333
      %1335 = vmatmul.bf16.gmra.mxu0 %v654
      %v1336 = vpop.f32.mrf.mxu0
      %v1337 = vadd.f32 %v1248, %v1336
      %v1338 = vpop.f32.mrf.mxu0
      %v1339 = vadd.f32 %v1250, %v1338
      %1340 = vmatmul.bf16.gmra.mxu0 %v659
      %v1341 = vpop.f32.mrf.mxu0
      %v1342 = vadd.f32 %v1253, %v1341
      %v1343 = vpop.f32.mrf.mxu0
      %v1344 = vadd.f32 %v1255, %v1343
      %1345 = vmatmul.bf16.gmra.mxu0 %v664
      %v1346 = vpop.f32.mrf.mxu0
      %v1347 = vadd.f32 %v1258, %v1346
      %v1348 = vpop.f32.mrf.mxu0
      %v1349 = vadd.f32 %v1260, %v1348
      %1350 = vmatmul.bf16.gmra.mxu0 %v669
      %v1351 = vpop.f32.mrf.mxu0
      %v1352 = vadd.f32 %v1263, %v1351
      %v1353 = vpop.f32.mrf.mxu0
      %v1354 = vadd.f32 %v1265, %v1353
      %1355 = vmatmul.bf16.gmra.mxu0 %v674
      %v1356 = vpop.f32.mrf.mxu0
      %v1357 = vadd.f32 %v1268, %v1356
      %v1358 = vpop.f32.mrf.mxu0
      %v1359 = vadd.f32 %v1270, %v1358
      %1360 = vmatmul.bf16.gmra.mxu0 %v679
      %v1361 = vpop.f32.mrf.mxu0
      %v1362 = vadd.f32 %v1273, %v1361
      %v1363 = vpop.f32.mrf.mxu0
      %v1364 = vadd.f32 %v1275, %v1363
      %1365 = vmatmul.bf16.gmra.mxu0 %v684
      %v1366 = vpop.f32.mrf.mxu0
      %v1367 = vadd.f32 %v1278, %v1366
      %v1368 = vpop.f32.mrf.mxu0
      %v1369 = vadd.f32 %v1280, %v1368
      %1370 = vdwg.mxu0
      %1371 = vmatpush.bf16.msra.mxu0 0
      %1372 = vmatpush.bf16.msra.mxu0 0
      %1373 = vmatpush.bf16.msra.mxu0 0
      %1374 = vmatpush.bf16.msra.mxu0 0
      %1375 = vmatpush.bf16.msra.mxu0 %v929
      %1376 = vmatpush.bf16.msra.mxu0 %v928
      %1377 = vmatpush.bf16.msra.mxu0 %v927
      %1378 = vmatpush.bf16.msra.mxu0 %v926
      %1379 = vmatmul.bf16.gmra.mxu0 %v968
      %v1380 = vpop.f32.mrf.mxu0
      %v1381 = vadd.f32 %v1292, %v1380
      %v1382 = vpop.f32.mrf.mxu0
      %v1383 = vadd.f32 %v1294, %v1382
      %1384 = vmatmul.bf16.gmra.mxu0 %v971
      %v1385 = vpop.f32.mrf.mxu0
      %v1386 = vadd.f32 %v1297, %v1385
      %v1387 = vpop.f32.mrf.mxu0
      %v1388 = vadd.f32 %v1299, %v1387
      %1389 = vmatmul.bf16.gmra.mxu0 %v974
      %v1390 = vpop.f32.mrf.mxu0
      %v1391 = vadd.f32 %v1302, %v1390
      %v1392 = vpop.f32.mrf.mxu0
      %v1393 = vadd.f32 %v1304, %v1392
      %1394 = vmatmul.bf16.gmra.mxu0 %v977
      %v1395 = vpop.f32.mrf.mxu0
      %v1396 = vadd.f32 %v1307, %v1395
      %v1397 = vpop.f32.mrf.mxu0
      %v1398 = vadd.f32 %v1309, %v1397
      %1399 = vmatmul.bf16.gmra.mxu0 %v980
      %v1400 = vpop.f32.mrf.mxu0
      %v1401 = vadd.f32 %v1312, %v1400
      %v1402 = vpop.f32.mrf.mxu0
      %v1403 = vadd.f32 %v1314, %v1402
      %1404 = vmatmul.bf16.gmra.mxu0 %v983
      %v1405 = vpop.f32.mrf.mxu0
      %v1406 = vadd.f32 %v1317, %v1405
      %v1407 = vpop.f32.mrf.mxu0
      %v1408 = vadd.f32 %v1319, %v1407
      %1409 = vmatmul.bf16.gmra.mxu0 %v986
      %v1410 = vpop.f32.mrf.mxu0
      %v1411 = vadd.f32 %v1322, %v1410
      %v1412 = vpop.f32.mrf.mxu0
      %v1413 = vadd.f32 %v1324, %v1412
      %1414 = vmatmul.bf16.gmra.mxu0 %v989
      %v1415 = vpop.f32.mrf.mxu0
      %v1416 = vadd.f32 %v1327, %v1415
      %v1417 = vpop.f32.mrf.mxu0
      %v1418 = vadd.f32 %v1329, %v1417
      %1419 = vmatmul.bf16.gmra.mxu0 %v992
      %v1420 = vpop.f32.mrf.mxu0
      %v1421 = vadd.f32 %v1332, %v1420
      %v1422 = vpop.f32.mrf.mxu0
      %v1423 = vadd.f32 %v1334, %v1422
      %1424 = vmatmul.bf16.gmra.mxu0 %v995
      %v1425 = vpop.f32.mrf.mxu0
      %v1426 = vadd.f32 %v1337, %v1425
      %v1427 = vpop.f32.mrf.mxu0
      %v1428 = vadd.f32 %v1339, %v1427
      %1429 = vmatmul.bf16.gmra.mxu0 %v998
      %v1430 = vpop.f32.mrf.mxu0
      %v1431 = vadd.f32 %v1342, %v1430
      %v1432 = vpop.f32.mrf.mxu0
      %v1433 = vadd.f32 %v1344, %v1432
      %1434 = vmatmul.bf16.gmra.mxu0 %v1001
      %v1435 = vpop.f32.mrf.mxu0
      %v1436 = vadd.f32 %v1347, %v1435
      %v1437 = vpop.f32.mrf.mxu0
      %v1438 = vadd.f32 %v1349, %v1437
      %1439 = vmatmul.bf16.gmra.mxu0 %v1004
      %v1440 = vpop.f32.mrf.mxu0
      %v1441 = vadd.f32 %v1352, %v1440
      %v1442 = vpop.f32.mrf.mxu0
      %v1443 = vadd.f32 %v1354, %v1442
      %1444 = vmatmul.bf16.gmra.mxu0 %v1007
      %v1445 = vpop.f32.mrf.mxu0
      %v1446 = vadd.f32 %v1357, %v1445
      %v1447 = vpop.f32.mrf.mxu0
      %v1448 = vadd.f32 %v1359, %v1447
      %1449 = vmatmul.bf16.gmra.mxu0 %v1010
      %v1450 = vpop.f32.mrf.mxu0
      %v1451 = vadd.f32 %v1362, %v1450
      %v1452 = vpop.f32.mrf.mxu0
      %v1453 = vadd.f32 %v1364, %v1452
      %1454 = vmatmul.bf16.gmra.mxu0 %v1013
      %v1455 = vpop.f32.mrf.mxu0
      %v1456 = vadd.f32 %v1367, %v1455
      %v1457 = vpop.f32.mrf.mxu0
      %v1458 = vadd.f32 %v1369, %v1457
      %1459 = vdwg.mxu0
      %vm1460 = vcmp.ge.f32.partialorder %v1381, 0.0
      %vm1461 = vcmp.ge.f32.partialorder %v1383, 0.0
      %vm1462 = vcmp.ge.f32.partialorder %v1386, 0.0
      %vm1463 = vcmp.ge.f32.partialorder %v1388, 0.0
      %vm1464 = vcmp.ge.f32.partialorder %v1391, 0.0
      %vm1465 = vcmp.ge.f32.partialorder %v1393, 0.0
      %vm1466 = vcmp.ge.f32.partialorder %v1396, 0.0
      %vm1467 = vcmp.ge.f32.partialorder %v1398, 0.0
      %vm1468 = vcmp.ge.f32.partialorder %v1401, 0.0
      %vm1469 = vcmp.ge.f32.partialorder %v1403, 0.0
      %vm1470 = vcmp.ge.f32.partialorder %v1406, 0.0
      %vm1471 = vcmp.ge.f32.partialorder %v1408, 0.0
      %vm1472 = vcmp.ge.f32.partialorder %v1411, 0.0
      %vm1473 = vcmp.ge.f32.partialorder %v1413, 0.0
      %vm1474 = vcmp.ge.f32.partialorder %v1416, 0.0
      %vm1475 = vcmp.ge.f32.partialorder %v1418, 0.0
      %vm1476 = vcmp.ge.f32.partialorder %v1421, 0.0
      %vm1477 = vcmp.ge.f32.partialorder %v1423, 0.0
      %vm1478 = vcmp.ge.f32.partialorder %v1426, 0.0
      %vm1479 = vcmp.ge.f32.partialorder %v1428, 0.0
      %vm1480 = vcmp.ge.f32.partialorder %v1431, 0.0
      %vm1481 = vcmp.ge.f32.partialorder %v1433, 0.0
      %vm1482 = vcmp.ge.f32.partialorder %v1436, 0.0
      %vm1483 = vcmp.ge.f32.partialorder %v1438, 0.0
      %vm1484 = vcmp.ge.f32.partialorder %v1441, 0.0
      %vm1485 = vcmp.ge.f32.partialorder %v1443, 0.0
      %vm1486 = vcmp.ge.f32.partialorder %v1446, 0.0
      %vm1487 = vcmp.ge.f32.partialorder %v1448, 0.0
      %vm1488 = vcmp.ge.f32.partialorder %v1451, 0.0
      %vm1489 = vcmp.ge.f32.partialorder %v1453, 0.0
      %vm1490 = vcmp.ge.f32.partialorder %v1456, 0.0
      %vm1491 = vcmp.ge.f32.partialorder %v1458, 0.0
      %v1492 = vmul.f32 %v1381, 0.25
      %v1493 = vmul.f32 %v1383, 0.25
      %v1494 = vmul.f32 %v1386, 0.25
      %v1495 = vmul.f32 %v1388, 0.25
      %v1496 = vmul.f32 %v1391, 0.25
      %v1497 = vmul.f32 %v1393, 0.25
      %v1498 = vmul.f32 %v1396, 0.25
      %v1499 = vmul.f32 %v1398, 0.25
      %v1500 = vmul.f32 %v1401, 0.25
      %v1501 = vmul.f32 %v1403, 0.25
      %v1502 = vmul.f32 %v1406, 0.25
      %v1503 = vmul.f32 %v1408, 0.25
      %v1504 = vmul.f32 %v1411, 0.25
      %v1505 = vmul.f32 %v1413, 0.25
      %v1506 = vmul.f32 %v1416, 0.25
      %v1507 = vmul.f32 %v1418, 0.25
      %v1508 = vmul.f32 %v1421, 0.25
      %v1509 = vmul.f32 %v1423, 0.25
      %v1510 = vmul.f32 %v1426, 0.25
      %v1511 = vmul.f32 %v1428, 0.25
      %v1512 = vmul.f32 %v1431, 0.25
      %v1513 = vmul.f32 %v1433, 0.25
      %v1514 = vmul.f32 %v1436, 0.25
      %v1515 = vmul.f32 %v1438, 0.25
      %v1516 = vmul.f32 %v1441, 0.25
      %v1517 = vmul.f32 %v1443, 0.25
      %v1518 = vmul.f32 %v1446, 0.25
      %v1519 = vmul.f32 %v1448, 0.25
      %v1520 = vmul.f32 %v1451, 0.25
      %v1521 = vmul.f32 %v1453, 0.25
      %v1522 = vmul.f32 %v1456, 0.25
      %v1523 = vmul.f32 %v1458, 0.25
      %v1524 = vsel %vm1460, %v1381, %v1492
      %v1525 = vsel %vm1461, %v1383, %v1493
      %v1526 = vsel %vm1462, %v1386, %v1494
      %v1527 = vsel %vm1463, %v1388, %v1495
      %v1528 = vsel %vm1464, %v1391, %v1496
      %v1529 = vsel %vm1465, %v1393, %v1497
      %v1530 = vsel %vm1466, %v1396, %v1498
      %v1531 = vsel %vm1467, %v1398, %v1499
      %v1532 = vsel %vm1468, %v1401, %v1500
      %v1533 = vsel %vm1469, %v1403, %v1501
      %v1534 = vsel %vm1470, %v1406, %v1502
      %v1535 = vsel %vm1471, %v1408, %v1503
      %v1536 = vsel %vm1472, %v1411, %v1504
      %v1537 = vsel %vm1473, %v1413, %v1505
      %v1538 = vsel %vm1474, %v1416, %v1506
      %v1539 = vsel %vm1475, %v1418, %v1507
      %v1540 = vsel %vm1476, %v1421, %v1508
      %v1541 = vsel %vm1477, %v1423, %v1509
      %v1542 = vsel %vm1478, %v1426, %v1510
      %v1543 = vsel %vm1479, %v1428, %v1511
      %v1544 = vsel %vm1480, %v1431, %v1512
      %v1545 = vsel %vm1481, %v1433, %v1513
      %v1546 = vsel %vm1482, %v1436, %v1514
      %v1547 = vsel %vm1483, %v1438, %v1515
      %v1548 = vsel %vm1484, %v1441, %v1516
      %v1549 = vsel %vm1485, %v1443, %v1517
      %v1550 = vsel %vm1486, %v1446, %v1518
      %v1551 = vsel %vm1487, %v1448, %v1519
      %v1552 = vsel %vm1488, %v1451, %v1520
      %v1553 = vsel %vm1489, %v1453, %v1521
      %v1554 = vsel %vm1490, %v1456, %v1522
      %v1555 = vsel %vm1491, %v1458, %v1523
      %v1556 = vpack.c.bf16 %v1524, %v1524
      %v1557 = vpack.c.bf16 %v1525, %v1525
      %v1558 = vpack.c.bf16 %v1526, %v1526
      %v1559 = vpack.c.bf16 %v1527, %v1527
      %v1560 = vpack.c.bf16 %v1528, %v1528
      %v1561 = vpack.c.bf16 %v1529, %v1529
      %v1562 = vpack.c.bf16 %v1530, %v1530
      %v1563 = vpack.c.bf16 %v1531, %v1531
      %v1564 = vpack.c.bf16 %v1532, %v1532
      %v1565 = vpack.c.bf16 %v1533, %v1533
      %v1566 = vpack.c.bf16 %v1534, %v1534
      %v1567 = vpack.c.bf16 %v1535, %v1535
      %v1568 = vpack.c.bf16 %v1536, %v1536
      %v1569 = vpack.c.bf16 %v1537, %v1537
      %v1570 = vpack.c.bf16 %v1538, %v1538
      %v1571 = vpack.c.bf16 %v1539, %v1539
      %v1572 = vpack.c.bf16 %v1540, %v1540
      %v1573 = vpack.c.bf16 %v1541, %v1541
      %v1574 = vpack.c.bf16 %v1542, %v1542
      %v1575 = vpack.c.bf16 %v1543, %v1543
      %v1576 = vpack.c.bf16 %v1544, %v1544
      %v1577 = vpack.c.bf16 %v1545, %v1545
      %v1578 = vpack.c.bf16 %v1546, %v1546
      %v1579 = vpack.c.bf16 %v1547, %v1547
      %v1580 = vpack.c.bf16 %v1548, %v1548
      %v1581 = vpack.c.bf16 %v1549, %v1549
      %v1582 = vpack.c.bf16 %v1550, %v1550
      %v1583 = vpack.c.bf16 %v1551, %v1551
      %v1584 = vpack.c.bf16 %v1552, %v1552
      %v1585 = vpack.c.bf16 %v1553, %v1553
      %v1586 = vpack.c.bf16 %v1554, %v1554
      %v1587 = vpack.c.bf16 %v1555, %v1555
      %vm1588 = vcmask 125952
      %1589 = vst.msk [vmem:[%s175] sm:$0xf] %vm1588, %v1556
      %1590 = vst.msk [vmem:[%s175 + $0x4] sm:$0xf] %vm1588, %v1557
      %1591 = vst.msk [vmem:[%s175 + $0x8] sm:$0xf] %vm1588, %v1558
      %1592 = vst.msk [vmem:[%s175 + $0xc] sm:$0xf] %vm1588, %v1559
      %1593 = vst.msk [vmem:[%s175 + $0x10] sm:$0xf] %vm1588, %v1560
      %1594 = vst.msk [vmem:[%s175 + $0x14] sm:$0xf] %vm1588, %v1561
      %1595 = vst.msk [vmem:[%s175 + $0x18] sm:$0xf] %vm1588, %v1562
      %1596 = vst.msk [vmem:[%s175 + $0x1c] sm:$0xf] %vm1588, %v1563
      %1597 = vst.msk [vmem:[%s175 + $0x20] sm:$0xf] %vm1588, %v1564
      %1598 = vst.msk [vmem:[%s175 + $0x24] sm:$0xf] %vm1588, %v1565
      %1599 = vst.msk [vmem:[%s175 + $0x28] sm:$0xf] %vm1588, %v1566
      %1600 = vst.msk [vmem:[%s175 + $0x2c] sm:$0xf] %vm1588, %v1567
      %1601 = vst.msk [vmem:[%s175 + $0x30] sm:$0xf] %vm1588, %v1568
      %1602 = vst.msk [vmem:[%s175 + $0x34] sm:$0xf] %vm1588, %v1569
      %1603 = vst.msk [vmem:[%s175 + $0x38] sm:$0xf] %vm1588, %v1570
      %1604 = vst.msk [vmem:[%s175 + $0x3c] sm:$0xf] %vm1588, %v1571
      %1605 = vst.msk [vmem:[%s175 + $0x40] sm:$0xf] %vm1588, %v1572
      %1606 = vst.msk [vmem:[%s175 + $0x44] sm:$0xf] %vm1588, %v1573
      %1607 = vst.msk [vmem:[%s175 + $0x48] sm:$0xf] %vm1588, %v1574
      %1608 = vst.msk [vmem:[%s175 + $0x4c] sm:$0xf] %vm1588, %v1575
      %1609 = vst.msk [vmem:[%s175 + $0x50] sm:$0xf] %vm1588, %v1576
      %1610 = vst.msk [vmem:[%s175 + $0x54] sm:$0xf] %vm1588, %v1577
      %1611 = vst.msk [vmem:[%s175 + $0x58] sm:$0xf] %vm1588, %v1578
      %1612 = vst.msk [vmem:[%s175 + $0x5c] sm:$0xf] %vm1588, %v1579
      %1613 = vst.msk [vmem:[%s175 + $0x60] sm:$0xf] %vm1588, %v1580
      %1614 = vst.msk [vmem:[%s175 + $0x64] sm:$0xf] %vm1588, %v1581
      %1615 = vst.msk [vmem:[%s175 + $0x68] sm:$0xf] %vm1588, %v1582
      %1616 = vst.msk [vmem:[%s175 + $0x6c] sm:$0xf] %vm1588, %v1583
      %1617 = vst.msk [vmem:[%s175 + $0x70] sm:$0xf] %vm1588, %v1584
      %1618 = vst.msk [vmem:[%s175 + $0x74] sm:$0xf] %vm1588, %v1585
      %1619 = vst.msk [vmem:[%s175 + $0x78] sm:$0xf] %vm1588, %v1586
      %1620 = vst.msk [vmem:[%s175 + $0x7c] sm:$0xf] %vm1588, %v1587
      %s1621 = smul.u32 32, %s14
      %p1622 = scmp.lt.s32.totalorder %s1621, 63
      %s1623 = scalar_select %p1622, %s1621, 63
      %s1624 = smul.addr %s1623, 4
      %s1625 = scalar_lea.vmem %s3, %s1624
      // Predicated region
      $region33: #{net2_forward.17} parent=31 // pred_check
        %p1626 = pneg %p100
      $region34: #{net2_forward.17} parent=31 // pred_check_branch
        %1628 = sbr.rel (%p1626) target = $region36
      $region35: #{net2_forward.17} parent=31 // pred_region
        %s1629 = smul.u32 32, %s14
      $region36: #{net2_forward.17} parent=31 // pred_fallthru
        _
    $region32: #{net2_forward.17} parent=5 // pred_fallthru
      _
    %p1630 = scmp.le.s32.totalorder 2, %s9
    // Predicated region
    $region37: #{net2_forward.17} parent=5 // pred_check
      %p1631 = pneg %p1630
    $region38: #{net2_forward.17} parent=5 // pred_check_branch
      %1633 = sbr.rel (%p1631) target = $region40
    $region39: #{net2_forward.17} parent=5 // pred_region
      %s1634 = ssub.s32 %s9, 2
      // Predicated region
      $region41: #{net2_forward.17} parent=39 // pred_check
        %p1635 = pneg %p106
      $region42: #{net2_forward.17} parent=39 // pred_check_branch
        %1637 = sbr.rel (%p1635) target = $region44
      $region43: #{net2_forward.17} parent=39 // pred_region
        %s1638 = smul.u32 32, %s15
        %p1639 = scmp.lt.s32.totalorder %s1638, 63
        %s1640 = scalar_select %p1639, %s1638, 63
        %s1641 = smul.addr %s1640, 4
        %s1642 = scalar_lea.vmem %s3, %s1641
      $region44: #{net2_forward.17} parent=39 // pred_fallthru
        _
    $region40: #{net2_forward.17} parent=5 // pred_fallthru
      _
  $region6: #{net2_forward.17} parent=0 // loop_footer
    %s13 = sadd.s32 1, %s9
  $region7: #{net2_forward.17} parent=0 // loop_footer_branch
    %8 = sbr.rel target = $region3
  $region8: #{net2_forward.17} parent=0 // loop_exit
    _

// kernel: net2_forward.18
$region0: #{net2_forward.18}
  #allocation0 [shape = 'u32[]', space=smem, size = 0x4, offset = 0x4, fixed_abs, tag = 'smem constant byte address 0x4 - core index']
  #allocation1 [shape = 'u32[72,128]{1,0:T(1,128)}', space=vmem, size = 0x9000, scoped, tag = 'internal scratch']
  %s0 = inlined_call_operand.vmem [shape: bf16[512,144], index: 0, kind: input, shape index: {}]
  %s1 = inlined_call_operand.vmem [shape: bf16[144,64], index: 1, kind: input, shape index: {}]
  %s2 = inlined_call_operand.vmem [shape: f32[1,64], index: 2, kind: input, shape index: {}]
  %s3 = inlined_call_operand.vmem [shape: bf16[512,64], index: 3, kind: input, shape index: {}]
  %s4 = inlined_call_operand.vmem [shape: bf16[512,64], index: 4, kind: output, shape index: {}]
  %s5 = sld [smem:[#allocation0]]
  $region49: #{net2_forward.18} parent=0
    _
  %s7 = ssub.s32 1, %s5
  %s8 = scalar_select 0, %s7, %s5
  loop: start=0, step=1, limit=4
  $region2: #{net2_forward.18} parent=0 // loop_pre_header
    _
  $region3: #{net2_forward.18} parent=0 // loop_header
    %s10 = sphi 0, %s14
    %p11 = scmp.ge.s32.totalorder %s10, 4
    %s20 = sphi 0, %s22
    %s23 = sphi 0, %s20
    %s24 = sphi 0, %s23
    %s40 = sphi 0, %s24
    %s44 = sphi 0, %s44
    %s46 = sphi 0, %s44
    %s47 = sphi 0, %s46
    %s61 = sphi 0, %s47
    %s65 = sphi 0, %s65
    %s67 = sphi 0, %s65
    %s68 = sphi 0, %s67
    %s82 = sphi 0, %s68
    %s88 = sphi 0, %s90
    %s91 = sphi 0, %s88
    %s92 = sphi 0, %s91
    %s108 = sphi 0, %s92
    %s114 = sphi 0, %s116
    %s117 = sphi 0, %s114
    %s118 = sphi 0, %s117
    %s134 = sphi 0, %s118
  $region4: #{net2_forward.18} parent=0 // loop_header_branch
    %13 = sbr.rel (%p11) target = $region8
  $region5: #{net2_forward.18} parent=0 // loop_body
    %s15 = ssub.s32 %s10, 1
    %s16 = ssub.s32 %s10, 2
    %s17 = sadd.s32 %s10, 1
    %s18 = ssub.s32 %s10, %s17
    %p19 = scmp.eq.s32.totalorder %s18, 0
    %s21 = sadd.s32 %s20, 1
    %s22 = scalar_select %p19, %s20, %s21
    %p25 = pneg %p19
    %p26 = scmp.eq.s32.totalorder %s10, 1
    %p27 = por %p25, %p26
    %p28 = scmp.ne.s32.totalorder %s20, %s23
    %p29 = scmp.eq.s32.totalorder %s10, 0
    %p30 = por %p28, %p29
    %p31 = scmp.ne.s32.totalorder %s20, %s23
    %p32 = scmp.eq.s32.totalorder %s15, 1
    %p33 = por %p31, %p32
    %p34 = scmp.ne.s32.totalorder %s23, %s24
    %p35 = scmp.eq.s32.totalorder %s15, 0
    %p36 = por %p34, %p35
    %p37 = scmp.ne.s32.totalorder %s23, %s24
    %p38 = scmp.eq.s32.totalorder %s16, 1
    %p39 = por %p37, %p38
    %p41 = scmp.ne.s32.totalorder %s24, %s40
    %p42 = scmp.eq.s32.totalorder %s16, 0
    %p43 = por %p41, %p42
    %s45 = sadd.s32 %s44, 1
    %p48 = scmp.eq.s32.totalorder %s10, 1
    %p49 = scmp.ne.s32.totalorder %s44, %s46
    %p50 = scmp.eq.s32.totalorder %s10, 0
    %p51 = por %p49, %p50
    %p52 = scmp.ne.s32.totalorder %s44, %s46
    %p53 = scmp.eq.s32.totalorder %s15, 1
    %p54 = por %p52, %p53
    %p55 = scmp.ne.s32.totalorder %s46, %s47
    %p56 = scmp.eq.s32.totalorder %s15, 0
    %p57 = por %p55, %p56
    %p58 = scmp.ne.s32.totalorder %s46, %s47
    %p59 = scmp.eq.s32.totalorder %s16, 1
    %p60 = por %p58, %p59
    %p62 = scmp.ne.s32.totalorder %s47, %s61
    %p63 = scmp.eq.s32.totalorder %s16, 0
    %p64 = por %p62, %p63
    %s66 = sadd.s32 %s65, 1
    %p69 = scmp.eq.s32.totalorder %s10, 1
    %p70 = scmp.ne.s32.totalorder %s65, %s67
    %p71 = scmp.eq.s32.totalorder %s10, 0
    %p72 = por %p70, %p71
    %p73 = scmp.ne.s32.totalorder %s65, %s67
    %p74 = scmp.eq.s32.totalorder %s15, 1
    %p75 = por %p73, %p74
    %p76 = scmp.ne.s32.totalorder %s67, %s68
    %p77 = scmp.eq.s32.totalorder %s15, 0
    %p78 = por %p76, %p77
    %p79 = scmp.ne.s32.totalorder %s67, %s68
    %p80 = scmp.eq.s32.totalorder %s16, 1
    %p81 = por %p79, %p80
    %p83 = scmp.ne.s32.totalorder %s68, %s82
    %p84 = scmp.eq.s32.totalorder %s16, 0
    %p85 = por %p83, %p84
    %s86 = ssub.s32 %s10, %s17
    %p87 = scmp.eq.s32.totalorder %s86, 0
    %s89 = sadd.s32 %s88, 1
    %s90 = scalar_select %p87, %s88, %s89
    %p93 = pneg %p87
    %p94 = scmp.eq.s32.totalorder %s10, 1
    %p95 = por %p93, %p94
    %p96 = scmp.ne.s32.totalorder %s88, %s91
    %p97 = scmp.eq.s32.totalorder %s10, 0
    %p98 = por %p96, %p97
    %p99 = scmp.ne.s32.totalorder %s88, %s91
    %p100 = scmp.eq.s32.totalorder %s15, 1
    %p101 = por %p99, %p100
    %p102 = scmp.ne.s32.totalorder %s91, %s92
    %p103 = scmp.eq.s32.totalorder %s15, 0
    %p104 = por %p102, %p103
    %p105 = scmp.ne.s32.totalorder %s91, %s92
    %p106 = scmp.eq.s32.totalorder %s16, 1
    %p107 = por %p105, %p106
    %p109 = scmp.ne.s32.totalorder %s92, %s108
    %p110 = scmp.eq.s32.totalorder %s16, 0
    %p111 = por %p109, %p110
    %s112 = ssub.s32 %s10, %s17
    %p113 = scmp.eq.s32.totalorder %s112, 0
    %s115 = sadd.s32 %s114, 1
    %s116 = scalar_select %p113, %s114, %s115
    %p119 = pneg %p113
    %p120 = scmp.eq.s32.totalorder %s10, 1
    %p121 = por %p119, %p120
    %p122 = scmp.ne.s32.totalorder %s114, %s117
    %p123 = scmp.eq.s32.totalorder %s10, 0
    %p124 = por %p122, %p123
    %p125 = scmp.ne.s32.totalorder %s114, %s117
    %p126 = scmp.eq.s32.totalorder %s15, 1
    %p127 = por %p125, %p126
    %p128 = scmp.ne.s32.totalorder %s117, %s118
    %p129 = scmp.eq.s32.totalorder %s15, 0
    %p130 = por %p128, %p129
    %p131 = scmp.ne.s32.totalorder %s117, %s118
    %p132 = scmp.eq.s32.totalorder %s16, 1
    %p133 = por %p131, %p132
    %p135 = scmp.ne.s32.totalorder %s118, %s134
    %p136 = scmp.eq.s32.totalorder %s16, 0
    %p137 = por %p135, %p136
    %p138 = scmp.le.s32.totalorder 1, %s10
    %p139 = scmp.lt.s32.totalorder %s10, 3
    %p140 = pnand %p138, %p139
    %p141 = pneg %p140
    // Predicated region
    $region9: #{net2_forward.18} parent=5 // pred_check
      _
    $region10: #{net2_forward.18} parent=5 // pred_check_branch
      %143 = sbr.rel (%p140) target = $region12
    $region11: #{net2_forward.18} parent=5 // pred_region
      %s144 = ssub.s32 %s10, 1
      // Predicated region
      $region13: #{net2_forward.18} parent=11 // pred_check
        %p145 = pneg %p57
      $region14: #{net2_forward.18} parent=11 // pred_check_branch
        %147 = sbr.rel (%p145) target = $region16
      $region15: #{net2_forward.18} parent=11 // pred_region
        _
      $region16: #{net2_forward.18} parent=11 // pred_fallthru
        _
      // Predicated region
      $region17: #{net2_forward.18} parent=11 // pred_check
        %p148 = pneg %p78
      $region18: #{net2_forward.18} parent=11 // pred_check_branch
        %150 = sbr.rel (%p148) target = $region20
      $region19: #{net2_forward.18} parent=11 // pred_region
        _
      $region20: #{net2_forward.18} parent=11 // pred_fallthru
        _
    $region12: #{net2_forward.18} parent=5 // pred_fallthru
      _
    %p151 = scmp.lt.s32.totalorder %s10, 2
    // Predicated region
    $region21: #{net2_forward.18} parent=5 // pred_check
      %p152 = pneg %p151
    $region22: #{net2_forward.18} parent=5 // pred_check_branch
      %154 = sbr.rel (%p152) target = $region24
    $region23: #{net2_forward.18} parent=5 // pred_region
      // Predicated region
      $region25: #{net2_forward.18} parent=23 // pred_check
        %p155 = pneg %p30
      $region26: #{net2_forward.18} parent=23 // pred_check_branch
        %157 = sbr.rel (%p155) target = $region28
      $region27: #{net2_forward.18} parent=23 // pred_region
        %s158 = smul.u32 32, %s10
        %p159 = scmp.lt.s32.totalorder %s158, 63
        %s160 = scalar_select %p159, %s158, 63
        %s161 = smul.addr %s160, 2
        %s162 = smul.addr %s161, 4
        %s163 = scalar_lea.vmem %s0, %s162
        %s164 = smul.u32 32, %s10
      $region28: #{net2_forward.18} parent=23 // pred_fallthru
        _
      // Predicated region
      $region29: #{net2_forward.18} parent=23 // pred_check
        %p165 = pneg %p98
      $region30: #{net2_forward.18} parent=23 // pred_check_branch
        %167 = sbr.rel (%p165) target = $region32
      $region31: #{net2_forward.18} parent=23 // pred_region
        %s168 = smul.u32 32, %s10
        %p169 = scmp.lt.s32.totalorder %s168, 63
        %s170 = scalar_select %p169, %s168, 63
        %s171 = smul.addr %s170, 4
        %s172 = scalar_lea.vmem %s3, %s171
        %s173 = smul.u32 32, %s10
      $region32: #{net2_forward.18} parent=23 // pred_fallthru
        _
    $region24: #{net2_forward.18} parent=5 // pred_fallthru
      _
    %p174 = scmp.le.s32.totalorder 1, %s10
    %p175 = scmp.lt.s32.totalorder %s10, 3
    %p176 = pnand %p174, %p175
    %p177 = pneg %p176
    // Predicated region
    $region33: #{net2_forward.18} parent=5 // pred_check
      _
    $region34: #{net2_forward.18} parent=5 // pred_check_branch
      %179 = sbr.rel (%p176) target = $region36
    $region35: #{net2_forward.18} parent=5 // pred_region
      %s180 = ssub.s32 %s10, 1
      %s181 = smul.u32 32, %s15
      %p182 = scmp.lt.s32.totalorder %s181, 63
      %s183 = scalar_select %p182, %s181, 63
      %s184 = smul.addr %s183, 2
      %s185 = smul.addr %s184, 4
      %s186 = scalar_lea.vmem %s0, %s185
      %p187 = pneg %p36
      %p188 = pneg %p33
      %p189 = pneg %p57
      %p190 = pneg %p54
      %p191 = pneg %p78
      %p192 = pneg %p75
      %s193 = smul.u32 32, %s15
      %p194 = scmp.lt.s32.totalorder %s193, 63
      %s195 = scalar_select %p194, %s193, 63
      %s196 = smul.addr %s195, 4
      %s197 = scalar_lea.vmem %s3, %s196
      %p198 = pneg %p104
      %p199 = pneg %p101
      %p200 = pneg %p130
      %p201 = pneg %p127
      %s202 = smul.u32 32, %s15
      %p203 = scmp.lt.s32.totalorder %s202, 63
      %s204 = scalar_select %p203, %s202, 63
      %s205 = smul.addr %s204, 4
      %s206 = scalar_lea.vmem %s4, %s205
      %s207 = smul.u32 32, %s15
      %p208 = scmp.lt.s32.totalorder %s207, 63
      %s209 = scalar_select %p208, %s207, 63
      %s210 = smul.addr %s209, 2
      %s211 = smul.addr %s210, 4
      %s212 = scalar_lea.vmem %s0, %s211
      %s213 = smul.u32 32, %s15
      %s214 = smul.u32 32, %s15
      %p215 = scmp.lt.s32.totalorder %s214, 63
      %s216 = scalar_select %p215, %s214, 63
      %s217 = smul.addr %s216, 4
      %s218 = scalar_lea.vmem %s3, %s217
      %s219 = smul.u32 32, %s15
      %s220 = smul.u32 32, %s15
      %p221 = scmp.lt.s32.totalorder %s220, 63
      %s222 = scalar_select %p221, %s220, 63
      %s223 = smul.addr %s222, 4
      %s224 = scalar_lea.vmem %s4, %s223
      %s225 = smul.u32 32, %s15
      %v227 = vld [vmem:[%s212] sm:$0xff]
      %v228 = vld [vmem:[%s212 + $0x8] sm:$0xff]
      %v229 = vld [vmem:[%s212 + $0x10] sm:$0xff]
      %v230 = vld [vmem:[%s212 + $0x18] sm:$0xff]
      %v231 = vld [vmem:[%s212 + $0x20] sm:$0xff]
      %v232 = vld [vmem:[%s212 + $0x28] sm:$0xff]
      %v233 = vld [vmem:[%s212 + $0x30] sm:$0xff]
      %v234 = vld [vmem:[%s212 + $0x38] sm:$0xff]
      %v235 = vld [vmem:[%s212 + $0x40] sm:$0xff]
      %v236 = vld [vmem:[%s212 + $0x48] sm:$0xff]
      %v237 = vld [vmem:[%s212 + $0x50] sm:$0xff]
      %v238 = vld [vmem:[%s212 + $0x58] sm:$0xff]
      %v239 = vld [vmem:[%s212 + $0x60] sm:$0xff]
      %v240 = vld [vmem:[%s212 + $0x68] sm:$0xff]
      %v241 = vld [vmem:[%s212 + $0x70] sm:$0xff]
      %v242 = vld [vmem:[%s212 + $0x78] sm:$0xff]
      %v243 = vld [vmem:[%s212 + $0x80] sm:$0xff]
      %v244 = vld [vmem:[%s212 + $0x88] sm:$0xff]
      %v245 = vld [vmem:[%s212 + $0x90] sm:$0xff]
      %v246 = vld [vmem:[%s212 + $0x98] sm:$0xff]
      %v247 = vld [vmem:[%s212 + $0xa0] sm:$0xff]
      %v248 = vld [vmem:[%s212 + $0xa8] sm:$0xff]
      %v249 = vld [vmem:[%s212 + $0xb0] sm:$0xff]
      %v250 = vld [vmem:[%s212 + $0xb8] sm:$0xff]
      %v251 = vld [vmem:[%s212 + $0xc0] sm:$0xff]
      %v252 = vld [vmem:[%s212 + $0xc8] sm:$0xff]
      %v253 = vld [vmem:[%s212 + $0xd0] sm:$0xff]
      %v254 = vld [vmem:[%s212 + $0xd8] sm:$0xff]
      %v255 = vld [vmem:[%s212 + $0xe0] sm:$0xff]
      %v256 = vld [vmem:[%s212 + $0xe8] sm:$0xff]
      %v257 = vld [vmem:[%s212 + $0xf0] sm:$0xff]
      %v258 = vld [vmem:[%s212 + $0xf8] sm:$0xff]
      %v259 = vld [vmem:[%s1] sm:$0xf]
      %v260 = vld [vmem:[%s1 + $0x4] sm:$0xf]
      %v261 = vld [vmem:[%s1 + $0x8] sm:$0xf]
      %v262 = vld [vmem:[%s1 + $0xc] sm:$0xf]
      %v263 = vld [vmem:[%s1 + $0x10] sm:$0xf]
      %v264 = vld [vmem:[%s1 + $0x14] sm:$0xf]
      %v265 = vld [vmem:[%s1 + $0x18] sm:$0xf]
      %v266 = vld [vmem:[%s1 + $0x1c] sm:$0xf]
      %v267 = vld [vmem:[%s1 + $0x20] sm:$0xf]
      %v268 = vld [vmem:[%s1 + $0x24] sm:$0xf]
      %v269 = vld [vmem:[%s1 + $0x28] sm:$0xf]
      %v270 = vld [vmem:[%s1 + $0x2c] sm:$0xf]
      %v271 = vld [vmem:[%s1 + $0x30] sm:$0xf]
      %v272 = vld [vmem:[%s1 + $0x34] sm:$0xf]
      %v273 = vld [vmem:[%s1 + $0x38] sm:$0xf]
      %v274 = vld [vmem:[%s1 + $0x3c] sm:$0xf]
      %v275 = vld [vmem:[%s1 + $0x40] sm:$0xf]
      %v276 = vld [vmem:[%s1 + $0x44] sm:$0xf]
      %v277 = vld [vmem:[%s2] sm:$0x1]
      %v279 = vperm.slane %v277, 0
      %v313 = vunpack.c.l.b16 %v227
      %v314 = vunpack.c.h.b16 %v227
      %v315 = vunpack.c.l.b16 %v228
      %v316 = vunpack.c.h.b16 %v228
      %v317 = vunpack.c.l.b16 %v229
      %v318 = vunpack.c.h.b16 %v229
      %v319 = vunpack.c.l.b16 %v230
      %v320 = vunpack.c.h.b16 %v230
      %v321 = vunpack.c.l.b16 %v231
      %v322 = vunpack.c.h.b16 %v231
      %v323 = vunpack.c.l.b16 %v232
      %v324 = vunpack.c.h.b16 %v232
      %v325 = vunpack.c.l.b16 %v233
      %v326 = vunpack.c.h.b16 %v233
      %v327 = vunpack.c.l.b16 %v234
      %v328 = vunpack.c.h.b16 %v234
      %v329 = vunpack.c.l.b16 %v235
      %v330 = vunpack.c.h.b16 %v235
      %v331 = vunpack.c.l.b16 %v236
      %v332 = vunpack.c.h.b16 %v236
      %v333 = vunpack.c.l.b16 %v237
      %v334 = vunpack.c.h.b16 %v237
      %v335 = vunpack.c.l.b16 %v238
      %v336 = vunpack.c.h.b16 %v238
      %v337 = vunpack.c.l.b16 %v239
      %v338 = vunpack.c.h.b16 %v239
      %v339 = vunpack.c.l.b16 %v240
      %v340 = vunpack.c.h.b16 %v240
      %v341 = vunpack.c.l.b16 %v241
      %v342 = vunpack.c.h.b16 %v241
      %v343 = vunpack.c.l.b16 %v242
      %v344 = vunpack.c.h.b16 %v242
      %v345 = vunpack.c.l.b16 %v243
      %v346 = vunpack.c.h.b16 %v243
      %v347 = vunpack.c.l.b16 %v244
      %v348 = vunpack.c.h.b16 %v244
      %v349 = vunpack.c.l.b16 %v245
      %v350 = vunpack.c.h.b16 %v245
      %v351 = vunpack.c.l.b16 %v246
      %v352 = vunpack.c.h.b16 %v246
      %v353 = vunpack.c.l.b16 %v247
      %v354 = vunpack.c.h.b16 %v247
      %v355 = vunpack.c.l.b16 %v248
      %v356 = vunpack.c.h.b16 %v248
      %v357 = vunpack.c.l.b16 %v249
      %v358 = vunpack.c.h.b16 %v249
      %v359 = vunpack.c.l.b16 %v250
      %v360 = vunpack.c.h.b16 %v250
      %v361 = vunpack.c.l.b16 %v251
      %v362 = vunpack.c.h.b16 %v251
      %v363 = vunpack.c.l.b16 %v252
      %v364 = vunpack.c.h.b16 %v252
      %v365 = vunpack.c.l.b16 %v253
      %v366 = vunpack.c.h.b16 %v253
      %v367 = vunpack.c.l.b16 %v254
      %v368 = vunpack.c.h.b16 %v254
      %v369 = vunpack.c.l.b16 %v255
      %v370 = vunpack.c.h.b16 %v255
      %v371 = vunpack.c.l.b16 %v256
      %v372 = vunpack.c.h.b16 %v256
      %v373 = vunpack.c.l.b16 %v257
      %v374 = vunpack.c.h.b16 %v257
      %v375 = vunpack.c.l.b16 %v258
      %v376 = vunpack.c.h.b16 %v258
      %v377 = vpack.c.b16 %v315, %v313
      %v378 = vpack.c.b16 %v316, %v314
      %v379 = vpack.c.b16 %v319, %v317
      %v380 = vpack.c.b16 %v320, %v318
      %v381 = vpack.c.b16 %v323, %v321
      %v382 = vpack.c.b16 %v324, %v322
      %v383 = vpack.c.b16 %v327, %v325
      %v384 = vpack.c.b16 %v328, %v326
      %v385 = vpack.c.b16 %v331, %v329
      %v386 = vpack.c.b16 %v332, %v330
      %v387 = vpack.c.b16 %v335, %v333
      %v388 = vpack.c.b16 %v336, %v334
      %v389 = vpack.c.b16 %v339, %v337
      %v390 = vpack.c.b16 %v340, %v338
      %v391 = vpack.c.b16 %v343, %v341
      %v392 = vpack.c.b16 %v344, %v342
      %v393 = vpack.c.b16 %v347, %v345
      %v394 = vpack.c.b16 %v348, %v346
      %v395 = vpack.c.b16 %v351, %v349
      %v396 = vpack.c.b16 %v352, %v350
      %v397 = vpack.c.b16 %v355, %v353
      %v398 = vpack.c.b16 %v356, %v354
      %v399 = vpack.c.b16 %v359, %v357
      %v400 = vpack.c.b16 %v360, %v358
      %v401 = vpack.c.b16 %v363, %v361
      %v402 = vpack.c.b16 %v364, %v362
      %v403 = vpack.c.b16 %v367, %v365
      %v404 = vpack.c.b16 %v368, %v366
      %v405 = vpack.c.b16 %v371, %v369
      %v406 = vpack.c.b16 %v372, %v370
      %v407 = vpack.c.b16 %v375, %v373
      %v408 = vpack.c.b16 %v376, %v374
      %v443 = vunpack.c.l.b16 %v259
      %v444 = vunpack.c.l.b16 %v260
      %v445 = vunpack.c.l.b16 %v261
      %v446 = vunpack.c.l.b16 %v262
      %v447 = vunpack.c.l.b16 %v263
      %v448 = vunpack.c.l.b16 %v264
      %v449 = vunpack.c.l.b16 %v265
      %v450 = vunpack.c.l.b16 %v266
      %v451 = vunpack.c.l.b16 %v267
      %v452 = vunpack.c.l.b16 %v268
      %v453 = vunpack.c.l.b16 %v269
      %v454 = vunpack.c.l.b16 %v270
      %v455 = vunpack.c.l.b16 %v271
      %v456 = vunpack.c.l.b16 %v272
      %v457 = vunpack.c.l.b16 %v273
      %v458 = vunpack.c.l.b16 %v274
      %v459 = vunpack.c.l.b16 %v275
      %v460 = vunpack.c.l.b16 %v276
      %v461 = vpack.c.b16 %v444, %v443
      %v462 = vpack.c.b16 %v446, %v445
      %v463 = vpack.c.b16 %v448, %v447
      %v464 = vpack.c.b16 %v450, %v449
      %v465 = vpack.c.b16 %v452, %v451
      %v466 = vpack.c.b16 %v454, %v453
      %v467 = vpack.c.b16 %v456, %v455
      %v468 = vpack.c.b16 %v458, %v457
      %v469 = vpack.c.b16 %v460, %v459
      %vm479 = vcmask 130048
      %v481 = vsel %vm479, %v378, 0
      %v484 = vsel %vm479, %v380, 0
      %v487 = vsel %vm479, %v382, 0
      %v490 = vsel %vm479, %v384, 0
      %v493 = vsel %vm479, %v386, 0
      %v496 = vsel %vm479, %v388, 0
      %v499 = vsel %vm479, %v390, 0
      %v502 = vsel %vm479, %v392, 0
      %v505 = vsel %vm479, %v394, 0
      %v508 = vsel %vm479, %v396, 0
      %v511 = vsel %vm479, %v398, 0
      %v514 = vsel %vm479, %v400, 0
      %v517 = vsel %vm479, %v402, 0
      %v520 = vsel %vm479, %v404, 0
      %v523 = vsel %vm479, %v406, 0
      %v526 = vsel %vm479, %v408, 0
      %528 = vmatpush.bf16.msra.mxu0 %v468
      %529 = vmatpush.bf16.msra.mxu0 %v467
      %530 = vmatpush.bf16.msra.mxu0 %v466
      %531 = vmatpush.bf16.msra.mxu0 %v465
      %532 = vmatpush.bf16.msra.mxu0 %v464
      %533 = vmatpush.bf16.msra.mxu0 %v463
      %534 = vmatpush.bf16.msra.mxu0 %v462
      %535 = vmatpush.bf16.msra.mxu0 %v461
      %536 = vmatmul.bf16.gmra.mxu0 %v377
      %v537 = vpop.f32.mrf.mxu0
      %v538 = vadd.f32 %v279, %v537
      %v539 = vpop.f32.mrf.mxu0
      %v540 = vadd.f32 %v279, %v539
      %541 = vmatmul.bf16.gmra.mxu0 %v379
      %v542 = vpop.f32.mrf.mxu0
      %v543 = vadd.f32 %v279, %v542
      %v544 = vpop.f32.mrf.mxu0
      %v545 = vadd.f32 %v279, %v544
      %546 = vmatmul.bf16.gmra.mxu0 %v381
      %v547 = vpop.f32.mrf.mxu0
      %v548 = vadd.f32 %v279, %v547
      %v549 = vpop.f32.mrf.mxu0
      %v550 = vadd.f32 %v279, %v549
      %551 = vmatmul.bf16.gmra.mxu0 %v383
      %v552 = vpop.f32.mrf.mxu0
      %v553 = vadd.f32 %v279, %v552
      %v554 = vpop.f32.mrf.mxu0
      %v555 = vadd.f32 %v279, %v554
      %556 = vmatmul.bf16.gmra.mxu0 %v385
      %v557 = vpop.f32.mrf.mxu0
      %v558 = vadd.f32 %v279, %v557
      %v559 = vpop.f32.mrf.mxu0
      %v560 = vadd.f32 %v279, %v559
      %561 = vmatmul.bf16.gmra.mxu0 %v387
      %v562 = vpop.f32.mrf.mxu0
      %v563 = vadd.f32 %v279, %v562
      %v564 = vpop.f32.mrf.mxu0
      %v565 = vadd.f32 %v279, %v564
      %566 = vmatmul.bf16.gmra.mxu0 %v389
      %v567 = vpop.f32.mrf.mxu0
      %v568 = vadd.f32 %v279, %v567
      %v569 = vpop.f32.mrf.mxu0
      %v570 = vadd.f32 %v279, %v569
      %571 = vmatmul.bf16.gmra.mxu0 %v391
      %v572 = vpop.f32.mrf.mxu0
      %v573 = vadd.f32 %v279, %v572
      %v574 = vpop.f32.mrf.mxu0
      %v575 = vadd.f32 %v279, %v574
      %576 = vmatmul.bf16.gmra.mxu0 %v393
      %v577 = vpop.f32.mrf.mxu0
      %v578 = vadd.f32 %v279, %v577
      %v579 = vpop.f32.mrf.mxu0
      %v580 = vadd.f32 %v279, %v579
      %581 = vmatmul.bf16.gmra.mxu0 %v395
      %v582 = vpop.f32.mrf.mxu0
      %v583 = vadd.f32 %v279, %v582
      %v584 = vpop.f32.mrf.mxu0
      %v585 = vadd.f32 %v279, %v584
      %586 = vmatmul.bf16.gmra.mxu0 %v397
      %v587 = vpop.f32.mrf.mxu0
      %v588 = vadd.f32 %v279, %v587
      %v589 = vpop.f32.mrf.mxu0
      %v590 = vadd.f32 %v279, %v589
      %591 = vmatmul.bf16.gmra.mxu0 %v399
      %v592 = vpop.f32.mrf.mxu0
      %v593 = vadd.f32 %v279, %v592
      %v594 = vpop.f32.mrf.mxu0
      %v595 = vadd.f32 %v279, %v594
      %596 = vmatmul.bf16.gmra.mxu0 %v401
      %v597 = vpop.f32.mrf.mxu0
      %v598 = vadd.f32 %v279, %v597
      %v599 = vpop.f32.mrf.mxu0
      %v600 = vadd.f32 %v279, %v599
      %601 = vmatmul.bf16.gmra.mxu0 %v403
      %v602 = vpop.f32.mrf.mxu0
      %v603 = vadd.f32 %v279, %v602
      %v604 = vpop.f32.mrf.mxu0
      %v605 = vadd.f32 %v279, %v604
      %606 = vmatmul.bf16.gmra.mxu0 %v405
      %v607 = vpop.f32.mrf.mxu0
      %v608 = vadd.f32 %v279, %v607
      %v609 = vpop.f32.mrf.mxu0
      %v610 = vadd.f32 %v279, %v609
      %611 = vmatmul.bf16.gmra.mxu0 %v407
      %v612 = vpop.f32.mrf.mxu0
      %v613 = vadd.f32 %v279, %v612
      %v614 = vpop.f32.mrf.mxu0
      %v615 = vadd.f32 %v279, %v614
      %616 = vdwg.mxu0
      %617 = vmatpush.bf16.msra.mxu0 0
      %618 = vmatpush.bf16.msra.mxu0 0
      %619 = vmatpush.bf16.msra.mxu0 0
      %620 = vmatpush.bf16.msra.mxu0 0
      %621 = vmatpush.bf16.msra.mxu0 0
      %622 = vmatpush.bf16.msra.mxu0 0
      %623 = vmatpush.bf16.msra.mxu0 0
      %624 = vmatpush.bf16.msra.mxu0 %v469
      %625 = vmatmul.bf16.gmra.mxu0 %v481
      %v626 = vpop.f32.mrf.mxu0
      %v627 = vadd.f32 %v538, %v626
      %v628 = vpop.f32.mrf.mxu0
      %v629 = vadd.f32 %v540, %v628
      %630 = vmatmul.bf16.gmra.mxu0 %v484
      %v631 = vpop.f32.mrf.mxu0
      %v632 = vadd.f32 %v543, %v631
      %v633 = vpop.f32.mrf.mxu0
      %v634 = vadd.f32 %v545, %v633
      %635 = vmatmul.bf16.gmra.mxu0 %v487
      %v636 = vpop.f32.mrf.mxu0
      %v637 = vadd.f32 %v548, %v636
      %v638 = vpop.f32.mrf.mxu0
      %v639 = vadd.f32 %v550, %v638
      %640 = vmatmul.bf16.gmra.mxu0 %v490
      %v641 = vpop.f32.mrf.mxu0
      %v642 = vadd.f32 %v553, %v641
      %v643 = vpop.f32.mrf.mxu0
      %v644 = vadd.f32 %v555, %v643
      %645 = vmatmul.bf16.gmra.mxu0 %v493
      %v646 = vpop.f32.mrf.mxu0
      %v647 = vadd.f32 %v558, %v646
      %v648 = vpop.f32.mrf.mxu0
      %v649 = vadd.f32 %v560, %v648
      %650 = vmatmul.bf16.gmra.mxu0 %v496
      %v651 = vpop.f32.mrf.mxu0
      %v652 = vadd.f32 %v563, %v651
      %v653 = vpop.f32.mrf.mxu0
      %v654 = vadd.f32 %v565, %v653
      %655 = vmatmul.bf16.gmra.mxu0 %v499
      %v656 = vpop.f32.mrf.mxu0
      %v657 = vadd.f32 %v568, %v656
      %v658 = vpop.f32.mrf.mxu0
      %v659 = vadd.f32 %v570, %v658
      %660 = vmatmul.bf16.gmra.mxu0 %v502
      %v661 = vpop.f32.mrf.mxu0
      %v662 = vadd.f32 %v573, %v661
      %v663 = vpop.f32.mrf.mxu0
      %v664 = vadd.f32 %v575, %v663
      %665 = vmatmul.bf16.gmra.mxu0 %v505
      %v666 = vpop.f32.mrf.mxu0
      %v667 = vadd.f32 %v578, %v666
      %v668 = vpop.f32.mrf.mxu0
      %v669 = vadd.f32 %v580, %v668
      %670 = vmatmul.bf16.gmra.mxu0 %v508
      %v671 = vpop.f32.mrf.mxu0
      %v672 = vadd.f32 %v583, %v671
      %v673 = vpop.f32.mrf.mxu0
      %v674 = vadd.f32 %v585, %v673
      %675 = vmatmul.bf16.gmra.mxu0 %v511
      %v676 = vpop.f32.mrf.mxu0
      %v677 = vadd.f32 %v588, %v676
      %v678 = vpop.f32.mrf.mxu0
      %v679 = vadd.f32 %v590, %v678
      %680 = vmatmul.bf16.gmra.mxu0 %v514
      %v681 = vpop.f32.mrf.mxu0
      %v682 = vadd.f32 %v593, %v681
      %v683 = vpop.f32.mrf.mxu0
      %v684 = vadd.f32 %v595, %v683
      %685 = vmatmul.bf16.gmra.mxu0 %v517
      %v686 = vpop.f32.mrf.mxu0
      %v687 = vadd.f32 %v598, %v686
      %v688 = vpop.f32.mrf.mxu0
      %v689 = vadd.f32 %v600, %v688
      %690 = vmatmul.bf16.gmra.mxu0 %v520
      %v691 = vpop.f32.mrf.mxu0
      %v692 = vadd.f32 %v603, %v691
      %v693 = vpop.f32.mrf.mxu0
      %v694 = vadd.f32 %v605, %v693
      %695 = vmatmul.bf16.gmra.mxu0 %v523
      %v696 = vpop.f32.mrf.mxu0
      %v697 = vadd.f32 %v608, %v696
      %v698 = vpop.f32.mrf.mxu0
      %v699 = vadd.f32 %v610, %v698
      %700 = vmatmul.bf16.gmra.mxu0 %v526
      %v701 = vpop.f32.mrf.mxu0
      %v702 = vadd.f32 %v613, %v701
      %v703 = vpop.f32.mrf.mxu0
      %v704 = vadd.f32 %v615, %v703
      %705 = vdwg.mxu0
      %vm706 = vcmp.ge.f32.partialorder %v627, 0.0
      %vm707 = vcmp.ge.f32.partialorder %v629, 0.0
      %vm708 = vcmp.ge.f32.partialorder %v632, 0.0
      %vm709 = vcmp.ge.f32.partialorder %v634, 0.0
      %vm710 = vcmp.ge.f32.partialorder %v637, 0.0
      %vm711 = vcmp.ge.f32.partialorder %v639, 0.0
      %vm712 = vcmp.ge.f32.partialorder %v642, 0.0
      %vm713 = vcmp.ge.f32.partialorder %v644, 0.0
      %vm714 = vcmp.ge.f32.partialorder %v647, 0.0
      %vm715 = vcmp.ge.f32.partialorder %v649, 0.0
      %vm716 = vcmp.ge.f32.partialorder %v652, 0.0
      %vm717 = vcmp.ge.f32.partialorder %v654, 0.0
      %vm718 = vcmp.ge.f32.partialorder %v657, 0.0
      %vm719 = vcmp.ge.f32.partialorder %v659, 0.0
      %vm720 = vcmp.ge.f32.partialorder %v662, 0.0
      %vm721 = vcmp.ge.f32.partialorder %v664, 0.0
      %vm722 = vcmp.ge.f32.partialorder %v667, 0.0
      %vm723 = vcmp.ge.f32.partialorder %v669, 0.0
      %vm724 = vcmp.ge.f32.partialorder %v672, 0.0
      %vm725 = vcmp.ge.f32.partialorder %v674, 0.0
      %vm726 = vcmp.ge.f32.partialorder %v677, 0.0
      %vm727 = vcmp.ge.f32.partialorder %v679, 0.0
      %vm728 = vcmp.ge.f32.partialorder %v682, 0.0
      %vm729 = vcmp.ge.f32.partialorder %v684, 0.0
      %vm730 = vcmp.ge.f32.partialorder %v687, 0.0
      %vm731 = vcmp.ge.f32.partialorder %v689, 0.0
      %vm732 = vcmp.ge.f32.partialorder %v692, 0.0
      %vm733 = vcmp.ge.f32.partialorder %v694, 0.0
      %vm734 = vcmp.ge.f32.partialorder %v697, 0.0
      %vm735 = vcmp.ge.f32.partialorder %v699, 0.0
      %vm736 = vcmp.ge.f32.partialorder %v702, 0.0
      %vm737 = vcmp.ge.f32.partialorder %v704, 0.0
      %v738 = vmul.f32 %v627, 0.25
      %v739 = vmul.f32 %v629, 0.25
      %v740 = vmul.f32 %v632, 0.25
      %v741 = vmul.f32 %v634, 0.25
      %v742 = vmul.f32 %v637, 0.25
      %v743 = vmul.f32 %v639, 0.25
      %v744 = vmul.f32 %v642, 0.25
      %v745 = vmul.f32 %v644, 0.25
      %v746 = vmul.f32 %v647, 0.25
      %v747 = vmul.f32 %v649, 0.25
      %v748 = vmul.f32 %v652, 0.25
      %v749 = vmul.f32 %v654, 0.25
      %v750 = vmul.f32 %v657, 0.25
      %v751 = vmul.f32 %v659, 0.25
      %v752 = vmul.f32 %v662, 0.25
      %v753 = vmul.f32 %v664, 0.25
      %v754 = vmul.f32 %v667, 0.25
      %v755 = vmul.f32 %v669, 0.25
      %v756 = vmul.f32 %v672, 0.25
      %v757 = vmul.f32 %v674, 0.25
      %v758 = vmul.f32 %v677, 0.25
      %v759 = vmul.f32 %v679, 0.25
      %v760 = vmul.f32 %v682, 0.25
      %v761 = vmul.f32 %v684, 0.25
      %v762 = vmul.f32 %v687, 0.25
      %v763 = vmul.f32 %v689, 0.25
      %v764 = vmul.f32 %v692, 0.25
      %v765 = vmul.f32 %v694, 0.25
      %v766 = vmul.f32 %v697, 0.25
      %v767 = vmul.f32 %v699, 0.25
      %v768 = vmul.f32 %v702, 0.25
      %v769 = vmul.f32 %v704, 0.25
      %v770 = vsel %vm706, %v627, %v738
      %v771 = vsel %vm707, %v629, %v739
      %v772 = vsel %vm708, %v632, %v740
      %v773 = vsel %vm709, %v634, %v741
      %v774 = vsel %vm710, %v637, %v742
      %v775 = vsel %vm711, %v639, %v743
      %v776 = vsel %vm712, %v642, %v744
      %v777 = vsel %vm713, %v644, %v745
      %v778 = vsel %vm714, %v647, %v746
      %v779 = vsel %vm715, %v649, %v747
      %v780 = vsel %vm716, %v652, %v748
      %v781 = vsel %vm717, %v654, %v749
      %v782 = vsel %vm718, %v657, %v750
      %v783 = vsel %vm719, %v659, %v751
      %v784 = vsel %vm720, %v662, %v752
      %v785 = vsel %vm721, %v664, %v753
      %v786 = vsel %vm722, %v667, %v754
      %v787 = vsel %vm723, %v669, %v755
      %v788 = vsel %vm724, %v672, %v756
      %v789 = vsel %vm725, %v674, %v757
      %v790 = vsel %vm726, %v677, %v758
      %v791 = vsel %vm727, %v679, %v759
      %v792 = vsel %vm728, %v682, %v760
      %v793 = vsel %vm729, %v684, %v761
      %v794 = vsel %vm730, %v687, %v762
      %v795 = vsel %vm731, %v689, %v763
      %v796 = vsel %vm732, %v692, %v764
      %v797 = vsel %vm733, %v694, %v765
      %v798 = vsel %vm734, %v697, %v766
      %v799 = vsel %vm735, %v699, %v767
      %v800 = vsel %vm736, %v702, %v768
      %v801 = vsel %vm737, %v704, %v769
      %v802 = vld [vmem:[%s218] sm:$0xf]
      %v803 = vld [vmem:[%s218 + $0x4] sm:$0xf]
      %v804 = vld [vmem:[%s218 + $0x8] sm:$0xf]
      %v805 = vld [vmem:[%s218 + $0xc] sm:$0xf]
      %v806 = vld [vmem:[%s218 + $0x10] sm:$0xf]
      %v807 = vld [vmem:[%s218 + $0x14] sm:$0xf]
      %v808 = vld [vmem:[%s218 + $0x18] sm:$0xf]
      %v809 = vld [vmem:[%s218 + $0x1c] sm:$0xf]
      %v810 = vld [vmem:[%s218 + $0x20] sm:$0xf]
      %v811 = vld [vmem:[%s218 + $0x24] sm:$0xf]
      %v812 = vld [vmem:[%s218 + $0x28] sm:$0xf]
      %v813 = vld [vmem:[%s218 + $0x2c] sm:$0xf]
      %v814 = vld [vmem:[%s218 + $0x30] sm:$0xf]
      %v815 = vld [vmem:[%s218 + $0x34] sm:$0xf]
      %v816 = vld [vmem:[%s218 + $0x38] sm:$0xf]
      %v817 = vld [vmem:[%s218 + $0x3c] sm:$0xf]
      %v818 = vld [vmem:[%s218 + $0x40] sm:$0xf]
      %v819 = vld [vmem:[%s218 + $0x44] sm:$0xf]
      %v820 = vld [vmem:[%s218 + $0x48] sm:$0xf]
      %v821 = vld [vmem:[%s218 + $0x4c] sm:$0xf]
      %v822 = vld [vmem:[%s218 + $0x50] sm:$0xf]
      %v823 = vld [vmem:[%s218 + $0x54] sm:$0xf]
      %v824 = vld [vmem:[%s218 + $0x58] sm:$0xf]
      %v825 = vld [vmem:[%s218 + $0x5c] sm:$0xf]
      %v826 = vld [vmem:[%s218 + $0x60] sm:$0xf]
      %v827 = vld [vmem:[%s218 + $0x64] sm:$0xf]
      %v828 = vld [vmem:[%s218 + $0x68] sm:$0xf]
      %v829 = vld [vmem:[%s218 + $0x6c] sm:$0xf]
      %v830 = vld [vmem:[%s218 + $0x70] sm:$0xf]
      %v831 = vld [vmem:[%s218 + $0x74] sm:$0xf]
      %v832 = vld [vmem:[%s218 + $0x78] sm:$0xf]
      %v833 = vld [vmem:[%s218 + $0x7c] sm:$0xf]
      %v834 = vunpack.c.l.bf16 %v802
      %v835 = vunpack.c.l.bf16 %v803
      %v836 = vunpack.c.l.bf16 %v804
      %v837 = vunpack.c.l.bf16 %v805
      %v838 = vunpack.c.l.bf16 %v806
      %v839 = vunpack.c.l.bf16 %v807
      %v840 = vunpack.c.l.bf16 %v808
      %v841 = vunpack.c.l.bf16 %v809
      %v842 = vunpack.c.l.bf16 %v810
      %v843 = vunpack.c.l.bf16 %v811
      %v844 = vunpack.c.l.bf16 %v812
      %v845 = vunpack.c.l.bf16 %v813
      %v846 = vunpack.c.l.bf16 %v814
      %v847 = vunpack.c.l.bf16 %v815
      %v848 = vunpack.c.l.bf16 %v816
      %v849 = vunpack.c.l.bf16 %v817
      %v850 = vunpack.c.l.bf16 %v818
      %v851 = vunpack.c.l.bf16 %v819
      %v852 = vunpack.c.l.bf16 %v820
      %v853 = vunpack.c.l.bf16 %v821
      %v854 = vunpack.c.l.bf16 %v822
      %v855 = vunpack.c.l.bf16 %v823
      %v856 = vunpack.c.l.bf16 %v824
      %v857 = vunpack.c.l.bf16 %v825
      %v858 = vunpack.c.l.bf16 %v826
      %v859 = vunpack.c.l.bf16 %v827
      %v860 = vunpack.c.l.bf16 %v828
      %v861 = vunpack.c.l.bf16 %v829
      %v862 = vunpack.c.l.bf16 %v830
      %v863 = vunpack.c.l.bf16 %v831
      %v864 = vunpack.c.l.bf16 %v832
      %v865 = vunpack.c.l.bf16 %v833
      %v866 = vmul.f32 %v834, -1.0
      %v867 = vmul.f32 %v835, -1.0
      %v868 = vmul.f32 %v836, -1.0
      %v869 = vmul.f32 %v837, -1.0
      %v870 = vmul.f32 %v838, -1.0
      %v871 = vmul.f32 %v839, -1.0
      %v872 = vmul.f32 %v840, -1.0
      %v873 = vmul.f32 %v841, -1.0
      %v874 = vmul.f32 %v842, -1.0
      %v875 = vmul.f32 %v843, -1.0
      %v876 = vmul.f32 %v844, -1.0
      %v877 = vmul.f32 %v845, -1.0
      %v878 = vmul.f32 %v846, -1.0
      %v879 = vmul.f32 %v847, -1.0
      %v880 = vmul.f32 %v848, -1.0
      %v881 = vmul.f32 %v849, -1.0
      %v882 = vmul.f32 %v850, -1.0
      %v883 = vmul.f32 %v851, -1.0
      %v884 = vmul.f32 %v852, -1.0
      %v885 = vmul.f32 %v853, -1.0
      %v886 = vmul.f32 %v854, -1.0
      %v887 = vmul.f32 %v855, -1.0
      %v888 = vmul.f32 %v856, -1.0
      %v889 = vmul.f32 %v857, -1.0
      %v890 = vmul.f32 %v858, -1.0
      %v891 = vmul.f32 %v859, -1.0
      %v892 = vmul.f32 %v860, -1.0
      %v893 = vmul.f32 %v861, -1.0
      %v894 = vmul.f32 %v862, -1.0
      %v895 = vmul.f32 %v863, -1.0
      %v896 = vmul.f32 %v864, -1.0
      %v897 = vmul.f32 %v865, -1.0
      %v898 = vadd.f32 %v770, %v866
      %v899 = vadd.f32 %v771, %v867
      %v900 = vadd.f32 %v772, %v868
      %v901 = vadd.f32 %v773, %v869
      %v902 = vadd.f32 %v774, %v870
      %v903 = vadd.f32 %v775, %v871
      %v904 = vadd.f32 %v776, %v872
      %v905 = vadd.f32 %v777, %v873
      %v906 = vadd.f32 %v778, %v874
      %v907 = vadd.f32 %v779, %v875
      %v908 = vadd.f32 %v780, %v876
      %v909 = vadd.f32 %v781, %v877
      %v910 = vadd.f32 %v782, %v878
      %v911 = vadd.f32 %v783, %v879
      %v912 = vadd.f32 %v784, %v880
      %v913 = vadd.f32 %v785, %v881
      %v914 = vadd.f32 %v786, %v882
      %v915 = vadd.f32 %v787, %v883
      %v916 = vadd.f32 %v788, %v884
      %v917 = vadd.f32 %v789, %v885
      %v918 = vadd.f32 %v790, %v886
      %v919 = vadd.f32 %v791, %v887
      %v920 = vadd.f32 %v792, %v888
      %v921 = vadd.f32 %v793, %v889
      %v922 = vadd.f32 %v794, %v890
      %v923 = vadd.f32 %v795, %v891
      %v924 = vadd.f32 %v796, %v892
      %v925 = vadd.f32 %v797, %v893
      %v926 = vadd.f32 %v798, %v894
      %v927 = vadd.f32 %v799, %v895
      %v928 = vadd.f32 %v800, %v896
      %v929 = vadd.f32 %v801, %v897
      %v930 = vpack.c.bf16 %v898, %v898
      %v931 = vpack.c.bf16 %v899, %v899
      %v932 = vpack.c.bf16 %v900, %v900
      %v933 = vpack.c.bf16 %v901, %v901
      %v934 = vpack.c.bf16 %v902, %v902
      %v935 = vpack.c.bf16 %v903, %v903
      %v936 = vpack.c.bf16 %v904, %v904
      %v937 = vpack.c.bf16 %v905, %v905
      %v938 = vpack.c.bf16 %v906, %v906
      %v939 = vpack.c.bf16 %v907, %v907
      %v940 = vpack.c.bf16 %v908, %v908
      %v941 = vpack.c.bf16 %v909, %v909
      %v942 = vpack.c.bf16 %v910, %v910
      %v943 = vpack.c.bf16 %v911, %v911
      %v944 = vpack.c.bf16 %v912, %v912
      %v945 = vpack.c.bf16 %v913, %v913
      %v946 = vpack.c.bf16 %v914, %v914
      %v947 = vpack.c.bf16 %v915, %v915
      %v948 = vpack.c.bf16 %v916, %v916
      %v949 = vpack.c.bf16 %v917, %v917
      %v950 = vpack.c.bf16 %v918, %v918
      %v951 = vpack.c.bf16 %v919, %v919
      %v952 = vpack.c.bf16 %v920, %v920
      %v953 = vpack.c.bf16 %v921, %v921
      %v954 = vpack.c.bf16 %v922, %v922
      %v955 = vpack.c.bf16 %v923, %v923
      %v956 = vpack.c.bf16 %v924, %v924
      %v957 = vpack.c.bf16 %v925, %v925
      %v958 = vpack.c.bf16 %v926, %v926
      %v959 = vpack.c.bf16 %v927, %v927
      %v960 = vpack.c.bf16 %v928, %v928
      %v961 = vpack.c.bf16 %v929, %v929
      %vm962 = vcmask 519168
      %963 = vst.msk [vmem:[%s224] sm:$0xf] %vm962, %v930
      %964 = vst.msk [vmem:[%s224 + $0x4] sm:$0xf] %vm962, %v931
      %965 = vst.msk [vmem:[%s224 + $0x8] sm:$0xf] %vm962, %v932
      %966 = vst.msk [vmem:[%s224 + $0xc] sm:$0xf] %vm962, %v933
      %967 = vst.msk [vmem:[%s224 + $0x10] sm:$0xf] %vm962, %v934
      %968 = vst.msk [vmem:[%s224 + $0x14] sm:$0xf] %vm962, %v935
      %969 = vst.msk [vmem:[%s224 + $0x18] sm:$0xf] %vm962, %v936
      %970 = vst.msk [vmem:[%s224 + $0x1c] sm:$0xf] %vm962, %v937
      %971 = vst.msk [vmem:[%s224 + $0x20] sm:$0xf] %vm962, %v938
      %972 = vst.msk [vmem:[%s224 + $0x24] sm:$0xf] %vm962, %v939
      %973 = vst.msk [vmem:[%s224 + $0x28] sm:$0xf] %vm962, %v940
      %974 = vst.msk [vmem:[%s224 + $0x2c] sm:$0xf] %vm962, %v941
      %975 = vst.msk [vmem:[%s224 + $0x30] sm:$0xf] %vm962, %v942
      %976 = vst.msk [vmem:[%s224 + $0x34] sm:$0xf] %vm962, %v943
      %977 = vst.msk [vmem:[%s224 + $0x38] sm:$0xf] %vm962, %v944
      %978 = vst.msk [vmem:[%s224 + $0x3c] sm:$0xf] %vm962, %v945
      %979 = vst.msk [vmem:[%s224 + $0x40] sm:$0xf] %vm962, %v946
      %980 = vst.msk [vmem:[%s224 + $0x44] sm:$0xf] %vm962, %v947
      %981 = vst.msk [vmem:[%s224 + $0x48] sm:$0xf] %vm962, %v948
      %982 = vst.msk [vmem:[%s224 + $0x4c] sm:$0xf] %vm962, %v949
      %983 = vst.msk [vmem:[%s224 + $0x50] sm:$0xf] %vm962, %v950
      %984 = vst.msk [vmem:[%s224 + $0x54] sm:$0xf] %vm962, %v951
      %985 = vst.msk [vmem:[%s224 + $0x58] sm:$0xf] %vm962, %v952
      %986 = vst.msk [vmem:[%s224 + $0x5c] sm:$0xf] %vm962, %v953
      %987 = vst.msk [vmem:[%s224 + $0x60] sm:$0xf] %vm962, %v954
      %988 = vst.msk [vmem:[%s224 + $0x64] sm:$0xf] %vm962, %v955
      %989 = vst.msk [vmem:[%s224 + $0x68] sm:$0xf] %vm962, %v956
      %990 = vst.msk [vmem:[%s224 + $0x6c] sm:$0xf] %vm962, %v957
      %991 = vst.msk [vmem:[%s224 + $0x70] sm:$0xf] %vm962, %v958
      %992 = vst.msk [vmem:[%s224 + $0x74] sm:$0xf] %vm962, %v959
      %993 = vst.msk [vmem:[%s224 + $0x78] sm:$0xf] %vm962, %v960
      %994 = vst.msk [vmem:[%s224 + $0x7c] sm:$0xf] %vm962, %v961
      %s995 = smul.u32 32, %s15
      %p996 = scmp.lt.s32.totalorder %s995, 63
      %s997 = scalar_select %p996, %s995, 63
      %s998 = smul.addr %s997, 4
      %s999 = scalar_lea.vmem %s4, %s998
      // Predicated region
      $region37: #{net2_forward.18} parent=35 // pred_check
        %p1000 = pneg %p127
      $region38: #{net2_forward.18} parent=35 // pred_check_branch
        %1002 = sbr.rel (%p1000) target = $region40
      $region39: #{net2_forward.18} parent=35 // pred_region
        %s1003 = smul.u32 32, %s15
      $region40: #{net2_forward.18} parent=35 // pred_fallthru
        _
    $region36: #{net2_forward.18} parent=5 // pred_fallthru
      _
    %p1004 = scmp.le.s32.totalorder 2, %s10
    // Predicated region
    $region41: #{net2_forward.18} parent=5 // pred_check
      %p1005 = pneg %p1004
    $region42: #{net2_forward.18} parent=5 // pred_check_branch
      %1007 = sbr.rel (%p1005) target = $region44
    $region43: #{net2_forward.18} parent=5 // pred_region
      %s1008 = ssub.s32 %s10, 2
      // Predicated region
      $region45: #{net2_forward.18} parent=43 // pred_check
        %p1009 = pneg %p133
      $region46: #{net2_forward.18} parent=43 // pred_check_branch
        %1011 = sbr.rel (%p1009) target = $region48
      $region47: #{net2_forward.18} parent=43 // pred_region
        %s1012 = smul.u32 32, %s16
        %p1013 = scmp.lt.s32.totalorder %s1012, 63
        %s1014 = scalar_select %p1013, %s1012, 63
        %s1015 = smul.addr %s1014, 4
        %s1016 = scalar_lea.vmem %s4, %s1015
      $region48: #{net2_forward.18} parent=43 // pred_fallthru
        _
    $region44: #{net2_forward.18} parent=5 // pred_fallthru
      _
  $region6: #{net2_forward.18} parent=0 // loop_footer
    %s14 = sadd.s32 1, %s10
  $region7: #{net2_forward.18} parent=0 // loop_footer_branch
    %9 = sbr.rel target = $region3
  $region8: #{net2_forward.18} parent=0 // loop_exit
    _

// kernel: net2_forward.19
$region0: #{net2_forward.19}
  #allocation0 [shape = 'u32[]', space=smem, size = 0x4, offset = 0x4, fixed_abs, tag = 'smem constant byte address 0x4 - core index']
  #allocation1 [shape = 'u32[72,128]{1,0:T(1,128)}', space=vmem, size = 0x9000, scoped, tag = 'internal scratch']
  %s0 = inlined_call_operand.vmem [shape: bf16[512,576], index: 0, kind: input, shape index: {}]
  %s1 = inlined_call_operand.vmem [shape: bf16[576,16], index: 1, kind: input, shape index: {}]
  %s2 = inlined_call_operand.vmem [shape: f32[1,16], index: 2, kind: input, shape index: {}]
  %s3 = inlined_call_operand.vmem [shape: bf16[512,16], index: 3, kind: input, shape index: {}]
  %s4 = inlined_call_operand.vmem [shape: bf16[512,16], index: 4, kind: output, shape index: {}]
  %s5 = sld [smem:[#allocation0]]
  $region49: #{net2_forward.19} parent=0
    _
  %s7 = ssub.s32 1, %s5
  %s8 = scalar_select 0, %s7, %s5
  loop: start=0, step=1, limit=4
  $region2: #{net2_forward.19} parent=0 // loop_pre_header
    _
  $region3: #{net2_forward.19} parent=0 // loop_header
    %s10 = sphi 0, %s14
    %p11 = scmp.ge.s32.totalorder %s10, 4
    %s20 = sphi 0, %s22
    %s23 = sphi 0, %s20
    %s24 = sphi 0, %s23
    %s40 = sphi 0, %s24
    %s44 = sphi 0, %s44
    %s46 = sphi 0, %s44
    %s47 = sphi 0, %s46
    %s61 = sphi 0, %s47
    %s65 = sphi 0, %s65
    %s67 = sphi 0, %s65
    %s68 = sphi 0, %s67
    %s82 = sphi 0, %s68
    %s88 = sphi 0, %s90
    %s91 = sphi 0, %s88
    %s92 = sphi 0, %s91
    %s108 = sphi 0, %s92
    %s114 = sphi 0, %s116
    %s117 = sphi 0, %s114
    %s118 = sphi 0, %s117
    %s134 = sphi 0, %s118
  $region4: #{net2_forward.19} parent=0 // loop_header_branch
    %13 = sbr.rel (%p11) target = $region8
  $region5: #{net2_forward.19} parent=0 // loop_body
    %s15 = ssub.s32 %s10, 1
    %s16 = ssub.s32 %s10, 2
    %s17 = sadd.s32 %s10, 1
    %s18 = ssub.s32 %s10, %s17
    %p19 = scmp.eq.s32.totalorder %s18, 0
    %s21 = sadd.s32 %s20, 1
    %s22 = scalar_select %p19, %s20, %s21
    %p25 = pneg %p19
    %p26 = scmp.eq.s32.totalorder %s10, 1
    %p27 = por %p25, %p26
    %p28 = scmp.ne.s32.totalorder %s20, %s23
    %p29 = scmp.eq.s32.totalorder %s10, 0
    %p30 = por %p28, %p29
    %p31 = scmp.ne.s32.totalorder %s20, %s23
    %p32 = scmp.eq.s32.totalorder %s15, 1
    %p33 = por %p31, %p32
    %p34 = scmp.ne.s32.totalorder %s23, %s24
    %p35 = scmp.eq.s32.totalorder %s15, 0
    %p36 = por %p34, %p35
    %p37 = scmp.ne.s32.totalorder %s23, %s24
    %p38 = scmp.eq.s32.totalorder %s16, 1
    %p39 = por %p37, %p38
    %p41 = scmp.ne.s32.totalorder %s24, %s40
    %p42 = scmp.eq.s32.totalorder %s16, 0
    %p43 = por %p41, %p42
    %s45 = sadd.s32 %s44, 1
    %p48 = scmp.eq.s32.totalorder %s10, 1
    %p49 = scmp.ne.s32.totalorder %s44, %s46
    %p50 = scmp.eq.s32.totalorder %s10, 0
    %p51 = por %p49, %p50
    %p52 = scmp.ne.s32.totalorder %s44, %s46
    %p53 = scmp.eq.s32.totalorder %s15, 1
    %p54 = por %p52, %p53
    %p55 = scmp.ne.s32.totalorder %s46, %s47
    %p56 = scmp.eq.s32.totalorder %s15, 0
    %p57 = por %p55, %p56
    %p58 = scmp.ne.s32.totalorder %s46, %s47
    %p59 = scmp.eq.s32.totalorder %s16, 1
    %p60 = por %p58, %p59
    %p62 = scmp.ne.s32.totalorder %s47, %s61
    %p63 = scmp.eq.s32.totalorder %s16, 0
    %p64 = por %p62, %p63
    %s66 = sadd.s32 %s65, 1
    %p69 = scmp.eq.s32.totalorder %s10, 1
    %p70 = scmp.ne.s32.totalorder %s65, %s67
    %p71 = scmp.eq.s32.totalorder %s10, 0
    %p72 = por %p70, %p71
    %p73 = scmp.ne.s32.totalorder %s65, %s67
    %p74 = scmp.eq.s32.totalorder %s15, 1
    %p75 = por %p73, %p74
    %p76 = scmp.ne.s32.totalorder %s67, %s68
    %p77 = scmp.eq.s32.totalorder %s15, 0
    %p78 = por %p76, %p77
    %p79 = scmp.ne.s32.totalorder %s67, %s68
    %p80 = scmp.eq.s32.totalorder %s16, 1
    %p81 = por %p79, %p80
    %p83 = scmp.ne.s32.totalorder %s68, %s82
    %p84 = scmp.eq.s32.totalorder %s16, 0
    %p85 = por %p83, %p84
    %s86 = ssub.s32 %s10, %s17
    %p87 = scmp.eq.s32.totalorder %s86, 0
    %s89 = sadd.s32 %s88, 1
    %s90 = scalar_select %p87, %s88, %s89
    %p93 = pneg %p87
    %p94 = scmp.eq.s32.totalorder %s10, 1
    %p95 = por %p93, %p94
    %p96 = scmp.ne.s32.totalorder %s88, %s91
    %p97 = scmp.eq.s32.totalorder %s10, 0
    %p98 = por %p96, %p97
    %p99 = scmp.ne.s32.totalorder %s88, %s91
    %p100 = scmp.eq.s32.totalorder %s15, 1
    %p101 = por %p99, %p100
    %p102 = scmp.ne.s32.totalorder %s91, %s92
    %p103 = scmp.eq.s32.totalorder %s15, 0
    %p104 = por %p102, %p103
    %p105 = scmp.ne.s32.totalorder %s91, %s92
    %p106 = scmp.eq.s32.totalorder %s16, 1
    %p107 = por %p105, %p106
    %p109 = scmp.ne.s32.totalorder %s92, %s108
    %p110 = scmp.eq.s32.totalorder %s16, 0
    %p111 = por %p109, %p110
    %s112 = ssub.s32 %s10, %s17
    %p113 = scmp.eq.s32.totalorder %s112, 0
    %s115 = sadd.s32 %s114, 1
    %s116 = scalar_select %p113, %s114, %s115
    %p119 = pneg %p113
    %p120 = scmp.eq.s32.totalorder %s10, 1
    %p121 = por %p119, %p120
    %p122 = scmp.ne.s32.totalorder %s114, %s117
    %p123 = scmp.eq.s32.totalorder %s10, 0
    %p124 = por %p122, %p123
    %p125 = scmp.ne.s32.totalorder %s114, %s117
    %p126 = scmp.eq.s32.totalorder %s15, 1
    %p127 = por %p125, %p126
    %p128 = scmp.ne.s32.totalorder %s117, %s118
    %p129 = scmp.eq.s32.totalorder %s15, 0
    %p130 = por %p128, %p129
    %p131 = scmp.ne.s32.totalorder %s117, %s118
    %p132 = scmp.eq.s32.totalorder %s16, 1
    %p133 = por %p131, %p132
    %p135 = scmp.ne.s32.totalorder %s118, %s134
    %p136 = scmp.eq.s32.totalorder %s16, 0
    %p137 = por %p135, %p136
    %p138 = scmp.le.s32.totalorder 1, %s10
    %p139 = scmp.lt.s32.totalorder %s10, 3
    %p140 = pnand %p138, %p139
    %p141 = pneg %p140
    // Predicated region
    $region9: #{net2_forward.19} parent=5 // pred_check
      _
    $region10: #{net2_forward.19} parent=5 // pred_check_branch
      %143 = sbr.rel (%p140) target = $region12
    $region11: #{net2_forward.19} parent=5 // pred_region
      %s144 = ssub.s32 %s10, 1
      // Predicated region
      $region13: #{net2_forward.19} parent=11 // pred_check
        %p145 = pneg %p57
      $region14: #{net2_forward.19} parent=11 // pred_check_branch
        %147 = sbr.rel (%p145) target = $region16
      $region15: #{net2_forward.19} parent=11 // pred_region
        _
      $region16: #{net2_forward.19} parent=11 // pred_fallthru
        _
      // Predicated region
      $region17: #{net2_forward.19} parent=11 // pred_check
        %p148 = pneg %p78
      $region18: #{net2_forward.19} parent=11 // pred_check_branch
        %150 = sbr.rel (%p148) target = $region20
      $region19: #{net2_forward.19} parent=11 // pred_region
        _
      $region20: #{net2_forward.19} parent=11 // pred_fallthru
        _
    $region12: #{net2_forward.19} parent=5 // pred_fallthru
      _
    %p151 = scmp.lt.s32.totalorder %s10, 2
    // Predicated region
    $region21: #{net2_forward.19} parent=5 // pred_check
      %p152 = pneg %p151
    $region22: #{net2_forward.19} parent=5 // pred_check_branch
      %154 = sbr.rel (%p152) target = $region24
    $region23: #{net2_forward.19} parent=5 // pred_region
      // Predicated region
      $region25: #{net2_forward.19} parent=23 // pred_check
        %p155 = pneg %p30
      $region26: #{net2_forward.19} parent=23 // pred_check_branch
        %157 = sbr.rel (%p155) target = $region28
      $region27: #{net2_forward.19} parent=23 // pred_region
        %s158 = smul.u32 32, %s10
        %p159 = scmp.lt.s32.totalorder %s158, 63
        %s160 = scalar_select %p159, %s158, 63
        %s161 = smul.addr %s160, 5
        %s162 = smul.addr %s161, 4
        %s163 = scalar_lea.vmem %s0, %s162
        %s164 = smul.u32 32, %s10
      $region28: #{net2_forward.19} parent=23 // pred_fallthru
        _
      // Predicated region
      $region29: #{net2_forward.19} parent=23 // pred_check
        %p165 = pneg %p98
      $region30: #{net2_forward.19} parent=23 // pred_check_branch
        %167 = sbr.rel (%p165) target = $region32
      $region31: #{net2_forward.19} parent=23 // pred_region
        %s168 = smul.u32 32, %s10
        %p169 = scmp.lt.s32.totalorder %s168, 63
        %s170 = scalar_select %p169, %s168, 63
        %s171 = smul.addr %s170, 4
        %s172 = scalar_lea.vmem %s3, %s171
        %s173 = smul.u32 32, %s10
      $region32: #{net2_forward.19} parent=23 // pred_fallthru
        _
    $region24: #{net2_forward.19} parent=5 // pred_fallthru
      _
    %p174 = scmp.le.s32.totalorder 1, %s10
    %p175 = scmp.lt.s32.totalorder %s10, 3
    %p176 = pnand %p174, %p175
    %p177 = pneg %p176
    // Predicated region
    $region33: #{net2_forward.19} parent=5 // pred_check
      _
    $region34: #{net2_forward.19} parent=5 // pred_check_branch
      %179 = sbr.rel (%p176) target = $region36
    $region35: #{net2_forward.19} parent=5 // pred_region
      %s180 = ssub.s32 %s10, 1
      %s181 = smul.u32 32, %s15
      %p182 = scmp.lt.s32.totalorder %s181, 63
      %s183 = scalar_select %p182, %s181, 63
      %s184 = smul.addr %s183, 5
      %s185 = smul.addr %s184, 4
      %s186 = scalar_lea.vmem %s0, %s185
      %p187 = pneg %p36
      %p188 = pneg %p33
      %p189 = pneg %p57
      %p190 = pneg %p54
      %p191 = pneg %p78
      %p192 = pneg %p75
      %s193 = smul.u32 32, %s15
      %p194 = scmp.lt.s32.totalorder %s193, 63
      %s195 = scalar_select %p194, %s193, 63
      %s196 = smul.addr %s195, 4
      %s197 = scalar_lea.vmem %s3, %s196
      %p198 = pneg %p104
      %p199 = pneg %p101
      %p200 = pneg %p130
      %p201 = pneg %p127
      %s202 = smul.u32 32, %s15
      %p203 = scmp.lt.s32.totalorder %s202, 63
      %s204 = scalar_select %p203, %s202, 63
      %s205 = smul.addr %s204, 4
      %s206 = scalar_lea.vmem %s4, %s205
      %s207 = smul.u32 32, %s15
      %p208 = scmp.lt.s32.totalorder %s207, 63
      %s209 = scalar_select %p208, %s207, 63
      %s210 = smul.addr %s209, 5
      %s211 = smul.addr %s210, 4
      %s212 = scalar_lea.vmem %s0, %s211
      %s213 = smul.u32 32, %s15
      %s214 = smul.u32 32, %s15
      %p215 = scmp.lt.s32.totalorder %s214, 63
      %s216 = scalar_select %p215, %s214, 63
      %s217 = smul.addr %s216, 4
      %s218 = scalar_lea.vmem %s3, %s217
      %s219 = smul.u32 32, %s15
      %s220 = smul.u32 32, %s15
      %p221 = scmp.lt.s32.totalorder %s220, 63
      %s222 = scalar_select %p221, %s220, 63
      %s223 = smul.addr %s222, 4
      %s224 = scalar_lea.vmem %s4, %s223
      %s225 = smul.u32 32, %s15
      %v227 = vld [vmem:[%s212] sm:$0xff]
      %v228 = vld [vmem:[%s212 + $0x8] sm:$0xff]
      %v229 = vld [vmem:[%s212 + $0x10] sm:$0xf]
      %v230 = vld [vmem:[%s212 + $0x14] sm:$0xff]
      %v231 = vld [vmem:[%s212 + $0x1c] sm:$0xff]
      %v232 = vld [vmem:[%s212 + $0x24] sm:$0xf]
      %v233 = vld [vmem:[%s212 + $0x28] sm:$0xff]
      %v234 = vld [vmem:[%s212 + $0x30] sm:$0xff]
      %v235 = vld [vmem:[%s212 + $0x38] sm:$0xf]
      %v236 = vld [vmem:[%s212 + $0x3c] sm:$0xff]
      %v237 = vld [vmem:[%s212 + $0x44] sm:$0xff]
      %v238 = vld [vmem:[%s212 + $0x4c] sm:$0xf]
      %v239 = vld [vmem:[%s212 + $0x50] sm:$0xff]
      %v240 = vld [vmem:[%s212 + $0x58] sm:$0xff]
      %v241 = vld [vmem:[%s212 + $0x60] sm:$0xf]
      %v242 = vld [vmem:[%s212 + $0x64] sm:$0xff]
      %v243 = vld [vmem:[%s212 + $0x6c] sm:$0xff]
      %v244 = vld [vmem:[%s212 + $0x74] sm:$0xf]
      %v245 = vld [vmem:[%s212 + $0x78] sm:$0xff]
      %v246 = vld [vmem:[%s212 + $0x80] sm:$0xff]
      %v247 = vld [vmem:[%s212 + $0x88] sm:$0xf]
      %v248 = vld [vmem:[%s212 + $0x8c] sm:$0xff]
      %v249 = vld [vmem:[%s212 + $0x94] sm:$0xff]
      %v250 = vld [vmem:[%s212 + $0x9c] sm:$0xf]
      %v251 = vld [vmem:[%s212 + $0xa0] sm:$0xff]
      %v252 = vld [vmem:[%s212 + $0xa8] sm:$0xff]
      %v253 = vld [vmem:[%s212 + $0xb0] sm:$0xf]
      %v254 = vld [vmem:[%s212 + $0xb4] sm:$0xff]
      %v255 = vld [vmem:[%s212 + $0xbc] sm:$0xff]
      %v256 = vld [vmem:[%s212 + $0xc4] sm:$0xf]
      %v257 = vld [vmem:[%s212 + $0xc8] sm:$0xff]
      %v258 = vld [vmem:[%s212 + $0xd0] sm:$0xff]
      %v259 = vld [vmem:[%s212 + $0xd8] sm:$0xf]
      %v260 = vld [vmem:[%s212 + $0xdc] sm:$0xff]
      %v261 = vld [vmem:[%s212 + $0xe4] sm:$0xff]
      %v262 = vld [vmem:[%s212 + $0xec] sm:$0xf]
      %v263 = vld [vmem:[%s212 + $0xf0] sm:$0xff]
      %v264 = vld [vmem:[%s212 + $0xf8] sm:$0xff]
      %v265 = vld [vmem:[%s212 + $0x100] sm:$0xf]
      %v266 = vld [vmem:[%s212 + $0x104] sm:$0xff]
      %v267 = vld [vmem:[%s212 + $0x10c] sm:$0xff]
      %v268 = vld [vmem:[%s212 + $0x114] sm:$0xf]
      %v269 = vld [vmem:[%s212 + $0x118] sm:$0xff]
      %v270 = vld [vmem:[%s212 + $0x120] sm:$0xff]
      %v271 = vld [vmem:[%s212 + $0x128] sm:$0xf]
      %v272 = vld [vmem:[%s212 + $0x12c] sm:$0xff]
      %v273 = vld [vmem:[%s212 + $0x134] sm:$0xff]
      %v274 = vld [vmem:[%s212 + $0x13c] sm:$0xf]
      %v275 = vld [vmem:[%s212 + $0x140] sm:$0xff]
      %v276 = vld [vmem:[%s212 + $0x148] sm:$0xff]
      %v277 = vld [vmem:[%s212 + $0x150] sm:$0xf]
      %v278 = vld [vmem:[%s212 + $0x154] sm:$0xff]
      %v279 = vld [vmem:[%s212 + $0x15c] sm:$0xff]
      %v280 = vld [vmem:[%s212 + $0x164] sm:$0xf]
      %v281 = vld [vmem:[%s212 + $0x168] sm:$0xff]
      %v282 = vld [vmem:[%s212 + $0x170] sm:$0xff]
      %v283 = vld [vmem:[%s212 + $0x178] sm:$0xf]
      %v284 = vld [vmem:[%s212 + $0x17c] sm:$0xff]
      %v285 = vld [vmem:[%s212 + $0x184] sm:$0xff]
      %v286 = vld [vmem:[%s212 + $0x18c] sm:$0xf]
      %v287 = vld [vmem:[%s212 + $0x190] sm:$0xff]
      %v288 = vld [vmem:[%s212 + $0x198] sm:$0xff]
      %v289 = vld [vmem:[%s212 + $0x1a0] sm:$0xf]
      %v290 = vld [vmem:[%s212 + $0x1a4] sm:$0xff]
      %v291 = vld [vmem:[%s212 + $0x1ac] sm:$0xff]
      %v292 = vld [vmem:[%s212 + $0x1b4] sm:$0xf]
      %v293 = vld [vmem:[%s212 + $0x1b8] sm:$0xff]
      %v294 = vld [vmem:[%s212 + $0x1c0] sm:$0xff]
      %v295 = vld [vmem:[%s212 + $0x1c8] sm:$0xf]
      %v296 = vld [vmem:[%s212 + $0x1cc] sm:$0xff]
      %v297 = vld [vmem:[%s212 + $0x1d4] sm:$0xff]
      %v298 = vld [vmem:[%s212 + $0x1dc] sm:$0xf]
      %v299 = vld [vmem:[%s212 + $0x1e0] sm:$0xff]
      %v300 = vld [vmem:[%s212 + $0x1e8] sm:$0xff]
      %v301 = vld [vmem:[%s212 + $0x1f0] sm:$0xf]
      %v302 = vld [vmem:[%s212 + $0x1f4] sm:$0xff]
      %v303 = vld [vmem:[%s212 + $0x1fc] sm:$0xff]
      %v304 = vld [vmem:[%s212 + $0x204] sm:$0xf]
      %v305 = vld [vmem:[%s212 + $0x208] sm:$0xff]
      %v306 = vld [vmem:[%s212 + $0x210] sm:$0xff]
      %v307 = vld [vmem:[%s212 + $0x218] sm:$0xf]
      %v308 = vld [vmem:[%s212 + $0x21c] sm:$0xff]
      %v309 = vld [vmem:[%s212 + $0x224] sm:$0xff]
      %v310 = vld [vmem:[%s212 + $0x22c] sm:$0xf]
      %v311 = vld [vmem:[%s212 + $0x230] sm:$0xff]
      %v312 = vld [vmem:[%s212 + $0x238] sm:$0xff]
      %v313 = vld [vmem:[%s212 + $0x240] sm:$0xf]
      %v314 = vld [vmem:[%s212 + $0x244] sm:$0xff]
      %v315 = vld [vmem:[%s212 + $0x24c] sm:$0xff]
      %v316 = vld [vmem:[%s212 + $0x254] sm:$0xf]
      %v317 = vld [vmem:[%s212 + $0x258] sm:$0xff]
      %v318 = vld [vmem:[%s212 + $0x260] sm:$0xff]
      %v319 = vld [vmem:[%s212 + $0x268] sm:$0xf]
      %v320 = vld [vmem:[%s212 + $0x26c] sm:$0xff]
      %v321 = vld [vmem:[%s212 + $0x274] sm:$0xff]
      %v322 = vld [vmem:[%s212 + $0x27c] sm:$0xf]
      %v323 = vld [vmem:[%s1] sm:$0xf]
      %v324 = vld [vmem:[%s1 + $0x4] sm:$0xf]
      %v325 = vld [vmem:[%s1 + $0x8] sm:$0xf]
      %v326 = vld [vmem:[%s1 + $0xc] sm:$0xf]
      %v327 = vld [vmem:[%s1 + $0x10] sm:$0xf]
      %v328 = vld [vmem:[%s1 + $0x14] sm:$0xf]
      %v329 = vld [vmem:[%s1 + $0x18] sm:$0xf]
      %v330 = vld [vmem:[%s1 + $0x1c] sm:$0xf]
      %v331 = vld [vmem:[%s1 + $0x20] sm:$0xf]
      %v332 = vld [vmem:[%s1 + $0x24] sm:$0xf]
      %v333 = vld [vmem:[%s1 + $0x28] sm:$0xf]
      %v334 = vld [vmem:[%s1 + $0x2c] sm:$0xf]
      %v335 = vld [vmem:[%s1 + $0x30] sm:$0xf]
      %v336 = vld [vmem:[%s1 + $0x34] sm:$0xf]
      %v337 = vld [vmem:[%s1 + $0x38] sm:$0xf]
      %v338 = vld [vmem:[%s1 + $0x3c] sm:$0xf]
      %v339 = vld [vmem:[%s1 + $0x40] sm:$0xf]
      %v340 = vld [vmem:[%s1 + $0x44] sm:$0xf]
      %v341 = vld [vmem:[%s1 + $0x48] sm:$0xf]
      %v342 = vld [vmem:[%s1 + $0x4c] sm:$0xf]
      %v343 = vld [vmem:[%s1 + $0x50] sm:$0xf]
      %v344 = vld [vmem:[%s1 + $0x54] sm:$0xf]
      %v345 = vld [vmem:[%s1 + $0x58] sm:$0xf]
      %v346 = vld [vmem:[%s1 + $0x5c] sm:$0xf]
      %v347 = vld [vmem:[%s1 + $0x60] sm:$0xf]
      %v348 = vld [vmem:[%s1 + $0x64] sm:$0xf]
      %v349 = vld [vmem:[%s1 + $0x68] sm:$0xf]
      %v350 = vld [vmem:[%s1 + $0x6c] sm:$0xf]
      %v351 = vld [vmem:[%s1 + $0x70] sm:$0xf]
      %v352 = vld [vmem:[%s1 + $0x74] sm:$0xf]
      %v353 = vld [vmem:[%s1 + $0x78] sm:$0xf]
      %v354 = vld [vmem:[%s1 + $0x7c] sm:$0xf]
      %v355 = vld [vmem:[%s1 + $0x80] sm:$0xf]
      %v356 = vld [vmem:[%s1 + $0x84] sm:$0xf]
      %v357 = vld [vmem:[%s1 + $0x88] sm:$0xf]
      %v358 = vld [vmem:[%s1 + $0x8c] sm:$0xf]
      %v359 = vld [vmem:[%s1 + $0x90] sm:$0xf]
      %v360 = vld [vmem:[%s1 + $0x94] sm:$0xf]
      %v361 = vld [vmem:[%s1 + $0x98] sm:$0xf]
      %v362 = vld [vmem:[%s1 + $0x9c] sm:$0xf]
      %v363 = vld [vmem:[%s1 + $0xa0] sm:$0xf]
      %v364 = vld [vmem:[%s1 + $0xa4] sm:$0xf]
      %v365 = vld [vmem:[%s1 + $0xa8] sm:$0xf]
      %v366 = vld [vmem:[%s1 + $0xac] sm:$0xf]
      %v367 = vld [vmem:[%s1 + $0xb0] sm:$0xf]
      %v368 = vld [vmem:[%s1 + $0xb4] sm:$0xf]
      %v369 = vld [vmem:[%s1 + $0xb8] sm:$0xf]
      %v370 = vld [vmem:[%s1 + $0xbc] sm:$0xf]
      %v371 = vld [vmem:[%s1 + $0xc0] sm:$0xf]
      %v372 = vld [vmem:[%s1 + $0xc4] sm:$0xf]
      %v373 = vld [vmem:[%s1 + $0xc8] sm:$0xf]
      %v374 = vld [vmem:[%s1 + $0xcc] sm:$0xf]
      %v375 = vld [vmem:[%s1 + $0xd0] sm:$0xf]
      %v376 = vld [vmem:[%s1 + $0xd4] sm:$0xf]
      %v377 = vld [vmem:[%s1 + $0xd8] sm:$0xf]
      %v378 = vld [vmem:[%s1 + $0xdc] sm:$0xf]
      %v379 = vld [vmem:[%s1 + $0xe0] sm:$0xf]
      %v380 = vld [vmem:[%s1 + $0xe4] sm:$0xf]
      %v381 = vld [vmem:[%s1 + $0xe8] sm:$0xf]
      %v382 = vld [vmem:[%s1 + $0xec] sm:$0xf]
      %v383 = vld [vmem:[%s1 + $0xf0] sm:$0xf]
      %v384 = vld [vmem:[%s1 + $0xf4] sm:$0xf]
      %v385 = vld [vmem:[%s1 + $0xf8] sm:$0xf]
      %v386 = vld [vmem:[%s1 + $0xfc] sm:$0xf]
      %v387 = vld [vmem:[%s1 + $0x100] sm:$0xf]
      %v388 = vld [vmem:[%s1 + $0x104] sm:$0xf]
      %v389 = vld [vmem:[%s1 + $0x108] sm:$0xf]
      %v390 = vld [vmem:[%s1 + $0x10c] sm:$0xf]
      %v391 = vld [vmem:[%s1 + $0x110] sm:$0xf]
      %v392 = vld [vmem:[%s1 + $0x114] sm:$0xf]
      %v393 = vld [vmem:[%s1 + $0x118] sm:$0xf]
      %v394 = vld [vmem:[%s1 + $0x11c] sm:$0xf]
      %v395 = vld [vmem:[%s2] sm:$0x1]
      %v397 = vperm.slane %v395, 0
      %v495 = vunpack.c.l.b16 %v227
      %v496 = vunpack.c.h.b16 %v227
      %v497 = vunpack.c.l.b16 %v228
      %v498 = vunpack.c.h.b16 %v228
      %v499 = vunpack.c.l.b16 %v229
      %v500 = vunpack.c.l.b16 %v230
      %v501 = vunpack.c.h.b16 %v230
      %v502 = vunpack.c.l.b16 %v231
      %v503 = vunpack.c.h.b16 %v231
      %v504 = vunpack.c.l.b16 %v232
      %v505 = vunpack.c.l.b16 %v233
      %v506 = vunpack.c.h.b16 %v233
      %v507 = vunpack.c.l.b16 %v234
      %v508 = vunpack.c.h.b16 %v234
      %v509 = vunpack.c.l.b16 %v235
      %v510 = vunpack.c.l.b16 %v236
      %v511 = vunpack.c.h.b16 %v236
      %v512 = vunpack.c.l.b16 %v237
      %v513 = vunpack.c.h.b16 %v237
      %v514 = vunpack.c.l.b16 %v238
      %v515 = vunpack.c.l.b16 %v239
      %v516 = vunpack.c.h.b16 %v239
      %v517 = vunpack.c.l.b16 %v240
      %v518 = vunpack.c.h.b16 %v240
      %v519 = vunpack.c.l.b16 %v241
      %v520 = vunpack.c.l.b16 %v242
      %v521 = vunpack.c.h.b16 %v242
      %v522 = vunpack.c.l.b16 %v243
      %v523 = vunpack.c.h.b16 %v243
      %v524 = vunpack.c.l.b16 %v244
      %v525 = vunpack.c.l.b16 %v245
      %v526 = vunpack.c.h.b16 %v245
      %v527 = vunpack.c.l.b16 %v246
      %v528 = vunpack.c.h.b16 %v246
      %v529 = vunpack.c.l.b16 %v247
      %v530 = vunpack.c.l.b16 %v248
      %v531 = vunpack.c.h.b16 %v248
      %v532 = vunpack.c.l.b16 %v249
      %v533 = vunpack.c.h.b16 %v249
      %v534 = vunpack.c.l.b16 %v250
      %v535 = vunpack.c.l.b16 %v251
      %v536 = vunpack.c.h.b16 %v251
      %v537 = vunpack.c.l.b16 %v252
      %v538 = vunpack.c.h.b16 %v252
      %v539 = vunpack.c.l.b16 %v253
      %v540 = vunpack.c.l.b16 %v254
      %v541 = vunpack.c.h.b16 %v254
      %v542 = vunpack.c.l.b16 %v255
      %v543 = vunpack.c.h.b16 %v255
      %v544 = vunpack.c.l.b16 %v256
      %v545 = vunpack.c.l.b16 %v257
      %v546 = vunpack.c.h.b16 %v257
      %v547 = vunpack.c.l.b16 %v258
      %v548 = vunpack.c.h.b16 %v258
      %v549 = vunpack.c.l.b16 %v259
      %v550 = vunpack.c.l.b16 %v260
      %v551 = vunpack.c.h.b16 %v260
      %v552 = vunpack.c.l.b16 %v261
      %v553 = vunpack.c.h.b16 %v261
      %v554 = vunpack.c.l.b16 %v262
      %v555 = vunpack.c.l.b16 %v263
      %v556 = vunpack.c.h.b16 %v263
      %v557 = vunpack.c.l.b16 %v264
      %v558 = vunpack.c.h.b16 %v264
      %v559 = vunpack.c.l.b16 %v265
      %v560 = vunpack.c.l.b16 %v266
      %v561 = vunpack.c.h.b16 %v266
      %v562 = vunpack.c.l.b16 %v267
      %v563 = vunpack.c.h.b16 %v267
      %v564 = vunpack.c.l.b16 %v268
      %v565 = vunpack.c.l.b16 %v269
      %v566 = vunpack.c.h.b16 %v269
      %v567 = vunpack.c.l.b16 %v270
      %v568 = vunpack.c.h.b16 %v270
      %v569 = vunpack.c.l.b16 %v271
      %v570 = vunpack.c.l.b16 %v272
      %v571 = vunpack.c.h.b16 %v272
      %v572 = vunpack.c.l.b16 %v273
      %v573 = vunpack.c.h.b16 %v273
      %v574 = vunpack.c.l.b16 %v274
      %v575 = vunpack.c.l.b16 %v275
      %v576 = vunpack.c.h.b16 %v275
      %v577 = vunpack.c.l.b16 %v276
      %v578 = vunpack.c.h.b16 %v276
      %v579 = vunpack.c.l.b16 %v277
      %v580 = vunpack.c.l.b16 %v278
      %v581 = vunpack.c.h.b16 %v278
      %v582 = vunpack.c.l.b16 %v279
      %v583 = vunpack.c.h.b16 %v279
      %v584 = vunpack.c.l.b16 %v280
      %v585 = vunpack.c.l.b16 %v281
      %v586 = vunpack.c.h.b16 %v281
      %v587 = vunpack.c.l.b16 %v282
      %v588 = vunpack.c.h.b16 %v282
      %v589 = vunpack.c.l.b16 %v283
      %v590 = vunpack.c.l.b16 %v284
      %v591 = vunpack.c.h.b16 %v284
      %v592 = vunpack.c.l.b16 %v285
      %v593 = vunpack.c.h.b16 %v285
      %v594 = vunpack.c.l.b16 %v286
      %v595 = vunpack.c.l.b16 %v287
      %v596 = vunpack.c.h.b16 %v287
      %v597 = vunpack.c.l.b16 %v288
      %v598 = vunpack.c.h.b16 %v288
      %v599 = vunpack.c.l.b16 %v289
      %v600 = vunpack.c.l.b16 %v290
      %v601 = vunpack.c.h.b16 %v290
      %v602 = vunpack.c.l.b16 %v291
      %v603 = vunpack.c.h.b16 %v291
      %v604 = vunpack.c.l.b16 %v292
      %v605 = vunpack.c.l.b16 %v293
      %v606 = vunpack.c.h.b16 %v293
      %v607 = vunpack.c.l.b16 %v294
      %v608 = vunpack.c.h.b16 %v294
      %v609 = vunpack.c.l.b16 %v295
      %v610 = vunpack.c.l.b16 %v296
      %v611 = vunpack.c.h.b16 %v296
      %v612 = vunpack.c.l.b16 %v297
      %v613 = vunpack.c.h.b16 %v297
      %v614 = vunpack.c.l.b16 %v298
      %v615 = vunpack.c.l.b16 %v299
      %v616 = vunpack.c.h.b16 %v299
      %v617 = vunpack.c.l.b16 %v300
      %v618 = vunpack.c.h.b16 %v300
      %v619 = vunpack.c.l.b16 %v301
      %v620 = vunpack.c.l.b16 %v302
      %v621 = vunpack.c.h.b16 %v302
      %v622 = vunpack.c.l.b16 %v303
      %v623 = vunpack.c.h.b16 %v303
      %v624 = vunpack.c.l.b16 %v304
      %v625 = vunpack.c.l.b16 %v305
      %v626 = vunpack.c.h.b16 %v305
      %v627 = vunpack.c.l.b16 %v306
      %v628 = vunpack.c.h.b16 %v306
      %v629 = vunpack.c.l.b16 %v307
      %v630 = vunpack.c.l.b16 %v308
      %v631 = vunpack.c.h.b16 %v308
      %v632 = vunpack.c.l.b16 %v309
      %v633 = vunpack.c.h.b16 %v309
      %v634 = vunpack.c.l.b16 %v310
      %v635 = vunpack.c.l.b16 %v311
      %v636 = vunpack.c.h.b16 %v311
      %v637 = vunpack.c.l.b16 %v312
      %v638 = vunpack.c.h.b16 %v312
      %v639 = vunpack.c.l.b16 %v313
      %v640 = vunpack.c.l.b16 %v314
      %v641 = vunpack.c.h.b16 %v314
      %v642 = vunpack.c.l.b16 %v315
      %v643 = vunpack.c.h.b16 %v315
      %v644 = vunpack.c.l.b16 %v316
      %v645 = vunpack.c.l.b16 %v317
      %v646 = vunpack.c.h.b16 %v317
      %v647 = vunpack.c.l.b16 %v318
      %v648 = vunpack.c.h.b16 %v318
      %v649 = vunpack.c.l.b16 %v319
      %v650 = vunpack.c.l.b16 %v320
      %v651 = vunpack.c.h.b16 %v320
      %v652 = vunpack.c.l.b16 %v321
      %v653 = vunpack.c.h.b16 %v321
      %v654 = vunpack.c.l.b16 %v322
      %v655 = vpack.c.b16 %v500, %v495
      %v656 = vpack.c.b16 %v501, %v496
      %v657 = vpack.c.b16 %v502, %v497
      %v658 = vpack.c.b16 %v503, %v498
      %v659 = vpack.c.b16 %v504, %v499
      %v660 = vpack.c.b16 %v510, %v505
      %v661 = vpack.c.b16 %v511, %v506
      %v662 = vpack.c.b16 %v512, %v507
      %v663 = vpack.c.b16 %v513, %v508
      %v664 = vpack.c.b16 %v514, %v509
      %v665 = vpack.c.b16 %v520, %v515
      %v666 = vpack.c.b16 %v521, %v516
      %v667 = vpack.c.b16 %v522, %v517
      %v668 = vpack.c.b16 %v523, %v518
      %v669 = vpack.c.b16 %v524, %v519
      %v670 = vpack.c.b16 %v530, %v525
      %v671 = vpack.c.b16 %v531, %v526
      %v672 = vpack.c.b16 %v532, %v527
      %v673 = vpack.c.b16 %v533, %v528
      %v674 = vpack.c.b16 %v534, %v529
      %v675 = vpack.c.b16 %v540, %v535
      %v676 = vpack.c.b16 %v541, %v536
      %v677 = vpack.c.b16 %v542, %v537
      %v678 = vpack.c.b16 %v543, %v538
      %v679 = vpack.c.b16 %v544, %v539
      %v680 = vpack.c.b16 %v550, %v545
      %v681 = vpack.c.b16 %v551, %v546
      %v682 = vpack.c.b16 %v552, %v547
      %v683 = vpack.c.b16 %v553, %v548
      %v684 = vpack.c.b16 %v554, %v549
      %v685 = vpack.c.b16 %v560, %v555
      %v686 = vpack.c.b16 %v561, %v556
      %v687 = vpack.c.b16 %v562, %v557
      %v688 = vpack.c.b16 %v563, %v558
      %v689 = vpack.c.b16 %v564, %v559
      %v690 = vpack.c.b16 %v570, %v565
      %v691 = vpack.c.b16 %v571, %v566
      %v692 = vpack.c.b16 %v572, %v567
      %v693 = vpack.c.b16 %v573, %v568
      %v694 = vpack.c.b16 %v574, %v569
      %v695 = vpack.c.b16 %v580, %v575
      %v696 = vpack.c.b16 %v581, %v576
      %v697 = vpack.c.b16 %v582, %v577
      %v698 = vpack.c.b16 %v583, %v578
      %v699 = vpack.c.b16 %v584, %v579
      %v700 = vpack.c.b16 %v590, %v585
      %v701 = vpack.c.b16 %v591, %v586
      %v702 = vpack.c.b16 %v592, %v587
      %v703 = vpack.c.b16 %v593, %v588
      %v704 = vpack.c.b16 %v594, %v589
      %v705 = vpack.c.b16 %v600, %v595
      %v706 = vpack.c.b16 %v601, %v596
      %v707 = vpack.c.b16 %v602, %v597
      %v708 = vpack.c.b16 %v603, %v598
      %v709 = vpack.c.b16 %v604, %v599
      %v710 = vpack.c.b16 %v610, %v605
      %v711 = vpack.c.b16 %v611, %v606
      %v712 = vpack.c.b16 %v612, %v607
      %v713 = vpack.c.b16 %v613, %v608
      %v714 = vpack.c.b16 %v614, %v609
      %v715 = vpack.c.b16 %v620, %v615
      %v716 = vpack.c.b16 %v621, %v616
      %v717 = vpack.c.b16 %v622, %v617
      %v718 = vpack.c.b16 %v623, %v618
      %v719 = vpack.c.b16 %v624, %v619
      %v720 = vpack.c.b16 %v630, %v625
      %v721 = vpack.c.b16 %v631, %v626
      %v722 = vpack.c.b16 %v632, %v627
      %v723 = vpack.c.b16 %v633, %v628
      %v724 = vpack.c.b16 %v634, %v629
      %v725 = vpack.c.b16 %v640, %v635
      %v726 = vpack.c.b16 %v641, %v636
      %v727 = vpack.c.b16 %v642, %v637
      %v728 = vpack.c.b16 %v643, %v638
      %v729 = vpack.c.b16 %v644, %v639
      %v730 = vpack.c.b16 %v650, %v645
      %v731 = vpack.c.b16 %v651, %v646
      %v732 = vpack.c.b16 %v652, %v647
      %v733 = vpack.c.b16 %v653, %v648
      %v734 = vpack.c.b16 %v654, %v649
      %v871 = vunpack.c.l.b16 %v323
      %v872 = vunpack.c.l.b16 %v324
      %v873 = vunpack.c.l.b16 %v325
      %v874 = vunpack.c.l.b16 %v326
      %v875 = vunpack.c.l.b16 %v327
      %v876 = vunpack.c.l.b16 %v328
      %v877 = vunpack.c.l.b16 %v329
      %v878 = vunpack.c.l.b16 %v330
      %v879 = vunpack.c.l.b16 %v331
      %v880 = vunpack.c.l.b16 %v332
      %v881 = vunpack.c.l.b16 %v333
      %v882 = vunpack.c.l.b16 %v334
      %v883 = vunpack.c.l.b16 %v335
      %v884 = vunpack.c.l.b16 %v336
      %v885 = vunpack.c.l.b16 %v337
      %v886 = vunpack.c.l.b16 %v338
      %v887 = vunpack.c.l.b16 %v339
      %v888 = vunpack.c.l.b16 %v340
      %v889 = vunpack.c.l.b16 %v341
      %v890 = vunpack.c.l.b16 %v342
      %v891 = vunpack.c.l.b16 %v343
      %v892 = vunpack.c.l.b16 %v344
      %v893 = vunpack.c.l.b16 %v345
      %v894 = vunpack.c.l.b16 %v346
      %v895 = vunpack.c.l.b16 %v347
      %v896 = vunpack.c.l.b16 %v348
      %v897 = vunpack.c.l.b16 %v349
      %v898 = vunpack.c.l.b16 %v350
      %v899 = vunpack.c.l.b16 %v351
      %v900 = vunpack.c.l.b16 %v352
      %v901 = vunpack.c.l.b16 %v353
      %v902 = vunpack.c.l.b16 %v354
      %v903 = vunpack.c.l.b16 %v355
      %v904 = vunpack.c.l.b16 %v356
      %v905 = vunpack.c.l.b16 %v357
      %v906 = vunpack.c.l.b16 %v358
      %v907 = vunpack.c.l.b16 %v359
      %v908 = vunpack.c.l.b16 %v360
      %v909 = vunpack.c.l.b16 %v361
      %v910 = vunpack.c.l.b16 %v362
      %v911 = vunpack.c.l.b16 %v363
      %v912 = vunpack.c.l.b16 %v364
      %v913 = vunpack.c.l.b16 %v365
      %v914 = vunpack.c.l.b16 %v366
      %v915 = vunpack.c.l.b16 %v367
      %v916 = vunpack.c.l.b16 %v368
      %v917 = vunpack.c.l.b16 %v369
      %v918 = vunpack.c.l.b16 %v370
      %v919 = vunpack.c.l.b16 %v371
      %v920 = vunpack.c.l.b16 %v372
      %v921 = vunpack.c.l.b16 %v373
      %v922 = vunpack.c.l.b16 %v374
      %v923 = vunpack.c.l.b16 %v375
      %v924 = vunpack.c.l.b16 %v376
      %v925 = vunpack.c.l.b16 %v377
      %v926 = vunpack.c.l.b16 %v378
      %v927 = vunpack.c.l.b16 %v379
      %v928 = vunpack.c.l.b16 %v380
      %v929 = vunpack.c.l.b16 %v381
      %v930 = vunpack.c.l.b16 %v382
      %v931 = vunpack.c.l.b16 %v383
      %v932 = vunpack.c.l.b16 %v384
      %v933 = vunpack.c.l.b16 %v385
      %v934 = vunpack.c.l.b16 %v386
      %v935 = vunpack.c.l.b16 %v387
      %v936 = vunpack.c.l.b16 %v388
      %v937 = vunpack.c.l.b16 %v389
      %v938 = vunpack.c.l.b16 %v390
      %v939 = vunpack.c.l.b16 %v391
      %v940 = vunpack.c.l.b16 %v392
      %v941 = vunpack.c.l.b16 %v393
      %v942 = vunpack.c.l.b16 %v394
      %v943 = vpack.c.b16 %v872, %v871
      %v944 = vpack.c.b16 %v874, %v873
      %v945 = vpack.c.b16 %v876, %v875
      %v946 = vpack.c.b16 %v878, %v877
      %v947 = vpack.c.b16 %v880, %v879
      %v948 = vpack.c.b16 %v882, %v881
      %v949 = vpack.c.b16 %v884, %v883
      %v950 = vpack.c.b16 %v886, %v885
      %v951 = vpack.c.b16 %v888, %v887
      %v952 = vpack.c.b16 %v890, %v889
      %v953 = vpack.c.b16 %v892, %v891
      %v954 = vpack.c.b16 %v894, %v893
      %v955 = vpack.c.b16 %v896, %v895
      %v956 = vpack.c.b16 %v898, %v897
      %v957 = vpack.c.b16 %v900, %v899
      %v958 = vpack.c.b16 %v902, %v901
      %v959 = vpack.c.b16 %v904, %v903
      %v960 = vpack.c.b16 %v906, %v905
      %v961 = vpack.c.b16 %v908, %v907
      %v962 = vpack.c.b16 %v910, %v909
      %v963 = vpack.c.b16 %v912, %v911
      %v964 = vpack.c.b16 %v914, %v913
      %v965 = vpack.c.b16 %v916, %v915
      %v966 = vpack.c.b16 %v918, %v917
      %v967 = vpack.c.b16 %v920, %v919
      %v968 = vpack.c.b16 %v922, %v921
      %v969 = vpack.c.b16 %v924, %v923
      %v970 = vpack.c.b16 %v926, %v925
      %v971 = vpack.c.b16 %v928, %v927
      %v972 = vpack.c.b16 %v930, %v929
      %v973 = vpack.c.b16 %v932, %v931
      %v974 = vpack.c.b16 %v934, %v933
      %v975 = vpack.c.b16 %v936, %v935
      %v976 = vpack.c.b16 %v938, %v937
      %v977 = vpack.c.b16 %v940, %v939
      %v978 = vpack.c.b16 %v942, %v941
      %vm1015 = vcmask 523264
      %v1017 = vsel %vm1015, %v659, 0
      %v1020 = vsel %vm1015, %v664, 0
      %v1023 = vsel %vm1015, %v669, 0
      %v1026 = vsel %vm1015, %v674, 0
      %v1029 = vsel %vm1015, %v679, 0
      %v1032 = vsel %vm1015, %v684, 0
      %v1035 = vsel %vm1015, %v689, 0
      %v1038 = vsel %vm1015, %v694, 0
      %v1041 = vsel %vm1015, %v699, 0
      %v1044 = vsel %vm1015, %v704, 0
      %v1047 = vsel %vm1015, %v709, 0
      %v1050 = vsel %vm1015, %v714, 0
      %v1053 = vsel %vm1015, %v719, 0
      %v1056 = vsel %vm1015, %v724, 0
      %v1059 = vsel %vm1015, %v729, 0
      %v1062 = vsel %vm1015, %v734, 0
      %1064 = vmatpush.bf16.msra.mxu0 %v950
      %1065 = vmatpush.bf16.msra.mxu0 %v949
      %1066 = vmatpush.bf16.msra.mxu0 %v948
      %1067 = vmatpush.bf16.msra.mxu0 %v947
      %1068 = vmatpush.bf16.msra.mxu0 %v946
      %1069 = vmatpush.bf16.msra.mxu0 %v945
      %1070 = vmatpush.bf16.msra.mxu0 %v944
      %1071 = vmatpush.bf16.msra.mxu0 %v943
      %1072 = vmatmul.bf16.gmra.mxu0 %v655
      %v1073 = vpop.f32.mrf.mxu0
      %v1074 = vadd.f32 %v397, %v1073
      %v1075 = vpop.f32.mrf.mxu0
      %v1076 = vadd.f32 %v397, %v1075
      %1077 = vmatmul.bf16.gmra.mxu0 %v660
      %v1078 = vpop.f32.mrf.mxu0
      %v1079 = vadd.f32 %v397, %v1078
      %v1080 = vpop.f32.mrf.mxu0
      %v1081 = vadd.f32 %v397, %v1080
      %1082 = vmatmul.bf16.gmra.mxu0 %v665
      %v1083 = vpop.f32.mrf.mxu0
      %v1084 = vadd.f32 %v397, %v1083
      %v1085 = vpop.f32.mrf.mxu0
      %v1086 = vadd.f32 %v397, %v1085
      %1087 = vmatmul.bf16.gmra.mxu0 %v670
      %v1088 = vpop.f32.mrf.mxu0
      %v1089 = vadd.f32 %v397, %v1088
      %v1090 = vpop.f32.mrf.mxu0
      %v1091 = vadd.f32 %v397, %v1090
      %1092 = vmatmul.bf16.gmra.mxu0 %v675
      %v1093 = vpop.f32.mrf.mxu0
      %v1094 = vadd.f32 %v397, %v1093
      %v1095 = vpop.f32.mrf.mxu0
      %v1096 = vadd.f32 %v397, %v1095
      %1097 = vmatmul.bf16.gmra.mxu0 %v680
      %v1098 = vpop.f32.mrf.mxu0
      %v1099 = vadd.f32 %v397, %v1098
      %v1100 = vpop.f32.mrf.mxu0
      %v1101 = vadd.f32 %v397, %v1100
      %1102 = vmatmul.bf16.gmra.mxu0 %v685
      %v1103 = vpop.f32.mrf.mxu0
      %v1104 = vadd.f32 %v397, %v1103
      %v1105 = vpop.f32.mrf.mxu0
      %v1106 = vadd.f32 %v397, %v1105
      %1107 = vmatmul.bf16.gmra.mxu0 %v690
      %v1108 = vpop.f32.mrf.mxu0
      %v1109 = vadd.f32 %v397, %v1108
      %v1110 = vpop.f32.mrf.mxu0
      %v1111 = vadd.f32 %v397, %v1110
      %1112 = vmatmul.bf16.gmra.mxu0 %v695
      %v1113 = vpop.f32.mrf.mxu0
      %v1114 = vadd.f32 %v397, %v1113
      %v1115 = vpop.f32.mrf.mxu0
      %v1116 = vadd.f32 %v397, %v1115
      %1117 = vmatmul.bf16.gmra.mxu0 %v700
      %v1118 = vpop.f32.mrf.mxu0
      %v1119 = vadd.f32 %v397, %v1118
      %v1120 = vpop.f32.mrf.mxu0
      %v1121 = vadd.f32 %v397, %v1120
      %1122 = vmatmul.bf16.gmra.mxu0 %v705
      %v1123 = vpop.f32.mrf.mxu0
      %v1124 = vadd.f32 %v397, %v1123
      %v1125 = vpop.f32.mrf.mxu0
      %v1126 = vadd.f32 %v397, %v1125
      %1127 = vmatmul.bf16.gmra.mxu0 %v710
      %v1128 = vpop.f32.mrf.mxu0
      %v1129 = vadd.f32 %v397, %v1128
      %v1130 = vpop.f32.mrf.mxu0
      %v1131 = vadd.f32 %v397, %v1130
      %1132 = vmatmul.bf16.gmra.mxu0 %v715
      %v1133 = vpop.f32.mrf.mxu0
      %v1134 = vadd.f32 %v397, %v1133
      %v1135 = vpop.f32.mrf.mxu0
      %v1136 = vadd.f32 %v397, %v1135
      %1137 = vmatmul.bf16.gmra.mxu0 %v720
      %v1138 = vpop.f32.mrf.mxu0
      %v1139 = vadd.f32 %v397, %v1138
      %v1140 = vpop.f32.mrf.mxu0
      %v1141 = vadd.f32 %v397, %v1140
      %1142 = vmatmul.bf16.gmra.mxu0 %v725
      %v1143 = vpop.f32.mrf.mxu0
      %v1144 = vadd.f32 %v397, %v1143
      %v1145 = vpop.f32.mrf.mxu0
      %v1146 = vadd.f32 %v397, %v1145
      %1147 = vmatmul.bf16.gmra.mxu0 %v730
      %v1148 = vpop.f32.mrf.mxu0
      %v1149 = vadd.f32 %v397, %v1148
      %v1150 = vpop.f32.mrf.mxu0
      %v1151 = vadd.f32 %v397, %v1150
      %1152 = vdwg.mxu0
      %1153 = vmatpush.bf16.msra.mxu0 %v958
      %1154 = vmatpush.bf16.msra.mxu0 %v957
      %1155 = vmatpush.bf16.msra.mxu0 %v956
      %1156 = vmatpush.bf16.msra.mxu0 %v955
      %1157 = vmatpush.bf16.msra.mxu0 %v954
      %1158 = vmatpush.bf16.msra.mxu0 %v953
      %1159 = vmatpush.bf16.msra.mxu0 %v952
      %1160 = vmatpush.bf16.msra.mxu0 %v951
      %1161 = vmatmul.bf16.gmra.mxu0 %v656
      %v1162 = vpop.f32.mrf.mxu0
      %v1163 = vadd.f32 %v1074, %v1162
      %v1164 = vpop.f32.mrf.mxu0
      %v1165 = vadd.f32 %v1076, %v1164
      %1166 = vmatmul.bf16.gmra.mxu0 %v661
      %v1167 = vpop.f32.mrf.mxu0
      %v1168 = vadd.f32 %v1079, %v1167
      %v1169 = vpop.f32.mrf.mxu0
      %v1170 = vadd.f32 %v1081, %v1169
      %1171 = vmatmul.bf16.gmra.mxu0 %v666
      %v1172 = vpop.f32.mrf.mxu0
      %v1173 = vadd.f32 %v1084, %v1172
      %v1174 = vpop.f32.mrf.mxu0
      %v1175 = vadd.f32 %v1086, %v1174
      %1176 = vmatmul.bf16.gmra.mxu0 %v671
      %v1177 = vpop.f32.mrf.mxu0
      %v1178 = vadd.f32 %v1089, %v1177
      %v1179 = vpop.f32.mrf.mxu0
      %v1180 = vadd.f32 %v1091, %v1179
      %1181 = vmatmul.bf16.gmra.mxu0 %v676
      %v1182 = vpop.f32.mrf.mxu0
      %v1183 = vadd.f32 %v1094, %v1182
      %v1184 = vpop.f32.mrf.mxu0
      %v1185 = vadd.f32 %v1096, %v1184
      %1186 = vmatmul.bf16.gmra.mxu0 %v681
      %v1187 = vpop.f32.mrf.mxu0
      %v1188 = vadd.f32 %v1099, %v1187
      %v1189 = vpop.f32.mrf.mxu0
      %v1190 = vadd.f32 %v1101, %v1189
      %1191 = vmatmul.bf16.gmra.mxu0 %v686
      %v1192 = vpop.f32.mrf.mxu0
      %v1193 = vadd.f32 %v1104, %v1192
      %v1194 = vpop.f32.mrf.mxu0
      %v1195 = vadd.f32 %v1106, %v1194
      %1196 = vmatmul.bf16.gmra.mxu0 %v691
      %v1197 = vpop.f32.mrf.mxu0
      %v1198 = vadd.f32 %v1109, %v1197
      %v1199 = vpop.f32.mrf.mxu0
      %v1200 = vadd.f32 %v1111, %v1199
      %1201 = vmatmul.bf16.gmra.mxu0 %v696
      %v1202 = vpop.f32.mrf.mxu0
      %v1203 = vadd.f32 %v1114, %v1202
      %v1204 = vpop.f32.mrf.mxu0
      %v1205 = vadd.f32 %v1116, %v1204
      %1206 = vmatmul.bf16.gmra.mxu0 %v701
      %v1207 = vpop.f32.mrf.mxu0
      %v1208 = vadd.f32 %v1119, %v1207
      %v1209 = vpop.f32.mrf.mxu0
      %v1210 = vadd.f32 %v1121, %v1209
      %1211 = vmatmul.bf16.gmra.mxu0 %v706
      %v1212 = vpop.f32.mrf.mxu0
      %v1213 = vadd.f32 %v1124, %v1212
      %v1214 = vpop.f32.mrf.mxu0
      %v1215 = vadd.f32 %v1126, %v1214
      %1216 = vmatmul.bf16.gmra.mxu0 %v711
      %v1217 = vpop.f32.mrf.mxu0
      %v1218 = vadd.f32 %v1129, %v1217
      %v1219 = vpop.f32.mrf.mxu0
      %v1220 = vadd.f32 %v1131, %v1219
      %1221 = vmatmul.bf16.gmra.mxu0 %v716
      %v1222 = vpop.f32.mrf.mxu0
      %v1223 = vadd.f32 %v1134, %v1222
      %v1224 = vpop.f32.mrf.mxu0
      %v1225 = vadd.f32 %v1136, %v1224
      %1226 = vmatmul.bf16.gmra.mxu0 %v721
      %v1227 = vpop.f32.mrf.mxu0
      %v1228 = vadd.f32 %v1139, %v1227
      %v1229 = vpop.f32.mrf.mxu0
      %v1230 = vadd.f32 %v1141, %v1229
      %1231 = vmatmul.bf16.gmra.mxu0 %v726
      %v1232 = vpop.f32.mrf.mxu0
      %v1233 = vadd.f32 %v1144, %v1232
      %v1234 = vpop.f32.mrf.mxu0
      %v1235 = vadd.f32 %v1146, %v1234
      %1236 = vmatmul.bf16.gmra.mxu0 %v731
      %v1237 = vpop.f32.mrf.mxu0
      %v1238 = vadd.f32 %v1149, %v1237
      %v1239 = vpop.f32.mrf.mxu0
      %v1240 = vadd.f32 %v1151, %v1239
      %1241 = vdwg.mxu0
      %1242 = vmatpush.bf16.msra.mxu0 %v966
      %1243 = vmatpush.bf16.msra.mxu0 %v965
      %1244 = vmatpush.bf16.msra.mxu0 %v964
      %1245 = vmatpush.bf16.msra.mxu0 %v963
      %1246 = vmatpush.bf16.msra.mxu0 %v962
      %1247 = vmatpush.bf16.msra.mxu0 %v961
      %1248 = vmatpush.bf16.msra.mxu0 %v960
      %1249 = vmatpush.bf16.msra.mxu0 %v959
      %1250 = vmatmul.bf16.gmra.mxu0 %v657
      %v1251 = vpop.f32.mrf.mxu0
      %v1252 = vadd.f32 %v1163, %v1251
      %v1253 = vpop.f32.mrf.mxu0
      %v1254 = vadd.f32 %v1165, %v1253
      %1255 = vmatmul.bf16.gmra.mxu0 %v662
      %v1256 = vpop.f32.mrf.mxu0
      %v1257 = vadd.f32 %v1168, %v1256
      %v1258 = vpop.f32.mrf.mxu0
      %v1259 = vadd.f32 %v1170, %v1258
      %1260 = vmatmul.bf16.gmra.mxu0 %v667
      %v1261 = vpop.f32.mrf.mxu0
      %v1262 = vadd.f32 %v1173, %v1261
      %v1263 = vpop.f32.mrf.mxu0
      %v1264 = vadd.f32 %v1175, %v1263
      %1265 = vmatmul.bf16.gmra.mxu0 %v672
      %v1266 = vpop.f32.mrf.mxu0
      %v1267 = vadd.f32 %v1178, %v1266
      %v1268 = vpop.f32.mrf.mxu0
      %v1269 = vadd.f32 %v1180, %v1268
      %1270 = vmatmul.bf16.gmra.mxu0 %v677
      %v1271 = vpop.f32.mrf.mxu0
      %v1272 = vadd.f32 %v1183, %v1271
      %v1273 = vpop.f32.mrf.mxu0
      %v1274 = vadd.f32 %v1185, %v1273
      %1275 = vmatmul.bf16.gmra.mxu0 %v682
      %v1276 = vpop.f32.mrf.mxu0
      %v1277 = vadd.f32 %v1188, %v1276
      %v1278 = vpop.f32.mrf.mxu0
      %v1279 = vadd.f32 %v1190, %v1278
      %1280 = vmatmul.bf16.gmra.mxu0 %v687
      %v1281 = vpop.f32.mrf.mxu0
      %v1282 = vadd.f32 %v1193, %v1281
      %v1283 = vpop.f32.mrf.mxu0
      %v1284 = vadd.f32 %v1195, %v1283
      %1285 = vmatmul.bf16.gmra.mxu0 %v692
      %v1286 = vpop.f32.mrf.mxu0
      %v1287 = vadd.f32 %v1198, %v1286
      %v1288 = vpop.f32.mrf.mxu0
      %v1289 = vadd.f32 %v1200, %v1288
      %1290 = vmatmul.bf16.gmra.mxu0 %v697
      %v1291 = vpop.f32.mrf.mxu0
      %v1292 = vadd.f32 %v1203, %v1291
      %v1293 = vpop.f32.mrf.mxu0
      %v1294 = vadd.f32 %v1205, %v1293
      %1295 = vmatmul.bf16.gmra.mxu0 %v702
      %v1296 = vpop.f32.mrf.mxu0
      %v1297 = vadd.f32 %v1208, %v1296
      %v1298 = vpop.f32.mrf.mxu0
      %v1299 = vadd.f32 %v1210, %v1298
      %1300 = vmatmul.bf16.gmra.mxu0 %v707
      %v1301 = vpop.f32.mrf.mxu0
      %v1302 = vadd.f32 %v1213, %v1301
      %v1303 = vpop.f32.mrf.mxu0
      %v1304 = vadd.f32 %v1215, %v1303
      %1305 = vmatmul.bf16.gmra.mxu0 %v712
      %v1306 = vpop.f32.mrf.mxu0
      %v1307 = vadd.f32 %v1218, %v1306
      %v1308 = vpop.f32.mrf.mxu0
      %v1309 = vadd.f32 %v1220, %v1308
      %1310 = vmatmul.bf16.gmra.mxu0 %v717
      %v1311 = vpop.f32.mrf.mxu0
      %v1312 = vadd.f32 %v1223, %v1311
      %v1313 = vpop.f32.mrf.mxu0
      %v1314 = vadd.f32 %v1225, %v1313
      %1315 = vmatmul.bf16.gmra.mxu0 %v722
      %v1316 = vpop.f32.mrf.mxu0
      %v1317 = vadd.f32 %v1228, %v1316
      %v1318 = vpop.f32.mrf.mxu0
      %v1319 = vadd.f32 %v1230, %v1318
      %1320 = vmatmul.bf16.gmra.mxu0 %v727
      %v1321 = vpop.f32.mrf.mxu0
      %v1322 = vadd.f32 %v1233, %v1321
      %v1323 = vpop.f32.mrf.mxu0
      %v1324 = vadd.f32 %v1235, %v1323
      %1325 = vmatmul.bf16.gmra.mxu0 %v732
      %v1326 = vpop.f32.mrf.mxu0
      %v1327 = vadd.f32 %v1238, %v1326
      %v1328 = vpop.f32.mrf.mxu0
      %v1329 = vadd.f32 %v1240, %v1328
      %1330 = vdwg.mxu0
      %1331 = vmatpush.bf16.msra.mxu0 %v974
      %1332 = vmatpush.bf16.msra.mxu0 %v973
      %1333 = vmatpush.bf16.msra.mxu0 %v972
      %1334 = vmatpush.bf16.msra.mxu0 %v971
      %1335 = vmatpush.bf16.msra.mxu0 %v970
      %1336 = vmatpush.bf16.msra.mxu0 %v969
      %1337 = vmatpush.bf16.msra.mxu0 %v968
      %1338 = vmatpush.bf16.msra.mxu0 %v967
      %1339 = vmatmul.bf16.gmra.mxu0 %v658
      %v1340 = vpop.f32.mrf.mxu0
      %v1341 = vadd.f32 %v1252, %v1340
      %v1342 = vpop.f32.mrf.mxu0
      %v1343 = vadd.f32 %v1254, %v1342
      %1344 = vmatmul.bf16.gmra.mxu0 %v663
      %v1345 = vpop.f32.mrf.mxu0
      %v1346 = vadd.f32 %v1257, %v1345
      %v1347 = vpop.f32.mrf.mxu0
      %v1348 = vadd.f32 %v1259, %v1347
      %1349 = vmatmul.bf16.gmra.mxu0 %v668
      %v1350 = vpop.f32.mrf.mxu0
      %v1351 = vadd.f32 %v1262, %v1350
      %v1352 = vpop.f32.mrf.mxu0
      %v1353 = vadd.f32 %v1264, %v1352
      %1354 = vmatmul.bf16.gmra.mxu0 %v673
      %v1355 = vpop.f32.mrf.mxu0
      %v1356 = vadd.f32 %v1267, %v1355
      %v1357 = vpop.f32.mrf.mxu0
      %v1358 = vadd.f32 %v1269, %v1357
      %1359 = vmatmul.bf16.gmra.mxu0 %v678
      %v1360 = vpop.f32.mrf.mxu0
      %v1361 = vadd.f32 %v1272, %v1360
      %v1362 = vpop.f32.mrf.mxu0
      %v1363 = vadd.f32 %v1274, %v1362
      %1364 = vmatmul.bf16.gmra.mxu0 %v683
      %v1365 = vpop.f32.mrf.mxu0
      %v1366 = vadd.f32 %v1277, %v1365
      %v1367 = vpop.f32.mrf.mxu0
      %v1368 = vadd.f32 %v1279, %v1367
      %1369 = vmatmul.bf16.gmra.mxu0 %v688
      %v1370 = vpop.f32.mrf.mxu0
      %v1371 = vadd.f32 %v1282, %v1370
      %v1372 = vpop.f32.mrf.mxu0
      %v1373 = vadd.f32 %v1284, %v1372
      %1374 = vmatmul.bf16.gmra.mxu0 %v693
      %v1375 = vpop.f32.mrf.mxu0
      %v1376 = vadd.f32 %v1287, %v1375
      %v1377 = vpop.f32.mrf.mxu0
      %v1378 = vadd.f32 %v1289, %v1377
      %1379 = vmatmul.bf16.gmra.mxu0 %v698
      %v1380 = vpop.f32.mrf.mxu0
      %v1381 = vadd.f32 %v1292, %v1380
      %v1382 = vpop.f32.mrf.mxu0
      %v1383 = vadd.f32 %v1294, %v1382
      %1384 = vmatmul.bf16.gmra.mxu0 %v703
      %v1385 = vpop.f32.mrf.mxu0
      %v1386 = vadd.f32 %v1297, %v1385
      %v1387 = vpop.f32.mrf.mxu0
      %v1388 = vadd.f32 %v1299, %v1387
      %1389 = vmatmul.bf16.gmra.mxu0 %v708
      %v1390 = vpop.f32.mrf.mxu0
      %v1391 = vadd.f32 %v1302, %v1390
      %v1392 = vpop.f32.mrf.mxu0
      %v1393 = vadd.f32 %v1304, %v1392
      %1394 = vmatmul.bf16.gmra.mxu0 %v713
      %v1395 = vpop.f32.mrf.mxu0
      %v1396 = vadd.f32 %v1307, %v1395
      %v1397 = vpop.f32.mrf.mxu0
      %v1398 = vadd.f32 %v1309, %v1397
      %1399 = vmatmul.bf16.gmra.mxu0 %v718
      %v1400 = vpop.f32.mrf.mxu0
      %v1401 = vadd.f32 %v1312, %v1400
      %v1402 = vpop.f32.mrf.mxu0
      %v1403 = vadd.f32 %v1314, %v1402
      %1404 = vmatmul.bf16.gmra.mxu0 %v723
      %v1405 = vpop.f32.mrf.mxu0
      %v1406 = vadd.f32 %v1317, %v1405
      %v1407 = vpop.f32.mrf.mxu0
      %v1408 = vadd.f32 %v1319, %v1407
      %1409 = vmatmul.bf16.gmra.mxu0 %v728
      %v1410 = vpop.f32.mrf.mxu0
      %v1411 = vadd.f32 %v1322, %v1410
      %v1412 = vpop.f32.mrf.mxu0
      %v1413 = vadd.f32 %v1324, %v1412
      %1414 = vmatmul.bf16.gmra.mxu0 %v733
      %v1415 = vpop.f32.mrf.mxu0
      %v1416 = vadd.f32 %v1327, %v1415
      %v1417 = vpop.f32.mrf.mxu0
      %v1418 = vadd.f32 %v1329, %v1417
      %1419 = vdwg.mxu0
      %1420 = vmatpush.bf16.msra.mxu0 0
      %1421 = vmatpush.bf16.msra.mxu0 0
      %1422 = vmatpush.bf16.msra.mxu0 0
      %1423 = vmatpush.bf16.msra.mxu0 0
      %1424 = vmatpush.bf16.msra.mxu0 %v978
      %1425 = vmatpush.bf16.msra.mxu0 %v977
      %1426 = vmatpush.bf16.msra.mxu0 %v976
      %1427 = vmatpush.bf16.msra.mxu0 %v975
      %1428 = vmatmul.bf16.gmra.mxu0 %v1017
      %v1429 = vpop.f32.mrf.mxu0
      %v1430 = vadd.f32 %v1341, %v1429
      %v1431 = vpop.f32.mrf.mxu0
      %v1432 = vadd.f32 %v1343, %v1431
      %1433 = vmatmul.bf16.gmra.mxu0 %v1020
      %v1434 = vpop.f32.mrf.mxu0
      %v1435 = vadd.f32 %v1346, %v1434
      %v1436 = vpop.f32.mrf.mxu0
      %v1437 = vadd.f32 %v1348, %v1436
      %1438 = vmatmul.bf16.gmra.mxu0 %v1023
      %v1439 = vpop.f32.mrf.mxu0
      %v1440 = vadd.f32 %v1351, %v1439
      %v1441 = vpop.f32.mrf.mxu0
      %v1442 = vadd.f32 %v1353, %v1441
      %1443 = vmatmul.bf16.gmra.mxu0 %v1026
      %v1444 = vpop.f32.mrf.mxu0
      %v1445 = vadd.f32 %v1356, %v1444
      %v1446 = vpop.f32.mrf.mxu0
      %v1447 = vadd.f32 %v1358, %v1446
      %1448 = vmatmul.bf16.gmra.mxu0 %v1029
      %v1449 = vpop.f32.mrf.mxu0
      %v1450 = vadd.f32 %v1361, %v1449
      %v1451 = vpop.f32.mrf.mxu0
      %v1452 = vadd.f32 %v1363, %v1451
      %1453 = vmatmul.bf16.gmra.mxu0 %v1032
      %v1454 = vpop.f32.mrf.mxu0
      %v1455 = vadd.f32 %v1366, %v1454
      %v1456 = vpop.f32.mrf.mxu0
      %v1457 = vadd.f32 %v1368, %v1456
      %1458 = vmatmul.bf16.gmra.mxu0 %v1035
      %v1459 = vpop.f32.mrf.mxu0
      %v1460 = vadd.f32 %v1371, %v1459
      %v1461 = vpop.f32.mrf.mxu0
      %v1462 = vadd.f32 %v1373, %v1461
      %1463 = vmatmul.bf16.gmra.mxu0 %v1038
      %v1464 = vpop.f32.mrf.mxu0
      %v1465 = vadd.f32 %v1376, %v1464
      %v1466 = vpop.f32.mrf.mxu0
      %v1467 = vadd.f32 %v1378, %v1466
      %1468 = vmatmul.bf16.gmra.mxu0 %v1041
      %v1469 = vpop.f32.mrf.mxu0
      %v1470 = vadd.f32 %v1381, %v1469
      %v1471 = vpop.f32.mrf.mxu0
      %v1472 = vadd.f32 %v1383, %v1471
      %1473 = vmatmul.bf16.gmra.mxu0 %v1044
      %v1474 = vpop.f32.mrf.mxu0
      %v1475 = vadd.f32 %v1386, %v1474
      %v1476 = vpop.f32.mrf.mxu0
      %v1477 = vadd.f32 %v1388, %v1476
      %1478 = vmatmul.bf16.gmra.mxu0 %v1047
      %v1479 = vpop.f32.mrf.mxu0
      %v1480 = vadd.f32 %v1391, %v1479
      %v1481 = vpop.f32.mrf.mxu0
      %v1482 = vadd.f32 %v1393, %v1481
      %1483 = vmatmul.bf16.gmra.mxu0 %v1050
      %v1484 = vpop.f32.mrf.mxu0
      %v1485 = vadd.f32 %v1396, %v1484
      %v1486 = vpop.f32.mrf.mxu0
      %v1487 = vadd.f32 %v1398, %v1486
      %1488 = vmatmul.bf16.gmra.mxu0 %v1053
      %v1489 = vpop.f32.mrf.mxu0
      %v1490 = vadd.f32 %v1401, %v1489
      %v1491 = vpop.f32.mrf.mxu0
      %v1492 = vadd.f32 %v1403, %v1491
      %1493 = vmatmul.bf16.gmra.mxu0 %v1056
      %v1494 = vpop.f32.mrf.mxu0
      %v1495 = vadd.f32 %v1406, %v1494
      %v1496 = vpop.f32.mrf.mxu0
      %v1497 = vadd.f32 %v1408, %v1496
      %1498 = vmatmul.bf16.gmra.mxu0 %v1059
      %v1499 = vpop.f32.mrf.mxu0
      %v1500 = vadd.f32 %v1411, %v1499
      %v1501 = vpop.f32.mrf.mxu0
      %v1502 = vadd.f32 %v1413, %v1501
      %1503 = vmatmul.bf16.gmra.mxu0 %v1062
      %v1504 = vpop.f32.mrf.mxu0
      %v1505 = vadd.f32 %v1416, %v1504
      %v1506 = vpop.f32.mrf.mxu0
      %v1507 = vadd.f32 %v1418, %v1506
      %1508 = vdwg.mxu0
      %vm1509 = vcmp.ge.f32.partialorder %v1430, 0.0
      %vm1510 = vcmp.ge.f32.partialorder %v1432, 0.0
      %vm1511 = vcmp.ge.f32.partialorder %v1435, 0.0
      %vm1512 = vcmp.ge.f32.partialorder %v1437, 0.0
      %vm1513 = vcmp.ge.f32.partialorder %v1440, 0.0
      %vm1514 = vcmp.ge.f32.partialorder %v1442, 0.0
      %vm1515 = vcmp.ge.f32.partialorder %v1445, 0.0
      %vm1516 = vcmp.ge.f32.partialorder %v1447, 0.0
      %vm1517 = vcmp.ge.f32.partialorder %v1450, 0.0
      %vm1518 = vcmp.ge.f32.partialorder %v1452, 0.0
      %vm1519 = vcmp.ge.f32.partialorder %v1455, 0.0
      %vm1520 = vcmp.ge.f32.partialorder %v1457, 0.0
      %vm1521 = vcmp.ge.f32.partialorder %v1460, 0.0
      %vm1522 = vcmp.ge.f32.partialorder %v1462, 0.0
      %vm1523 = vcmp.ge.f32.partialorder %v1465, 0.0
      %vm1524 = vcmp.ge.f32.partialorder %v1467, 0.0
      %vm1525 = vcmp.ge.f32.partialorder %v1470, 0.0
      %vm1526 = vcmp.ge.f32.partialorder %v1472, 0.0
      %vm1527 = vcmp.ge.f32.partialorder %v1475, 0.0
      %vm1528 = vcmp.ge.f32.partialorder %v1477, 0.0
      %vm1529 = vcmp.ge.f32.partialorder %v1480, 0.0
      %vm1530 = vcmp.ge.f32.partialorder %v1482, 0.0
      %vm1531 = vcmp.ge.f32.partialorder %v1485, 0.0
      %vm1532 = vcmp.ge.f32.partialorder %v1487, 0.0
      %vm1533 = vcmp.ge.f32.partialorder %v1490, 0.0
      %vm1534 = vcmp.ge.f32.partialorder %v1492, 0.0
      %vm1535 = vcmp.ge.f32.partialorder %v1495, 0.0
      %vm1536 = vcmp.ge.f32.partialorder %v1497, 0.0
      %vm1537 = vcmp.ge.f32.partialorder %v1500, 0.0
      %vm1538 = vcmp.ge.f32.partialorder %v1502, 0.0
      %vm1539 = vcmp.ge.f32.partialorder %v1505, 0.0
      %vm1540 = vcmp.ge.f32.partialorder %v1507, 0.0
      %v1541 = vmul.f32 %v1430, 0.25
      %v1542 = vmul.f32 %v1432, 0.25
      %v1543 = vmul.f32 %v1435, 0.25
      %v1544 = vmul.f32 %v1437, 0.25
      %v1545 = vmul.f32 %v1440, 0.25
      %v1546 = vmul.f32 %v1442, 0.25
      %v1547 = vmul.f32 %v1445, 0.25
      %v1548 = vmul.f32 %v1447, 0.25
      %v1549 = vmul.f32 %v1450, 0.25
      %v1550 = vmul.f32 %v1452, 0.25
      %v1551 = vmul.f32 %v1455, 0.25
      %v1552 = vmul.f32 %v1457, 0.25
      %v1553 = vmul.f32 %v1460, 0.25
      %v1554 = vmul.f32 %v1462, 0.25
      %v1555 = vmul.f32 %v1465, 0.25
      %v1556 = vmul.f32 %v1467, 0.25
      %v1557 = vmul.f32 %v1470, 0.25
      %v1558 = vmul.f32 %v1472, 0.25
      %v1559 = vmul.f32 %v1475, 0.25
      %v1560 = vmul.f32 %v1477, 0.25
      %v1561 = vmul.f32 %v1480, 0.25
      %v1562 = vmul.f32 %v1482, 0.25
      %v1563 = vmul.f32 %v1485, 0.25
      %v1564 = vmul.f32 %v1487, 0.25
      %v1565 = vmul.f32 %v1490, 0.25
      %v1566 = vmul.f32 %v1492, 0.25
      %v1567 = vmul.f32 %v1495, 0.25
      %v1568 = vmul.f32 %v1497, 0.25
      %v1569 = vmul.f32 %v1500, 0.25
      %v1570 = vmul.f32 %v1502, 0.25
      %v1571 = vmul.f32 %v1505, 0.25
      %v1572 = vmul.f32 %v1507, 0.25
      %v1573 = vsel %vm1509, %v1430, %v1541
      %v1574 = vsel %vm1510, %v1432, %v1542
      %v1575 = vsel %vm1511, %v1435, %v1543
      %v1576 = vsel %vm1512, %v1437, %v1544
      %v1577 = vsel %vm1513, %v1440, %v1545
      %v1578 = vsel %vm1514, %v1442, %v1546
      %v1579 = vsel %vm1515, %v1445, %v1547
      %v1580 = vsel %vm1516, %v1447, %v1548
      %v1581 = vsel %vm1517, %v1450, %v1549
      %v1582 = vsel %vm1518, %v1452, %v1550
      %v1583 = vsel %vm1519, %v1455, %v1551
      %v1584 = vsel %vm1520, %v1457, %v1552
      %v1585 = vsel %vm1521, %v1460, %v1553
      %v1586 = vsel %vm1522, %v1462, %v1554
      %v1587 = vsel %vm1523, %v1465, %v1555
      %v1588 = vsel %vm1524, %v1467, %v1556
      %v1589 = vsel %vm1525, %v1470, %v1557
      %v1590 = vsel %vm1526, %v1472, %v1558
      %v1591 = vsel %vm1527, %v1475, %v1559
      %v1592 = vsel %vm1528, %v1477, %v1560
      %v1593 = vsel %vm1529, %v1480, %v1561
      %v1594 = vsel %vm1530, %v1482, %v1562
      %v1595 = vsel %vm1531, %v1485, %v1563
      %v1596 = vsel %vm1532, %v1487, %v1564
      %v1597 = vsel %vm1533, %v1490, %v1565
      %v1598 = vsel %vm1534, %v1492, %v1566
      %v1599 = vsel %vm1535, %v1495, %v1567
      %v1600 = vsel %vm1536, %v1497, %v1568
      %v1601 = vsel %vm1537, %v1500, %v1569
      %v1602 = vsel %vm1538, %v1502, %v1570
      %v1603 = vsel %vm1539, %v1505, %v1571
      %v1604 = vsel %vm1540, %v1507, %v1572
      %v1605 = vld [vmem:[%s218] sm:$0xf]
      %v1606 = vld [vmem:[%s218 + $0x4] sm:$0xf]
      %v1607 = vld [vmem:[%s218 + $0x8] sm:$0xf]
      %v1608 = vld [vmem:[%s218 + $0xc] sm:$0xf]
      %v1609 = vld [vmem:[%s218 + $0x10] sm:$0xf]
      %v1610 = vld [vmem:[%s218 + $0x14] sm:$0xf]
      %v1611 = vld [vmem:[%s218 + $0x18] sm:$0xf]
      %v1612 = vld [vmem:[%s218 + $0x1c] sm:$0xf]
      %v1613 = vld [vmem:[%s218 + $0x20] sm:$0xf]
      %v1614 = vld [vmem:[%s218 + $0x24] sm:$0xf]
      %v1615 = vld [vmem:[%s218 + $0x28] sm:$0xf]
      %v1616 = vld [vmem:[%s218 + $0x2c] sm:$0xf]
      %v1617 = vld [vmem:[%s218 + $0x30] sm:$0xf]
      %v1618 = vld [vmem:[%s218 + $0x34] sm:$0xf]
      %v1619 = vld [vmem:[%s218 + $0x38] sm:$0xf]
      %v1620 = vld [vmem:[%s218 + $0x3c] sm:$0xf]
      %v1621 = vld [vmem:[%s218 + $0x40] sm:$0xf]
      %v1622 = vld [vmem:[%s218 + $0x44] sm:$0xf]
      %v1623 = vld [vmem:[%s218 + $0x48] sm:$0xf]
      %v1624 = vld [vmem:[%s218 + $0x4c] sm:$0xf]
      %v1625 = vld [vmem:[%s218 + $0x50] sm:$0xf]
      %v1626 = vld [vmem:[%s218 + $0x54] sm:$0xf]
      %v1627 = vld [vmem:[%s218 + $0x58] sm:$0xf]
      %v1628 = vld [vmem:[%s218 + $0x5c] sm:$0xf]
      %v1629 = vld [vmem:[%s218 + $0x60] sm:$0xf]
      %v1630 = vld [vmem:[%s218 + $0x64] sm:$0xf]
      %v1631 = vld [vmem:[%s218 + $0x68] sm:$0xf]
      %v1632 = vld [vmem:[%s218 + $0x6c] sm:$0xf]
      %v1633 = vld [vmem:[%s218 + $0x70] sm:$0xf]
      %v1634 = vld [vmem:[%s218 + $0x74] sm:$0xf]
      %v1635 = vld [vmem:[%s218 + $0x78] sm:$0xf]
      %v1636 = vld [vmem:[%s218 + $0x7c] sm:$0xf]
      %v1637 = vunpack.c.l.bf16 %v1605
      %v1638 = vunpack.c.l.bf16 %v1606
      %v1639 = vunpack.c.l.bf16 %v1607
      %v1640 = vunpack.c.l.bf16 %v1608
      %v1641 = vunpack.c.l.bf16 %v1609
      %v1642 = vunpack.c.l.bf16 %v1610
      %v1643 = vunpack.c.l.bf16 %v1611
      %v1644 = vunpack.c.l.bf16 %v1612
      %v1645 = vunpack.c.l.bf16 %v1613
      %v1646 = vunpack.c.l.bf16 %v1614
      %v1647 = vunpack.c.l.bf16 %v1615
      %v1648 = vunpack.c.l.bf16 %v1616
      %v1649 = vunpack.c.l.bf16 %v1617
      %v1650 = vunpack.c.l.bf16 %v1618
      %v1651 = vunpack.c.l.bf16 %v1619
      %v1652 = vunpack.c.l.bf16 %v1620
      %v1653 = vunpack.c.l.bf16 %v1621
      %v1654 = vunpack.c.l.bf16 %v1622
      %v1655 = vunpack.c.l.bf16 %v1623
      %v1656 = vunpack.c.l.bf16 %v1624
      %v1657 = vunpack.c.l.bf16 %v1625
      %v1658 = vunpack.c.l.bf16 %v1626
      %v1659 = vunpack.c.l.bf16 %v1627
      %v1660 = vunpack.c.l.bf16 %v1628
      %v1661 = vunpack.c.l.bf16 %v1629
      %v1662 = vunpack.c.l.bf16 %v1630
      %v1663 = vunpack.c.l.bf16 %v1631
      %v1664 = vunpack.c.l.bf16 %v1632
      %v1665 = vunpack.c.l.bf16 %v1633
      %v1666 = vunpack.c.l.bf16 %v1634
      %v1667 = vunpack.c.l.bf16 %v1635
      %v1668 = vunpack.c.l.bf16 %v1636
      %v1669 = vadd.f32 %v1573, %v1637
      %v1670 = vadd.f32 %v1574, %v1638
      %v1671 = vadd.f32 %v1575, %v1639
      %v1672 = vadd.f32 %v1576, %v1640
      %v1673 = vadd.f32 %v1577, %v1641
      %v1674 = vadd.f32 %v1578, %v1642
      %v1675 = vadd.f32 %v1579, %v1643
      %v1676 = vadd.f32 %v1580, %v1644
      %v1677 = vadd.f32 %v1581, %v1645
      %v1678 = vadd.f32 %v1582, %v1646
      %v1679 = vadd.f32 %v1583, %v1647
      %v1680 = vadd.f32 %v1584, %v1648
      %v1681 = vadd.f32 %v1585, %v1649
      %v1682 = vadd.f32 %v1586, %v1650
      %v1683 = vadd.f32 %v1587, %v1651
      %v1684 = vadd.f32 %v1588, %v1652
      %v1685 = vadd.f32 %v1589, %v1653
      %v1686 = vadd.f32 %v1590, %v1654
      %v1687 = vadd.f32 %v1591, %v1655
      %v1688 = vadd.f32 %v1592, %v1656
      %v1689 = vadd.f32 %v1593, %v1657
      %v1690 = vadd.f32 %v1594, %v1658
      %v1691 = vadd.f32 %v1595, %v1659
      %v1692 = vadd.f32 %v1596, %v1660
      %v1693 = vadd.f32 %v1597, %v1661
      %v1694 = vadd.f32 %v1598, %v1662
      %v1695 = vadd.f32 %v1599, %v1663
      %v1696 = vadd.f32 %v1600, %v1664
      %v1697 = vadd.f32 %v1601, %v1665
      %v1698 = vadd.f32 %v1602, %v1666
      %v1699 = vadd.f32 %v1603, %v1667
      %v1700 = vadd.f32 %v1604, %v1668
      %v1701 = vpack.c.bf16 %v1669, %v1669
      %v1702 = vpack.c.bf16 %v1670, %v1670
      %v1703 = vpack.c.bf16 %v1671, %v1671
      %v1704 = vpack.c.bf16 %v1672, %v1672
      %v1705 = vpack.c.bf16 %v1673, %v1673
      %v1706 = vpack.c.bf16 %v1674, %v1674
      %v1707 = vpack.c.bf16 %v1675, %v1675
      %v1708 = vpack.c.bf16 %v1676, %v1676
      %v1709 = vpack.c.bf16 %v1677, %v1677
      %v1710 = vpack.c.bf16 %v1678, %v1678
      %v1711 = vpack.c.bf16 %v1679, %v1679
      %v1712 = vpack.c.bf16 %v1680, %v1680
      %v1713 = vpack.c.bf16 %v1681, %v1681
      %v1714 = vpack.c.bf16 %v1682, %v1682
      %v1715 = vpack.c.bf16 %v1683, %v1683
      %v1716 = vpack.c.bf16 %v1684, %v1684
      %v1717 = vpack.c.bf16 %v1685, %v1685
      %v1718 = vpack.c.bf16 %v1686, %v1686
      %v1719 = vpack.c.bf16 %v1687, %v1687
      %v1720 = vpack.c.bf16 %v1688, %v1688
      %v1721 = vpack.c.bf16 %v1689, %v1689
      %v1722 = vpack.c.bf16 %v1690, %v1690
      %v1723 = vpack.c.bf16 %v1691, %v1691
      %v1724 = vpack.c.bf16 %v1692, %v1692
      %v1725 = vpack.c.bf16 %v1693, %v1693
      %v1726 = vpack.c.bf16 %v1694, %v1694
      %v1727 = vpack.c.bf16 %v1695, %v1695
      %v1728 = vpack.c.bf16 %v1696, %v1696
      %v1729 = vpack.c.bf16 %v1697, %v1697
      %v1730 = vpack.c.bf16 %v1698, %v1698
      %v1731 = vpack.c.bf16 %v1699, %v1699
      %v1732 = vpack.c.bf16 %v1700, %v1700
      %vm1733 = vcmask 125952
      %1734 = vst.msk [vmem:[%s224] sm:$0xf] %vm1733, %v1701
      %1735 = vst.msk [vmem:[%s224 + $0x4] sm:$0xf] %vm1733, %v1702
      %1736 = vst.msk [vmem:[%s224 + $0x8] sm:$0xf] %vm1733, %v1703
      %1737 = vst.msk [vmem:[%s224 + $0xc] sm:$0xf] %vm1733, %v1704
      %1738 = vst.msk [vmem:[%s224 + $0x10] sm:$0xf] %vm1733, %v1705
      %1739 = vst.msk [vmem:[%s224 + $0x14] sm:$0xf] %vm1733, %v1706
      %1740 = vst.msk [vmem:[%s224 + $0x18] sm:$0xf] %vm1733, %v1707
      %1741 = vst.msk [vmem:[%s224 + $0x1c] sm:$0xf] %vm1733, %v1708
      %1742 = vst.msk [vmem:[%s224 + $0x20] sm:$0xf] %vm1733, %v1709
      %1743 = vst.msk [vmem:[%s224 + $0x24] sm:$0xf] %vm1733, %v1710
      %1744 = vst.msk [vmem:[%s224 + $0x28] sm:$0xf] %vm1733, %v1711
      %1745 = vst.msk [vmem:[%s224 + $0x2c] sm:$0xf] %vm1733, %v1712
      %1746 = vst.msk [vmem:[%s224 + $0x30] sm:$0xf] %vm1733, %v1713
      %1747 = vst.msk [vmem:[%s224 + $0x34] sm:$0xf] %vm1733, %v1714
      %1748 = vst.msk [vmem:[%s224 + $0x38] sm:$0xf] %vm1733, %v1715
      %1749 = vst.msk [vmem:[%s224 + $0x3c] sm:$0xf] %vm1733, %v1716
      %1750 = vst.msk [vmem:[%s224 + $0x40] sm:$0xf] %vm1733, %v1717
      %1751 = vst.msk [vmem:[%s224 + $0x44] sm:$0xf] %vm1733, %v1718
      %1752 = vst.msk [vmem:[%s224 + $0x48] sm:$0xf] %vm1733, %v1719
      %1753 = vst.msk [vmem:[%s224 + $0x4c] sm:$0xf] %vm1733, %v1720
      %1754 = vst.msk [vmem:[%s224 + $0x50] sm:$0xf] %vm1733, %v1721
      %1755 = vst.msk [vmem:[%s224 + $0x54] sm:$0xf] %vm1733, %v1722
      %1756 = vst.msk [vmem:[%s224 + $0x58] sm:$0xf] %vm1733, %v1723
      %1757 = vst.msk [vmem:[%s224 + $0x5c] sm:$0xf] %vm1733, %v1724
      %1758 = vst.msk [vmem:[%s224 + $0x60] sm:$0xf] %vm1733, %v1725
      %1759 = vst.msk [vmem:[%s224 + $0x64] sm:$0xf] %vm1733, %v1726
      %1760 = vst.msk [vmem:[%s224 + $0x68] sm:$0xf] %vm1733, %v1727
      %1761 = vst.msk [vmem:[%s224 + $0x6c] sm:$0xf] %vm1733, %v1728
      %1762 = vst.msk [vmem:[%s224 + $0x70] sm:$0xf] %vm1733, %v1729
      %1763 = vst.msk [vmem:[%s224 + $0x74] sm:$0xf] %vm1733, %v1730
      %1764 = vst.msk [vmem:[%s224 + $0x78] sm:$0xf] %vm1733, %v1731
      %1765 = vst.msk [vmem:[%s224 + $0x7c] sm:$0xf] %vm1733, %v1732
      %s1766 = smul.u32 32, %s15
      %p1767 = scmp.lt.s32.totalorder %s1766, 63
      %s1768 = scalar_select %p1767, %s1766, 63
      %s1769 = smul.addr %s1768, 4
      %s1770 = scalar_lea.vmem %s4, %s1769
      // Predicated region
      $region37: #{net2_forward.19} parent=35 // pred_check
        %p1771 = pneg %p127
      $region38: #{net2_forward.19} parent=35 // pred_check_branch
        %1773 = sbr.rel (%p1771) target = $region40
      $region39: #{net2_forward.19} parent=35 // pred_region
        %s1774 = smul.u32 32, %s15
      $region40: #{net2_forward.19} parent=35 // pred_fallthru
        _
    $region36: #{net2_forward.19} parent=5 // pred_fallthru
      _
    %p1775 = scmp.le.s32.totalorder 2, %s10
    // Predicated region
    $region41: #{net2_forward.19} parent=5 // pred_check
      %p1776 = pneg %p1775
    $region42: #{net2_forward.19} parent=5 // pred_check_branch
      %1778 = sbr.rel (%p1776) target = $region44
    $region43: #{net2_forward.19} parent=5 // pred_region
      %s1779 = ssub.s32 %s10, 2
      // Predicated region
      $region45: #{net2_forward.19} parent=43 // pred_check
        %p1780 = pneg %p133
      $region46: #{net2_forward.19} parent=43 // pred_check_branch
        %1782 = sbr.rel (%p1780) target = $region48
      $region47: #{net2_forward.19} parent=43 // pred_region
        %s1783 = smul.u32 32, %s16
        %p1784 = scmp.lt.s32.totalorder %s1783, 63
        %s1785 = scalar_select %p1784, %s1783, 63
        %s1786 = smul.addr %s1785, 4
        %s1787 = scalar_lea.vmem %s4, %s1786
      $region48: #{net2_forward.19} parent=43 // pred_fallthru
        _
    $region44: #{net2_forward.19} parent=5 // pred_fallthru
      _
  $region6: #{net2_forward.19} parent=0 // loop_footer
    %s14 = sadd.s32 1, %s10
  $region7: #{net2_forward.19} parent=0 // loop_footer_branch
    %9 = sbr.rel target = $region3
  $region8: #{net2_forward.19} parent=0 // loop_exit
    _

// kernel: net2_forward.23
$region0: #{net2_forward.23}
  #allocation0 [shape = 'u32[]', space=smem, size = 0x4, offset = 0x4, fixed_abs, tag = 'smem constant byte address 0x4 - core index']
  #allocation1 [shape = 'u32[72,128]{1,0:T(1,128)}', space=vmem, size = 0x9000, scoped, tag = 'internal scratch']
  %s0 = inlined_call_operand.vmem [shape: bf16[2048,144], index: 0, kind: input, shape index: {}]
  %s1 = inlined_call_operand.vmem [shape: bf16[2048,144], index: 1, kind: input, shape index: {}]
  %s2 = inlined_call_operand.vmem [shape: bf16[144,3], index: 2, kind: input, shape index: {}]
  %s3 = inlined_call_operand.vmem [shape: bf16[144,3], index: 3, kind: input, shape index: {}]
  %s4 = inlined_call_operand.vmem [shape: f32[1,3], index: 4, kind: input, shape index: {}]
  %s5 = inlined_call_operand.vmem [shape: f32[2048,3], index: 5, kind: output, shape index: {}]
  %s6 = sld [smem:[#allocation0]]
  $region53: #{net2_forward.23} parent=0
    _
  %s8 = ssub.s32 1, %s6
  %s9 = scalar_select 0, %s8, %s6
  loop: start=0, step=1, limit=6
  $region2: #{net2_forward.23} parent=0 // loop_pre_header
    _
  $region3: #{net2_forward.23} parent=0 // loop_header
    %s11 = sphi 0, %s15
    %p12 = scmp.ge.s32.totalorder %s11, 6
    %s21 = sphi 0, %s23
    %s24 = sphi 0, %s21
    %s25 = sphi 0, %s24
    %s41 = sphi 0, %s25
    %s47 = sphi 0, %s49
    %s50 = sphi 0, %s47
    %s51 = sphi 0, %s50
    %s67 = sphi 0, %s51
    %s71 = sphi 0, %s71
    %s73 = sphi 0, %s71
    %s74 = sphi 0, %s73
    %s88 = sphi 0, %s74
    %s92 = sphi 0, %s92
    %s94 = sphi 0, %s92
    %s95 = sphi 0, %s94
    %s109 = sphi 0, %s95
    %s113 = sphi 0, %s113
    %s115 = sphi 0, %s113
    %s116 = sphi 0, %s115
    %s130 = sphi 0, %s116
    %s136 = sphi 0, %s138
    %s139 = sphi 0, %s136
    %s140 = sphi 0, %s139
    %s156 = sphi 0, %s140
  $region4: #{net2_forward.23} parent=0 // loop_header_branch
    %14 = sbr.rel (%p12) target = $region8
  $region5: #{net2_forward.23} parent=0 // loop_body
    %s16 = ssub.s32 %s11, 1
    %s17 = ssub.s32 %s11, 2
    %s18 = sadd.s32 %s11, 1
    %s19 = ssub.s32 %s11, %s18
    %p20 = scmp.eq.s32.totalorder %s19, 0
    %s22 = sadd.s32 %s21, 1
    %s23 = scalar_select %p20, %s21, %s22
    %p26 = pneg %p20
    %p27 = scmp.eq.s32.totalorder %s11, 3
    %p28 = por %p26, %p27
    %p29 = scmp.ne.s32.totalorder %s21, %s24
    %p30 = scmp.eq.s32.totalorder %s11, 0
    %p31 = por %p29, %p30
    %p32 = scmp.ne.s32.totalorder %s21, %s24
    %p33 = scmp.eq.s32.totalorder %s16, 3
    %p34 = por %p32, %p33
    %p35 = scmp.ne.s32.totalorder %s24, %s25
    %p36 = scmp.eq.s32.totalorder %s16, 0
    %p37 = por %p35, %p36
    %p38 = scmp.ne.s32.totalorder %s24, %s25
    %p39 = scmp.eq.s32.totalorder %s17, 3
    %p40 = por %p38, %p39
    %p42 = scmp.ne.s32.totalorder %s25, %s41
    %p43 = scmp.eq.s32.totalorder %s17, 0
    %p44 = por %p42, %p43
    %s45 = ssub.s32 %s11, %s18
    %p46 = scmp.eq.s32.totalorder %s45, 0
    %s48 = sadd.s32 %s47, 1
    %s49 = scalar_select %p46, %s47, %s48
    %p52 = pneg %p46
    %p53 = scmp.eq.s32.totalorder %s11, 3
    %p54 = por %p52, %p53
    %p55 = scmp.ne.s32.totalorder %s47, %s50
    %p56 = scmp.eq.s32.totalorder %s11, 0
    %p57 = por %p55, %p56
    %p58 = scmp.ne.s32.totalorder %s47, %s50
    %p59 = scmp.eq.s32.totalorder %s16, 3
    %p60 = por %p58, %p59
    %p61 = scmp.ne.s32.totalorder %s50, %s51
    %p62 = scmp.eq.s32.totalorder %s16, 0
    %p63 = por %p61, %p62
    %p64 = scmp.ne.s32.totalorder %s50, %s51
    %p65 = scmp.eq.s32.totalorder %s17, 3
    %p66 = por %p64, %p65
    %p68 = scmp.ne.s32.totalorder %s51, %s67
    %p69 = scmp.eq.s32.totalorder %s17, 0
    %p70 = por %p68, %p69
    %s72 = sadd.s32 %s71, 1
    %p75 = scmp.eq.s32.totalorder %s11, 3
    %p76 = scmp.ne.s32.totalorder %s71, %s73
    %p77 = scmp.eq.s32.totalorder %s11, 0
    %p78 = por %p76, %p77
    %p79 = scmp.ne.s32.totalorder %s71, %s73
    %p80 = scmp.eq.s32.totalorder %s16, 3
    %p81 = por %p79, %p80
    %p82 = scmp.ne.s32.totalorder %s73, %s74
    %p83 = scmp.eq.s32.totalorder %s16, 0
    %p84 = por %p82, %p83
    %p85 = scmp.ne.s32.totalorder %s73, %s74
    %p86 = scmp.eq.s32.totalorder %s17, 3
    %p87 = por %p85, %p86
    %p89 = scmp.ne.s32.totalorder %s74, %s88
    %p90 = scmp.eq.s32.totalorder %s17, 0
    %p91 = por %p89, %p90
    %s93 = sadd.s32 %s92, 1
    %p96 = scmp.eq.s32.totalorder %s11, 3
    %p97 = scmp.ne.s32.totalorder %s92, %s94
    %p98 = scmp.eq.s32.totalorder %s11, 0
    %p99 = por %p97, %p98
    %p100 = scmp.ne.s32.totalorder %s92, %s94
    %p101 = scmp.eq.s32.totalorder %s16, 3
    %p102 = por %p100, %p101
    %p103 = scmp.ne.s32.totalorder %s94, %s95
    %p104 = scmp.eq.s32.totalorder %s16, 0
    %p105 = por %p103, %p104
    %p106 = scmp.ne.s32.totalorder %s94, %s95
    %p107 = scmp.eq.s32.totalorder %s17, 3
    %p108 = por %p106, %p107
    %p110 = scmp.ne.s32.totalorder %s95, %s109
    %p111 = scmp.eq.s32.totalorder %s17, 0
    %p112 = por %p110, %p111
    %s114 = sadd.s32 %s113, 1
    %p117 = scmp.eq.s32.totalorder %s11, 3
    %p118 = scmp.ne.s32.totalorder %s113, %s115
    %p119 = scmp.eq.s32.totalorder %s11, 0
    %p120 = por %p118, %p119
    %p121 = scmp.ne.s32.totalorder %s113, %s115
    %p122 = scmp.eq.s32.totalorder %s16, 3
    %p123 = por %p121, %p122
    %p124 = scmp.ne.s32.totalorder %s115, %s116
    %p125 = scmp.eq.s32.totalorder %s16, 0
    %p126 = por %p124, %p125
    %p127 = scmp.ne.s32.totalorder %s115, %s116
    %p128 = scmp.eq.s32.totalorder %s17, 3
    %p129 = por %p127, %p128
    %p131 = scmp.ne.s32.totalorder %s116, %s130
    %p132 = scmp.eq.s32.totalorder %s17, 0
    %p133 = por %p131, %p132
    %s134 = ssub.s32 %s11, %s18
    %p135 = scmp.eq.s32.totalorder %s134, 0
    %s137 = sadd.s32 %s136, 1
    %s138 = scalar_select %p135, %s136, %s137
    %p141 = pneg %p135
    %p142 = scmp.eq.s32.totalorder %s11, 3
    %p143 = por %p141, %p142
    %p144 = scmp.ne.s32.totalorder %s136, %s139
    %p145 = scmp.eq.s32.totalorder %s11, 0
    %p146 = por %p144, %p145
    %p147 = scmp.ne.s32.totalorder %s136, %s139
    %p148 = scmp.eq.s32.totalorder %s16, 3
    %p149 = por %p147, %p148
    %p150 = scmp.ne.s32.totalorder %s139, %s140
    %p151 = scmp.eq.s32.totalorder %s16, 0
    %p152 = por %p150, %p151
    %p153 = scmp.ne.s32.totalorder %s139, %s140
    %p154 = scmp.eq.s32.totalorder %s17, 3
    %p155 = por %p153, %p154
    %p157 = scmp.ne.s32.totalorder %s140, %s156
    %p158 = scmp.eq.s32.totalorder %s17, 0
    %p159 = por %p157, %p158
    %p160 = scmp.le.s32.totalorder 1, %s11
    %p161 = scmp.lt.s32.totalorder %s11, 5
    %p162 = pnand %p160, %p161
    %p163 = pneg %p162
    // Predicated region
    $region9: #{net2_forward.23} parent=5 // pred_check
      _
    $region10: #{net2_forward.23} parent=5 // pred_check_branch
      %165 = sbr.rel (%p162) target = $region12
    $region11: #{net2_forward.23} parent=5 // pred_region
      %s166 = ssub.s32 %s11, 1
      // Predicated region
      $region13: #{net2_forward.23} parent=11 // pred_check
        %p167 = pneg %p84
      $region14: #{net2_forward.23} parent=11 // pred_check_branch
        %169 = sbr.rel (%p167) target = $region16
      $region15: #{net2_forward.23} parent=11 // pred_region
        _
      $region16: #{net2_forward.23} parent=11 // pred_fallthru
        _
      // Predicated region
      $region17: #{net2_forward.23} parent=11 // pred_check
        %p170 = pneg %p105
      $region18: #{net2_forward.23} parent=11 // pred_check_branch
        %172 = sbr.rel (%p170) target = $region20
      $region19: #{net2_forward.23} parent=11 // pred_region
        _
      $region20: #{net2_forward.23} parent=11 // pred_fallthru
        _
      // Predicated region
      $region21: #{net2_forward.23} parent=11 // pred_check
        %p173 = pneg %p126
      $region22: #{net2_forward.23} parent=11 // pred_check_branch
        %175 = sbr.rel (%p173) target = $region24
      $region23: #{net2_forward.23} parent=11 // pred_region
        _
      $region24: #{net2_forward.23} parent=11 // pred_fallthru
        _
    $region12: #{net2_forward.23} parent=5 // pred_fallthru
      _
    %p176 = scmp.lt.s32.totalorder %s11, 4
    // Predicated region
    $region25: #{net2_forward.23} parent=5 // pred_check
      %p177 = pneg %p176
    $region26: #{net2_forward.23} parent=5 // pred_check_branch
      %179 = sbr.rel (%p177) target = $region28
    $region27: #{net2_forward.23} parent=5 // pred_region
      // Predicated region
      $region29: #{net2_forward.23} parent=27 // pred_check
        %p180 = pneg %p31
      $region30: #{net2_forward.23} parent=27 // pred_check_branch
        %182 = sbr.rel (%p180) target = $region32
      $region31: #{net2_forward.23} parent=27 // pred_region
        %s183 = smul.u32 64, %s11
        %p184 = scmp.lt.s32.totalorder %s183, 255
        %s185 = scalar_select %p184, %s183, 255
        %s186 = smul.addr %s185, 2
        %s187 = smul.addr %s186, 4
        %s188 = scalar_lea.vmem %s0, %s187
        %s189 = smul.u32 64, %s11
      $region32: #{net2_forward.23} parent=27 // pred_fallthru
        _
      // Predicated region
      $region33: #{net2_forward.23} parent=27 // pred_check
        %p190 = pneg %p57
      $region34: #{net2_forward.23} parent=27 // pred_check_branch
        %192 = sbr.rel (%p190) target = $region36
      $region35: #{net2_forward.23} parent=27 // pred_region
        %s193 = smul.u32 64, %s11
        %p194 = scmp.lt.s32.totalorder %s193, 255
        %s195 = scalar_select %p194, %s193, 255
        %s196 = smul.addr %s195, 2
        %s197 = smul.addr %s196, 4
        %s198 = scalar_lea.vmem %s1, %s197
        %s199 = smul.u32 64, %s11
      $region36: #{net2_forward.23} parent=27 // pred_fallthru
        _
    $region28: #{net2_forward.23} parent=5 // pred_fallthru
      _
    %p200 = scmp.le.s32.totalorder 1, %s11
    %p201 = scmp.lt.s32.totalorder %s11, 5
    %p202 = pnand %p200, %p201
    %p203 = pneg %p202
    // Predicated region
    $region37: #{net2_forward.23} parent=5 // pred_check
      _
    $region38: #{net2_forward.23} parent=5 // pred_check_branch
      %205 = sbr.rel (%p202) target = $region40
    $region39: #{net2_forward.23} parent=5 // pred_region
      %s206 = ssub.s32 %s11, 1
      %s207 = smul.u32 64, %s16
      %p208 = scmp.lt.s32.totalorder %s207, 255
      %s209 = scalar_select %p208, %s207, 255
      %s210 = smul.addr %s209, 2
      %s211 = smul.addr %s210, 4
      %s212 = scalar_lea.vmem %s0, %s211
      %p213 = pneg %p37
      %p214 = pneg %p34
      %s215 = smul.u32 64, %s16
      %p216 = scmp.lt.s32.totalorder %s215, 255
      %s217 = scalar_select %p216, %s215, 255
      %s218 = smul.addr %s217, 2
      %s219 = smul.addr %s218, 4
      %s220 = scalar_lea.vmem %s1, %s219
      %p221 = pneg %p63
      %p222 = pneg %p60
      %p223 = pneg %p84
      %p224 = pneg %p81
      %p225 = pneg %p105
      %p226 = pneg %p102
      %p227 = pneg %p126
      %p228 = pneg %p123
      %p229 = pneg %p152
      %p230 = pneg %p149
      %s231 = smul.u32 64, %s16
      %p232 = scmp.lt.s32.totalorder %s231, 255
      %s233 = scalar_select %p232, %s231, 255
      %s234 = smul.addr %s233, 8
      %s235 = scalar_lea.vmem %s5, %s234
      %s236 = smul.u32 64, %s16
      %p237 = scmp.lt.s32.totalorder %s236, 255
      %s238 = scalar_select %p237, %s236, 255
      %s239 = smul.addr %s238, 2
      %s240 = smul.addr %s239, 4
      %s241 = scalar_lea.vmem %s0, %s240
      %s242 = smul.u32 64, %s16
      %s243 = smul.u32 64, %s16
      %p244 = scmp.lt.s32.totalorder %s243, 255
      %s245 = scalar_select %p244, %s243, 255
      %s246 = smul.addr %s245, 2
      %s247 = smul.addr %s246, 4
      %s248 = scalar_lea.vmem %s1, %s247
      %s249 = smul.u32 64, %s16
      %s250 = smul.u32 64, %s16
      %p251 = scmp.lt.s32.totalorder %s250, 255
      %s252 = scalar_select %p251, %s250, 255
      %s253 = smul.addr %s252, 8
      %s254 = scalar_lea.vmem %s5, %s253
      %s255 = smul.u32 64, %s16
      %v257 = vld [vmem:[%s241] sm:$0xff]
      %v258 = vld [vmem:[%s241 + $0x8] sm:$0xff]
      %v259 = vld [vmem:[%s241 + $0x10] sm:$0xff]
      %v260 = vld [vmem:[%s241 + $0x18] sm:$0xff]
      %v261 = vld [vmem:[%s241 + $0x20] sm:$0xff]
      %v262 = vld [vmem:[%s241 + $0x28] sm:$0xff]
      %v263 = vld [vmem:[%s241 + $0x30] sm:$0xff]
      %v264 = vld [vmem:[%s241 + $0x38] sm:$0xff]
      %v265 = vld [vmem:[%s241 + $0x40] sm:$0xff]
      %v266 = vld [vmem:[%s241 + $0x48] sm:$0xff]
      %v267 = vld [vmem:[%s241 + $0x50] sm:$0xff]
      %v268 = vld [vmem:[%s241 + $0x58] sm:$0xff]
      %v269 = vld [vmem:[%s241 + $0x60] sm:$0xff]
      %v270 = vld [vmem:[%s241 + $0x68] sm:$0xff]
      %v271 = vld [vmem:[%s241 + $0x70] sm:$0xff]
      %v272 = vld [vmem:[%s241 + $0x78] sm:$0xff]
      %v273 = vld [vmem:[%s241 + $0x80] sm:$0xff]
      %v274 = vld [vmem:[%s241 + $0x88] sm:$0xff]
      %v275 = vld [vmem:[%s241 + $0x90] sm:$0xff]
      %v276 = vld [vmem:[%s241 + $0x98] sm:$0xff]
      %v277 = vld [vmem:[%s241 + $0xa0] sm:$0xff]
      %v278 = vld [vmem:[%s241 + $0xa8] sm:$0xff]
      %v279 = vld [vmem:[%s241 + $0xb0] sm:$0xff]
      %v280 = vld [vmem:[%s241 + $0xb8] sm:$0xff]
      %v281 = vld [vmem:[%s241 + $0xc0] sm:$0xff]
      %v282 = vld [vmem:[%s241 + $0xc8] sm:$0xff]
      %v283 = vld [vmem:[%s241 + $0xd0] sm:$0xff]
      %v284 = vld [vmem:[%s241 + $0xd8] sm:$0xff]
      %v285 = vld [vmem:[%s241 + $0xe0] sm:$0xff]
      %v286 = vld [vmem:[%s241 + $0xe8] sm:$0xff]
      %v287 = vld [vmem:[%s241 + $0xf0] sm:$0xff]
      %v288 = vld [vmem:[%s241 + $0xf8] sm:$0xff]
      %v289 = vld [vmem:[%s241 + $0x100] sm:$0xff]
      %v290 = vld [vmem:[%s241 + $0x108] sm:$0xff]
      %v291 = vld [vmem:[%s241 + $0x110] sm:$0xff]
      %v292 = vld [vmem:[%s241 + $0x118] sm:$0xff]
      %v293 = vld [vmem:[%s241 + $0x120] sm:$0xff]
      %v294 = vld [vmem:[%s241 + $0x128] sm:$0xff]
      %v295 = vld [vmem:[%s241 + $0x130] sm:$0xff]
      %v296 = vld [vmem:[%s241 + $0x138] sm:$0xff]
      %v297 = vld [vmem:[%s241 + $0x140] sm:$0xff]
      %v298 = vld [vmem:[%s241 + $0x148] sm:$0xff]
      %v299 = vld [vmem:[%s241 + $0x150] sm:$0xff]
      %v300 = vld [vmem:[%s241 + $0x158] sm:$0xff]
      %v301 = vld [vmem:[%s241 + $0x160] sm:$0xff]
      %v302 = vld [vmem:[%s241 + $0x168] sm:$0xff]
      %v303 = vld [vmem:[%s241 + $0x170] sm:$0xff]
      %v304 = vld [vmem:[%s241 + $0x178] sm:$0xff]
      %v305 = vld [vmem:[%s241 + $0x180] sm:$0xff]
      %v306 = vld [vmem:[%s241 + $0x188] sm:$0xff]
      %v307 = vld [vmem:[%s241 + $0x190] sm:$0xff]
      %v308 = vld [vmem:[%s241 + $0x198] sm:$0xff]
      %v309 = vld [vmem:[%s241 + $0x1a0] sm:$0xff]
      %v310 = vld [vmem:[%s241 + $0x1a8] sm:$0xff]
      %v311 = vld [vmem:[%s241 + $0x1b0] sm:$0xff]
      %v312 = vld [vmem:[%s241 + $0x1b8] sm:$0xff]
      %v313 = vld [vmem:[%s241 + $0x1c0] sm:$0xff]
      %v314 = vld [vmem:[%s241 + $0x1c8] sm:$0xff]
      %v315 = vld [vmem:[%s241 + $0x1d0] sm:$0xff]
      %v316 = vld [vmem:[%s241 + $0x1d8] sm:$0xff]
      %v317 = vld [vmem:[%s241 + $0x1e0] sm:$0xff]
      %v318 = vld [vmem:[%s241 + $0x1e8] sm:$0xff]
      %v319 = vld [vmem:[%s241 + $0x1f0] sm:$0xff]
      %v320 = vld [vmem:[%s241 + $0x1f8] sm:$0xff]
      %v321 = vld [vmem:[%s2] sm:$0xf]
      %v322 = vld [vmem:[%s2 + $0x4] sm:$0xf]
      %v323 = vld [vmem:[%s2 + $0x8] sm:$0xf]
      %v324 = vld [vmem:[%s2 + $0xc] sm:$0xf]
      %v325 = vld [vmem:[%s2 + $0x10] sm:$0xf]
      %v326 = vld [vmem:[%s2 + $0x14] sm:$0xf]
      %v327 = vld [vmem:[%s2 + $0x18] sm:$0xf]
      %v328 = vld [vmem:[%s2 + $0x1c] sm:$0xf]
      %v329 = vld [vmem:[%s2 + $0x20] sm:$0xf]
      %v330 = vld [vmem:[%s2 + $0x24] sm:$0xf]
      %v331 = vld [vmem:[%s2 + $0x28] sm:$0xf]
      %v332 = vld [vmem:[%s2 + $0x2c] sm:$0xf]
      %v333 = vld [vmem:[%s2 + $0x30] sm:$0xf]
      %v334 = vld [vmem:[%s2 + $0x34] sm:$0xf]
      %v335 = vld [vmem:[%s2 + $0x38] sm:$0xf]
      %v336 = vld [vmem:[%s2 + $0x3c] sm:$0xf]
      %v337 = vld [vmem:[%s2 + $0x40] sm:$0xf]
      %v338 = vld [vmem:[%s2 + $0x44] sm:$0xf]
      %v339 = vld [vmem:[%s248] sm:$0xff]
      %v340 = vld [vmem:[%s248 + $0x8] sm:$0xff]
      %v341 = vld [vmem:[%s248 + $0x10] sm:$0xff]
      %v342 = vld [vmem:[%s248 + $0x18] sm:$0xff]
      %v343 = vld [vmem:[%s248 + $0x20] sm:$0xff]
      %v344 = vld [vmem:[%s248 + $0x28] sm:$0xff]
      %v345 = vld [vmem:[%s248 + $0x30] sm:$0xff]
      %v346 = vld [vmem:[%s248 + $0x38] sm:$0xff]
      %v347 = vld [vmem:[%s248 + $0x40] sm:$0xff]
      %v348 = vld [vmem:[%s248 + $0x48] sm:$0xff]
      %v349 = vld [vmem:[%s248 + $0x50] sm:$0xff]
      %v350 = vld [vmem:[%s248 + $0x58] sm:$0xff]
      %v351 = vld [vmem:[%s248 + $0x60] sm:$0xff]
      %v352 = vld [vmem:[%s248 + $0x68] sm:$0xff]
      %v353 = vld [vmem:[%s248 + $0x70] sm:$0xff]
      %v354 = vld [vmem:[%s248 + $0x78] sm:$0xff]
      %v355 = vld [vmem:[%s248 + $0x80] sm:$0xff]
      %v356 = vld [vmem:[%s248 + $0x88] sm:$0xff]
      %v357 = vld [vmem:[%s248 + $0x90] sm:$0xff]
      %v358 = vld [vmem:[%s248 + $0x98] sm:$0xff]
      %v359 = vld [vmem:[%s248 + $0xa0] sm:$0xff]
      %v360 = vld [vmem:[%s248 + $0xa8] sm:$0xff]
      %v361 = vld [vmem:[%s248 + $0xb0] sm:$0xff]
      %v362 = vld [vmem:[%s248 + $0xb8] sm:$0xff]
      %v363 = vld [vmem:[%s248 + $0xc0] sm:$0xff]
      %v364 = vld [vmem:[%s248 + $0xc8] sm:$0xff]
      %v365 = vld [vmem:[%s248 + $0xd0] sm:$0xff]
      %v366 = vld [vmem:[%s248 + $0xd8] sm:$0xff]
      %v367 = vld [vmem:[%s248 + $0xe0] sm:$0xff]
      %v368 = vld [vmem:[%s248 + $0xe8] sm:$0xff]
      %v369 = vld [vmem:[%s248 + $0xf0] sm:$0xff]
      %v370 = vld [vmem:[%s248 + $0xf8] sm:$0xff]
      %v371 = vld [vmem:[%s248 + $0x100] sm:$0xff]
      %v372 = vld [vmem:[%s248 + $0x108] sm:$0xff]
      %v373 = vld [vmem:[%s248 + $0x110] sm:$0xff]
      %v374 = vld [vmem:[%s248 + $0x118] sm:$0xff]
      %v375 = vld [vmem:[%s248 + $0x120] sm:$0xff]
      %v376 = vld [vmem:[%s248 + $0x128] sm:$0xff]
      %v377 = vld [vmem:[%s248 + $0x130] sm:$0xff]
      %v378 = vld [vmem:[%s248 + $0x138] sm:$0xff]
      %v379 = vld [vmem:[%s248 + $0x140] sm:$0xff]
      %v380 = vld [vmem:[%s248 + $0x148] sm:$0xff]
      %v381 = vld [vmem:[%s248 + $0x150] sm:$0xff]
      %v382 = vld [vmem:[%s248 + $0x158] sm:$0xff]
      %v383 = vld [vmem:[%s248 + $0x160] sm:$0xff]
      %v384 = vld [vmem:[%s248 + $0x168] sm:$0xff]
      %v385 = vld [vmem:[%s248 + $0x170] sm:$0xff]
      %v386 = vld [vmem:[%s248 + $0x178] sm:$0xff]
      %v387 = vld [vmem:[%s248 + $0x180] sm:$0xff]
      %v388 = vld [vmem:[%s248 + $0x188] sm:$0xff]
      %v389 = vld [vmem:[%s248 + $0x190] sm:$0xff]
      %v390 = vld [vmem:[%s248 + $0x198] sm:$0xff]
      %v391 = vld [vmem:[%s248 + $0x1a0] sm:$0xff]
      %v392 = vld [vmem:[%s248 + $0x1a8] sm:$0xff]
      %v393 = vld [vmem:[%s248 + $0x1b0] sm:$0xff]
      %v394 = vld [vmem:[%s248 + $0x1b8] sm:$0xff]
      %v395 = vld [vmem:[%s248 + $0x1c0] sm:$0xff]
      %v396 = vld [vmem:[%s248 + $0x1c8] sm:$0xff]
      %v397 = vld [vmem:[%s248 + $0x1d0] sm:$0xff]
      %v398 = vld [vmem:[%s248 + $0x1d8] sm:$0xff]
      %v399 = vld [vmem:[%s248 + $0x1e0] sm:$0xff]
      %v400 = vld [vmem:[%s248 + $0x1e8] sm:$0xff]
      %v401 = vld [vmem:[%s248 + $0x1f0] sm:$0xff]
      %v402 = vld [vmem:[%s248 + $0x1f8] sm:$0xff]
      %v403 = vld [vmem:[%s3] sm:$0xf]
      %v404 = vld [vmem:[%s3 + $0x4] sm:$0xf]
      %v405 = vld [vmem:[%s3 + $0x8] sm:$0xf]
      %v406 = vld [vmem:[%s3 + $0xc] sm:$0xf]
      %v407 = vld [vmem:[%s3 + $0x10] sm:$0xf]
      %v408 = vld [vmem:[%s3 + $0x14] sm:$0xf]
      %v409 = vld [vmem:[%s3 + $0x18] sm:$0xf]
      %v410 = vld [vmem:[%s3 + $0x1c] sm:$0xf]
      %v411 = vld [vmem:[%s3 + $0x20] sm:$0xf]
      %v412 = vld [vmem:[%s3 + $0x24] sm:$0xf]
      %v413 = vld [vmem:[%s3 + $0x28] sm:$0xf]
      %v414 = vld [vmem:[%s3 + $0x2c] sm:$0xf]
      %v415 = vld [vmem:[%s3 + $0x30] sm:$0xf]
      %v416 = vld [vmem:[%s3 + $0x34] sm:$0xf]
      %v417 = vld [vmem:[%s3 + $0x38] sm:$0xf]
      %v418 = vld [vmem:[%s3 + $0x3c] sm:$0xf]
      %v419 = vld [vmem:[%s3 + $0x40] sm:$0xf]
      %v420 = vld [vmem:[%s3 + $0x44] sm:$0xf]
      %v485 = vunpack.c.l.b16 %v339
      %v486 = vunpack.c.h.b16 %v339
      %v487 = vunpack.c.l.b16 %v340
      %v488 = vunpack.c.h.b16 %v340
      %v489 = vunpack.c.l.b16 %v341
      %v490 = vunpack.c.h.b16 %v341
      %v491 = vunpack.c.l.b16 %v342
      %v492 = vunpack.c.h.b16 %v342
      %v493 = vunpack.c.l.b16 %v343
      %v494 = vunpack.c.h.b16 %v343
      %v495 = vunpack.c.l.b16 %v344
      %v496 = vunpack.c.h.b16 %v344
      %v497 = vunpack.c.l.b16 %v345
      %v498 = vunpack.c.h.b16 %v345
      %v499 = vunpack.c.l.b16 %v346
      %v500 = vunpack.c.h.b16 %v346
      %v501 = vunpack.c.l.b16 %v347
      %v502 = vunpack.c.h.b16 %v347
      %v503 = vunpack.c.l.b16 %v348
      %v504 = vunpack.c.h.b16 %v348
      %v505 = vunpack.c.l.b16 %v349
      %v506 = vunpack.c.h.b16 %v349
      %v507 = vunpack.c.l.b16 %v350
      %v508 = vunpack.c.h.b16 %v350
      %v509 = vunpack.c.l.b16 %v351
      %v510 = vunpack.c.h.b16 %v351
      %v511 = vunpack.c.l.b16 %v352
      %v512 = vunpack.c.h.b16 %v352
      %v513 = vunpack.c.l.b16 %v353
      %v514 = vunpack.c.h.b16 %v353
      %v515 = vunpack.c.l.b16 %v354
      %v516 = vunpack.c.h.b16 %v354
      %v517 = vunpack.c.l.b16 %v355
      %v518 = vunpack.c.h.b16 %v355
      %v519 = vunpack.c.l.b16 %v356
      %v520 = vunpack.c.h.b16 %v356
      %v521 = vunpack.c.l.b16 %v357
      %v522 = vunpack.c.h.b16 %v357
      %v523 = vunpack.c.l.b16 %v358
      %v524 = vunpack.c.h.b16 %v358
      %v525 = vunpack.c.l.b16 %v359
      %v526 = vunpack.c.h.b16 %v359
      %v527 = vunpack.c.l.b16 %v360
      %v528 = vunpack.c.h.b16 %v360
      %v529 = vunpack.c.l.b16 %v361
      %v530 = vunpack.c.h.b16 %v361
      %v531 = vunpack.c.l.b16 %v362
      %v532 = vunpack.c.h.b16 %v362
      %v533 = vunpack.c.l.b16 %v363
      %v534 = vunpack.c.h.b16 %v363
      %v535 = vunpack.c.l.b16 %v364
      %v536 = vunpack.c.h.b16 %v364
      %v537 = vunpack.c.l.b16 %v365
      %v538 = vunpack.c.h.b16 %v365
      %v539 = vunpack.c.l.b16 %v366
      %v540 = vunpack.c.h.b16 %v366
      %v541 = vunpack.c.l.b16 %v367
      %v542 = vunpack.c.h.b16 %v367
      %v543 = vunpack.c.l.b16 %v368
      %v544 = vunpack.c.h.b16 %v368
      %v545 = vunpack.c.l.b16 %v369
      %v546 = vunpack.c.h.b16 %v369
      %v547 = vunpack.c.l.b16 %v370
      %v548 = vunpack.c.h.b16 %v370
      %v549 = vunpack.c.l.b16 %v371
      %v550 = vunpack.c.h.b16 %v371
      %v551 = vunpack.c.l.b16 %v372
      %v552 = vunpack.c.h.b16 %v372
      %v553 = vunpack.c.l.b16 %v373
      %v554 = vunpack.c.h.b16 %v373
      %v555 = vunpack.c.l.b16 %v374
      %v556 = vunpack.c.h.b16 %v374
      %v557 = vunpack.c.l.b16 %v375
      %v558 = vunpack.c.h.b16 %v375
      %v559 = vunpack.c.l.b16 %v376
      %v560 = vunpack.c.h.b16 %v376
      %v561 = vunpack.c.l.b16 %v377
      %v562 = vunpack.c.h.b16 %v377
      %v563 = vunpack.c.l.b16 %v378
      %v564 = vunpack.c.h.b16 %v378
      %v565 = vunpack.c.l.b16 %v379
      %v566 = vunpack.c.h.b16 %v379
      %v567 = vunpack.c.l.b16 %v380
      %v568 = vunpack.c.h.b16 %v380
      %v569 = vunpack.c.l.b16 %v381
      %v570 = vunpack.c.h.b16 %v381
      %v571 = vunpack.c.l.b16 %v382
      %v572 = vunpack.c.h.b16 %v382
      %v573 = vunpack.c.l.b16 %v383
      %v574 = vunpack.c.h.b16 %v383
      %v575 = vunpack.c.l.b16 %v384
      %v576 = vunpack.c.h.b16 %v384
      %v577 = vunpack.c.l.b16 %v385
      %v578 = vunpack.c.h.b16 %v385
      %v579 = vunpack.c.l.b16 %v386
      %v580 = vunpack.c.h.b16 %v386
      %v581 = vunpack.c.l.b16 %v387
      %v582 = vunpack.c.h.b16 %v387
      %v583 = vunpack.c.l.b16 %v388
      %v584 = vunpack.c.h.b16 %v388
      %v585 = vunpack.c.l.b16 %v389
      %v586 = vunpack.c.h.b16 %v389
      %v587 = vunpack.c.l.b16 %v390
      %v588 = vunpack.c.h.b16 %v390
      %v589 = vunpack.c.l.b16 %v391
      %v590 = vunpack.c.h.b16 %v391
      %v591 = vunpack.c.l.b16 %v392
      %v592 = vunpack.c.h.b16 %v392
      %v593 = vunpack.c.l.b16 %v393
      %v594 = vunpack.c.h.b16 %v393
      %v595 = vunpack.c.l.b16 %v394
      %v596 = vunpack.c.h.b16 %v394
      %v597 = vunpack.c.l.b16 %v395
      %v598 = vunpack.c.h.b16 %v395
      %v599 = vunpack.c.l.b16 %v396
      %v600 = vunpack.c.h.b16 %v396
      %v601 = vunpack.c.l.b16 %v397
      %v602 = vunpack.c.h.b16 %v397
      %v603 = vunpack.c.l.b16 %v398
      %v604 = vunpack.c.h.b16 %v398
      %v605 = vunpack.c.l.b16 %v399
      %v606 = vunpack.c.h.b16 %v399
      %v607 = vunpack.c.l.b16 %v400
      %v608 = vunpack.c.h.b16 %v400
      %v609 = vunpack.c.l.b16 %v401
      %v610 = vunpack.c.h.b16 %v401
      %v611 = vunpack.c.l.b16 %v402
      %v612 = vunpack.c.h.b16 %v402
      %v613 = vpack.c.b16 %v487, %v485
      %v614 = vpack.c.b16 %v488, %v486
      %v615 = vpack.c.b16 %v491, %v489
      %v616 = vpack.c.b16 %v492, %v490
      %v617 = vpack.c.b16 %v495, %v493
      %v618 = vpack.c.b16 %v496, %v494
      %v619 = vpack.c.b16 %v499, %v497
      %v620 = vpack.c.b16 %v500, %v498
      %v621 = vpack.c.b16 %v503, %v501
      %v622 = vpack.c.b16 %v504, %v502
      %v623 = vpack.c.b16 %v507, %v505
      %v624 = vpack.c.b16 %v508, %v506
      %v625 = vpack.c.b16 %v511, %v509
      %v626 = vpack.c.b16 %v512, %v510
      %v627 = vpack.c.b16 %v515, %v513
      %v628 = vpack.c.b16 %v516, %v514
      %v629 = vpack.c.b16 %v519, %v517
      %v630 = vpack.c.b16 %v520, %v518
      %v631 = vpack.c.b16 %v523, %v521
      %v632 = vpack.c.b16 %v524, %v522
      %v633 = vpack.c.b16 %v527, %v525
      %v634 = vpack.c.b16 %v528, %v526
      %v635 = vpack.c.b16 %v531, %v529
      %v636 = vpack.c.b16 %v532, %v530
      %v637 = vpack.c.b16 %v535, %v533
      %v638 = vpack.c.b16 %v536, %v534
      %v639 = vpack.c.b16 %v539, %v537
      %v640 = vpack.c.b16 %v540, %v538
      %v641 = vpack.c.b16 %v543, %v541
      %v642 = vpack.c.b16 %v544, %v542
      %v643 = vpack.c.b16 %v547, %v545
      %v644 = vpack.c.b16 %v548, %v546
      %v645 = vpack.c.b16 %v551, %v549
      %v646 = vpack.c.b16 %v552, %v550
      %v647 = vpack.c.b16 %v555, %v553
      %v648 = vpack.c.b16 %v556, %v554
      %v649 = vpack.c.b16 %v559, %v557
      %v650 = vpack.c.b16 %v560, %v558
      %v651 = vpack.c.b16 %v563, %v561
      %v652 = vpack.c.b16 %v564, %v562
      %v653 = vpack.c.b16 %v567, %v565
      %v654 = vpack.c.b16 %v568, %v566
      %v655 = vpack.c.b16 %v571, %v569
      %v656 = vpack.c.b16 %v572, %v570
      %v657 = vpack.c.b16 %v575, %v573
      %v658 = vpack.c.b16 %v576, %v574
      %v659 = vpack.c.b16 %v579, %v577
      %v660 = vpack.c.b16 %v580, %v578
      %v661 = vpack.c.b16 %v583, %v581
      %v662 = vpack.c.b16 %v584, %v582
      %v663 = vpack.c.b16 %v587, %v585
      %v664 = vpack.c.b16 %v588, %v586
      %v665 = vpack.c.b16 %v591, %v589
      %v666 = vpack.c.b16 %v592, %v590
      %v667 = vpack.c.b16 %v595, %v593
      %v668 = vpack.c.b16 %v596, %v594
      %v669 = vpack.c.b16 %v599, %v597
      %v670 = vpack.c.b16 %v600, %v598
      %v671 = vpack.c.b16 %v603, %v601
      %v672 = vpack.c.b16 %v604, %v602
      %v673 = vpack.c.b16 %v607, %v605
      %v674 = vpack.c.b16 %v608, %v606
      %v675 = vpack.c.b16 %v611, %v609
      %v676 = vpack.c.b16 %v612, %v610
      %v727 = vunpack.c.l.b16 %v403
      %v728 = vunpack.c.l.b16 %v404
      %v729 = vunpack.c.l.b16 %v405
      %v730 = vunpack.c.l.b16 %v406
      %v731 = vunpack.c.l.b16 %v407
      %v732 = vunpack.c.l.b16 %v408
      %v733 = vunpack.c.l.b16 %v409
      %v734 = vunpack.c.l.b16 %v410
      %v735 = vunpack.c.l.b16 %v411
      %v736 = vunpack.c.l.b16 %v412
      %v737 = vunpack.c.l.b16 %v413
      %v738 = vunpack.c.l.b16 %v414
      %v739 = vunpack.c.l.b16 %v415
      %v740 = vunpack.c.l.b16 %v416
      %v741 = vunpack.c.l.b16 %v417
      %v742 = vunpack.c.l.b16 %v418
      %v743 = vunpack.c.l.b16 %v419
      %v744 = vunpack.c.l.b16 %v420
      %v745 = vpack.c.b16 %v728, %v727
      %v746 = vpack.c.b16 %v730, %v729
      %v747 = vpack.c.b16 %v732, %v731
      %v748 = vpack.c.b16 %v734, %v733
      %v749 = vpack.c.b16 %v736, %v735
      %v750 = vpack.c.b16 %v738, %v737
      %v751 = vpack.c.b16 %v740, %v739
      %v752 = vpack.c.b16 %v742, %v741
      %v753 = vpack.c.b16 %v744, %v743
      %vm763 = vcmask 130048
      %v765 = vsel %vm763, %v614, 0
      %v768 = vsel %vm763, %v616, 0
      %v771 = vsel %vm763, %v618, 0
      %v774 = vsel %vm763, %v620, 0
      %v777 = vsel %vm763, %v622, 0
      %v780 = vsel %vm763, %v624, 0
      %v783 = vsel %vm763, %v626, 0
      %v786 = vsel %vm763, %v628, 0
      %v789 = vsel %vm763, %v630, 0
      %v792 = vsel %vm763, %v632, 0
      %v795 = vsel %vm763, %v634, 0
      %v798 = vsel %vm763, %v636, 0
      %v801 = vsel %vm763, %v638, 0
      %v804 = vsel %vm763, %v640, 0
      %v807 = vsel %vm763, %v642, 0
      %v810 = vsel %vm763, %v644, 0
      %v813 = vsel %vm763, %v646, 0
      %v816 = vsel %vm763, %v648, 0
      %v819 = vsel %vm763, %v650, 0
      %v822 = vsel %vm763, %v652, 0
      %v825 = vsel %vm763, %v654, 0
      %v828 = vsel %vm763, %v656, 0
      %v831 = vsel %vm763, %v658, 0
      %v834 = vsel %vm763, %v660, 0
      %v837 = vsel %vm763, %v662, 0
      %v840 = vsel %vm763, %v664, 0
      %v843 = vsel %vm763, %v666, 0
      %v846 = vsel %vm763, %v668, 0
      %v849 = vsel %vm763, %v670, 0
      %v852 = vsel %vm763, %v672, 0
      %v855 = vsel %vm763, %v674, 0
      %v858 = vsel %vm763, %v676, 0
      %860 = vmatpush.bf16.msra.mxu0 %v752
      %861 = vmatpush.bf16.msra.mxu0 %v751
      %862 = vmatpush.bf16.msra.mxu0 %v750
      %863 = vmatpush.bf16.msra.mxu0 %v749
      %864 = vmatpush.bf16.msra.mxu0 %v748
      %865 = vmatpush.bf16.msra.mxu0 %v747
      %866 = vmatpush.bf16.msra.mxu0 %v746
      %867 = vmatpush.bf16.msra.mxu0 %v745
      %868 = vmatmul.bf16.gmra.mxu0 %v613
      %v869 = vpop.f32.mrf.mxu0
      %v870 = vadd.f32 0.0, %v869
      %v871 = vpop.f32.mrf.mxu0
      %v872 = vadd.f32 0.0, %v871
      %873 = vmatmul.bf16.gmra.mxu0 %v615
      %v874 = vpop.f32.mrf.mxu0
      %v875 = vadd.f32 0.0, %v874
      %v876 = vpop.f32.mrf.mxu0
      %v877 = vadd.f32 0.0, %v876
      %878 = vmatmul.bf16.gmra.mxu0 %v617
      %v879 = vpop.f32.mrf.mxu0
      %v880 = vadd.f32 0.0, %v879
      %v881 = vpop.f32.mrf.mxu0
      %v882 = vadd.f32 0.0, %v881
      %883 = vmatmul.bf16.gmra.mxu0 %v619
      %v884 = vpop.f32.mrf.mxu0
      %v885 = vadd.f32 0.0, %v884
      %v886 = vpop.f32.mrf.mxu0
      %v887 = vadd.f32 0.0, %v886
      %888 = vmatmul.bf16.gmra.mxu0 %v621
      %v889 = vpop.f32.mrf.mxu0
      %v890 = vadd.f32 0.0, %v889
      %v891 = vpop.f32.mrf.mxu0
      %v892 = vadd.f32 0.0, %v891
      %893 = vmatmul.bf16.gmra.mxu0 %v623
      %v894 = vpop.f32.mrf.mxu0
      %v895 = vadd.f32 0.0, %v894
      %v896 = vpop.f32.mrf.mxu0
      %v897 = vadd.f32 0.0, %v896
      %898 = vmatmul.bf16.gmra.mxu0 %v625
      %v899 = vpop.f32.mrf.mxu0
      %v900 = vadd.f32 0.0, %v899
      %v901 = vpop.f32.mrf.mxu0
      %v902 = vadd.f32 0.0, %v901
      %903 = vmatmul.bf16.gmra.mxu0 %v627
      %v904 = vpop.f32.mrf.mxu0
      %v905 = vadd.f32 0.0, %v904
      %v906 = vpop.f32.mrf.mxu0
      %v907 = vadd.f32 0.0, %v906
      %908 = vmatmul.bf16.gmra.mxu0 %v629
      %v909 = vpop.f32.mrf.mxu0
      %v910 = vadd.f32 0.0, %v909
      %v911 = vpop.f32.mrf.mxu0
      %v912 = vadd.f32 0.0, %v911
      %913 = vmatmul.bf16.gmra.mxu0 %v631
      %v914 = vpop.f32.mrf.mxu0
      %v915 = vadd.f32 0.0, %v914
      %v916 = vpop.f32.mrf.mxu0
      %v917 = vadd.f32 0.0, %v916
      %918 = vmatmul.bf16.gmra.mxu0 %v633
      %v919 = vpop.f32.mrf.mxu0
      %v920 = vadd.f32 0.0, %v919
      %v921 = vpop.f32.mrf.mxu0
      %v922 = vadd.f32 0.0, %v921
      %923 = vmatmul.bf16.gmra.mxu0 %v635
      %v924 = vpop.f32.mrf.mxu0
      %v925 = vadd.f32 0.0, %v924
      %v926 = vpop.f32.mrf.mxu0
      %v927 = vadd.f32 0.0, %v926
      %928 = vmatmul.bf16.gmra.mxu0 %v637
      %v929 = vpop.f32.mrf.mxu0
      %v930 = vadd.f32 0.0, %v929
      %v931 = vpop.f32.mrf.mxu0
      %v932 = vadd.f32 0.0, %v931
      %933 = vmatmul.bf16.gmra.mxu0 %v639
      %v934 = vpop.f32.mrf.mxu0
      %v935 = vadd.f32 0.0, %v934
      %v936 = vpop.f32.mrf.mxu0
      %v937 = vadd.f32 0.0, %v936
      %938 = vmatmul.bf16.gmra.mxu0 %v641
      %v939 = vpop.f32.mrf.mxu0
      %v940 = vadd.f32 0.0, %v939
      %v941 = vpop.f32.mrf.mxu0
      %v942 = vadd.f32 0.0, %v941
      %943 = vmatmul.bf16.gmra.mxu0 %v643
      %v944 = vpop.f32.mrf.mxu0
      %v945 = vadd.f32 0.0, %v944
      %v946 = vpop.f32.mrf.mxu0
      %v947 = vadd.f32 0.0, %v946
      %948 = vmatmul.bf16.gmra.mxu0 %v645
      %v949 = vpop.f32.mrf.mxu0
      %v950 = vadd.f32 0.0, %v949
      %v951 = vpop.f32.mrf.mxu0
      %v952 = vadd.f32 0.0, %v951
      %953 = vmatmul.bf16.gmra.mxu0 %v647
      %v954 = vpop.f32.mrf.mxu0
      %v955 = vadd.f32 0.0, %v954
      %v956 = vpop.f32.mrf.mxu0
      %v957 = vadd.f32 0.0, %v956
      %958 = vmatmul.bf16.gmra.mxu0 %v649
      %v959 = vpop.f32.mrf.mxu0
      %v960 = vadd.f32 0.0, %v959
      %v961 = vpop.f32.mrf.mxu0
      %v962 = vadd.f32 0.0, %v961
      %963 = vmatmul.bf16.gmra.mxu0 %v651
      %v964 = vpop.f32.mrf.mxu0
      %v965 = vadd.f32 0.0, %v964
      %v966 = vpop.f32.mrf.mxu0
      %v967 = vadd.f32 0.0, %v966
      %968 = vmatmul.bf16.gmra.mxu0 %v653
      %v969 = vpop.f32.mrf.mxu0
      %v970 = vadd.f32 0.0, %v969
      %v971 = vpop.f32.mrf.mxu0
      %v972 = vadd.f32 0.0, %v971
      %973 = vmatmul.bf16.gmra.mxu0 %v655
      %v974 = vpop.f32.mrf.mxu0
      %v975 = vadd.f32 0.0, %v974
      %v976 = vpop.f32.mrf.mxu0
      %v977 = vadd.f32 0.0, %v976
      %978 = vmatmul.bf16.gmra.mxu0 %v657
      %v979 = vpop.f32.mrf.mxu0
      %v980 = vadd.f32 0.0, %v979
      %v981 = vpop.f32.mrf.mxu0
      %v982 = vadd.f32 0.0, %v981
      %983 = vmatmul.bf16.gmra.mxu0 %v659
      %v984 = vpop.f32.mrf.mxu0
      %v985 = vadd.f32 0.0, %v984
      %v986 = vpop.f32.mrf.mxu0
      %v987 = vadd.f32 0.0, %v986
      %988 = vmatmul.bf16.gmra.mxu0 %v661
      %v989 = vpop.f32.mrf.mxu0
      %v990 = vadd.f32 0.0, %v989
      %v991 = vpop.f32.mrf.mxu0
      %v992 = vadd.f32 0.0, %v991
      %993 = vmatmul.bf16.gmra.mxu0 %v663
      %v994 = vpop.f32.mrf.mxu0
      %v995 = vadd.f32 0.0, %v994
      %v996 = vpop.f32.mrf.mxu0
      %v997 = vadd.f32 0.0, %v996
      %998 = vmatmul.bf16.gmra.mxu0 %v665
      %v999 = vpop.f32.mrf.mxu0
      %v1000 = vadd.f32 0.0, %v999
      %v1001 = vpop.f32.mrf.mxu0
      %v1002 = vadd.f32 0.0, %v1001
      %1003 = vmatmul.bf16.gmra.mxu0 %v667
      %v1004 = vpop.f32.mrf.mxu0
      %v1005 = vadd.f32 0.0, %v1004
      %v1006 = vpop.f32.mrf.mxu0
      %v1007 = vadd.f32 0.0, %v1006
      %1008 = vmatmul.bf16.gmra.mxu0 %v669
      %v1009 = vpop.f32.mrf.mxu0
      %v1010 = vadd.f32 0.0, %v1009
      %v1011 = vpop.f32.mrf.mxu0
      %v1012 = vadd.f32 0.0, %v1011
      %1013 = vmatmul.bf16.gmra.mxu0 %v671
      %v1014 = vpop.f32.mrf.mxu0
      %v1015 = vadd.f32 0.0, %v1014
      %v1016 = vpop.f32.mrf.mxu0
      %v1017 = vadd.f32 0.0, %v1016
      %1018 = vmatmul.bf16.gmra.mxu0 %v673
      %v1019 = vpop.f32.mrf.mxu0
      %v1020 = vadd.f32 0.0, %v1019
      %v1021 = vpop.f32.mrf.mxu0
      %v1022 = vadd.f32 0.0, %v1021
      %1023 = vmatmul.bf16.gmra.mxu0 %v675
      %v1024 = vpop.f32.mrf.mxu0
      %v1025 = vadd.f32 0.0, %v1024
      %v1026 = vpop.f32.mrf.mxu0
      %v1027 = vadd.f32 0.0, %v1026
      %1028 = vdwg.mxu0
      %1029 = vmatpush.bf16.msra.mxu0 0
      %1030 = vmatpush.bf16.msra.mxu0 0
      %1031 = vmatpush.bf16.msra.mxu0 0
      %1032 = vmatpush.bf16.msra.mxu0 0
      %1033 = vmatpush.bf16.msra.mxu0 0
      %1034 = vmatpush.bf16.msra.mxu0 0
      %1035 = vmatpush.bf16.msra.mxu0 0
      %1036 = vmatpush.bf16.msra.mxu0 %v753
      %1037 = vmatmul.bf16.gmra.mxu0 %v765
      %v1038 = vpop.f32.mrf.mxu0
      %v1039 = vadd.f32 %v870, %v1038
      %v1040 = vpop.f32.mrf.mxu0
      %v1041 = vadd.f32 %v872, %v1040
      %1042 = vmatmul.bf16.gmra.mxu0 %v768
      %v1043 = vpop.f32.mrf.mxu0
      %v1044 = vadd.f32 %v875, %v1043
      %v1045 = vpop.f32.mrf.mxu0
      %v1046 = vadd.f32 %v877, %v1045
      %1047 = vmatmul.bf16.gmra.mxu0 %v771
      %v1048 = vpop.f32.mrf.mxu0
      %v1049 = vadd.f32 %v880, %v1048
      %v1050 = vpop.f32.mrf.mxu0
      %v1051 = vadd.f32 %v882, %v1050
      %1052 = vmatmul.bf16.gmra.mxu0 %v774
      %v1053 = vpop.f32.mrf.mxu0
      %v1054 = vadd.f32 %v885, %v1053
      %v1055 = vpop.f32.mrf.mxu0
      %v1056 = vadd.f32 %v887, %v1055
      %1057 = vmatmul.bf16.gmra.mxu0 %v777
      %v1058 = vpop.f32.mrf.mxu0
      %v1059 = vadd.f32 %v890, %v1058
      %v1060 = vpop.f32.mrf.mxu0
      %v1061 = vadd.f32 %v892, %v1060
      %1062 = vmatmul.bf16.gmra.mxu0 %v780
      %v1063 = vpop.f32.mrf.mxu0
      %v1064 = vadd.f32 %v895, %v1063
      %v1065 = vpop.f32.mrf.mxu0
      %v1066 = vadd.f32 %v897, %v1065
      %1067 = vmatmul.bf16.gmra.mxu0 %v783
      %v1068 = vpop.f32.mrf.mxu0
      %v1069 = vadd.f32 %v900, %v1068
      %v1070 = vpop.f32.mrf.mxu0
      %v1071 = vadd.f32 %v902, %v1070
      %1072 = vmatmul.bf16.gmra.mxu0 %v786
      %v1073 = vpop.f32.mrf.mxu0
      %v1074 = vadd.f32 %v905, %v1073
      %v1075 = vpop.f32.mrf.mxu0
      %v1076 = vadd.f32 %v907, %v1075
      %1077 = vmatmul.bf16.gmra.mxu0 %v789
      %v1078 = vpop.f32.mrf.mxu0
      %v1079 = vadd.f32 %v910, %v1078
      %v1080 = vpop.f32.mrf.mxu0
      %v1081 = vadd.f32 %v912, %v1080
      %1082 = vmatmul.bf16.gmra.mxu0 %v792
      %v1083 = vpop.f32.mrf.mxu0
      %v1084 = vadd.f32 %v915, %v1083
      %v1085 = vpop.f32.mrf.mxu0
      %v1086 = vadd.f32 %v917, %v1085
      %1087 = vmatmul.bf16.gmra.mxu0 %v795
      %v1088 = vpop.f32.mrf.mxu0
      %v1089 = vadd.f32 %v920, %v1088
      %v1090 = vpop.f32.mrf.mxu0
      %v1091 = vadd.f32 %v922, %v1090
      %1092 = vmatmul.bf16.gmra.mxu0 %v798
      %v1093 = vpop.f32.mrf.mxu0
      %v1094 = vadd.f32 %v925, %v1093
      %v1095 = vpop.f32.mrf.mxu0
      %v1096 = vadd.f32 %v927, %v1095
      %1097 = vmatmul.bf16.gmra.mxu0 %v801
      %v1098 = vpop.f32.mrf.mxu0
      %v1099 = vadd.f32 %v930, %v1098
      %v1100 = vpop.f32.mrf.mxu0
      %v1101 = vadd.f32 %v932, %v1100
      %1102 = vmatmul.bf16.gmra.mxu0 %v804
      %v1103 = vpop.f32.mrf.mxu0
      %v1104 = vadd.f32 %v935, %v1103
      %v1105 = vpop.f32.mrf.mxu0
      %v1106 = vadd.f32 %v937, %v1105
      %1107 = vmatmul.bf16.gmra.mxu0 %v807
      %v1108 = vpop.f32.mrf.mxu0
      %v1109 = vadd.f32 %v940, %v1108
      %v1110 = vpop.f32.mrf.mxu0
      %v1111 = vadd.f32 %v942, %v1110
      %1112 = vmatmul.bf16.gmra.mxu0 %v810
      %v1113 = vpop.f32.mrf.mxu0
      %v1114 = vadd.f32 %v945, %v1113
      %v1115 = vpop.f32.mrf.mxu0
      %v1116 = vadd.f32 %v947, %v1115
      %1117 = vmatmul.bf16.gmra.mxu0 %v813
      %v1118 = vpop.f32.mrf.mxu0
      %v1119 = vadd.f32 %v950, %v1118
      %v1120 = vpop.f32.mrf.mxu0
      %v1121 = vadd.f32 %v952, %v1120
      %1122 = vmatmul.bf16.gmra.mxu0 %v816
      %v1123 = vpop.f32.mrf.mxu0
      %v1124 = vadd.f32 %v955, %v1123
      %v1125 = vpop.f32.mrf.mxu0
      %v1126 = vadd.f32 %v957, %v1125
      %1127 = vmatmul.bf16.gmra.mxu0 %v819
      %v1128 = vpop.f32.mrf.mxu0
      %v1129 = vadd.f32 %v960, %v1128
      %v1130 = vpop.f32.mrf.mxu0
      %v1131 = vadd.f32 %v962, %v1130
      %1132 = vmatmul.bf16.gmra.mxu0 %v822
      %v1133 = vpop.f32.mrf.mxu0
      %v1134 = vadd.f32 %v965, %v1133
      %v1135 = vpop.f32.mrf.mxu0
      %v1136 = vadd.f32 %v967, %v1135
      %1137 = vmatmul.bf16.gmra.mxu0 %v825
      %v1138 = vpop.f32.mrf.mxu0
      %v1139 = vadd.f32 %v970, %v1138
      %v1140 = vpop.f32.mrf.mxu0
      %v1141 = vadd.f32 %v972, %v1140
      %1142 = vmatmul.bf16.gmra.mxu0 %v828
      %v1143 = vpop.f32.mrf.mxu0
      %v1144 = vadd.f32 %v975, %v1143
      %v1145 = vpop.f32.mrf.mxu0
      %v1146 = vadd.f32 %v977, %v1145
      %1147 = vmatmul.bf16.gmra.mxu0 %v831
      %v1148 = vpop.f32.mrf.mxu0
      %v1149 = vadd.f32 %v980, %v1148
      %v1150 = vpop.f32.mrf.mxu0
      %v1151 = vadd.f32 %v982, %v1150
      %1152 = vmatmul.bf16.gmra.mxu0 %v834
      %v1153 = vpop.f32.mrf.mxu0
      %v1154 = vadd.f32 %v985, %v1153
      %v1155 = vpop.f32.mrf.mxu0
      %v1156 = vadd.f32 %v987, %v1155
      %1157 = vmatmul.bf16.gmra.mxu0 %v837
      %v1158 = vpop.f32.mrf.mxu0
      %v1159 = vadd.f32 %v990, %v1158
      %v1160 = vpop.f32.mrf.mxu0
      %v1161 = vadd.f32 %v992, %v1160
      %1162 = vmatmul.bf16.gmra.mxu0 %v840
      %v1163 = vpop.f32.mrf.mxu0
      %v1164 = vadd.f32 %v995, %v1163
      %v1165 = vpop.f32.mrf.mxu0
      %v1166 = vadd.f32 %v997, %v1165
      %1167 = vmatmul.bf16.gmra.mxu0 %v843
      %v1168 = vpop.f32.mrf.mxu0
      %v1169 = vadd.f32 %v1000, %v1168
      %v1170 = vpop.f32.mrf.mxu0
      %v1171 = vadd.f32 %v1002, %v1170
      %1172 = vmatmul.bf16.gmra.mxu0 %v846
      %v1173 = vpop.f32.mrf.mxu0
      %v1174 = vadd.f32 %v1005, %v1173
      %v1175 = vpop.f32.mrf.mxu0
      %v1176 = vadd.f32 %v1007, %v1175
      %1177 = vmatmul.bf16.gmra.mxu0 %v849
      %v1178 = vpop.f32.mrf.mxu0
      %v1179 = vadd.f32 %v1010, %v1178
      %v1180 = vpop.f32.mrf.mxu0
      %v1181 = vadd.f32 %v1012, %v1180
      %1182 = vmatmul.bf16.gmra.mxu0 %v852
      %v1183 = vpop.f32.mrf.mxu0
      %v1184 = vadd.f32 %v1015, %v1183
      %v1185 = vpop.f32.mrf.mxu0
      %v1186 = vadd.f32 %v1017, %v1185
      %1187 = vmatmul.bf16.gmra.mxu0 %v855
      %v1188 = vpop.f32.mrf.mxu0
      %v1189 = vadd.f32 %v1020, %v1188
      %v1190 = vpop.f32.mrf.mxu0
      %v1191 = vadd.f32 %v1022, %v1190
      %1192 = vmatmul.bf16.gmra.mxu0 %v858
      %v1193 = vpop.f32.mrf.mxu0
      %v1194 = vadd.f32 %v1025, %v1193
      %v1195 = vpop.f32.mrf.mxu0
      %v1196 = vadd.f32 %v1027, %v1195
      %1197 = vdwg.mxu0
      %v1262 = vunpack.c.l.b16 %v257
      %v1263 = vunpack.c.h.b16 %v257
      %v1264 = vunpack.c.l.b16 %v258
      %v1265 = vunpack.c.h.b16 %v258
      %v1266 = vunpack.c.l.b16 %v259
      %v1267 = vunpack.c.h.b16 %v259
      %v1268 = vunpack.c.l.b16 %v260
      %v1269 = vunpack.c.h.b16 %v260
      %v1270 = vunpack.c.l.b16 %v261
      %v1271 = vunpack.c.h.b16 %v261
      %v1272 = vunpack.c.l.b16 %v262
      %v1273 = vunpack.c.h.b16 %v262
      %v1274 = vunpack.c.l.b16 %v263
      %v1275 = vunpack.c.h.b16 %v263
      %v1276 = vunpack.c.l.b16 %v264
      %v1277 = vunpack.c.h.b16 %v264
      %v1278 = vunpack.c.l.b16 %v265
      %v1279 = vunpack.c.h.b16 %v265
      %v1280 = vunpack.c.l.b16 %v266
      %v1281 = vunpack.c.h.b16 %v266
      %v1282 = vunpack.c.l.b16 %v267
      %v1283 = vunpack.c.h.b16 %v267
      %v1284 = vunpack.c.l.b16 %v268
      %v1285 = vunpack.c.h.b16 %v268
      %v1286 = vunpack.c.l.b16 %v269
      %v1287 = vunpack.c.h.b16 %v269
      %v1288 = vunpack.c.l.b16 %v270
      %v1289 = vunpack.c.h.b16 %v270
      %v1290 = vunpack.c.l.b16 %v271
      %v1291 = vunpack.c.h.b16 %v271
      %v1292 = vunpack.c.l.b16 %v272
      %v1293 = vunpack.c.h.b16 %v272
      %v1294 = vunpack.c.l.b16 %v273
      %v1295 = vunpack.c.h.b16 %v273
      %v1296 = vunpack.c.l.b16 %v274
      %v1297 = vunpack.c.h.b16 %v274
      %v1298 = vunpack.c.l.b16 %v275
      %v1299 = vunpack.c.h.b16 %v275
      %v1300 = vunpack.c.l.b16 %v276
      %v1301 = vunpack.c.h.b16 %v276
      %v1302 = vunpack.c.l.b16 %v277
      %v1303 = vunpack.c.h.b16 %v277
      %v1304 = vunpack.c.l.b16 %v278
      %v1305 = vunpack.c.h.b16 %v278
      %v1306 = vunpack.c.l.b16 %v279
      %v1307 = vunpack.c.h.b16 %v279
      %v1308 = vunpack.c.l.b16 %v280
      %v1309 = vunpack.c.h.b16 %v280
      %v1310 = vunpack.c.l.b16 %v281
      %v1311 = vunpack.c.h.b16 %v281
      %v1312 = vunpack.c.l.b16 %v282
      %v1313 = vunpack.c.h.b16 %v282
      %v1314 = vunpack.c.l.b16 %v283
      %v1315 = vunpack.c.h.b16 %v283
      %v1316 = vunpack.c.l.b16 %v284
      %v1317 = vunpack.c.h.b16 %v284
      %v1318 = vunpack.c.l.b16 %v285
      %v1319 = vunpack.c.h.b16 %v285
      %v1320 = vunpack.c.l.b16 %v286
      %v1321 = vunpack.c.h.b16 %v286
      %v1322 = vunpack.c.l.b16 %v287
      %v1323 = vunpack.c.h.b16 %v287
      %v1324 = vunpack.c.l.b16 %v288
      %v1325 = vunpack.c.h.b16 %v288
      %v1326 = vunpack.c.l.b16 %v289
      %v1327 = vunpack.c.h.b16 %v289
      %v1328 = vunpack.c.l.b16 %v290
      %v1329 = vunpack.c.h.b16 %v290
      %v1330 = vunpack.c.l.b16 %v291
      %v1331 = vunpack.c.h.b16 %v291
      %v1332 = vunpack.c.l.b16 %v292
      %v1333 = vunpack.c.h.b16 %v292
      %v1334 = vunpack.c.l.b16 %v293
      %v1335 = vunpack.c.h.b16 %v293
      %v1336 = vunpack.c.l.b16 %v294
      %v1337 = vunpack.c.h.b16 %v294
      %v1338 = vunpack.c.l.b16 %v295
      %v1339 = vunpack.c.h.b16 %v295
      %v1340 = vunpack.c.l.b16 %v296
      %v1341 = vunpack.c.h.b16 %v296
      %v1342 = vunpack.c.l.b16 %v297
      %v1343 = vunpack.c.h.b16 %v297
      %v1344 = vunpack.c.l.b16 %v298
      %v1345 = vunpack.c.h.b16 %v298
      %v1346 = vunpack.c.l.b16 %v299
      %v1347 = vunpack.c.h.b16 %v299
      %v1348 = vunpack.c.l.b16 %v300
      %v1349 = vunpack.c.h.b16 %v300
      %v1350 = vunpack.c.l.b16 %v301
      %v1351 = vunpack.c.h.b16 %v301
      %v1352 = vunpack.c.l.b16 %v302
      %v1353 = vunpack.c.h.b16 %v302
      %v1354 = vunpack.c.l.b16 %v303
      %v1355 = vunpack.c.h.b16 %v303
      %v1356 = vunpack.c.l.b16 %v304
      %v1357 = vunpack.c.h.b16 %v304
      %v1358 = vunpack.c.l.b16 %v305
      %v1359 = vunpack.c.h.b16 %v305
      %v1360 = vunpack.c.l.b16 %v306
      %v1361 = vunpack.c.h.b16 %v306
      %v1362 = vunpack.c.l.b16 %v307
      %v1363 = vunpack.c.h.b16 %v307
      %v1364 = vunpack.c.l.b16 %v308
      %v1365 = vunpack.c.h.b16 %v308
      %v1366 = vunpack.c.l.b16 %v309
      %v1367 = vunpack.c.h.b16 %v309
      %v1368 = vunpack.c.l.b16 %v310
      %v1369 = vunpack.c.h.b16 %v310
      %v1370 = vunpack.c.l.b16 %v311
      %v1371 = vunpack.c.h.b16 %v311
      %v1372 = vunpack.c.l.b16 %v312
      %v1373 = vunpack.c.h.b16 %v312
      %v1374 = vunpack.c.l.b16 %v313
      %v1375 = vunpack.c.h.b16 %v313
      %v1376 = vunpack.c.l.b16 %v314
      %v1377 = vunpack.c.h.b16 %v314
      %v1378 = vunpack.c.l.b16 %v315
      %v1379 = vunpack.c.h.b16 %v315
      %v1380 = vunpack.c.l.b16 %v316
      %v1381 = vunpack.c.h.b16 %v316
      %v1382 = vunpack.c.l.b16 %v317
      %v1383 = vunpack.c.h.b16 %v317
      %v1384 = vunpack.c.l.b16 %v318
      %v1385 = vunpack.c.h.b16 %v318
      %v1386 = vunpack.c.l.b16 %v319
      %v1387 = vunpack.c.h.b16 %v319
      %v1388 = vunpack.c.l.b16 %v320
      %v1389 = vunpack.c.h.b16 %v320
      %v1390 = vpack.c.b16 %v1264, %v1262
      %v1391 = vpack.c.b16 %v1265, %v1263
      %v1392 = vpack.c.b16 %v1268, %v1266
      %v1393 = vpack.c.b16 %v1269, %v1267
      %v1394 = vpack.c.b16 %v1272, %v1270
      %v1395 = vpack.c.b16 %v1273, %v1271
      %v1396 = vpack.c.b16 %v1276, %v1274
      %v1397 = vpack.c.b16 %v1277, %v1275
      %v1398 = vpack.c.b16 %v1280, %v1278
      %v1399 = vpack.c.b16 %v1281, %v1279
      %v1400 = vpack.c.b16 %v1284, %v1282
      %v1401 = vpack.c.b16 %v1285, %v1283
      %v1402 = vpack.c.b16 %v1288, %v1286
      %v1403 = vpack.c.b16 %v1289, %v1287
      %v1404 = vpack.c.b16 %v1292, %v1290
      %v1405 = vpack.c.b16 %v1293, %v1291
      %v1406 = vpack.c.b16 %v1296, %v1294
      %v1407 = vpack.c.b16 %v1297, %v1295
      %v1408 = vpack.c.b16 %v1300, %v1298
      %v1409 = vpack.c.b16 %v1301, %v1299
      %v1410 = vpack.c.b16 %v1304, %v1302
      %v1411 = vpack.c.b16 %v1305, %v1303
      %v1412 = vpack.c.b16 %v1308, %v1306
      %v1413 = vpack.c.b16 %v1309, %v1307
      %v1414 = vpack.c.b16 %v1312, %v1310
      %v1415 = vpack.c.b16 %v1313, %v1311
      %v1416 = vpack.c.b16 %v1316, %v1314
      %v1417 = vpack.c.b16 %v1317, %v1315
      %v1418 = vpack.c.b16 %v1320, %v1318
      %v1419 = vpack.c.b16 %v1321, %v1319
      %v1420 = vpack.c.b16 %v1324, %v1322
      %v1421 = vpack.c.b16 %v1325, %v1323
      %v1422 = vpack.c.b16 %v1328, %v1326
      %v1423 = vpack.c.b16 %v1329, %v1327
      %v1424 = vpack.c.b16 %v1332, %v1330
      %v1425 = vpack.c.b16 %v1333, %v1331
      %v1426 = vpack.c.b16 %v1336, %v1334
      %v1427 = vpack.c.b16 %v1337, %v1335
      %v1428 = vpack.c.b16 %v1340, %v1338
      %v1429 = vpack.c.b16 %v1341, %v1339
      %v1430 = vpack.c.b16 %v1344, %v1342
      %v1431 = vpack.c.b16 %v1345, %v1343
      %v1432 = vpack.c.b16 %v1348, %v1346
      %v1433 = vpack.c.b16 %v1349, %v1347
      %v1434 = vpack.c.b16 %v1352, %v1350
      %v1435 = vpack.c.b16 %v1353, %v1351
      %v1436 = vpack.c.b16 %v1356, %v1354
      %v1437 = vpack.c.b16 %v1357, %v1355
      %v1438 = vpack.c.b16 %v1360, %v1358
      %v1439 = vpack.c.b16 %v1361, %v1359
      %v1440 = vpack.c.b16 %v1364, %v1362
      %v1441 = vpack.c.b16 %v1365, %v1363
      %v1442 = vpack.c.b16 %v1368, %v1366
      %v1443 = vpack.c.b16 %v1369, %v1367
      %v1444 = vpack.c.b16 %v1372, %v1370
      %v1445 = vpack.c.b16 %v1373, %v1371
      %v1446 = vpack.c.b16 %v1376, %v1374
      %v1447 = vpack.c.b16 %v1377, %v1375
      %v1448 = vpack.c.b16 %v1380, %v1378
      %v1449 = vpack.c.b16 %v1381, %v1379
      %v1450 = vpack.c.b16 %v1384, %v1382
      %v1451 = vpack.c.b16 %v1385, %v1383
      %v1452 = vpack.c.b16 %v1388, %v1386
      %v1453 = vpack.c.b16 %v1389, %v1387
      %v1504 = vunpack.c.l.b16 %v321
      %v1505 = vunpack.c.l.b16 %v322
      %v1506 = vunpack.c.l.b16 %v323
      %v1507 = vunpack.c.l.b16 %v324
      %v1508 = vunpack.c.l.b16 %v325
      %v1509 = vunpack.c.l.b16 %v326
      %v1510 = vunpack.c.l.b16 %v327
      %v1511 = vunpack.c.l.b16 %v328
      %v1512 = vunpack.c.l.b16 %v329
      %v1513 = vunpack.c.l.b16 %v330
      %v1514 = vunpack.c.l.b16 %v331
      %v1515 = vunpack.c.l.b16 %v332
      %v1516 = vunpack.c.l.b16 %v333
      %v1517 = vunpack.c.l.b16 %v334
      %v1518 = vunpack.c.l.b16 %v335
      %v1519 = vunpack.c.l.b16 %v336
      %v1520 = vunpack.c.l.b16 %v337
      %v1521 = vunpack.c.l.b16 %v338
      %v1522 = vpack.c.b16 %v1505, %v1504
      %v1523 = vpack.c.b16 %v1507, %v1506
      %v1524 = vpack.c.b16 %v1509, %v1508
      %v1525 = vpack.c.b16 %v1511, %v1510
      %v1526 = vpack.c.b16 %v1513, %v1512
      %v1527 = vpack.c.b16 %v1515, %v1514
      %v1528 = vpack.c.b16 %v1517, %v1516
      %v1529 = vpack.c.b16 %v1519, %v1518
      %v1530 = vpack.c.b16 %v1521, %v1520
      %v1541 = vsel %vm763, %v1391, 0
      %v1544 = vsel %vm763, %v1393, 0
      %v1547 = vsel %vm763, %v1395, 0
      %v1550 = vsel %vm763, %v1397, 0
      %v1553 = vsel %vm763, %v1399, 0
      %v1556 = vsel %vm763, %v1401, 0
      %v1559 = vsel %vm763, %v1403, 0
      %v1562 = vsel %vm763, %v1405, 0
      %v1565 = vsel %vm763, %v1407, 0
      %v1568 = vsel %vm763, %v1409, 0
      %v1571 = vsel %vm763, %v1411, 0
      %v1574 = vsel %vm763, %v1413, 0
      %v1577 = vsel %vm763, %v1415, 0
      %v1580 = vsel %vm763, %v1417, 0
      %v1583 = vsel %vm763, %v1419, 0
      %v1586 = vsel %vm763, %v1421, 0
      %v1589 = vsel %vm763, %v1423, 0
      %v1592 = vsel %vm763, %v1425, 0
      %v1595 = vsel %vm763, %v1427, 0
      %v1598 = vsel %vm763, %v1429, 0
      %v1601 = vsel %vm763, %v1431, 0
      %v1604 = vsel %vm763, %v1433, 0
      %v1607 = vsel %vm763, %v1435, 0
      %v1610 = vsel %vm763, %v1437, 0
      %v1613 = vsel %vm763, %v1439, 0
      %v1616 = vsel %vm763, %v1441, 0
      %v1619 = vsel %vm763, %v1443, 0
      %v1622 = vsel %vm763, %v1445, 0
      %v1625 = vsel %vm763, %v1447, 0
      %v1628 = vsel %vm763, %v1449, 0
      %v1631 = vsel %vm763, %v1451, 0
      %v1634 = vsel %vm763, %v1453, 0
      %1636 = vmatpush.bf16.msra.mxu0 %v1529
      %1637 = vmatpush.bf16.msra.mxu0 %v1528
      %1638 = vmatpush.bf16.msra.mxu0 %v1527
      %1639 = vmatpush.bf16.msra.mxu0 %v1526
      %1640 = vmatpush.bf16.msra.mxu0 %v1525
      %1641 = vmatpush.bf16.msra.mxu0 %v1524
      %1642 = vmatpush.bf16.msra.mxu0 %v1523
      %1643 = vmatpush.bf16.msra.mxu0 %v1522
      %1644 = vmatmul.bf16.gmra.mxu0 %v1390
      %v1645 = vpop.f32.mrf.mxu0
      %v1646 = vadd.f32 %v1039, %v1645
      %v1647 = vpop.f32.mrf.mxu0
      %v1648 = vadd.f32 %v1041, %v1647
      %1649 = vmatmul.bf16.gmra.mxu0 %v1392
      %v1650 = vpop.f32.mrf.mxu0
      %v1651 = vadd.f32 %v1044, %v1650
      %v1652 = vpop.f32.mrf.mxu0
      %v1653 = vadd.f32 %v1046, %v1652
      %1654 = vmatmul.bf16.gmra.mxu0 %v1394
      %v1655 = vpop.f32.mrf.mxu0
      %v1656 = vadd.f32 %v1049, %v1655
      %v1657 = vpop.f32.mrf.mxu0
      %v1658 = vadd.f32 %v1051, %v1657
      %1659 = vmatmul.bf16.gmra.mxu0 %v1396
      %v1660 = vpop.f32.mrf.mxu0
      %v1661 = vadd.f32 %v1054, %v1660
      %v1662 = vpop.f32.mrf.mxu0
      %v1663 = vadd.f32 %v1056, %v1662
      %1664 = vmatmul.bf16.gmra.mxu0 %v1398
      %v1665 = vpop.f32.mrf.mxu0
      %v1666 = vadd.f32 %v1059, %v1665
      %v1667 = vpop.f32.mrf.mxu0
      %v1668 = vadd.f32 %v1061, %v1667
      %1669 = vmatmul.bf16.gmra.mxu0 %v1400
      %v1670 = vpop.f32.mrf.mxu0
      %v1671 = vadd.f32 %v1064, %v1670
      %v1672 = vpop.f32.mrf.mxu0
      %v1673 = vadd.f32 %v1066, %v1672
      %1674 = vmatmul.bf16.gmra.mxu0 %v1402
      %v1675 = vpop.f32.mrf.mxu0
      %v1676 = vadd.f32 %v1069, %v1675
      %v1677 = vpop.f32.mrf.mxu0
      %v1678 = vadd.f32 %v1071, %v1677
      %1679 = vmatmul.bf16.gmra.mxu0 %v1404
      %v1680 = vpop.f32.mrf.mxu0
      %v1681 = vadd.f32 %v1074, %v1680
      %v1682 = vpop.f32.mrf.mxu0
      %v1683 = vadd.f32 %v1076, %v1682
      %1684 = vmatmul.bf16.gmra.mxu0 %v1406
      %v1685 = vpop.f32.mrf.mxu0
      %v1686 = vadd.f32 %v1079, %v1685
      %v1687 = vpop.f32.mrf.mxu0
      %v1688 = vadd.f32 %v1081, %v1687
      %1689 = vmatmul.bf16.gmra.mxu0 %v1408
      %v1690 = vpop.f32.mrf.mxu0
      %v1691 = vadd.f32 %v1084, %v1690
      %v1692 = vpop.f32.mrf.mxu0
      %v1693 = vadd.f32 %v1086, %v1692
      %1694 = vmatmul.bf16.gmra.mxu0 %v1410
      %v1695 = vpop.f32.mrf.mxu0
      %v1696 = vadd.f32 %v1089, %v1695
      %v1697 = vpop.f32.mrf.mxu0
      %v1698 = vadd.f32 %v1091, %v1697
      %1699 = vmatmul.bf16.gmra.mxu0 %v1412
      %v1700 = vpop.f32.mrf.mxu0
      %v1701 = vadd.f32 %v1094, %v1700
      %v1702 = vpop.f32.mrf.mxu0
      %v1703 = vadd.f32 %v1096, %v1702
      %1704 = vmatmul.bf16.gmra.mxu0 %v1414
      %v1705 = vpop.f32.mrf.mxu0
      %v1706 = vadd.f32 %v1099, %v1705
      %v1707 = vpop.f32.mrf.mxu0
      %v1708 = vadd.f32 %v1101, %v1707
      %1709 = vmatmul.bf16.gmra.mxu0 %v1416
      %v1710 = vpop.f32.mrf.mxu0
      %v1711 = vadd.f32 %v1104, %v1710
      %v1712 = vpop.f32.mrf.mxu0
      %v1713 = vadd.f32 %v1106, %v1712
      %1714 = vmatmul.bf16.gmra.mxu0 %v1418
      %v1715 = vpop.f32.mrf.mxu0
      %v1716 = vadd.f32 %v1109, %v1715
      %v1717 = vpop.f32.mrf.mxu0
      %v1718 = vadd.f32 %v1111, %v1717
      %1719 = vmatmul.bf16.gmra.mxu0 %v1420
      %v1720 = vpop.f32.mrf.mxu0
      %v1721 = vadd.f32 %v1114, %v1720
      %v1722 = vpop.f32.mrf.mxu0
      %v1723 = vadd.f32 %v1116, %v1722
      %1724 = vmatmul.bf16.gmra.mxu0 %v1422
      %v1725 = vpop.f32.mrf.mxu0
      %v1726 = vadd.f32 %v1119, %v1725
      %v1727 = vpop.f32.mrf.mxu0
      %v1728 = vadd.f32 %v1121, %v1727
      %1729 = vmatmul.bf16.gmra.mxu0 %v1424
      %v1730 = vpop.f32.mrf.mxu0
      %v1731 = vadd.f32 %v1124, %v1730
      %v1732 = vpop.f32.mrf.mxu0
      %v1733 = vadd.f32 %v1126, %v1732
      %1734 = vmatmul.bf16.gmra.mxu0 %v1426
      %v1735 = vpop.f32.mrf.mxu0
      %v1736 = vadd.f32 %v1129, %v1735
      %v1737 = vpop.f32.mrf.mxu0
      %v1738 = vadd.f32 %v1131, %v1737
      %1739 = vmatmul.bf16.gmra.mxu0 %v1428
      %v1740 = vpop.f32.mrf.mxu0
      %v1741 = vadd.f32 %v1134, %v1740
      %v1742 = vpop.f32.mrf.mxu0
      %v1743 = vadd.f32 %v1136, %v1742
      %1744 = vmatmul.bf16.gmra.mxu0 %v1430
      %v1745 = vpop.f32.mrf.mxu0
      %v1746 = vadd.f32 %v1139, %v1745
      %v1747 = vpop.f32.mrf.mxu0
      %v1748 = vadd.f32 %v1141, %v1747
      %1749 = vmatmul.bf16.gmra.mxu0 %v1432
      %v1750 = vpop.f32.mrf.mxu0
      %v1751 = vadd.f32 %v1144, %v1750
      %v1752 = vpop.f32.mrf.mxu0
      %v1753 = vadd.f32 %v1146, %v1752
      %1754 = vmatmul.bf16.gmra.mxu0 %v1434
      %v1755 = vpop.f32.mrf.mxu0
      %v1756 = vadd.f32 %v1149, %v1755
      %v1757 = vpop.f32.mrf.mxu0
      %v1758 = vadd.f32 %v1151, %v1757
      %1759 = vmatmul.bf16.gmra.mxu0 %v1436
      %v1760 = vpop.f32.mrf.mxu0
      %v1761 = vadd.f32 %v1154, %v1760
      %v1762 = vpop.f32.mrf.mxu0
      %v1763 = vadd.f32 %v1156, %v1762
      %1764 = vmatmul.bf16.gmra.mxu0 %v1438
      %v1765 = vpop.f32.mrf.mxu0
      %v1766 = vadd.f32 %v1159, %v1765
      %v1767 = vpop.f32.mrf.mxu0
      %v1768 = vadd.f32 %v1161, %v1767
      %1769 = vmatmul.bf16.gmra.mxu0 %v1440
      %v1770 = vpop.f32.mrf.mxu0
      %v1771 = vadd.f32 %v1164, %v1770
      %v1772 = vpop.f32.mrf.mxu0
      %v1773 = vadd.f32 %v1166, %v1772
      %1774 = vmatmul.bf16.gmra.mxu0 %v1442
      %v1775 = vpop.f32.mrf.mxu0
      %v1776 = vadd.f32 %v1169, %v1775
      %v1777 = vpop.f32.mrf.mxu0
      %v1778 = vadd.f32 %v1171, %v1777
      %1779 = vmatmul.bf16.gmra.mxu0 %v1444
      %v1780 = vpop.f32.mrf.mxu0
      %v1781 = vadd.f32 %v1174, %v1780
      %v1782 = vpop.f32.mrf.mxu0
      %v1783 = vadd.f32 %v1176, %v1782
      %1784 = vmatmul.bf16.gmra.mxu0 %v1446
      %v1785 = vpop.f32.mrf.mxu0
      %v1786 = vadd.f32 %v1179, %v1785
      %v1787 = vpop.f32.mrf.mxu0
      %v1788 = vadd.f32 %v1181, %v1787
      %1789 = vmatmul.bf16.gmra.mxu0 %v1448
      %v1790 = vpop.f32.mrf.mxu0
      %v1791 = vadd.f32 %v1184, %v1790
      %v1792 = vpop.f32.mrf.mxu0
      %v1793 = vadd.f32 %v1186, %v1792
      %1794 = vmatmul.bf16.gmra.mxu0 %v1450
      %v1795 = vpop.f32.mrf.mxu0
      %v1796 = vadd.f32 %v1189, %v1795
      %v1797 = vpop.f32.mrf.mxu0
      %v1798 = vadd.f32 %v1191, %v1797
      %1799 = vmatmul.bf16.gmra.mxu0 %v1452
      %v1800 = vpop.f32.mrf.mxu0
      %v1801 = vadd.f32 %v1194, %v1800
      %v1802 = vpop.f32.mrf.mxu0
      %v1803 = vadd.f32 %v1196, %v1802
      %1804 = vdwg.mxu0
      %1805 = vmatpush.bf16.msra.mxu0 0
      %1806 = vmatpush.bf16.msra.mxu0 0
      %1807 = vmatpush.bf16.msra.mxu0 0
      %1808 = vmatpush.bf16.msra.mxu0 0
      %1809 = vmatpush.bf16.msra.mxu0 0
      %1810 = vmatpush.bf16.msra.mxu0 0
      %1811 = vmatpush.bf16.msra.mxu0 0
      %1812 = vmatpush.bf16.msra.mxu0 %v1530
      %1813 = vmatmul.bf16.gmra.mxu0 %v1541
      %v1814 = vpop.f32.mrf.mxu0
      %v1815 = vadd.f32 %v1646, %v1814
      %v1816 = vpop.f32.mrf.mxu0
      %v1817 = vadd.f32 %v1648, %v1816
      %1818 = vmatmul.bf16.gmra.mxu0 %v1544
      %v1819 = vpop.f32.mrf.mxu0
      %v1820 = vadd.f32 %v1651, %v1819
      %v1821 = vpop.f32.mrf.mxu0
      %v1822 = vadd.f32 %v1653, %v1821
      %1823 = vmatmul.bf16.gmra.mxu0 %v1547
      %v1824 = vpop.f32.mrf.mxu0
      %v1825 = vadd.f32 %v1656, %v1824
      %v1826 = vpop.f32.mrf.mxu0
      %v1827 = vadd.f32 %v1658, %v1826
      %1828 = vmatmul.bf16.gmra.mxu0 %v1550
      %v1829 = vpop.f32.mrf.mxu0
      %v1830 = vadd.f32 %v1661, %v1829
      %v1831 = vpop.f32.mrf.mxu0
      %v1832 = vadd.f32 %v1663, %v1831
      %1833 = vmatmul.bf16.gmra.mxu0 %v1553
      %v1834 = vpop.f32.mrf.mxu0
      %v1835 = vadd.f32 %v1666, %v1834
      %v1836 = vpop.f32.mrf.mxu0
      %v1837 = vadd.f32 %v1668, %v1836
      %1838 = vmatmul.bf16.gmra.mxu0 %v1556
      %v1839 = vpop.f32.mrf.mxu0
      %v1840 = vadd.f32 %v1671, %v1839
      %v1841 = vpop.f32.mrf.mxu0
      %v1842 = vadd.f32 %v1673, %v1841
      %1843 = vmatmul.bf16.gmra.mxu0 %v1559
      %v1844 = vpop.f32.mrf.mxu0
      %v1845 = vadd.f32 %v1676, %v1844
      %v1846 = vpop.f32.mrf.mxu0
      %v1847 = vadd.f32 %v1678, %v1846
      %1848 = vmatmul.bf16.gmra.mxu0 %v1562
      %v1849 = vpop.f32.mrf.mxu0
      %v1850 = vadd.f32 %v1681, %v1849
      %v1851 = vpop.f32.mrf.mxu0
      %v1852 = vadd.f32 %v1683, %v1851
      %1853 = vmatmul.bf16.gmra.mxu0 %v1565
      %v1854 = vpop.f32.mrf.mxu0
      %v1855 = vadd.f32 %v1686, %v1854
      %v1856 = vpop.f32.mrf.mxu0
      %v1857 = vadd.f32 %v1688, %v1856
      %1858 = vmatmul.bf16.gmra.mxu0 %v1568
      %v1859 = vpop.f32.mrf.mxu0
      %v1860 = vadd.f32 %v1691, %v1859
      %v1861 = vpop.f32.mrf.mxu0
      %v1862 = vadd.f32 %v1693, %v1861
      %1863 = vmatmul.bf16.gmra.mxu0 %v1571
      %v1864 = vpop.f32.mrf.mxu0
      %v1865 = vadd.f32 %v1696, %v1864
      %v1866 = vpop.f32.mrf.mxu0
      %v1867 = vadd.f32 %v1698, %v1866
      %1868 = vmatmul.bf16.gmra.mxu0 %v1574
      %v1869 = vpop.f32.mrf.mxu0
      %v1870 = vadd.f32 %v1701, %v1869
      %v1871 = vpop.f32.mrf.mxu0
      %v1872 = vadd.f32 %v1703, %v1871
      %1873 = vmatmul.bf16.gmra.mxu0 %v1577
      %v1874 = vpop.f32.mrf.mxu0
      %v1875 = vadd.f32 %v1706, %v1874
      %v1876 = vpop.f32.mrf.mxu0
      %v1877 = vadd.f32 %v1708, %v1876
      %1878 = vmatmul.bf16.gmra.mxu0 %v1580
      %v1879 = vpop.f32.mrf.mxu0
      %v1880 = vadd.f32 %v1711, %v1879
      %v1881 = vpop.f32.mrf.mxu0
      %v1882 = vadd.f32 %v1713, %v1881
      %1883 = vmatmul.bf16.gmra.mxu0 %v1583
      %v1884 = vpop.f32.mrf.mxu0
      %v1885 = vadd.f32 %v1716, %v1884
      %v1886 = vpop.f32.mrf.mxu0
      %v1887 = vadd.f32 %v1718, %v1886
      %1888 = vmatmul.bf16.gmra.mxu0 %v1586
      %v1889 = vpop.f32.mrf.mxu0
      %v1890 = vadd.f32 %v1721, %v1889
      %v1891 = vpop.f32.mrf.mxu0
      %v1892 = vadd.f32 %v1723, %v1891
      %1893 = vmatmul.bf16.gmra.mxu0 %v1589
      %v1894 = vpop.f32.mrf.mxu0
      %v1895 = vadd.f32 %v1726, %v1894
      %v1896 = vpop.f32.mrf.mxu0
      %v1897 = vadd.f32 %v1728, %v1896
      %1898 = vmatmul.bf16.gmra.mxu0 %v1592
      %v1899 = vpop.f32.mrf.mxu0
      %v1900 = vadd.f32 %v1731, %v1899
      %v1901 = vpop.f32.mrf.mxu0
      %v1902 = vadd.f32 %v1733, %v1901
      %1903 = vmatmul.bf16.gmra.mxu0 %v1595
      %v1904 = vpop.f32.mrf.mxu0
      %v1905 = vadd.f32 %v1736, %v1904
      %v1906 = vpop.f32.mrf.mxu0
      %v1907 = vadd.f32 %v1738, %v1906
      %1908 = vmatmul.bf16.gmra.mxu0 %v1598
      %v1909 = vpop.f32.mrf.mxu0
      %v1910 = vadd.f32 %v1741, %v1909
      %v1911 = vpop.f32.mrf.mxu0
      %v1912 = vadd.f32 %v1743, %v1911
      %1913 = vmatmul.bf16.gmra.mxu0 %v1601
      %v1914 = vpop.f32.mrf.mxu0
      %v1915 = vadd.f32 %v1746, %v1914
      %v1916 = vpop.f32.mrf.mxu0
      %v1917 = vadd.f32 %v1748, %v1916
      %1918 = vmatmul.bf16.gmra.mxu0 %v1604
      %v1919 = vpop.f32.mrf.mxu0
      %v1920 = vadd.f32 %v1751, %v1919
      %v1921 = vpop.f32.mrf.mxu0
      %v1922 = vadd.f32 %v1753, %v1921
      %1923 = vmatmul.bf16.gmra.mxu0 %v1607
      %v1924 = vpop.f32.mrf.mxu0
      %v1925 = vadd.f32 %v1756, %v1924
      %v1926 = vpop.f32.mrf.mxu0
      %v1927 = vadd.f32 %v1758, %v1926
      %1928 = vmatmul.bf16.gmra.mxu0 %v1610
      %v1929 = vpop.f32.mrf.mxu0
      %v1930 = vadd.f32 %v1761, %v1929
      %v1931 = vpop.f32.mrf.mxu0
      %v1932 = vadd.f32 %v1763, %v1931
      %1933 = vmatmul.bf16.gmra.mxu0 %v1613
      %v1934 = vpop.f32.mrf.mxu0
      %v1935 = vadd.f32 %v1766, %v1934
      %v1936 = vpop.f32.mrf.mxu0
      %v1937 = vadd.f32 %v1768, %v1936
      %1938 = vmatmul.bf16.gmra.mxu0 %v1616
      %v1939 = vpop.f32.mrf.mxu0
      %v1940 = vadd.f32 %v1771, %v1939
      %v1941 = vpop.f32.mrf.mxu0
      %v1942 = vadd.f32 %v1773, %v1941
      %1943 = vmatmul.bf16.gmra.mxu0 %v1619
      %v1944 = vpop.f32.mrf.mxu0
      %v1945 = vadd.f32 %v1776, %v1944
      %v1946 = vpop.f32.mrf.mxu0
      %v1947 = vadd.f32 %v1778, %v1946
      %1948 = vmatmul.bf16.gmra.mxu0 %v1622
      %v1949 = vpop.f32.mrf.mxu0
      %v1950 = vadd.f32 %v1781, %v1949
      %v1951 = vpop.f32.mrf.mxu0
      %v1952 = vadd.f32 %v1783, %v1951
      %1953 = vmatmul.bf16.gmra.mxu0 %v1625
      %v1954 = vpop.f32.mrf.mxu0
      %v1955 = vadd.f32 %v1786, %v1954
      %v1956 = vpop.f32.mrf.mxu0
      %v1957 = vadd.f32 %v1788, %v1956
      %1958 = vmatmul.bf16.gmra.mxu0 %v1628
      %v1959 = vpop.f32.mrf.mxu0
      %v1960 = vadd.f32 %v1791, %v1959
      %v1961 = vpop.f32.mrf.mxu0
      %v1962 = vadd.f32 %v1793, %v1961
      %1963 = vmatmul.bf16.gmra.mxu0 %v1631
      %v1964 = vpop.f32.mrf.mxu0
      %v1965 = vadd.f32 %v1796, %v1964
      %v1966 = vpop.f32.mrf.mxu0
      %v1967 = vadd.f32 %v1798, %v1966
      %1968 = vmatmul.bf16.gmra.mxu0 %v1634
      %v1969 = vpop.f32.mrf.mxu0
      %v1970 = vadd.f32 %v1801, %v1969
      %v1971 = vpop.f32.mrf.mxu0
      %v1972 = vadd.f32 %v1803, %v1971
      %1973 = vdwg.mxu0
      %v1974 = vld [vmem:[%s4] sm:$0x1]
      %v1976 = vperm.slane %v1974, 0
      %v1978 = vadd.f32 %v1815, %v1976
      %v1979 = vadd.f32 %v1817, %v1976
      %v1980 = vadd.f32 %v1820, %v1976
      %v1981 = vadd.f32 %v1822, %v1976
      %v1982 = vadd.f32 %v1825, %v1976
      %v1983 = vadd.f32 %v1827, %v1976
      %v1984 = vadd.f32 %v1830, %v1976
      %v1985 = vadd.f32 %v1832, %v1976
      %v1986 = vadd.f32 %v1835, %v1976
      %v1987 = vadd.f32 %v1837, %v1976
      %v1988 = vadd.f32 %v1840, %v1976
      %v1989 = vadd.f32 %v1842, %v1976
      %v1990 = vadd.f32 %v1845, %v1976
      %v1991 = vadd.f32 %v1847, %v1976
      %v1992 = vadd.f32 %v1850, %v1976
      %v1993 = vadd.f32 %v1852, %v1976
      %v1994 = vadd.f32 %v1855, %v1976
      %v1995 = vadd.f32 %v1857, %v1976
      %v1996 = vadd.f32 %v1860, %v1976
      %v1997 = vadd.f32 %v1862, %v1976
      %v1998 = vadd.f32 %v1865, %v1976
      %v1999 = vadd.f32 %v1867, %v1976
      %v2000 = vadd.f32 %v1870, %v1976
      %v2001 = vadd.f32 %v1872, %v1976
      %v2002 = vadd.f32 %v1875, %v1976
      %v2003 = vadd.f32 %v1877, %v1976
      %v2004 = vadd.f32 %v1880, %v1976
      %v2005 = vadd.f32 %v1882, %v1976
      %v2006 = vadd.f32 %v1885, %v1976
      %v2007 = vadd.f32 %v1887, %v1976
      %v2008 = vadd.f32 %v1890, %v1976
      %v2009 = vadd.f32 %v1892, %v1976
      %v2010 = vadd.f32 %v1895, %v1976
      %v2011 = vadd.f32 %v1897, %v1976
      %v2012 = vadd.f32 %v1900, %v1976
      %v2013 = vadd.f32 %v1902, %v1976
      %v2014 = vadd.f32 %v1905, %v1976
      %v2015 = vadd.f32 %v1907, %v1976
      %v2016 = vadd.f32 %v1910, %v1976
      %v2017 = vadd.f32 %v1912, %v1976
      %v2018 = vadd.f32 %v1915, %v1976
      %v2019 = vadd.f32 %v1917, %v1976
      %v2020 = vadd.f32 %v1920, %v1976
      %v2021 = vadd.f32 %v1922, %v1976
      %v2022 = vadd.f32 %v1925, %v1976
      %v2023 = vadd.f32 %v1927, %v1976
      %v2024 = vadd.f32 %v1930, %v1976
      %v2025 = vadd.f32 %v1932, %v1976
      %v2026 = vadd.f32 %v1935, %v1976
      %v2027 = vadd.f32 %v1937, %v1976
      %v2028 = vadd.f32 %v1940, %v1976
      %v2029 = vadd.f32 %v1942, %v1976
      %v2030 = vadd.f32 %v1945, %v1976
      %v2031 = vadd.f32 %v1947, %v1976
      %v2032 = vadd.f32 %v1950, %v1976
      %v2033 = vadd.f32 %v1952, %v1976
      %v2034 = vadd.f32 %v1955, %v1976
      %v2035 = vadd.f32 %v1957, %v1976
      %v2036 = vadd.f32 %v1960, %v1976
      %v2037 = vadd.f32 %v1962, %v1976
      %v2038 = vadd.f32 %v1965, %v1976
      %v2039 = vadd.f32 %v1967, %v1976
      %v2040 = vadd.f32 %v1970, %v1976
      %v2041 = vadd.f32 %v1972, %v1976
      %vm2042 = vcmask 23552
      %2043 = vst.msk [vmem:[%s254] sm:$0xff] %vm2042, %v1978
      %2044 = vst.msk [vmem:[%s254 + $0x8] sm:$0xff] %vm2042, %v1979
      %2045 = vst.msk [vmem:[%s254 + $0x10] sm:$0xff] %vm2042, %v1980
      %2046 = vst.msk [vmem:[%s254 + $0x18] sm:$0xff] %vm2042, %v1981
      %2047 = vst.msk [vmem:[%s254 + $0x20] sm:$0xff] %vm2042, %v1982
      %2048 = vst.msk [vmem:[%s254 + $0x28] sm:$0xff] %vm2042, %v1983
      %2049 = vst.msk [vmem:[%s254 + $0x30] sm:$0xff] %vm2042, %v1984
      %2050 = vst.msk [vmem:[%s254 + $0x38] sm:$0xff] %vm2042, %v1985
      %2051 = vst.msk [vmem:[%s254 + $0x40] sm:$0xff] %vm2042, %v1986
      %2052 = vst.msk [vmem:[%s254 + $0x48] sm:$0xff] %vm2042, %v1987
      %2053 = vst.msk [vmem:[%s254 + $0x50] sm:$0xff] %vm2042, %v1988
      %2054 = vst.msk [vmem:[%s254 + $0x58] sm:$0xff] %vm2042, %v1989
      %2055 = vst.msk [vmem:[%s254 + $0x60] sm:$0xff] %vm2042, %v1990
      %2056 = vst.msk [vmem:[%s254 + $0x68] sm:$0xff] %vm2042, %v1991
      %2057 = vst.msk [vmem:[%s254 + $0x70] sm:$0xff] %vm2042, %v1992
      %2058 = vst.msk [vmem:[%s254 + $0x78] sm:$0xff] %vm2042, %v1993
      %2059 = vst.msk [vmem:[%s254 + $0x80] sm:$0xff] %vm2042, %v1994
      %2060 = vst.msk [vmem:[%s254 + $0x88] sm:$0xff] %vm2042, %v1995
      %2061 = vst.msk [vmem:[%s254 + $0x90] sm:$0xff] %vm2042, %v1996
      %2062 = vst.msk [vmem:[%s254 + $0x98] sm:$0xff] %vm2042, %v1997
      %2063 = vst.msk [vmem:[%s254 + $0xa0] sm:$0xff] %vm2042, %v1998
      %2064 = vst.msk [vmem:[%s254 + $0xa8] sm:$0xff] %vm2042, %v1999
      %2065 = vst.msk [vmem:[%s254 + $0xb0] sm:$0xff] %vm2042, %v2000
      %2066 = vst.msk [vmem:[%s254 + $0xb8] sm:$0xff] %vm2042, %v2001
      %2067 = vst.msk [vmem:[%s254 + $0xc0] sm:$0xff] %vm2042, %v2002
      %2068 = vst.msk [vmem:[%s254 + $0xc8] sm:$0xff] %vm2042, %v2003
      %2069 = vst.msk [vmem:[%s254 + $0xd0] sm:$0xff] %vm2042, %v2004
      %2070 = vst.msk [vmem:[%s254 + $0xd8] sm:$0xff] %vm2042, %v2005
      %2071 = vst.msk [vmem:[%s254 + $0xe0] sm:$0xff] %vm2042, %v2006
      %2072 = vst.msk [vmem:[%s254 + $0xe8] sm:$0xff] %vm2042, %v2007
      %2073 = vst.msk [vmem:[%s254 + $0xf0] sm:$0xff] %vm2042, %v2008
      %2074 = vst.msk [vmem:[%s254 + $0xf8] sm:$0xff] %vm2042, %v2009
      %2075 = vst.msk [vmem:[%s254 + $0x100] sm:$0xff] %vm2042, %v2010
      %2076 = vst.msk [vmem:[%s254 + $0x108] sm:$0xff] %vm2042, %v2011
      %2077 = vst.msk [vmem:[%s254 + $0x110] sm:$0xff] %vm2042, %v2012
      %2078 = vst.msk [vmem:[%s254 + $0x118] sm:$0xff] %vm2042, %v2013
      %2079 = vst.msk [vmem:[%s254 + $0x120] sm:$0xff] %vm2042, %v2014
      %2080 = vst.msk [vmem:[%s254 + $0x128] sm:$0xff] %vm2042, %v2015
      %2081 = vst.msk [vmem:[%s254 + $0x130] sm:$0xff] %vm2042, %v2016
      %2082 = vst.msk [vmem:[%s254 + $0x138] sm:$0xff] %vm2042, %v2017
      %2083 = vst.msk [vmem:[%s254 + $0x140] sm:$0xff] %vm2042, %v2018
      %2084 = vst.msk [vmem:[%s254 + $0x148] sm:$0xff] %vm2042, %v2019
      %2085 = vst.msk [vmem:[%s254 + $0x150] sm:$0xff] %vm2042, %v2020
      %2086 = vst.msk [vmem:[%s254 + $0x158] sm:$0xff] %vm2042, %v2021
      %2087 = vst.msk [vmem:[%s254 + $0x160] sm:$0xff] %vm2042, %v2022
      %2088 = vst.msk [vmem:[%s254 + $0x168] sm:$0xff] %vm2042, %v2023
      %2089 = vst.msk [vmem:[%s254 + $0x170] sm:$0xff] %vm2042, %v2024
      %2090 = vst.msk [vmem:[%s254 + $0x178] sm:$0xff] %vm2042, %v2025
      %2091 = vst.msk [vmem:[%s254 + $0x180] sm:$0xff] %vm2042, %v2026
      %2092 = vst.msk [vmem:[%s254 + $0x188] sm:$0xff] %vm2042, %v2027
      %2093 = vst.msk [vmem:[%s254 + $0x190] sm:$0xff] %vm2042, %v2028
      %2094 = vst.msk [vmem:[%s254 + $0x198] sm:$0xff] %vm2042, %v2029
      %2095 = vst.msk [vmem:[%s254 + $0x1a0] sm:$0xff] %vm2042, %v2030
      %2096 = vst.msk [vmem:[%s254 + $0x1a8] sm:$0xff] %vm2042, %v2031
      %2097 = vst.msk [vmem:[%s254 + $0x1b0] sm:$0xff] %vm2042, %v2032
      %2098 = vst.msk [vmem:[%s254 + $0x1b8] sm:$0xff] %vm2042, %v2033
      %2099 = vst.msk [vmem:[%s254 + $0x1c0] sm:$0xff] %vm2042, %v2034
      %2100 = vst.msk [vmem:[%s254 + $0x1c8] sm:$0xff] %vm2042, %v2035
      %2101 = vst.msk [vmem:[%s254 + $0x1d0] sm:$0xff] %vm2042, %v2036
      %2102 = vst.msk [vmem:[%s254 + $0x1d8] sm:$0xff] %vm2042, %v2037
      %2103 = vst.msk [vmem:[%s254 + $0x1e0] sm:$0xff] %vm2042, %v2038
      %2104 = vst.msk [vmem:[%s254 + $0x1e8] sm:$0xff] %vm2042, %v2039
      %2105 = vst.msk [vmem:[%s254 + $0x1f0] sm:$0xff] %vm2042, %v2040
      %2106 = vst.msk [vmem:[%s254 + $0x1f8] sm:$0xff] %vm2042, %v2041
      %s2107 = smul.u32 64, %s16
      %p2108 = scmp.lt.s32.totalorder %s2107, 255
      %s2109 = scalar_select %p2108, %s2107, 255
      %s2110 = smul.addr %s2109, 8
      %s2111 = scalar_lea.vmem %s5, %s2110
      // Predicated region
      $region41: #{net2_forward.23} parent=39 // pred_check
        %p2112 = pneg %p149
      $region42: #{net2_forward.23} parent=39 // pred_check_branch
        %2114 = sbr.rel (%p2112) target = $region44
      $region43: #{net2_forward.23} parent=39 // pred_region
        %s2115 = smul.u32 64, %s16
      $region44: #{net2_forward.23} parent=39 // pred_fallthru
        _
    $region40: #{net2_forward.23} parent=5 // pred_fallthru
      _
    %p2116 = scmp.le.s32.totalorder 2, %s11
    // Predicated region
    $region45: #{net2_forward.23} parent=5 // pred_check
      %p2117 = pneg %p2116
    $region46: #{net2_forward.23} parent=5 // pred_check_branch
      %2119 = sbr.rel (%p2117) target = $region48
    $region47: #{net2_forward.23} parent=5 // pred_region
      %s2120 = ssub.s32 %s11, 2
      // Predicated region
      $region49: #{net2_forward.23} parent=47 // pred_check
        %p2121 = pneg %p155
      $region50: #{net2_forward.23} parent=47 // pred_check_branch
        %2123 = sbr.rel (%p2121) target = $region52
      $region51: #{net2_forward.23} parent=47 // pred_region
        %s2124 = smul.u32 64, %s17
        %p2125 = scmp.lt.s32.totalorder %s2124, 255
        %s2126 = scalar_select %p2125, %s2124, 255
        %s2127 = smul.addr %s2126, 8
        %s2128 = scalar_lea.vmem %s5, %s2127
      $region52: #{net2_forward.23} parent=47 // pred_fallthru
        _
    $region48: #{net2_forward.23} parent=5 // pred_fallthru
      _
  $region6: #{net2_forward.23} parent=0 // loop_footer
    %s15 = sadd.s32 1, %s11
  $region7: #{net2_forward.23} parent=0 // loop_footer_branch
    %10 = sbr.rel target = $region3
  $region8: #{net2_forward.23} parent=0 // loop_exit
    _

</llo_original>
